<compile_context>
chip_gen: v7x
topology: tpu7x:2x2x1
jax: 0.10.0
libtpu: 0.0.40
codegen_flags: <defaults>
</compile_context>

<pallas_src>
import jax
import jax.numpy as jnp
from jax import lax
from jax.experimental import pallas as pl
from jax.experimental.pallas import tpu as pltpu


# Geometry pinned by fc1 = 50*6*6 (=> 150x150 inputs).
_C1_K = 3 * 5 * 5            # 75   conv1 im2col depth, (c, kh, kw) order
_P1_ROWS = 15 * 16           # 240  pooled conv1 pixels, width padded 15 -> 16
_Y1_ROWS = 256               # conv1 scratch rows (max shifted read = 242)
_Z_ROWS = 12 * 16            # 192  conv2 "wide" output rows (12 x padded 16)
_CPAD = 128                  # conv channel padding (20 -> 128, 50 -> 128)
_C2_K = 16 * _CPAD           # 2048 conv2 im2col depth (kh, kw, padded c_in)
_NPOOL2 = 36                 # 6*6 pooled conv2 pixels
_FC_IN = _NPOOL2 * _CPAD     # 4608
_HID = 200
_NCLS = 2


# ----------------------------- Pallas kernels -----------------------------

def _conv_stack_kernel(p1_ref, w1_ref, b1_ref, w2_ref, b2_ref, sel_ref,
                       o_ref, y1_scr, im_scr):
    """Per-image conv1+pool -> conv2 (in-kernel im2col) + pool, fully in VMEM."""
    # ---- conv1 + bias + ReLU + 2x2 max-pool ------------------------------
    # p1 rows are ordered d*240 + ph*16 + pw (d = pool-window position), so a
    # single (960, 75) @ (75, 128) dot covers all 4 window positions; the
    # reshape splits a leading axis on a 240-row (tile-aligned) boundary.
    y = jnp.dot(p1_ref[0], w1_ref[...], preferred_element_type=jnp.float32)
    y = jnp.max(y.reshape(4, _P1_ROWS, _CPAD), axis=0)          # pool (max)
    y1 = jnp.maximum(y + b1_ref[...], 0.0).astype(jnp.bfloat16)
    y1_scr[0:_P1_ROWS, :] = y1
    y1_scr[_P1_ROWS:_Y1_ROWS, :] = jnp.zeros(
        (_Y1_ROWS - _P1_ROWS, _CPAD), jnp.bfloat16)

    # ---- conv2 im2col built in VMEM --------------------------------------
    # y1_scr row r holds pooled pixel (h, w) = (r // 16, r % 16); the (kh, kw)
    # tap of output pixel (oh, ow) is row (oh*16 + ow) + (kh*16 + kw), i.e. a
    # static row shift.  Each tap lands at lane offset (kh*4 + kw)*128.
    for kh in range(4):
        for kw in range(4):
            k = kh * 4 + kw
            s = kh * 16 + kw
            im_scr[:, k * _CPAD:(k + 1) * _CPAD] = y1_scr[s:s + _Z_ROWS, :]

    # One K=2048 MXU dot for conv2 over the wide 12x16 output grid (columns
    # 12..15 of each spatial row are junk and are never selected below).
    z = jnp.dot(im_scr[...], w2_ref[...], preferred_element_type=jnp.float32)

    # ---- 2x2 max-pool + compaction as 4 selection matmuls ----------------
    # sel[d] is a 0/1 matrix picking window position d of every pooled pixel,
    # so the max over d is the pool and the result is already compact (36 rows
    # in (qh, qw) order) -- no sublane-strided gathers needed.
    pooled = jnp.dot(sel_ref[0], z, preferred_element_type=jnp.float32)
    for d in range(1, 4):
        pooled = jnp.maximum(
            pooled, jnp.dot(sel_ref[d], z, preferred_element_type=jnp.float32))
    o_ref[0] = jnp.maximum(pooled + b2_ref[...], 0.0).astype(o_ref.dtype)


def _fc_head_kernel(x_ref, w1_ref, b1_ref, w2_ref, b2_ref, o_ref):
    """fc1 + ReLU + fc2 + log_softmax(dim=1), all rows in one block."""
    h = jnp.dot(x_ref[...], w1_ref[...], preferred_element_type=jnp.float32)
    h = jnp.maximum(h + b1_ref[...], 0.0)
    z = jnp.dot(h.astype(w2_ref.dtype), w2_ref[...],
                preferred_element_type=jnp.float32)
    z = z + b2_ref[...]
    m = jnp.max(z, axis=-1, keepdims=True)
    s = z - m
    lse = jnp.log(jnp.sum(jnp.exp(s), axis=-1, keepdims=True))
    o_ref[...] = s - lse


# ----------------------------- kernel wrappers -----------------------------

def conv_stack(p1, w1, b1, w2, b2, sel):
    """p1: (N, 960, 75) bf16 -> (N, 36, 128) bf16 pooled conv2 activations."""
    N = p1.shape[0]
    return pl.pallas_call(
        _conv_stack_kernel,
        out_shape=jax.ShapeDtypeStruct((N, _NPOOL2, _CPAD), jnp.bfloat16),
        grid=(N,),
        in_specs=[
            pl.BlockSpec((1, 4 * _P1_ROWS, _C1_K), lambda n: (n, 0, 0)),
            pl.BlockSpec((_C1_K, _CPAD), lambda n: (0, 0)),
            pl.BlockSpec((1, _CPAD), lambda n: (0, 0)),
            pl.BlockSpec((_C2_K, _CPAD), lambda n: (0, 0)),
            pl.BlockSpec((1, _CPAD), lambda n: (0, 0)),
            pl.BlockSpec((4, _NPOOL2, _Z_ROWS), lambda n: (0, 0, 0)),
        ],
        out_specs=pl.BlockSpec((1, _NPOOL2, _CPAD), lambda n: (n, 0, 0)),
        scratch_shapes=[
            pltpu.VMEM((_Y1_ROWS, _CPAD), jnp.bfloat16),    # conv1 output
            pltpu.VMEM((_Z_ROWS, _C2_K), jnp.bfloat16),     # conv2 im2col
        ],
        compiler_params=pltpu.CompilerParams(
            dimension_semantics=("parallel",)),
    )(p1, w1, b1, w2, b2, sel)


def fc_head(x, w1, b1, w2, b2):
    """x: (N, 4608) bf16 -> (N, 2) f32 log-probabilities."""
    N, K = x.shape
    H = w1.shape[1]
    C = w2.shape[1]
    return pl.pallas_call(
        _fc_head_kernel,
        out_shape=jax.ShapeDtypeStruct((N, C), jnp.float32),
        grid=(1,),
        in_specs=[
            pl.BlockSpec((N, K), lambda i: (0, 0)),
            pl.BlockSpec((K, H), lambda i: (0, 0)),
            pl.BlockSpec((1, H), lambda i: (0, 0)),
            pl.BlockSpec((H, C), lambda i: (0, 0)),
            pl.BlockSpec((1, C), lambda i: (0, 0)),
        ],
        out_specs=pl.BlockSpec((N, C), lambda i: (0, 0)),
    )(x, w1, b1, w2, b2)


# ----------------------------- model forward -----------------------------

def cnn_forward(x, params):
    # x: (N, 3, 150, 150) float32, NCHW (PyTorch convention).
    N = x.shape[0]
    cdt = jnp.bfloat16

    # ---- conv1 im2col prepared once from the raw input (the 5x5/s5 patches
    # are non-overlapping, so this is a single cheap XLA transpose of the raw
    # 270 KB input).  Rows ordered d*240 + ph*16 + pw; pw padded 15 -> 16 so
    # all downstream in-kernel row arithmetic stays inside a spatial row.
    # TODO(synk): this one patch rearrangement remains XLA glue; everything
    # downstream of it stays VMEM-resident inside kernel A.
    xb = x.astype(cdt)
    p = xb.reshape(N, 3, 15, 2, 5, 15, 2, 5)            # n c ph dh kh pw dw kw
    p = p.transpose(0, 3, 6, 2, 5, 1, 4, 7)             # n dh dw ph pw c kh kw
    p = jnp.pad(p, ((0, 0), (0, 0), (0, 0), (0, 0), (0, 1),
                    (0, 0), (0, 0), (0, 0)))            # pw 15 -> 16
    p1 = p.reshape(N, 4 * _P1_ROWS, _C1_K)

    # ---- conv weights / biases: output channels padded 20/50 -> 128 so all
    # kernel stores are lane-dense.  Padded channels stay exactly zero through
    # bias+ReLU and meet zero weight rows downstream.
    w1 = params["conv1_w"].reshape(20, _C1_K).T.astype(cdt)        # (75, 20)
    w1 = jnp.pad(w1, ((0, 0), (0, _CPAD - 20)))                    # (75, 128)
    b1 = jnp.pad(params["conv1_b"], (0, _CPAD - 20)).reshape(1, _CPAD)
    b1 = b1.astype(jnp.float32)

    w2 = params["conv2_w"].transpose(2, 3, 1, 0)                   # kh kw ci co
    w2 = jnp.pad(w2, ((0, 0), (0, 0), (0, _CPAD - 20), (0, _CPAD - 50)))
    w2 = w2.reshape(_C2_K, _CPAD).astype(cdt)                      # (2048, 128)
    b2 = jnp.pad(params["conv2_b"], (0, _CPAD - 50)).reshape(1, _CPAD)
    b2 = b2.astype(jnp.float32)

    # ---- 2x2-pool selection matrices: sel[d, p, r] = 1 iff wide-conv2 row
    # r = (2qh+dh)*16 + (2qw+dw) is window position d of pooled pixel
    # p = qh*6 + qw.
    qh = jnp.arange(6)
    qw = jnp.arange(6)
    rows = []
    for dh in range(2):
        for dw in range(2):
            r = (2 * qh[:, None] + dh) * 16 + (2 * qw[None, :] + dw)
            rows.append(r.reshape(_NPOOL2))
    sel = jax.nn.one_hot(jnp.stack(rows), _Z_ROWS, dtype=jnp.float32)

    y2 = conv_stack(p1, w1, b1, w2, b2, sel)            # (N, 36, 128) bf16
    flat = y2.reshape(N, _FC_IN)                        # free view, no copy

    # ---- fc weights permuted at trace time: PyTorch flattens (c, h, w); our
    # activation flattens (pixel, padded-channel).  Padded channels get zero
    # weight rows, so no activation slicing / compaction is ever needed.
    wf1 = params["fc1_w"].reshape(_HID, 50, 6, 6).transpose(2, 3, 1, 0)
    wf1 = jnp.pad(wf1, ((0, 0), (0, 0), (0, _CPAD - 50), (0, 0)))
    wf1 = wf1.reshape(_FC_IN, _HID).astype(cdt)
    bf1 = params["fc1_b"].reshape(1, _HID).astype(jnp.float32)
    wf2 = params["fc2_w"].T.astype(cdt)                 # (200, 2)
    bf2 = params["fc2_b"].reshape(1, _NCLS).astype(jnp.float32)

    return fc_head(flat, wf1, bf1, wf2, bf2)


# ------------------------ reference (pure JAX, f32) ------------------------

def reference_forward(x, params):
    dn = ("NCHW", "OIHW", "NCHW")
    y = lax.conv_general_dilated(x, params["conv1_w"], (5, 5), "VALID",
                                 dimension_numbers=dn)
    y = jax.nn.relu(y + params["conv1_b"][None, :, None, None])
    y = lax.reduce_window(y, -jnp.inf, lax.max, (1, 1, 2, 2), (1, 1, 2, 2), "VALID")
    y = lax.conv_general_dilated(y, params["conv2_w"], (1, 1), "VALID",
                                 dimension_numbers=dn)
    y = jax.nn.relu(y + params["conv2_b"][None, :, None, None])
    y = lax.reduce_window(y, -jnp.inf, lax.max, (1, 1, 2, 2), (1, 1, 2, 2), "VALID")
    y = y.reshape(y.shape[0], -1)
    y = jax.nn.relu(y @ params["fc1_w"].T + params["fc1_b"])
    y = y @ params["fc2_w"].T + params["fc2_b"]
    return jax.nn.log_softmax(y, axis=1)


# ----------------------------- params init -----------------------------

def init_params(key):
    ks = jax.random.split(key, 8)

    def u(k, shape, fan_in):
        bound = 1.0 / jnp.sqrt(jnp.float32(fan_in))
        return jax.random.uniform(k, shape, jnp.float32, -bound, bound)

    return {
        "conv1_w": u(ks[0], (20, 3, 5, 5), 3 * 5 * 5),
        "conv1_b": u(ks[1], (20,), 3 * 5 * 5),
        "conv2_w": u(ks[2], (50, 20, 4, 4), 20 * 4 * 4),
        "conv2_b": u(ks[3], (50,), 20 * 4 * 4),
        "fc1_w":   u(ks[4], (200, 50 * 6 * 6), 50 * 6 * 6),
        "fc1_b":   u(ks[5], (200,), 50 * 6 * 6),
        "fc2_w":   u(ks[6], (2, 200), 200),
        "fc2_b":   u(ks[7], (2,), 200),
    }


if __name__ == "__main__":
    key = jax.random.PRNGKey(0)
    pkey, xkey = jax.random.split(key)
    params = init_params(pkey)

    # fc1 expects 50*6*6 features, which pins the spatial size to 150x150;
    # batch kept small (2) -> kernel A runs 2 parallel grid steps.
    x = jax.random.normal(xkey, (2, 3, 150, 150), jnp.float32)

    out = jax.jit(cnn_forward)(x, params)
    out = jax.block_until_ready(out)

    ref = reference_forward(x, params)
    assert out.shape == (2, 2)
    # Tolerance reflects bf16 matmuls (f32 accumulation) vs the f32 reference.
    assert jnp.allclose(out, ref, atol=1e-2, rtol=1e-2), "mismatch vs JAX reference"
    print("KERNEL_OK")
</pallas_src>

<mosaic_0001>
module attributes {stable_mosaic.version = 11 : i64} {
  func.func @_conv_stack_kernel(%arg0: i32, %arg1: memref<1x960x75xbf16, #tpu.memory_space<vmem>>, %arg2: memref<75x128xbf16, #tpu.memory_space<vmem>>, %arg3: memref<1x128xf32, #tpu.memory_space<vmem>>, %arg4: memref<2048x128xbf16, #tpu.memory_space<vmem>>, %arg5: memref<1x128xf32, #tpu.memory_space<vmem>>, %arg6: memref<4x36x192xf32, #tpu.memory_space<vmem>>, %arg7: memref<1x36x128xbf16, #tpu.memory_space<vmem>>, %arg8: memref<256x128xbf16, #tpu.memory_space<vmem>>, %arg9: memref<192x2048xbf16, #tpu.memory_space<vmem>>) attributes {dimension_semantics = [#tpu.dimension_semantics<parallel>], iteration_bounds = array<i64: 2>, scalar_prefetch = 0 : i64, scratch_operands = 2 : i64, tpu.core_type = #tpu.core_type<tc>, window_params = [{transform_indices = @transform_0, window_bounds = array<i64: 1, 960, 75>}, {pipeline_mode = #tpu.pipeline_mode<synchronous>, transform_indices = @transform_1, window_bounds = array<i64: 75, 128>}, {pipeline_mode = #tpu.pipeline_mode<synchronous>, transform_indices = @transform_2, window_bounds = array<i64: 1, 128>}, {pipeline_mode = #tpu.pipeline_mode<synchronous>, transform_indices = @transform_3, window_bounds = array<i64: 2048, 128>}, {pipeline_mode = #tpu.pipeline_mode<synchronous>, transform_indices = @transform_4, window_bounds = array<i64: 1, 128>}, {pipeline_mode = #tpu.pipeline_mode<synchronous>, transform_indices = @transform_5, window_bounds = array<i64: 4, 36, 192>}, {transform_indices = @transform_6, window_bounds = array<i64: 1, 36, 128>}]} {
    %c0 = arith.constant 0 : index
    %c0_0 = arith.constant 0 : index
    %c0_1 = arith.constant 0 : index
    %0 = vector.load %arg1[%c0, %c0_0, %c0_1] : memref<1x960x75xbf16, #tpu.memory_space<vmem>>, vector<1x960x75xbf16>
    %1 = vector.shape_cast %0 : vector<1x960x75xbf16> to vector<960x75xbf16>
    %c0_2 = arith.constant 0 : index
    %c0_3 = arith.constant 0 : index
    %2 = vector.load %arg2[%c0_2, %c0_3] : memref<75x128xbf16, #tpu.memory_space<vmem>>, vector<75x128xbf16>
    %cst = arith.constant dense<0.000000e+00> : vector<960x128xf32>
    %3 = tpu.matmul %1, %2, %cst {dimension_numbers = #tpu.dot_dimension_numbers<[1], [0], [0], [1], [0, 0, 1, 1], [], []>} : vector<960x75xbf16>, vector<75x128xbf16>, vector<960x128xf32> -> vector<960x128xf32>
    %4 = vector.shape_cast %3 : vector<960x128xf32> to vector<4x240x128xf32>
    %cst_4 = arith.constant dense<0xFF800000> : vector<240x128xf32>
    %5 = vector.multi_reduction <maximumf>, %4, %cst_4 [0] : vector<4x240x128xf32> to vector<240x128xf32>
    %c0_5 = arith.constant 0 : index
    %c0_6 = arith.constant 0 : index
    %6 = vector.load %arg3[%c0_5, %c0_6] : memref<1x128xf32, #tpu.memory_space<vmem>>, vector<1x128xf32>
    %7 = vector.broadcast %6 : vector<1x128xf32> to vector<240x128xf32>
    %8 = arith.addf %5, %7 : vector<240x128xf32>
    %cst_7 = arith.constant 0.000000e+00 : f32
    %9 = vector.broadcast %cst_7 : f32 to vector<240x128xf32>
    %10 = arith.maximumf %8, %9 : vector<240x128xf32>
    %11 = arith.truncf %10 : vector<240x128xf32> to vector<240x128xbf16>
    %c0_8 = arith.constant 0 : index
    %c0_9 = arith.constant 0 : index
    %12 = vector.load %arg8[%c0_8, %c0_9] : memref<256x128xbf16, #tpu.memory_space<vmem>>, vector<240x128xbf16>
    tpu.vector_store %arg8[%c0_8, %c0_9], %11 {strides = array<i32>} : memref<256x128xbf16, #tpu.memory_space<vmem>>, vector<240x128xbf16>,
    %cst_10 = arith.constant 0.000000e+00 : bf16
    %13 = vector.broadcast %cst_10 : bf16 to vector<16x128xbf16>
    %c240 = arith.constant 240 : index
    %c0_11 = arith.constant 0 : index
    %14 = vector.load %arg8[%c240, %c0_11] : memref<256x128xbf16, #tpu.memory_space<vmem>>, vector<16x128xbf16>
    tpu.vector_store %arg8[%c240, %c0_11], %13 {strides = array<i32>} : memref<256x128xbf16, #tpu.memory_space<vmem>>, vector<16x128xbf16>,
    %c0_12 = arith.constant 0 : index
    %c0_13 = arith.constant 0 : index
    %15 = vector.load %arg8[%c0_12, %c0_13] : memref<256x128xbf16, #tpu.memory_space<vmem>>, vector<192x128xbf16>
    %c0_14 = arith.constant 0 : index
    %c0_15 = arith.constant 0 : index
    %16 = vector.load %arg9[%c0_14, %c0_15] : memref<192x2048xbf16, #tpu.memory_space<vmem>>, vector<192x128xbf16>
    tpu.vector_store %arg9[%c0_14, %c0_15], %15 {strides = array<i32>} : memref<192x2048xbf16, #tpu.memory_space<vmem>>, vector<192x128xbf16>,
    %c1 = arith.constant 1 : index
    %c0_16 = arith.constant 0 : index
    %17 = vector.load %arg8[%c1, %c0_16] : memref<256x128xbf16, #tpu.memory_space<vmem>>, vector<192x128xbf16>
    %c0_17 = arith.constant 0 : index
    %c128 = arith.constant 128 : index
    %18 = vector.load %arg9[%c0_17, %c128] : memref<192x2048xbf16, #tpu.memory_space<vmem>>, vector<192x128xbf16>
    tpu.vector_store %arg9[%c0_17, %c128], %17 {strides = array<i32>} : memref<192x2048xbf16, #tpu.memory_space<vmem>>, vector<192x128xbf16>,
    %c2 = arith.constant 2 : index
    %c0_18 = arith.constant 0 : index
    %19 = vector.load %arg8[%c2, %c0_18] : memref<256x128xbf16, #tpu.memory_space<vmem>>, vector<192x128xbf16>
    %c0_19 = arith.constant 0 : index
    %c256 = arith.constant 256 : index
    %20 = vector.load %arg9[%c0_19, %c256] : memref<192x2048xbf16, #tpu.memory_space<vmem>>, vector<192x128xbf16>
    tpu.vector_store %arg9[%c0_19, %c256], %19 {strides = array<i32>} : memref<192x2048xbf16, #tpu.memory_space<vmem>>, vector<192x128xbf16>,
    %c3 = arith.constant 3 : index
    %c0_20 = arith.constant 0 : index
    %21 = vector.load %arg8[%c3, %c0_20] : memref<256x128xbf16, #tpu.memory_space<vmem>>, vector<192x128xbf16>
    %c0_21 = arith.constant 0 : index
    %c384 = arith.constant 384 : index
    %22 = vector.load %arg9[%c0_21, %c384] : memref<192x2048xbf16, #tpu.memory_space<vmem>>, vector<192x128xbf16>
    tpu.vector_store %arg9[%c0_21, %c384], %21 {strides = array<i32>} : memref<192x2048xbf16, #tpu.memory_space<vmem>>, vector<192x128xbf16>,
    %c16 = arith.constant 16 : index
    %c0_22 = arith.constant 0 : index
    %23 = vector.load %arg8[%c16, %c0_22] : memref<256x128xbf16, #tpu.memory_space<vmem>>, vector<192x128xbf16>
    %c0_23 = arith.constant 0 : index
    %c512 = arith.constant 512 : index
    %24 = vector.load %arg9[%c0_23, %c512] : memref<192x2048xbf16, #tpu.memory_space<vmem>>, vector<192x128xbf16>
    tpu.vector_store %arg9[%c0_23, %c512], %23 {strides = array<i32>} : memref<192x2048xbf16, #tpu.memory_space<vmem>>, vector<192x128xbf16>,
    %c17 = arith.constant 17 : index
    %c0_24 = arith.constant 0 : index
    %25 = vector.load %arg8[%c17, %c0_24] : memref<256x128xbf16, #tpu.memory_space<vmem>>, vector<192x128xbf16>
    %c0_25 = arith.constant 0 : index
    %c640 = arith.constant 640 : index
    %26 = vector.load %arg9[%c0_25, %c640] : memref<192x2048xbf16, #tpu.memory_space<vmem>>, vector<192x128xbf16>
    tpu.vector_store %arg9[%c0_25, %c640], %25 {strides = array<i32>} : memref<192x2048xbf16, #tpu.memory_space<vmem>>, vector<192x128xbf16>,
    %c18 = arith.constant 18 : index
    %c0_26 = arith.constant 0 : index
    %27 = vector.load %arg8[%c18, %c0_26] : memref<256x128xbf16, #tpu.memory_space<vmem>>, vector<192x128xbf16>
    %c0_27 = arith.constant 0 : index
    %c768 = arith.constant 768 : index
    %28 = vector.load %arg9[%c0_27, %c768] : memref<192x2048xbf16, #tpu.memory_space<vmem>>, vector<192x128xbf16>
    tpu.vector_store %arg9[%c0_27, %c768], %27 {strides = array<i32>} : memref<192x2048xbf16, #tpu.memory_space<vmem>>, vector<192x128xbf16>,
    %c19 = arith.constant 19 : index
    %c0_28 = arith.constant 0 : index
    %29 = vector.load %arg8[%c19, %c0_28] : memref<256x128xbf16, #tpu.memory_space<vmem>>, vector<192x128xbf16>
    %c0_29 = arith.constant 0 : index
    %c896 = arith.constant 896 : index
    %30 = vector.load %arg9[%c0_29, %c896] : memref<192x2048xbf16, #tpu.memory_space<vmem>>, vector<192x128xbf16>
    tpu.vector_store %arg9[%c0_29, %c896], %29 {strides = array<i32>} : memref<192x2048xbf16, #tpu.memory_space<vmem>>, vector<192x128xbf16>,
    %c32 = arith.constant 32 : index
    %c0_30 = arith.constant 0 : index
    %31 = vector.load %arg8[%c32, %c0_30] : memref<256x128xbf16, #tpu.memory_space<vmem>>, vector<192x128xbf16>
    %c0_31 = arith.constant 0 : index
    %c1024 = arith.constant 1024 : index
    %32 = vector.load %arg9[%c0_31, %c1024] : memref<192x2048xbf16, #tpu.memory_space<vmem>>, vector<192x128xbf16>
    tpu.vector_store %arg9[%c0_31, %c1024], %31 {strides = array<i32>} : memref<192x2048xbf16, #tpu.memory_space<vmem>>, vector<192x128xbf16>,
    %c33 = arith.constant 33 : index
    %c0_32 = arith.constant 0 : index
    %33 = vector.load %arg8[%c33, %c0_32] : memref<256x128xbf16, #tpu.memory_space<vmem>>, vector<192x128xbf16>
    %c0_33 = arith.constant 0 : index
    %c1152 = arith.constant 1152 : index
    %34 = vector.load %arg9[%c0_33, %c1152] : memref<192x2048xbf16, #tpu.memory_space<vmem>>, vector<192x128xbf16>
    tpu.vector_store %arg9[%c0_33, %c1152], %33 {strides = array<i32>} : memref<192x2048xbf16, #tpu.memory_space<vmem>>, vector<192x128xbf16>,
    %c34 = arith.constant 34 : index
    %c0_34 = arith.constant 0 : index
    %35 = vector.load %arg8[%c34, %c0_34] : memref<256x128xbf16, #tpu.memory_space<vmem>>, vector<192x128xbf16>
    %c0_35 = arith.constant 0 : index
    %c1280 = arith.constant 1280 : index
    %36 = vector.load %arg9[%c0_35, %c1280] : memref<192x2048xbf16, #tpu.memory_space<vmem>>, vector<192x128xbf16>
    tpu.vector_store %arg9[%c0_35, %c1280], %35 {strides = array<i32>} : memref<192x2048xbf16, #tpu.memory_space<vmem>>, vector<192x128xbf16>,
    %c35 = arith.constant 35 : index
    %c0_36 = arith.constant 0 : index
    %37 = vector.load %arg8[%c35, %c0_36] : memref<256x128xbf16, #tpu.memory_space<vmem>>, vector<192x128xbf16>
    %c0_37 = arith.constant 0 : index
    %c1408 = arith.constant 1408 : index
    %38 = vector.load %arg9[%c0_37, %c1408] : memref<192x2048xbf16, #tpu.memory_space<vmem>>, vector<192x128xbf16>
    tpu.vector_store %arg9[%c0_37, %c1408], %37 {strides = array<i32>} : memref<192x2048xbf16, #tpu.memory_space<vmem>>, vector<192x128xbf16>,
    %c48 = arith.constant 48 : index
    %c0_38 = arith.constant 0 : index
    %39 = vector.load %arg8[%c48, %c0_38] : memref<256x128xbf16, #tpu.memory_space<vmem>>, vector<192x128xbf16>
    %c0_39 = arith.constant 0 : index
    %c1536 = arith.constant 1536 : index
    %40 = vector.load %arg9[%c0_39, %c1536] : memref<192x2048xbf16, #tpu.memory_space<vmem>>, vector<192x128xbf16>
    tpu.vector_store %arg9[%c0_39, %c1536], %39 {strides = array<i32>} : memref<192x2048xbf16, #tpu.memory_space<vmem>>, vector<192x128xbf16>,
    %c49 = arith.constant 49 : index
    %c0_40 = arith.constant 0 : index
    %41 = vector.load %arg8[%c49, %c0_40] : memref<256x128xbf16, #tpu.memory_space<vmem>>, vector<192x128xbf16>
    %c0_41 = arith.constant 0 : index
    %c1664 = arith.constant 1664 : index
    %42 = vector.load %arg9[%c0_41, %c1664] : memref<192x2048xbf16, #tpu.memory_space<vmem>>, vector<192x128xbf16>
    tpu.vector_store %arg9[%c0_41, %c1664], %41 {strides = array<i32>} : memref<192x2048xbf16, #tpu.memory_space<vmem>>, vector<192x128xbf16>,
    %c50 = arith.constant 50 : index
    %c0_42 = arith.constant 0 : index
    %43 = vector.load %arg8[%c50, %c0_42] : memref<256x128xbf16, #tpu.memory_space<vmem>>, vector<192x128xbf16>
    %c0_43 = arith.constant 0 : index
    %c1792 = arith.constant 1792 : index
    %44 = vector.load %arg9[%c0_43, %c1792] : memref<192x2048xbf16, #tpu.memory_space<vmem>>, vector<192x128xbf16>
    tpu.vector_store %arg9[%c0_43, %c1792], %43 {strides = array<i32>} : memref<192x2048xbf16, #tpu.memory_space<vmem>>, vector<192x128xbf16>,
    %c51 = arith.constant 51 : index
    %c0_44 = arith.constant 0 : index
    %45 = vector.load %arg8[%c51, %c0_44] : memref<256x128xbf16, #tpu.memory_space<vmem>>, vector<192x128xbf16>
    %c0_45 = arith.constant 0 : index
    %c1920 = arith.constant 1920 : index
    %46 = vector.load %arg9[%c0_45, %c1920] : memref<192x2048xbf16, #tpu.memory_space<vmem>>, vector<192x128xbf16>
    tpu.vector_store %arg9[%c0_45, %c1920], %45 {strides = array<i32>} : memref<192x2048xbf16, #tpu.memory_space<vmem>>, vector<192x128xbf16>,
    %c0_46 = arith.constant 0 : index
    %c0_47 = arith.constant 0 : index
    %47 = vector.load %arg9[%c0_46, %c0_47] : memref<192x2048xbf16, #tpu.memory_space<vmem>>, vector<192x2048xbf16>
    %c0_48 = arith.constant 0 : index
    %c0_49 = arith.constant 0 : index
    %48 = vector.load %arg4[%c0_48, %c0_49] : memref<2048x128xbf16, #tpu.memory_space<vmem>>, vector<2048x128xbf16>
    %cst_50 = arith.constant dense<0.000000e+00> : vector<192x128xf32>
    %49 = tpu.matmul %47, %48, %cst_50 {dimension_numbers = #tpu.dot_dimension_numbers<[1], [0], [0], [1], [0, 0, 1, 1], [], []>} : vector<192x2048xbf16>, vector<2048x128xbf16>, vector<192x128xf32> -> vector<192x128xf32>
    %c0_51 = arith.constant 0 : index
    %c0_52 = arith.constant 0 : index
    %c0_53 = arith.constant 0 : index
    %50 = vector.load %arg6[%c0_51, %c0_52, %c0_53] : memref<4x36x192xf32, #tpu.memory_space<vmem>>, vector<1x36x192xf32>
    %51 = vector.shape_cast %50 : vector<1x36x192xf32> to vector<36x192xf32>
    %cst_54 = arith.constant dense<0.000000e+00> : vector<36x128xf32>
    %52 = tpu.matmul %51, %49, %cst_54 {dimension_numbers = #tpu.dot_dimension_numbers<[1], [0], [0], [1], [0, 0, 1, 1], [], []>} : vector<36x192xf32>, vector<192x128xf32>, vector<36x128xf32> -> vector<36x128xf32>
    %c1_55 = arith.constant 1 : index
    %c0_56 = arith.constant 0 : index
    %c0_57 = arith.constant 0 : index
    %53 = vector.load %arg6[%c1_55, %c0_56, %c0_57] : memref<4x36x192xf32, #tpu.memory_space<vmem>>, vector<1x36x192xf32>
    %54 = vector.shape_cast %53 : vector<1x36x192xf32> to vector<36x192xf32>
    %cst_58 = arith.constant dense<0.000000e+00> : vector<36x128xf32>
    %55 = tpu.matmul %54, %49, %cst_58 {dimension_numbers = #tpu.dot_dimension_numbers<[1], [0], [0], [1], [0, 0, 1, 1], [], []>} : vector<36x192xf32>, vector<192x128xf32>, vector<36x128xf32> -> vector<36x128xf32>
    %56 = arith.maximumf %52, %55 : vector<36x128xf32>
    %c2_59 = arith.constant 2 : index
    %c0_60 = arith.constant 0 : index
    %c0_61 = arith.constant 0 : index
    %57 = vector.load %arg6[%c2_59, %c0_60, %c0_61] : memref<4x36x192xf32, #tpu.memory_space<vmem>>, vector<1x36x192xf32>
    %58 = vector.shape_cast %57 : vector<1x36x192xf32> to vector<36x192xf32>
    %cst_62 = arith.constant dense<0.000000e+00> : vector<36x128xf32>
    %59 = tpu.matmul %58, %49, %cst_62 {dimension_numbers = #tpu.dot_dimension_numbers<[1], [0], [0], [1], [0, 0, 1, 1], [], []>} : vector<36x192xf32>, vector<192x128xf32>, vector<36x128xf32> -> vector<36x128xf32>
    %60 = arith.maximumf %56, %59 : vector<36x128xf32>
    %c3_63 = arith.constant 3 : index
    %c0_64 = arith.constant 0 : index
    %c0_65 = arith.constant 0 : index
    %61 = vector.load %arg6[%c3_63, %c0_64, %c0_65] : memref<4x36x192xf32, #tpu.memory_space<vmem>>, vector<1x36x192xf32>
    %62 = vector.shape_cast %61 : vector<1x36x192xf32> to vector<36x192xf32>
    %cst_66 = arith.constant dense<0.000000e+00> : vector<36x128xf32>
    %63 = tpu.matmul %62, %49, %cst_66 {dimension_numbers = #tpu.dot_dimension_numbers<[1], [0], [0], [1], [0, 0, 1, 1], [], []>} : vector<36x192xf32>, vector<192x128xf32>, vector<36x128xf32> -> vector<36x128xf32>
    %64 = arith.maximumf %60, %63 : vector<36x128xf32>
    %c0_67 = arith.constant 0 : index
    %c0_68 = arith.constant 0 : index
    %65 = vector.load %arg5[%c0_67, %c0_68] : memref<1x128xf32, #tpu.memory_space<vmem>>, vector<1x128xf32>
    %66 = vector.broadcast %65 : vector<1x128xf32> to vector<36x128xf32>
    %67 = arith.addf %64, %66 : vector<36x128xf32>
    %cst_69 = arith.constant 0.000000e+00 : f32
    %68 = vector.broadcast %cst_69 : f32 to vector<36x128xf32>
    %69 = arith.maximumf %67, %68 : vector<36x128xf32>
    %70 = arith.truncf %69 : vector<36x128xf32> to vector<36x128xbf16>
    %c0_70 = arith.constant 0 : index
    %c0_71 = arith.constant 0 : index
    %c0_72 = arith.constant 0 : index
    %71 = vector.load %arg7[%c0_70, %c0_71, %c0_72] : memref<1x36x128xbf16, #tpu.memory_space<vmem>>, vector<1x36x128xbf16>
    %72 = vector.shape_cast %71 : vector<1x36x128xbf16> to vector<36x128xbf16>
    %73 = vector.shape_cast %70 : vector<36x128xbf16> to vector<1x36x128xbf16>
    tpu.vector_store %arg7[%c0_70, %c0_71, %c0_72], %73 {strides = array<i32>} : memref<1x36x128xbf16, #tpu.memory_space<vmem>>, vector<1x36x128xbf16>,
    return
  }
  func.func @transform_0(%arg0: i32) -> (i32, i32, i32) {
    %c0_i32 = arith.constant 0 : i32
    %c0_i32_0 = arith.constant 0 : i32
    %c0_i32_1 = arith.constant 0 : i32
    return %arg0, %c0_i32, %c0_i32_0 : i32, i32, i32
  }
  func.func @transform_1(%arg0: i32) -> (i32, i32) {
    %c0_i32 = arith.constant 0 : i32
    %c0_i32_0 = arith.constant 0 : i32
    %c0_i32_1 = arith.constant 0 : i32
    return %c0_i32, %c0_i32_0 : i32, i32
  }
  func.func @transform_2(%arg0: i32) -> (i32, i32) {
    %c0_i32 = arith.constant 0 : i32
    %c0_i32_0 = arith.constant 0 : i32
    %c0_i32_1 = arith.constant 0 : i32
    return %c0_i32, %c0_i32_0 : i32, i32
  }
  func.func @transform_3(%arg0: i32) -> (i32, i32) {
    %c0_i32 = arith.constant 0 : i32
    %c0_i32_0 = arith.constant 0 : i32
    %c0_i32_1 = arith.constant 0 : i32
    return %c0_i32, %c0_i32_0 : i32, i32
  }
  func.func @transform_4(%arg0: i32) -> (i32, i32) {
    %c0_i32 = arith.constant 0 : i32
    %c0_i32_0 = arith.constant 0 : i32
    %c0_i32_1 = arith.constant 0 : i32
    return %c0_i32, %c0_i32_0 : i32, i32
  }
  func.func @transform_5(%arg0: i32) -> (i32, i32, i32) {
    %c0_i32 = arith.constant 0 : i32
    %c0_i32_0 = arith.constant 0 : i32
    %c0_i32_1 = arith.constant 0 : i32
    %c0_i32_2 = arith.constant 0 : i32
    return %c0_i32, %c0_i32_0, %c0_i32_1 : i32, i32, i32
  }
  func.func @transform_6(%arg0: i32) -> (i32, i32, i32) {
    %c0_i32 = arith.constant 0 : i32
    %c0_i32_0 = arith.constant 0 : i32
    %c0_i32_1 = arith.constant 0 : i32
    return %arg0, %c0_i32, %c0_i32_0 : i32, i32, i32
  }
}

module attributes {stable_mosaic.version = 11 : i64} {
  func.func @_fc_head_kernel(%arg0: i32, %arg1: memref<2x4608xbf16, #tpu.memory_space<vmem>>, %arg2: memref<4608x200xbf16, #tpu.memory_space<vmem>>, %arg3: memref<1x200xf32, #tpu.memory_space<vmem>>, %arg4: memref<200x2xbf16, #tpu.memory_space<vmem>>, %arg5: memref<1x2xf32, #tpu.memory_space<vmem>>, %arg6: memref<2x2xf32, #tpu.memory_space<vmem>>) attributes {dimension_semantics = [#tpu.dimension_semantics<arbitrary>], iteration_bounds = array<i64: 1>, scalar_prefetch = 0 : i64, scratch_operands = 0 : i64, tpu.core_type = #tpu.core_type<tc>, window_params = [{pipeline_mode = #tpu.pipeline_mode<synchronous>, transform_indices = @transform_0, window_bounds = array<i64: 2, 4608>}, {pipeline_mode = #tpu.pipeline_mode<synchronous>, transform_indices = @transform_1, window_bounds = array<i64: 4608, 200>}, {pipeline_mode = #tpu.pipeline_mode<synchronous>, transform_indices = @transform_2, window_bounds = array<i64: 1, 200>}, {pipeline_mode = #tpu.pipeline_mode<synchronous>, transform_indices = @transform_3, window_bounds = array<i64: 200, 2>}, {pipeline_mode = #tpu.pipeline_mode<synchronous>, transform_indices = @transform_4, window_bounds = array<i64: 1, 2>}, {pipeline_mode = #tpu.pipeline_mode<synchronous>, transform_indices = @transform_5, window_bounds = array<i64: 2, 2>}]} {
    %c0 = arith.constant 0 : index
    %c0_0 = arith.constant 0 : index
    %0 = vector.load %arg1[%c0, %c0_0] : memref<2x4608xbf16, #tpu.memory_space<vmem>>, vector<2x4608xbf16>
    %c0_1 = arith.constant 0 : index
    %c0_2 = arith.constant 0 : index
    %1 = vector.load %arg2[%c0_1, %c0_2] : memref<4608x200xbf16, #tpu.memory_space<vmem>>, vector<4608x200xbf16>
    %cst = arith.constant dense<0.000000e+00> : vector<2x200xf32>
    %2 = tpu.matmul %0, %1, %cst {dimension_numbers = #tpu.dot_dimension_numbers<[1], [0], [0], [1], [0, 0, 1, 1], [], []>} : vector<2x4608xbf16>, vector<4608x200xbf16>, vector<2x200xf32> -> vector<2x200xf32>
    %c0_3 = arith.constant 0 : index
    %c0_4 = arith.constant 0 : index
    %3 = vector.load %arg3[%c0_3, %c0_4] : memref<1x200xf32, #tpu.memory_space<vmem>>, vector<1x200xf32>
    %4 = vector.broadcast %3 : vector<1x200xf32> to vector<2x200xf32>
    %5 = arith.addf %2, %4 : vector<2x200xf32>
    %cst_5 = arith.constant 0.000000e+00 : f32
    %6 = vector.broadcast %cst_5 : f32 to vector<2x200xf32>
    %7 = arith.maximumf %5, %6 : vector<2x200xf32>
    %8 = arith.truncf %7 : vector<2x200xf32> to vector<2x200xbf16>
    %c0_6 = arith.constant 0 : index
    %c0_7 = arith.constant 0 : index
    %9 = vector.load %arg4[%c0_6, %c0_7] : memref<200x2xbf16, #tpu.memory_space<vmem>>, vector<200x2xbf16>
    %cst_8 = arith.constant dense<0.000000e+00> : vector<2x2xf32>
    %10 = tpu.matmul %8, %9, %cst_8 {dimension_numbers = #tpu.dot_dimension_numbers<[1], [0], [0], [1], [0, 0, 1, 1], [], []>} : vector<2x200xbf16>, vector<200x2xbf16>, vector<2x2xf32> -> vector<2x2xf32>
    %c0_9 = arith.constant 0 : index
    %c0_10 = arith.constant 0 : index
    %11 = vector.load %arg5[%c0_9, %c0_10] : memref<1x2xf32, #tpu.memory_space<vmem>>, vector<1x2xf32>
    %12 = vector.broadcast %11 : vector<1x2xf32> to vector<2x2xf32>
    %13 = arith.addf %10, %12 : vector<2x2xf32>
    %cst_11 = arith.constant dense<0xFF800000> : vector<2xf32>
    %14 = vector.multi_reduction <maximumf>, %13, %cst_11 [1] : vector<2x2xf32> to vector<2xf32>
    %15 = vector.shape_cast %14 : vector<2xf32> to vector<2x1xf32>
    %16 = vector.broadcast %15 : vector<2x1xf32> to vector<2x2xf32>
    %17 = arith.subf %13, %16 : vector<2x2xf32>
    %18 = math.exp %17 : vector<2x2xf32>
    %cst_12 = arith.constant dense<0.000000e+00> : vector<2xf32>
    %19 = vector.multi_reduction <add>, %18, %cst_12 [1] : vector<2x2xf32> to vector<2xf32>
    %20 = vector.shape_cast %19 : vector<2xf32> to vector<2x1xf32>
    %21 = math.log %20 : vector<2x1xf32>
    %22 = vector.broadcast %21 : vector<2x1xf32> to vector<2x2xf32>
    %23 = arith.subf %17, %22 : vector<2x2xf32>
    %c0_13 = arith.constant 0 : index
    %c0_14 = arith.constant 0 : index
    %24 = vector.load %arg6[%c0_13, %c0_14] : memref<2x2xf32, #tpu.memory_space<vmem>>, vector<2x2xf32>
    tpu.vector_store %arg6[%c0_13, %c0_14], %23 {strides = array<i32>} : memref<2x2xf32, #tpu.memory_space<vmem>>, vector<2x2xf32>,
    return
  }
  func.func @transform_0(%arg0: i32) -> (i32, i32) {
    %c0_i32 = arith.constant 0 : i32
    %c0_i32_0 = arith.constant 0 : i32
    %c0_i32_1 = arith.constant 0 : i32
    return %c0_i32, %c0_i32_0 : i32, i32
  }
  func.func @transform_1(%arg0: i32) -> (i32, i32) {
    %c0_i32 = arith.constant 0 : i32
    %c0_i32_0 = arith.constant 0 : i32
    %c0_i32_1 = arith.constant 0 : i32
    return %c0_i32, %c0_i32_0 : i32, i32
  }
  func.func @transform_2(%arg0: i32) -> (i32, i32) {
    %c0_i32 = arith.constant 0 : i32
    %c0_i32_0 = arith.constant 0 : i32
    %c0_i32_1 = arith.constant 0 : i32
    return %c0_i32, %c0_i32_0 : i32, i32
  }
  func.func @transform_3(%arg0: i32) -> (i32, i32) {
    %c0_i32 = arith.constant 0 : i32
    %c0_i32_0 = arith.constant 0 : i32
    %c0_i32_1 = arith.constant 0 : i32
    return %c0_i32, %c0_i32_0 : i32, i32
  }
  func.func @transform_4(%arg0: i32) -> (i32, i32) {
    %c0_i32 = arith.constant 0 : i32
    %c0_i32_0 = arith.constant 0 : i32
    %c0_i32_1 = arith.constant 0 : i32
    return %c0_i32, %c0_i32_0 : i32, i32
  }
  func.func @transform_5(%arg0: i32) -> (i32, i32) {
    %c0_i32 = arith.constant 0 : i32
    %c0_i32_0 = arith.constant 0 : i32
    %c0_i32_1 = arith.constant 0 : i32
    return %c0_i32, %c0_i32_0 : i32, i32
  }
}

</mosaic_0001>

<llo_original>
// kernel: cnn_forward.2
$region0: #{cnn_forward.2}
  #allocation0 [shape = 'u32[]', space=smem, size = 0x4, offset = 0x4, fixed_abs, tag = 'smem constant byte address 0x4 - core index']
  #allocation1 [shape = 'u32[144,128]{1,0:T(1,128)}', space=vmem, size = 0x12000, scoped, tag = 'internal scratch']
  #allocation2 [shape = 'bf16[256,128]{1,0:T(16,128)(2,1)}', space=vmem, size = 0x10000, scoped, tag = 'scratch operand']
  #allocation3 [shape = 'bf16[192,2048]{1,0:T(16,128)(2,1)}', space=vmem, size = 0xc0000, scoped, tag = 'scratch operand']
  %s0 = inlined_call_operand.vmem [shape: bf16[2,960,75], index: 0, kind: input, shape index: {}]
  %s1 = inlined_call_operand.vmem [shape: bf16[75,128], index: 1, kind: input, shape index: {}]
  %s2 = inlined_call_operand.vmem [shape: f32[1,128], index: 2, kind: input, shape index: {}]
  %s3 = inlined_call_operand.vmem [shape: bf16[2048,128], index: 3, kind: input, shape index: {}]
  %s4 = inlined_call_operand.vmem [shape: f32[1,128], index: 4, kind: input, shape index: {}]
  %s5 = inlined_call_operand.vmem [shape: f32[4,36,192], index: 5, kind: input, shape index: {}]
  %s6 = inlined_call_operand.vmem [shape: bf16[2,36,128], index: 6, kind: output, shape index: {}]
  %s7 = sld [smem:[#allocation0]]
  $region57: #{cnn_forward.2} parent=0
    _
  %s9 = ssub.s32 1, %s7
  %s10 = scalar_select 0, %s9, %s7
  loop: start=0, step=1, limit=4
  $region2: #{cnn_forward.2} parent=0 // loop_pre_header
    _
  $region3: #{cnn_forward.2} parent=0 // loop_header
    %s12 = sphi 0, %s16
    %p13 = scmp.ge.s32.totalorder %s12, 4
    %s22 = sphi 0, %s24
    %s25 = sphi 0, %s22
    %s26 = sphi 0, %s25
    %s42 = sphi 0, %s26
    %s46 = sphi 0, %s46
    %s48 = sphi 0, %s46
    %s49 = sphi 0, %s48
    %s63 = sphi 0, %s49
    %s67 = sphi 0, %s67
    %s69 = sphi 0, %s67
    %s70 = sphi 0, %s69
    %s84 = sphi 0, %s70
    %s88 = sphi 0, %s88
    %s90 = sphi 0, %s88
    %s91 = sphi 0, %s90
    %s105 = sphi 0, %s91
    %s109 = sphi 0, %s109
    %s111 = sphi 0, %s109
    %s112 = sphi 0, %s111
    %s126 = sphi 0, %s112
    %s130 = sphi 0, %s130
    %s132 = sphi 0, %s130
    %s133 = sphi 0, %s132
    %s147 = sphi 0, %s133
    %s153 = sphi 0, %s155
    %s156 = sphi 0, %s153
    %s157 = sphi 0, %s156
    %s173 = sphi 0, %s157
  $region4: #{cnn_forward.2} parent=0 // loop_header_branch
    %15 = sbr.rel (%p13) target = $region8
  $region5: #{cnn_forward.2} parent=0 // loop_body
    %s17 = ssub.s32 %s12, 1
    %s18 = ssub.s32 %s12, 2
    %s19 = sadd.s32 %s12, 1
    %s20 = ssub.s32 %s12, %s19
    %p21 = scmp.eq.s32.totalorder %s20, 0
    %s23 = sadd.s32 %s22, 1
    %s24 = scalar_select %p21, %s22, %s23
    %p27 = pneg %p21
    %p28 = scmp.eq.s32.totalorder %s12, 1
    %p29 = por %p27, %p28
    %p30 = scmp.ne.s32.totalorder %s22, %s25
    %p31 = scmp.eq.s32.totalorder %s12, 0
    %p32 = por %p30, %p31
    %p33 = scmp.ne.s32.totalorder %s22, %s25
    %p34 = scmp.eq.s32.totalorder %s17, 1
    %p35 = por %p33, %p34
    %p36 = scmp.ne.s32.totalorder %s25, %s26
    %p37 = scmp.eq.s32.totalorder %s17, 0
    %p38 = por %p36, %p37
    %p39 = scmp.ne.s32.totalorder %s25, %s26
    %p40 = scmp.eq.s32.totalorder %s18, 1
    %p41 = por %p39, %p40
    %p43 = scmp.ne.s32.totalorder %s26, %s42
    %p44 = scmp.eq.s32.totalorder %s18, 0
    %p45 = por %p43, %p44
    %s47 = sadd.s32 %s46, 1
    %p50 = scmp.eq.s32.totalorder %s12, 1
    %p51 = scmp.ne.s32.totalorder %s46, %s48
    %p52 = scmp.eq.s32.totalorder %s12, 0
    %p53 = por %p51, %p52
    %p54 = scmp.ne.s32.totalorder %s46, %s48
    %p55 = scmp.eq.s32.totalorder %s17, 1
    %p56 = por %p54, %p55
    %p57 = scmp.ne.s32.totalorder %s48, %s49
    %p58 = scmp.eq.s32.totalorder %s17, 0
    %p59 = por %p57, %p58
    %p60 = scmp.ne.s32.totalorder %s48, %s49
    %p61 = scmp.eq.s32.totalorder %s18, 1
    %p62 = por %p60, %p61
    %p64 = scmp.ne.s32.totalorder %s49, %s63
    %p65 = scmp.eq.s32.totalorder %s18, 0
    %p66 = por %p64, %p65
    %s68 = sadd.s32 %s67, 1
    %p71 = scmp.eq.s32.totalorder %s12, 1
    %p72 = scmp.ne.s32.totalorder %s67, %s69
    %p73 = scmp.eq.s32.totalorder %s12, 0
    %p74 = por %p72, %p73
    %p75 = scmp.ne.s32.totalorder %s67, %s69
    %p76 = scmp.eq.s32.totalorder %s17, 1
    %p77 = por %p75, %p76
    %p78 = scmp.ne.s32.totalorder %s69, %s70
    %p79 = scmp.eq.s32.totalorder %s17, 0
    %p80 = por %p78, %p79
    %p81 = scmp.ne.s32.totalorder %s69, %s70
    %p82 = scmp.eq.s32.totalorder %s18, 1
    %p83 = por %p81, %p82
    %p85 = scmp.ne.s32.totalorder %s70, %s84
    %p86 = scmp.eq.s32.totalorder %s18, 0
    %p87 = por %p85, %p86
    %s89 = sadd.s32 %s88, 1
    %p92 = scmp.eq.s32.totalorder %s12, 1
    %p93 = scmp.ne.s32.totalorder %s88, %s90
    %p94 = scmp.eq.s32.totalorder %s12, 0
    %p95 = por %p93, %p94
    %p96 = scmp.ne.s32.totalorder %s88, %s90
    %p97 = scmp.eq.s32.totalorder %s17, 1
    %p98 = por %p96, %p97
    %p99 = scmp.ne.s32.totalorder %s90, %s91
    %p100 = scmp.eq.s32.totalorder %s17, 0
    %p101 = por %p99, %p100
    %p102 = scmp.ne.s32.totalorder %s90, %s91
    %p103 = scmp.eq.s32.totalorder %s18, 1
    %p104 = por %p102, %p103
    %p106 = scmp.ne.s32.totalorder %s91, %s105
    %p107 = scmp.eq.s32.totalorder %s18, 0
    %p108 = por %p106, %p107
    %s110 = sadd.s32 %s109, 1
    %p113 = scmp.eq.s32.totalorder %s12, 1
    %p114 = scmp.ne.s32.totalorder %s109, %s111
    %p115 = scmp.eq.s32.totalorder %s12, 0
    %p116 = por %p114, %p115
    %p117 = scmp.ne.s32.totalorder %s109, %s111
    %p118 = scmp.eq.s32.totalorder %s17, 1
    %p119 = por %p117, %p118
    %p120 = scmp.ne.s32.totalorder %s111, %s112
    %p121 = scmp.eq.s32.totalorder %s17, 0
    %p122 = por %p120, %p121
    %p123 = scmp.ne.s32.totalorder %s111, %s112
    %p124 = scmp.eq.s32.totalorder %s18, 1
    %p125 = por %p123, %p124
    %p127 = scmp.ne.s32.totalorder %s112, %s126
    %p128 = scmp.eq.s32.totalorder %s18, 0
    %p129 = por %p127, %p128
    %s131 = sadd.s32 %s130, 1
    %p134 = scmp.eq.s32.totalorder %s12, 1
    %p135 = scmp.ne.s32.totalorder %s130, %s132
    %p136 = scmp.eq.s32.totalorder %s12, 0
    %p137 = por %p135, %p136
    %p138 = scmp.ne.s32.totalorder %s130, %s132
    %p139 = scmp.eq.s32.totalorder %s17, 1
    %p140 = por %p138, %p139
    %p141 = scmp.ne.s32.totalorder %s132, %s133
    %p142 = scmp.eq.s32.totalorder %s17, 0
    %p143 = por %p141, %p142
    %p144 = scmp.ne.s32.totalorder %s132, %s133
    %p145 = scmp.eq.s32.totalorder %s18, 1
    %p146 = por %p144, %p145
    %p148 = scmp.ne.s32.totalorder %s133, %s147
    %p149 = scmp.eq.s32.totalorder %s18, 0
    %p150 = por %p148, %p149
    %s151 = ssub.s32 %s12, %s19
    %p152 = scmp.eq.s32.totalorder %s151, 0
    %s154 = sadd.s32 %s153, 1
    %s155 = scalar_select %p152, %s153, %s154
    %p158 = pneg %p152
    %p159 = scmp.eq.s32.totalorder %s12, 1
    %p160 = por %p158, %p159
    %p161 = scmp.ne.s32.totalorder %s153, %s156
    %p162 = scmp.eq.s32.totalorder %s12, 0
    %p163 = por %p161, %p162
    %p164 = scmp.ne.s32.totalorder %s153, %s156
    %p165 = scmp.eq.s32.totalorder %s17, 1
    %p166 = por %p164, %p165
    %p167 = scmp.ne.s32.totalorder %s156, %s157
    %p168 = scmp.eq.s32.totalorder %s17, 0
    %p169 = por %p167, %p168
    %p170 = scmp.ne.s32.totalorder %s156, %s157
    %p171 = scmp.eq.s32.totalorder %s18, 1
    %p172 = por %p170, %p171
    %p174 = scmp.ne.s32.totalorder %s157, %s173
    %p175 = scmp.eq.s32.totalorder %s18, 0
    %p176 = por %p174, %p175
    %p177 = scmp.le.s32.totalorder 1, %s12
    %p178 = scmp.lt.s32.totalorder %s12, 3
    %p179 = pnand %p177, %p178
    %p180 = pneg %p179
    // Predicated region
    $region9: #{cnn_forward.2} parent=5 // pred_check
      _
    $region10: #{cnn_forward.2} parent=5 // pred_check_branch
      %182 = sbr.rel (%p179) target = $region12
    $region11: #{cnn_forward.2} parent=5 // pred_region
      %s183 = ssub.s32 %s12, 1
      // Predicated region
      $region13: #{cnn_forward.2} parent=11 // pred_check
        %p184 = pneg %p59
      $region14: #{cnn_forward.2} parent=11 // pred_check_branch
        %186 = sbr.rel (%p184) target = $region16
      $region15: #{cnn_forward.2} parent=11 // pred_region
        _
      $region16: #{cnn_forward.2} parent=11 // pred_fallthru
        _
      // Predicated region
      $region17: #{cnn_forward.2} parent=11 // pred_check
        %p187 = pneg %p80
      $region18: #{cnn_forward.2} parent=11 // pred_check_branch
        %189 = sbr.rel (%p187) target = $region20
      $region19: #{cnn_forward.2} parent=11 // pred_region
        _
      $region20: #{cnn_forward.2} parent=11 // pred_fallthru
        _
      // Predicated region
      $region21: #{cnn_forward.2} parent=11 // pred_check
        %p190 = pneg %p101
      $region22: #{cnn_forward.2} parent=11 // pred_check_branch
        %192 = sbr.rel (%p190) target = $region24
      $region23: #{cnn_forward.2} parent=11 // pred_region
        _
      $region24: #{cnn_forward.2} parent=11 // pred_fallthru
        _
      // Predicated region
      $region25: #{cnn_forward.2} parent=11 // pred_check
        %p193 = pneg %p122
      $region26: #{cnn_forward.2} parent=11 // pred_check_branch
        %195 = sbr.rel (%p193) target = $region28
      $region27: #{cnn_forward.2} parent=11 // pred_region
        _
      $region28: #{cnn_forward.2} parent=11 // pred_fallthru
        _
      // Predicated region
      $region29: #{cnn_forward.2} parent=11 // pred_check
        %p196 = pneg %p143
      $region30: #{cnn_forward.2} parent=11 // pred_check_branch
        %198 = sbr.rel (%p196) target = $region32
      $region31: #{cnn_forward.2} parent=11 // pred_region
        _
      $region32: #{cnn_forward.2} parent=11 // pred_fallthru
        _
    $region12: #{cnn_forward.2} parent=5 // pred_fallthru
      _
    %p199 = scmp.lt.s32.totalorder %s12, 2
    // Predicated region
    $region33: #{cnn_forward.2} parent=5 // pred_check
      %p200 = pneg %p199
    $region34: #{cnn_forward.2} parent=5 // pred_check_branch
      %202 = sbr.rel (%p200) target = $region36
    $region35: #{cnn_forward.2} parent=5 // pred_region
      // Predicated region
      $region37: #{cnn_forward.2} parent=35 // pred_check
        %p203 = pneg %p32
      $region38: #{cnn_forward.2} parent=35 // pred_check_branch
        %205 = sbr.rel (%p203) target = $region40
      $region39: #{cnn_forward.2} parent=35 // pred_region
        %p206 = scmp.lt.s32.totalorder %s12, 1
        %s207 = scalar_select %p206, %s12, 1
        %s208 = smul.addr %s207, 120
        %s209 = smul.addr %s208, 4
        %s210 = scalar_lea.vmem %s0, %s209
      $region40: #{cnn_forward.2} parent=35 // pred_fallthru
        _
    $region36: #{cnn_forward.2} parent=5 // pred_fallthru
      _
    %p211 = scmp.le.s32.totalorder 1, %s12
    %p212 = scmp.lt.s32.totalorder %s12, 3
    %p213 = pnand %p211, %p212
    %p214 = pneg %p213
    // Predicated region
    $region41: #{cnn_forward.2} parent=5 // pred_check
      _
    $region42: #{cnn_forward.2} parent=5 // pred_check_branch
      %216 = sbr.rel (%p213) target = $region44
    $region43: #{cnn_forward.2} parent=5 // pred_region
      %s217 = ssub.s32 %s12, 1
      %p218 = scmp.lt.s32.totalorder %s17, 1
      %s219 = scalar_select %p218, %s17, 1
      %s220 = smul.addr %s219, 120
      %s221 = smul.addr %s220, 4
      %s222 = scalar_lea.vmem %s0, %s221
      %p223 = pneg %p38
      %p224 = pneg %p35
      %p225 = pneg %p59
      %p226 = pneg %p56
      %p227 = pneg %p80
      %p228 = pneg %p77
      %p229 = pneg %p101
      %p230 = pneg %p98
      %p231 = pneg %p122
      %p232 = pneg %p119
      %p233 = pneg %p143
      %p234 = pneg %p140
      %p235 = pneg %p169
      %p236 = pneg %p166
      %p237 = scmp.lt.s32.totalorder %s17, 1
      %s238 = scalar_select %p237, %s17, 1
      %s239 = smul.addr %s238, 5
      %s240 = smul.addr %s239, 4
      %s241 = scalar_lea.vmem %s6, %s240
      %p242 = scmp.lt.s32.totalorder %s17, 1
      %s243 = scalar_select %p242, %s17, 1
      %s244 = smul.addr %s243, 120
      %s245 = smul.addr %s244, 4
      %s246 = scalar_lea.vmem %s0, %s245
      %p247 = scmp.lt.s32.totalorder %s17, 1
      %s248 = scalar_select %p247, %s17, 1
      %s249 = smul.addr %s248, 5
      %s250 = smul.addr %s249, 4
      %s251 = scalar_lea.vmem %s6, %s250
      %v253 = vld [vmem:[%s246] sm:$0xf]
      %v254 = vld [vmem:[%s246 + $0x4] sm:$0xf]
      %v255 = vld [vmem:[%s246 + $0x8] sm:$0xf]
      %v256 = vld [vmem:[%s246 + $0xc] sm:$0xf]
      %v257 = vld [vmem:[%s246 + $0x10] sm:$0xf]
      %v258 = vld [vmem:[%s246 + $0x14] sm:$0xf]
      %v259 = vld [vmem:[%s246 + $0x18] sm:$0xf]
      %v260 = vld [vmem:[%s246 + $0x1c] sm:$0xf]
      %v261 = vld [vmem:[%s246 + $0x20] sm:$0xf]
      %v262 = vld [vmem:[%s246 + $0x24] sm:$0xf]
      %v263 = vld [vmem:[%s246 + $0x28] sm:$0xf]
      %v264 = vld [vmem:[%s246 + $0x2c] sm:$0xf]
      %v265 = vld [vmem:[%s246 + $0x30] sm:$0xf]
      %v266 = vld [vmem:[%s246 + $0x34] sm:$0xf]
      %v267 = vld [vmem:[%s246 + $0x38] sm:$0xf]
      %v268 = vld [vmem:[%s246 + $0x3c] sm:$0xf]
      %v269 = vld [vmem:[%s246 + $0x40] sm:$0xf]
      %v270 = vld [vmem:[%s246 + $0x44] sm:$0xf]
      %v271 = vld [vmem:[%s246 + $0x48] sm:$0xf]
      %v272 = vld [vmem:[%s246 + $0x4c] sm:$0xf]
      %v273 = vld [vmem:[%s246 + $0x50] sm:$0xf]
      %v274 = vld [vmem:[%s246 + $0x54] sm:$0xf]
      %v275 = vld [vmem:[%s246 + $0x58] sm:$0xf]
      %v276 = vld [vmem:[%s246 + $0x5c] sm:$0xf]
      %v277 = vld [vmem:[%s246 + $0x60] sm:$0xf]
      %v278 = vld [vmem:[%s246 + $0x64] sm:$0xf]
      %v279 = vld [vmem:[%s246 + $0x68] sm:$0xf]
      %v280 = vld [vmem:[%s246 + $0x6c] sm:$0xf]
      %v281 = vld [vmem:[%s246 + $0x70] sm:$0xf]
      %v282 = vld [vmem:[%s246 + $0x74] sm:$0xf]
      %v283 = vld [vmem:[%s246 + $0x78] sm:$0xf]
      %v284 = vld [vmem:[%s246 + $0x7c] sm:$0xf]
      %v285 = vld [vmem:[%s246 + $0x80] sm:$0xf]
      %v286 = vld [vmem:[%s246 + $0x84] sm:$0xf]
      %v287 = vld [vmem:[%s246 + $0x88] sm:$0xf]
      %v288 = vld [vmem:[%s246 + $0x8c] sm:$0xf]
      %v289 = vld [vmem:[%s246 + $0x90] sm:$0xf]
      %v290 = vld [vmem:[%s246 + $0x94] sm:$0xf]
      %v291 = vld [vmem:[%s246 + $0x98] sm:$0xf]
      %v292 = vld [vmem:[%s246 + $0x9c] sm:$0xf]
      %v293 = vld [vmem:[%s246 + $0xa0] sm:$0xf]
      %v294 = vld [vmem:[%s246 + $0xa4] sm:$0xf]
      %v295 = vld [vmem:[%s246 + $0xa8] sm:$0xf]
      %v296 = vld [vmem:[%s246 + $0xac] sm:$0xf]
      %v297 = vld [vmem:[%s246 + $0xb0] sm:$0xf]
      %v298 = vld [vmem:[%s246 + $0xb4] sm:$0xf]
      %v299 = vld [vmem:[%s246 + $0xb8] sm:$0xf]
      %v300 = vld [vmem:[%s246 + $0xbc] sm:$0xf]
      %v301 = vld [vmem:[%s246 + $0xc0] sm:$0xf]
      %v302 = vld [vmem:[%s246 + $0xc4] sm:$0xf]
      %v303 = vld [vmem:[%s246 + $0xc8] sm:$0xf]
      %v304 = vld [vmem:[%s246 + $0xcc] sm:$0xf]
      %v305 = vld [vmem:[%s246 + $0xd0] sm:$0xf]
      %v306 = vld [vmem:[%s246 + $0xd4] sm:$0xf]
      %v307 = vld [vmem:[%s246 + $0xd8] sm:$0xf]
      %v308 = vld [vmem:[%s246 + $0xdc] sm:$0xf]
      %v309 = vld [vmem:[%s246 + $0xe0] sm:$0xf]
      %v310 = vld [vmem:[%s246 + $0xe4] sm:$0xf]
      %v311 = vld [vmem:[%s246 + $0xe8] sm:$0xf]
      %v312 = vld [vmem:[%s246 + $0xec] sm:$0xf]
      %v313 = vld [vmem:[%s246 + $0xf0] sm:$0xf]
      %v314 = vld [vmem:[%s246 + $0xf4] sm:$0xf]
      %v315 = vld [vmem:[%s246 + $0xf8] sm:$0xf]
      %v316 = vld [vmem:[%s246 + $0xfc] sm:$0xf]
      %v317 = vld [vmem:[%s246 + $0x100] sm:$0xf]
      %v318 = vld [vmem:[%s246 + $0x104] sm:$0xf]
      %v319 = vld [vmem:[%s246 + $0x108] sm:$0xf]
      %v320 = vld [vmem:[%s246 + $0x10c] sm:$0xf]
      %v321 = vld [vmem:[%s246 + $0x110] sm:$0xf]
      %v322 = vld [vmem:[%s246 + $0x114] sm:$0xf]
      %v323 = vld [vmem:[%s246 + $0x118] sm:$0xf]
      %v324 = vld [vmem:[%s246 + $0x11c] sm:$0xf]
      %v325 = vld [vmem:[%s246 + $0x120] sm:$0xf]
      %v326 = vld [vmem:[%s246 + $0x124] sm:$0xf]
      %v327 = vld [vmem:[%s246 + $0x128] sm:$0xf]
      %v328 = vld [vmem:[%s246 + $0x12c] sm:$0xf]
      %v329 = vld [vmem:[%s246 + $0x130] sm:$0xf]
      %v330 = vld [vmem:[%s246 + $0x134] sm:$0xf]
      %v331 = vld [vmem:[%s246 + $0x138] sm:$0xf]
      %v332 = vld [vmem:[%s246 + $0x13c] sm:$0xf]
      %v333 = vld [vmem:[%s246 + $0x140] sm:$0xf]
      %v334 = vld [vmem:[%s246 + $0x144] sm:$0xf]
      %v335 = vld [vmem:[%s246 + $0x148] sm:$0xf]
      %v336 = vld [vmem:[%s246 + $0x14c] sm:$0xf]
      %v337 = vld [vmem:[%s246 + $0x150] sm:$0xf]
      %v338 = vld [vmem:[%s246 + $0x154] sm:$0xf]
      %v339 = vld [vmem:[%s246 + $0x158] sm:$0xf]
      %v340 = vld [vmem:[%s246 + $0x15c] sm:$0xf]
      %v341 = vld [vmem:[%s246 + $0x160] sm:$0xf]
      %v342 = vld [vmem:[%s246 + $0x164] sm:$0xf]
      %v343 = vld [vmem:[%s246 + $0x168] sm:$0xf]
      %v344 = vld [vmem:[%s246 + $0x16c] sm:$0xf]
      %v345 = vld [vmem:[%s246 + $0x170] sm:$0xf]
      %v346 = vld [vmem:[%s246 + $0x174] sm:$0xf]
      %v347 = vld [vmem:[%s246 + $0x178] sm:$0xf]
      %v348 = vld [vmem:[%s246 + $0x17c] sm:$0xf]
      %v349 = vld [vmem:[%s246 + $0x180] sm:$0xf]
      %v350 = vld [vmem:[%s246 + $0x184] sm:$0xf]
      %v351 = vld [vmem:[%s246 + $0x188] sm:$0xf]
      %v352 = vld [vmem:[%s246 + $0x18c] sm:$0xf]
      %v353 = vld [vmem:[%s246 + $0x190] sm:$0xf]
      %v354 = vld [vmem:[%s246 + $0x194] sm:$0xf]
      %v355 = vld [vmem:[%s246 + $0x198] sm:$0xf]
      %v356 = vld [vmem:[%s246 + $0x19c] sm:$0xf]
      %v357 = vld [vmem:[%s246 + $0x1a0] sm:$0xf]
      %v358 = vld [vmem:[%s246 + $0x1a4] sm:$0xf]
      %v359 = vld [vmem:[%s246 + $0x1a8] sm:$0xf]
      %v360 = vld [vmem:[%s246 + $0x1ac] sm:$0xf]
      %v361 = vld [vmem:[%s246 + $0x1b0] sm:$0xf]
      %v362 = vld [vmem:[%s246 + $0x1b4] sm:$0xf]
      %v363 = vld [vmem:[%s246 + $0x1b8] sm:$0xf]
      %v364 = vld [vmem:[%s246 + $0x1bc] sm:$0xf]
      %v365 = vld [vmem:[%s246 + $0x1c0] sm:$0xf]
      %v366 = vld [vmem:[%s246 + $0x1c4] sm:$0xf]
      %v367 = vld [vmem:[%s246 + $0x1c8] sm:$0xf]
      %v368 = vld [vmem:[%s246 + $0x1cc] sm:$0xf]
      %v369 = vld [vmem:[%s246 + $0x1d0] sm:$0xf]
      %v370 = vld [vmem:[%s246 + $0x1d4] sm:$0xf]
      %v371 = vld [vmem:[%s246 + $0x1d8] sm:$0xf]
      %v372 = vld [vmem:[%s246 + $0x1dc] sm:$0xf]
      %v373 = vld [vmem:[%s1] sm:$0xf]
      %v374 = vld [vmem:[%s1 + $0x4] sm:$0xf]
      %v375 = vld [vmem:[%s1 + $0x8] sm:$0xf]
      %v376 = vld [vmem:[%s1 + $0xc] sm:$0xf]
      %v377 = vld [vmem:[%s1 + $0x10] sm:$0xf]
      %v378 = vld [vmem:[%s1 + $0x14] sm:$0xf]
      %v379 = vld [vmem:[%s1 + $0x18] sm:$0xf]
      %v380 = vld [vmem:[%s1 + $0x1c] sm:$0xf]
      %v381 = vld [vmem:[%s1 + $0x20] sm:$0xf]
      %v382 = vld [vmem:[%s1 + $0x24] sm:$0x3]
      %v503 = vunpack.c.l.b16 %v253
      %v504 = vunpack.c.l.b16 %v254
      %v505 = vunpack.c.l.b16 %v255
      %v506 = vunpack.c.l.b16 %v256
      %v507 = vunpack.c.l.b16 %v257
      %v508 = vunpack.c.l.b16 %v258
      %v509 = vunpack.c.l.b16 %v259
      %v510 = vunpack.c.l.b16 %v260
      %v511 = vunpack.c.l.b16 %v261
      %v512 = vunpack.c.l.b16 %v262
      %v513 = vunpack.c.l.b16 %v263
      %v514 = vunpack.c.l.b16 %v264
      %v515 = vunpack.c.l.b16 %v265
      %v516 = vunpack.c.l.b16 %v266
      %v517 = vunpack.c.l.b16 %v267
      %v518 = vunpack.c.l.b16 %v268
      %v519 = vunpack.c.l.b16 %v269
      %v520 = vunpack.c.l.b16 %v270
      %v521 = vunpack.c.l.b16 %v271
      %v522 = vunpack.c.l.b16 %v272
      %v523 = vunpack.c.l.b16 %v273
      %v524 = vunpack.c.l.b16 %v274
      %v525 = vunpack.c.l.b16 %v275
      %v526 = vunpack.c.l.b16 %v276
      %v527 = vunpack.c.l.b16 %v277
      %v528 = vunpack.c.l.b16 %v278
      %v529 = vunpack.c.l.b16 %v279
      %v530 = vunpack.c.l.b16 %v280
      %v531 = vunpack.c.l.b16 %v281
      %v532 = vunpack.c.l.b16 %v282
      %v533 = vunpack.c.l.b16 %v283
      %v534 = vunpack.c.l.b16 %v284
      %v535 = vunpack.c.l.b16 %v285
      %v536 = vunpack.c.l.b16 %v286
      %v537 = vunpack.c.l.b16 %v287
      %v538 = vunpack.c.l.b16 %v288
      %v539 = vunpack.c.l.b16 %v289
      %v540 = vunpack.c.l.b16 %v290
      %v541 = vunpack.c.l.b16 %v291
      %v542 = vunpack.c.l.b16 %v292
      %v543 = vunpack.c.l.b16 %v293
      %v544 = vunpack.c.l.b16 %v294
      %v545 = vunpack.c.l.b16 %v295
      %v546 = vunpack.c.l.b16 %v296
      %v547 = vunpack.c.l.b16 %v297
      %v548 = vunpack.c.l.b16 %v298
      %v549 = vunpack.c.l.b16 %v299
      %v550 = vunpack.c.l.b16 %v300
      %v551 = vunpack.c.l.b16 %v301
      %v552 = vunpack.c.l.b16 %v302
      %v553 = vunpack.c.l.b16 %v303
      %v554 = vunpack.c.l.b16 %v304
      %v555 = vunpack.c.l.b16 %v305
      %v556 = vunpack.c.l.b16 %v306
      %v557 = vunpack.c.l.b16 %v307
      %v558 = vunpack.c.l.b16 %v308
      %v559 = vunpack.c.l.b16 %v309
      %v560 = vunpack.c.l.b16 %v310
      %v561 = vunpack.c.l.b16 %v311
      %v562 = vunpack.c.l.b16 %v312
      %v563 = vunpack.c.l.b16 %v313
      %v564 = vunpack.c.l.b16 %v314
      %v565 = vunpack.c.l.b16 %v315
      %v566 = vunpack.c.l.b16 %v316
      %v567 = vunpack.c.l.b16 %v317
      %v568 = vunpack.c.l.b16 %v318
      %v569 = vunpack.c.l.b16 %v319
      %v570 = vunpack.c.l.b16 %v320
      %v571 = vunpack.c.l.b16 %v321
      %v572 = vunpack.c.l.b16 %v322
      %v573 = vunpack.c.l.b16 %v323
      %v574 = vunpack.c.l.b16 %v324
      %v575 = vunpack.c.l.b16 %v325
      %v576 = vunpack.c.l.b16 %v326
      %v577 = vunpack.c.l.b16 %v327
      %v578 = vunpack.c.l.b16 %v328
      %v579 = vunpack.c.l.b16 %v329
      %v580 = vunpack.c.l.b16 %v330
      %v581 = vunpack.c.l.b16 %v331
      %v582 = vunpack.c.l.b16 %v332
      %v583 = vunpack.c.l.b16 %v333
      %v584 = vunpack.c.l.b16 %v334
      %v585 = vunpack.c.l.b16 %v335
      %v586 = vunpack.c.l.b16 %v336
      %v587 = vunpack.c.l.b16 %v337
      %v588 = vunpack.c.l.b16 %v338
      %v589 = vunpack.c.l.b16 %v339
      %v590 = vunpack.c.l.b16 %v340
      %v591 = vunpack.c.l.b16 %v341
      %v592 = vunpack.c.l.b16 %v342
      %v593 = vunpack.c.l.b16 %v343
      %v594 = vunpack.c.l.b16 %v344
      %v595 = vunpack.c.l.b16 %v345
      %v596 = vunpack.c.l.b16 %v346
      %v597 = vunpack.c.l.b16 %v347
      %v598 = vunpack.c.l.b16 %v348
      %v599 = vunpack.c.l.b16 %v349
      %v600 = vunpack.c.l.b16 %v350
      %v601 = vunpack.c.l.b16 %v351
      %v602 = vunpack.c.l.b16 %v352
      %v603 = vunpack.c.l.b16 %v353
      %v604 = vunpack.c.l.b16 %v354
      %v605 = vunpack.c.l.b16 %v355
      %v606 = vunpack.c.l.b16 %v356
      %v607 = vunpack.c.l.b16 %v357
      %v608 = vunpack.c.l.b16 %v358
      %v609 = vunpack.c.l.b16 %v359
      %v610 = vunpack.c.l.b16 %v360
      %v611 = vunpack.c.l.b16 %v361
      %v612 = vunpack.c.l.b16 %v362
      %v613 = vunpack.c.l.b16 %v363
      %v614 = vunpack.c.l.b16 %v364
      %v615 = vunpack.c.l.b16 %v365
      %v616 = vunpack.c.l.b16 %v366
      %v617 = vunpack.c.l.b16 %v367
      %v618 = vunpack.c.l.b16 %v368
      %v619 = vunpack.c.l.b16 %v369
      %v620 = vunpack.c.l.b16 %v370
      %v621 = vunpack.c.l.b16 %v371
      %v622 = vunpack.c.l.b16 %v372
      %v623 = vpack.c.b16 %v504, %v503
      %v624 = vpack.c.b16 %v506, %v505
      %v625 = vpack.c.b16 %v508, %v507
      %v626 = vpack.c.b16 %v510, %v509
      %v627 = vpack.c.b16 %v512, %v511
      %v628 = vpack.c.b16 %v514, %v513
      %v629 = vpack.c.b16 %v516, %v515
      %v630 = vpack.c.b16 %v518, %v517
      %v631 = vpack.c.b16 %v520, %v519
      %v632 = vpack.c.b16 %v522, %v521
      %v633 = vpack.c.b16 %v524, %v523
      %v634 = vpack.c.b16 %v526, %v525
      %v635 = vpack.c.b16 %v528, %v527
      %v636 = vpack.c.b16 %v530, %v529
      %v637 = vpack.c.b16 %v532, %v531
      %v638 = vpack.c.b16 %v534, %v533
      %v639 = vpack.c.b16 %v536, %v535
      %v640 = vpack.c.b16 %v538, %v537
      %v641 = vpack.c.b16 %v540, %v539
      %v642 = vpack.c.b16 %v542, %v541
      %v643 = vpack.c.b16 %v544, %v543
      %v644 = vpack.c.b16 %v546, %v545
      %v645 = vpack.c.b16 %v548, %v547
      %v646 = vpack.c.b16 %v550, %v549
      %v647 = vpack.c.b16 %v552, %v551
      %v648 = vpack.c.b16 %v554, %v553
      %v649 = vpack.c.b16 %v556, %v555
      %v650 = vpack.c.b16 %v558, %v557
      %v651 = vpack.c.b16 %v560, %v559
      %v652 = vpack.c.b16 %v562, %v561
      %v653 = vpack.c.b16 %v564, %v563
      %v654 = vpack.c.b16 %v566, %v565
      %v655 = vpack.c.b16 %v568, %v567
      %v656 = vpack.c.b16 %v570, %v569
      %v657 = vpack.c.b16 %v572, %v571
      %v658 = vpack.c.b16 %v574, %v573
      %v659 = vpack.c.b16 %v576, %v575
      %v660 = vpack.c.b16 %v578, %v577
      %v661 = vpack.c.b16 %v580, %v579
      %v662 = vpack.c.b16 %v582, %v581
      %v663 = vpack.c.b16 %v584, %v583
      %v664 = vpack.c.b16 %v586, %v585
      %v665 = vpack.c.b16 %v588, %v587
      %v666 = vpack.c.b16 %v590, %v589
      %v667 = vpack.c.b16 %v592, %v591
      %v668 = vpack.c.b16 %v594, %v593
      %v669 = vpack.c.b16 %v596, %v595
      %v670 = vpack.c.b16 %v598, %v597
      %v671 = vpack.c.b16 %v600, %v599
      %v672 = vpack.c.b16 %v602, %v601
      %v673 = vpack.c.b16 %v604, %v603
      %v674 = vpack.c.b16 %v606, %v605
      %v675 = vpack.c.b16 %v608, %v607
      %v676 = vpack.c.b16 %v610, %v609
      %v677 = vpack.c.b16 %v612, %v611
      %v678 = vpack.c.b16 %v614, %v613
      %v679 = vpack.c.b16 %v616, %v615
      %v680 = vpack.c.b16 %v618, %v617
      %v681 = vpack.c.b16 %v620, %v619
      %v682 = vpack.c.b16 %v622, %v621
      %v693 = vunpack.c.l.b16 %v373
      %v694 = vunpack.c.l.b16 %v374
      %v695 = vunpack.c.l.b16 %v375
      %v696 = vunpack.c.l.b16 %v376
      %v697 = vunpack.c.l.b16 %v377
      %v698 = vunpack.c.l.b16 %v378
      %v699 = vunpack.c.l.b16 %v379
      %v700 = vunpack.c.l.b16 %v380
      %v701 = vunpack.c.l.b16 %v381
      %v702 = vunpack.c.l.b16 %v382
      %v703 = vpack.c.b16 %v694, %v693
      %v704 = vpack.c.b16 %v696, %v695
      %v705 = vpack.c.b16 %v698, %v697
      %v706 = vpack.c.b16 %v700, %v699
      %v707 = vpack.c.b16 %v702, %v701
      %vm712 = vcmask 613376
      %v714 = vsel %vm712, %v623, 0
      %v717 = vsel %vm712, %v624, 0
      %v720 = vsel %vm712, %v625, 0
      %v723 = vsel %vm712, %v626, 0
      %v726 = vsel %vm712, %v627, 0
      %v729 = vsel %vm712, %v628, 0
      %v732 = vsel %vm712, %v629, 0
      %v735 = vsel %vm712, %v630, 0
      %v738 = vsel %vm712, %v631, 0
      %v741 = vsel %vm712, %v632, 0
      %v744 = vsel %vm712, %v633, 0
      %v747 = vsel %vm712, %v634, 0
      %v750 = vsel %vm712, %v635, 0
      %v753 = vsel %vm712, %v636, 0
      %v756 = vsel %vm712, %v637, 0
      %v759 = vsel %vm712, %v638, 0
      %v762 = vsel %vm712, %v639, 0
      %v765 = vsel %vm712, %v640, 0
      %v768 = vsel %vm712, %v641, 0
      %v771 = vsel %vm712, %v642, 0
      %v774 = vsel %vm712, %v643, 0
      %v777 = vsel %vm712, %v644, 0
      %v780 = vsel %vm712, %v645, 0
      %v783 = vsel %vm712, %v646, 0
      %v786 = vsel %vm712, %v647, 0
      %v789 = vsel %vm712, %v648, 0
      %v792 = vsel %vm712, %v649, 0
      %v795 = vsel %vm712, %v650, 0
      %v798 = vsel %vm712, %v651, 0
      %v801 = vsel %vm712, %v652, 0
      %v804 = vsel %vm712, %v653, 0
      %v807 = vsel %vm712, %v654, 0
      %v810 = vsel %vm712, %v655, 0
      %v813 = vsel %vm712, %v656, 0
      %v816 = vsel %vm712, %v657, 0
      %v819 = vsel %vm712, %v658, 0
      %v822 = vsel %vm712, %v659, 0
      %v825 = vsel %vm712, %v660, 0
      %v828 = vsel %vm712, %v661, 0
      %v831 = vsel %vm712, %v662, 0
      %v834 = vsel %vm712, %v663, 0
      %v837 = vsel %vm712, %v664, 0
      %v840 = vsel %vm712, %v665, 0
      %v843 = vsel %vm712, %v666, 0
      %v846 = vsel %vm712, %v667, 0
      %v849 = vsel %vm712, %v668, 0
      %v852 = vsel %vm712, %v669, 0
      %v855 = vsel %vm712, %v670, 0
      %v858 = vsel %vm712, %v671, 0
      %v861 = vsel %vm712, %v672, 0
      %v864 = vsel %vm712, %v673, 0
      %v867 = vsel %vm712, %v674, 0
      %v870 = vsel %vm712, %v675, 0
      %v873 = vsel %vm712, %v676, 0
      %v876 = vsel %vm712, %v677, 0
      %v879 = vsel %vm712, %v678, 0
      %v882 = vsel %vm712, %v679, 0
      %v885 = vsel %vm712, %v680, 0
      %v888 = vsel %vm712, %v681, 0
      %v891 = vsel %vm712, %v682, 0
      %vm893 = vcmask 1044480
      %vm894 = vcmask 1045504
      %v895 = vsel %vm893, 4294967295, 65535
      %v896 = vsel %vm894, %v895, 0
      %v898 = vand.u32 %v707, %v896
      %900 = vmatprep.subr.bf16.mxu0 0
      %901 = vmatpush1.bf16.msra.mxu0 %v703
      %902 = vmatprep.subr.bf16.mxu0 0
      %903 = vmatpush1.bf16.msra.mxu0 %v704
      %904 = vmatprep.subr.bf16.mxu0 0
      %905 = vmatpush1.bf16.msra.mxu0 %v705
      %906 = vmatprep.subr.bf16.mxu0 0
      %907 = vmatpush1.bf16.msra.mxu0 %v706
      %908 = vmatprep.subr.bf16.mxu0 0
      %909 = vmatpush1.bf16.msra.mxu0 %v898
      %910 = vmatprep.subr.bf16.mxu0 0
      %911 = vmatpush1.bf16.msra.mxu0 0
      %912 = vmatprep.subr.bf16.mxu0 0
      %913 = vmatpush1.bf16.msra.mxu0 0
      %914 = vmatprep.subr.bf16.mxu0 0
      %915 = vmatpush1.bf16.msra.mxu0 0
      %916 = vmatprep.subr.bf16.mxu0 0
      %917 = vmatpush1.bf16.msra.mxu0 0
      %918 = vmatprep.subr.bf16.mxu0 0
      %919 = vmatpush1.bf16.msra.mxu0 0
      %920 = vmatprep.subr.bf16.mxu0 0
      %921 = vmatpush1.bf16.msra.mxu0 0
      %922 = vmatprep.subr.bf16.mxu0 0
      %923 = vmatpush1.bf16.msra.mxu0 0
      %924 = vmatprep.subr.bf16.mxu0 0
      %925 = vmatpush1.bf16.msra.mxu0 0
      %926 = vmatprep.subr.bf16.mxu0 0
      %927 = vmatpush1.bf16.msra.mxu0 0
      %928 = vmatprep.subr.bf16.mxu0 0
      %929 = vmatpush1.bf16.msra.mxu0 0
      %930 = vmatprep.subr.bf16.mxu0 0
      %931 = vmatpush1.bf16.msra.mxu0 0
      %932 = vmatprep.mubr.bf16.mxu0 0
      %933 = vmatmul.mubr.bf16.gmra.mrb[0].mxu0 %v714
      %v934 = vpop.f32.mrb[0].mxu0
      %v935 = vadd.f32 0.0, %v934
      %v936 = vpop.f32.mrb[0].mxu0
      %v937 = vpop.f32.mrb[0].mxu0
      %v938 = vadd.f32 0.0, %v937
      %v939 = vpop.f32.mrb[0].mxu0
      %940 = vmatprep.mubr.bf16.mxu0 0
      %941 = vmatmul.mubr.bf16.gmra.mrb[0].mxu0 %v717
      %v942 = vpop.f32.mrb[0].mxu0
      %v943 = vadd.f32 0.0, %v942
      %v944 = vpop.f32.mrb[0].mxu0
      %v945 = vpop.f32.mrb[0].mxu0
      %v946 = vadd.f32 0.0, %v945
      %v947 = vpop.f32.mrb[0].mxu0
      %948 = vmatprep.mubr.bf16.mxu0 0
      %949 = vmatmul.mubr.bf16.gmra.mrb[0].mxu0 %v720
      %v950 = vpop.f32.mrb[0].mxu0
      %v951 = vadd.f32 0.0, %v950
      %v952 = vpop.f32.mrb[0].mxu0
      %v953 = vpop.f32.mrb[0].mxu0
      %v954 = vadd.f32 0.0, %v953
      %v955 = vpop.f32.mrb[0].mxu0
      %956 = vmatprep.mubr.bf16.mxu0 0
      %957 = vmatmul.mubr.bf16.gmra.mrb[0].mxu0 %v723
      %v958 = vpop.f32.mrb[0].mxu0
      %v959 = vadd.f32 0.0, %v958
      %v960 = vpop.f32.mrb[0].mxu0
      %v961 = vpop.f32.mrb[0].mxu0
      %v962 = vadd.f32 0.0, %v961
      %v963 = vpop.f32.mrb[0].mxu0
      %964 = vmatprep.mubr.bf16.mxu0 0
      %965 = vmatmul.mubr.bf16.gmra.mrb[0].mxu0 %v726
      %v966 = vpop.f32.mrb[0].mxu0
      %v967 = vadd.f32 0.0, %v966
      %v968 = vpop.f32.mrb[0].mxu0
      %v969 = vpop.f32.mrb[0].mxu0
      %v970 = vadd.f32 0.0, %v969
      %v971 = vpop.f32.mrb[0].mxu0
      %972 = vmatprep.mubr.bf16.mxu0 0
      %973 = vmatmul.mubr.bf16.gmra.mrb[0].mxu0 %v729
      %v974 = vpop.f32.mrb[0].mxu0
      %v975 = vadd.f32 0.0, %v974
      %v976 = vpop.f32.mrb[0].mxu0
      %v977 = vpop.f32.mrb[0].mxu0
      %v978 = vadd.f32 0.0, %v977
      %v979 = vpop.f32.mrb[0].mxu0
      %980 = vmatprep.mubr.bf16.mxu0 0
      %981 = vmatmul.mubr.bf16.gmra.mrb[0].mxu0 %v732
      %v982 = vpop.f32.mrb[0].mxu0
      %v983 = vadd.f32 0.0, %v982
      %v984 = vpop.f32.mrb[0].mxu0
      %v985 = vpop.f32.mrb[0].mxu0
      %v986 = vadd.f32 0.0, %v985
      %v987 = vpop.f32.mrb[0].mxu0
      %988 = vmatprep.mubr.bf16.mxu0 0
      %989 = vmatmul.mubr.bf16.gmra.mrb[0].mxu0 %v735
      %v990 = vpop.f32.mrb[0].mxu0
      %v991 = vadd.f32 0.0, %v990
      %v992 = vpop.f32.mrb[0].mxu0
      %v993 = vpop.f32.mrb[0].mxu0
      %v994 = vadd.f32 0.0, %v993
      %v995 = vpop.f32.mrb[0].mxu0
      %996 = vmatprep.mubr.bf16.mxu0 0
      %997 = vmatmul.mubr.bf16.gmra.mrb[0].mxu0 %v738
      %v998 = vpop.f32.mrb[0].mxu0
      %v999 = vadd.f32 0.0, %v998
      %v1000 = vpop.f32.mrb[0].mxu0
      %v1001 = vpop.f32.mrb[0].mxu0
      %v1002 = vadd.f32 0.0, %v1001
      %v1003 = vpop.f32.mrb[0].mxu0
      %1004 = vmatprep.mubr.bf16.mxu0 0
      %1005 = vmatmul.mubr.bf16.gmra.mrb[0].mxu0 %v741
      %v1006 = vpop.f32.mrb[0].mxu0
      %v1007 = vadd.f32 0.0, %v1006
      %v1008 = vpop.f32.mrb[0].mxu0
      %v1009 = vpop.f32.mrb[0].mxu0
      %v1010 = vadd.f32 0.0, %v1009
      %v1011 = vpop.f32.mrb[0].mxu0
      %1012 = vmatprep.mubr.bf16.mxu0 0
      %1013 = vmatmul.mubr.bf16.gmra.mrb[0].mxu0 %v744
      %v1014 = vpop.f32.mrb[0].mxu0
      %v1015 = vadd.f32 0.0, %v1014
      %v1016 = vpop.f32.mrb[0].mxu0
      %v1017 = vpop.f32.mrb[0].mxu0
      %v1018 = vadd.f32 0.0, %v1017
      %v1019 = vpop.f32.mrb[0].mxu0
      %1020 = vmatprep.mubr.bf16.mxu0 0
      %1021 = vmatmul.mubr.bf16.gmra.mrb[0].mxu0 %v747
      %v1022 = vpop.f32.mrb[0].mxu0
      %v1023 = vadd.f32 0.0, %v1022
      %v1024 = vpop.f32.mrb[0].mxu0
      %v1025 = vpop.f32.mrb[0].mxu0
      %v1026 = vadd.f32 0.0, %v1025
      %v1027 = vpop.f32.mrb[0].mxu0
      %1028 = vmatprep.mubr.bf16.mxu0 0
      %1029 = vmatmul.mubr.bf16.gmra.mrb[0].mxu0 %v750
      %v1030 = vpop.f32.mrb[0].mxu0
      %v1031 = vadd.f32 0.0, %v1030
      %v1032 = vpop.f32.mrb[0].mxu0
      %v1033 = vpop.f32.mrb[0].mxu0
      %v1034 = vadd.f32 0.0, %v1033
      %v1035 = vpop.f32.mrb[0].mxu0
      %1036 = vmatprep.mubr.bf16.mxu0 0
      %1037 = vmatmul.mubr.bf16.gmra.mrb[0].mxu0 %v753
      %v1038 = vpop.f32.mrb[0].mxu0
      %v1039 = vadd.f32 0.0, %v1038
      %v1040 = vpop.f32.mrb[0].mxu0
      %v1041 = vpop.f32.mrb[0].mxu0
      %v1042 = vadd.f32 0.0, %v1041
      %v1043 = vpop.f32.mrb[0].mxu0
      %1044 = vmatprep.mubr.bf16.mxu0 0
      %1045 = vmatmul.mubr.bf16.gmra.mrb[0].mxu0 %v756
      %v1046 = vpop.f32.mrb[0].mxu0
      %v1047 = vadd.f32 0.0, %v1046
      %v1048 = vpop.f32.mrb[0].mxu0
      %v1049 = vpop.f32.mrb[0].mxu0
      %v1050 = vadd.f32 0.0, %v1049
      %v1051 = vpop.f32.mrb[0].mxu0
      %1052 = vmatprep.mubr.bf16.mxu0 0
      %1053 = vmatmul.mubr.bf16.gmra.mrb[0].mxu0 %v759
      %v1054 = vpop.f32.mrb[0].mxu0
      %v1055 = vadd.f32 0.0, %v1054
      %v1056 = vpop.f32.mrb[0].mxu0
      %v1057 = vpop.f32.mrb[0].mxu0
      %v1058 = vadd.f32 0.0, %v1057
      %v1059 = vpop.f32.mrb[0].mxu0
      %1060 = vmatprep.mubr.bf16.mxu0 0
      %1061 = vmatmul.mubr.bf16.gmra.mrb[0].mxu0 %v762
      %v1062 = vpop.f32.mrb[0].mxu0
      %v1063 = vadd.f32 0.0, %v1062
      %v1064 = vpop.f32.mrb[0].mxu0
      %v1065 = vpop.f32.mrb[0].mxu0
      %v1066 = vadd.f32 0.0, %v1065
      %v1067 = vpop.f32.mrb[0].mxu0
      %1068 = vmatprep.mubr.bf16.mxu0 0
      %1069 = vmatmul.mubr.bf16.gmra.mrb[0].mxu0 %v765
      %v1070 = vpop.f32.mrb[0].mxu0
      %v1071 = vadd.f32 0.0, %v1070
      %v1072 = vpop.f32.mrb[0].mxu0
      %v1073 = vpop.f32.mrb[0].mxu0
      %v1074 = vadd.f32 0.0, %v1073
      %v1075 = vpop.f32.mrb[0].mxu0
      %1076 = vmatprep.mubr.bf16.mxu0 0
      %1077 = vmatmul.mubr.bf16.gmra.mrb[0].mxu0 %v768
      %v1078 = vpop.f32.mrb[0].mxu0
      %v1079 = vadd.f32 0.0, %v1078
      %v1080 = vpop.f32.mrb[0].mxu0
      %v1081 = vpop.f32.mrb[0].mxu0
      %v1082 = vadd.f32 0.0, %v1081
      %v1083 = vpop.f32.mrb[0].mxu0
      %1084 = vmatprep.mubr.bf16.mxu0 0
      %1085 = vmatmul.mubr.bf16.gmra.mrb[0].mxu0 %v771
      %v1086 = vpop.f32.mrb[0].mxu0
      %v1087 = vadd.f32 0.0, %v1086
      %v1088 = vpop.f32.mrb[0].mxu0
      %v1089 = vpop.f32.mrb[0].mxu0
      %v1090 = vadd.f32 0.0, %v1089
      %v1091 = vpop.f32.mrb[0].mxu0
      %1092 = vmatprep.mubr.bf16.mxu0 0
      %1093 = vmatmul.mubr.bf16.gmra.mrb[0].mxu0 %v774
      %v1094 = vpop.f32.mrb[0].mxu0
      %v1095 = vadd.f32 0.0, %v1094
      %v1096 = vpop.f32.mrb[0].mxu0
      %v1097 = vpop.f32.mrb[0].mxu0
      %v1098 = vadd.f32 0.0, %v1097
      %v1099 = vpop.f32.mrb[0].mxu0
      %1100 = vmatprep.mubr.bf16.mxu0 0
      %1101 = vmatmul.mubr.bf16.gmra.mrb[0].mxu0 %v777
      %v1102 = vpop.f32.mrb[0].mxu0
      %v1103 = vadd.f32 0.0, %v1102
      %v1104 = vpop.f32.mrb[0].mxu0
      %v1105 = vpop.f32.mrb[0].mxu0
      %v1106 = vadd.f32 0.0, %v1105
      %v1107 = vpop.f32.mrb[0].mxu0
      %1108 = vmatprep.mubr.bf16.mxu0 0
      %1109 = vmatmul.mubr.bf16.gmra.mrb[0].mxu0 %v780
      %v1110 = vpop.f32.mrb[0].mxu0
      %v1111 = vadd.f32 0.0, %v1110
      %v1112 = vpop.f32.mrb[0].mxu0
      %v1113 = vpop.f32.mrb[0].mxu0
      %v1114 = vadd.f32 0.0, %v1113
      %v1115 = vpop.f32.mrb[0].mxu0
      %1116 = vmatprep.mubr.bf16.mxu0 0
      %1117 = vmatmul.mubr.bf16.gmra.mrb[0].mxu0 %v783
      %v1118 = vpop.f32.mrb[0].mxu0
      %v1119 = vadd.f32 0.0, %v1118
      %v1120 = vpop.f32.mrb[0].mxu0
      %v1121 = vpop.f32.mrb[0].mxu0
      %v1122 = vadd.f32 0.0, %v1121
      %v1123 = vpop.f32.mrb[0].mxu0
      %1124 = vmatprep.mubr.bf16.mxu0 0
      %1125 = vmatmul.mubr.bf16.gmra.mrb[0].mxu0 %v786
      %v1126 = vpop.f32.mrb[0].mxu0
      %v1127 = vadd.f32 0.0, %v1126
      %v1128 = vpop.f32.mrb[0].mxu0
      %v1129 = vpop.f32.mrb[0].mxu0
      %v1130 = vadd.f32 0.0, %v1129
      %v1131 = vpop.f32.mrb[0].mxu0
      %1132 = vmatprep.mubr.bf16.mxu0 0
      %1133 = vmatmul.mubr.bf16.gmra.mrb[0].mxu0 %v789
      %v1134 = vpop.f32.mrb[0].mxu0
      %v1135 = vadd.f32 0.0, %v1134
      %v1136 = vpop.f32.mrb[0].mxu0
      %v1137 = vpop.f32.mrb[0].mxu0
      %v1138 = vadd.f32 0.0, %v1137
      %v1139 = vpop.f32.mrb[0].mxu0
      %1140 = vmatprep.mubr.bf16.mxu0 0
      %1141 = vmatmul.mubr.bf16.gmra.mrb[0].mxu0 %v792
      %v1142 = vpop.f32.mrb[0].mxu0
      %v1143 = vadd.f32 0.0, %v1142
      %v1144 = vpop.f32.mrb[0].mxu0
      %v1145 = vpop.f32.mrb[0].mxu0
      %v1146 = vadd.f32 0.0, %v1145
      %v1147 = vpop.f32.mrb[0].mxu0
      %1148 = vmatprep.mubr.bf16.mxu0 0
      %1149 = vmatmul.mubr.bf16.gmra.mrb[0].mxu0 %v795
      %v1150 = vpop.f32.mrb[0].mxu0
      %v1151 = vadd.f32 0.0, %v1150
      %v1152 = vpop.f32.mrb[0].mxu0
      %v1153 = vpop.f32.mrb[0].mxu0
      %v1154 = vadd.f32 0.0, %v1153
      %v1155 = vpop.f32.mrb[0].mxu0
      %1156 = vmatprep.mubr.bf16.mxu0 0
      %1157 = vmatmul.mubr.bf16.gmra.mrb[0].mxu0 %v798
      %v1158 = vpop.f32.mrb[0].mxu0
      %v1159 = vadd.f32 0.0, %v1158
      %v1160 = vpop.f32.mrb[0].mxu0
      %v1161 = vpop.f32.mrb[0].mxu0
      %v1162 = vadd.f32 0.0, %v1161
      %v1163 = vpop.f32.mrb[0].mxu0
      %1164 = vmatprep.mubr.bf16.mxu0 0
      %1165 = vmatmul.mubr.bf16.gmra.mrb[0].mxu0 %v801
      %v1166 = vpop.f32.mrb[0].mxu0
      %v1167 = vadd.f32 0.0, %v1166
      %v1168 = vpop.f32.mrb[0].mxu0
      %v1169 = vpop.f32.mrb[0].mxu0
      %v1170 = vadd.f32 0.0, %v1169
      %v1171 = vpop.f32.mrb[0].mxu0
      %1172 = vmatprep.mubr.bf16.mxu0 0
      %1173 = vmatmul.mubr.bf16.gmra.mrb[0].mxu0 %v804
      %v1174 = vpop.f32.mrb[0].mxu0
      %v1175 = vadd.f32 0.0, %v1174
      %v1176 = vpop.f32.mrb[0].mxu0
      %v1177 = vpop.f32.mrb[0].mxu0
      %v1178 = vadd.f32 0.0, %v1177
      %v1179 = vpop.f32.mrb[0].mxu0
      %1180 = vmatprep.mubr.bf16.mxu0 0
      %1181 = vmatmul.mubr.bf16.gmra.mrb[0].mxu0 %v807
      %v1182 = vpop.f32.mrb[0].mxu0
      %v1183 = vadd.f32 0.0, %v1182
      %v1184 = vpop.f32.mrb[0].mxu0
      %v1185 = vpop.f32.mrb[0].mxu0
      %v1186 = vadd.f32 0.0, %v1185
      %v1187 = vpop.f32.mrb[0].mxu0
      %1188 = vmatprep.mubr.bf16.mxu0 0
      %1189 = vmatmul.mubr.bf16.gmra.mrb[0].mxu0 %v810
      %v1190 = vpop.f32.mrb[0].mxu0
      %v1191 = vadd.f32 0.0, %v1190
      %v1192 = vpop.f32.mrb[0].mxu0
      %v1193 = vpop.f32.mrb[0].mxu0
      %v1194 = vadd.f32 0.0, %v1193
      %v1195 = vpop.f32.mrb[0].mxu0
      %1196 = vmatprep.mubr.bf16.mxu0 0
      %1197 = vmatmul.mubr.bf16.gmra.mrb[0].mxu0 %v813
      %v1198 = vpop.f32.mrb[0].mxu0
      %v1199 = vadd.f32 0.0, %v1198
      %v1200 = vpop.f32.mrb[0].mxu0
      %v1201 = vpop.f32.mrb[0].mxu0
      %v1202 = vadd.f32 0.0, %v1201
      %v1203 = vpop.f32.mrb[0].mxu0
      %1204 = vmatprep.mubr.bf16.mxu0 0
      %1205 = vmatmul.mubr.bf16.gmra.mrb[0].mxu0 %v816
      %v1206 = vpop.f32.mrb[0].mxu0
      %v1207 = vadd.f32 0.0, %v1206
      %v1208 = vpop.f32.mrb[0].mxu0
      %v1209 = vpop.f32.mrb[0].mxu0
      %v1210 = vadd.f32 0.0, %v1209
      %v1211 = vpop.f32.mrb[0].mxu0
      %1212 = vmatprep.mubr.bf16.mxu0 0
      %1213 = vmatmul.mubr.bf16.gmra.mrb[0].mxu0 %v819
      %v1214 = vpop.f32.mrb[0].mxu0
      %v1215 = vadd.f32 0.0, %v1214
      %v1216 = vpop.f32.mrb[0].mxu0
      %v1217 = vpop.f32.mrb[0].mxu0
      %v1218 = vadd.f32 0.0, %v1217
      %v1219 = vpop.f32.mrb[0].mxu0
      %1220 = vmatprep.mubr.bf16.mxu0 0
      %1221 = vmatmul.mubr.bf16.gmra.mrb[0].mxu0 %v822
      %v1222 = vpop.f32.mrb[0].mxu0
      %v1223 = vadd.f32 0.0, %v1222
      %v1224 = vpop.f32.mrb[0].mxu0
      %v1225 = vpop.f32.mrb[0].mxu0
      %v1226 = vadd.f32 0.0, %v1225
      %v1227 = vpop.f32.mrb[0].mxu0
      %1228 = vmatprep.mubr.bf16.mxu0 0
      %1229 = vmatmul.mubr.bf16.gmra.mrb[0].mxu0 %v825
      %v1230 = vpop.f32.mrb[0].mxu0
      %v1231 = vadd.f32 0.0, %v1230
      %v1232 = vpop.f32.mrb[0].mxu0
      %v1233 = vpop.f32.mrb[0].mxu0
      %v1234 = vadd.f32 0.0, %v1233
      %v1235 = vpop.f32.mrb[0].mxu0
      %1236 = vmatprep.mubr.bf16.mxu0 0
      %1237 = vmatmul.mubr.bf16.gmra.mrb[0].mxu0 %v828
      %v1238 = vpop.f32.mrb[0].mxu0
      %v1239 = vadd.f32 0.0, %v1238
      %v1240 = vpop.f32.mrb[0].mxu0
      %v1241 = vpop.f32.mrb[0].mxu0
      %v1242 = vadd.f32 0.0, %v1241
      %v1243 = vpop.f32.mrb[0].mxu0
      %1244 = vmatprep.mubr.bf16.mxu0 0
      %1245 = vmatmul.mubr.bf16.gmra.mrb[0].mxu0 %v831
      %v1246 = vpop.f32.mrb[0].mxu0
      %v1247 = vadd.f32 0.0, %v1246
      %v1248 = vpop.f32.mrb[0].mxu0
      %v1249 = vpop.f32.mrb[0].mxu0
      %v1250 = vadd.f32 0.0, %v1249
      %v1251 = vpop.f32.mrb[0].mxu0
      %1252 = vmatprep.mubr.bf16.mxu0 0
      %1253 = vmatmul.mubr.bf16.gmra.mrb[0].mxu0 %v834
      %v1254 = vpop.f32.mrb[0].mxu0
      %v1255 = vadd.f32 0.0, %v1254
      %v1256 = vpop.f32.mrb[0].mxu0
      %v1257 = vpop.f32.mrb[0].mxu0
      %v1258 = vadd.f32 0.0, %v1257
      %v1259 = vpop.f32.mrb[0].mxu0
      %1260 = vmatprep.mubr.bf16.mxu0 0
      %1261 = vmatmul.mubr.bf16.gmra.mrb[0].mxu0 %v837
      %v1262 = vpop.f32.mrb[0].mxu0
      %v1263 = vadd.f32 0.0, %v1262
      %v1264 = vpop.f32.mrb[0].mxu0
      %v1265 = vpop.f32.mrb[0].mxu0
      %v1266 = vadd.f32 0.0, %v1265
      %v1267 = vpop.f32.mrb[0].mxu0
      %1268 = vmatprep.mubr.bf16.mxu0 0
      %1269 = vmatmul.mubr.bf16.gmra.mrb[0].mxu0 %v840
      %v1270 = vpop.f32.mrb[0].mxu0
      %v1271 = vadd.f32 0.0, %v1270
      %v1272 = vpop.f32.mrb[0].mxu0
      %v1273 = vpop.f32.mrb[0].mxu0
      %v1274 = vadd.f32 0.0, %v1273
      %v1275 = vpop.f32.mrb[0].mxu0
      %1276 = vmatprep.mubr.bf16.mxu0 0
      %1277 = vmatmul.mubr.bf16.gmra.mrb[0].mxu0 %v843
      %v1278 = vpop.f32.mrb[0].mxu0
      %v1279 = vadd.f32 0.0, %v1278
      %v1280 = vpop.f32.mrb[0].mxu0
      %v1281 = vpop.f32.mrb[0].mxu0
      %v1282 = vadd.f32 0.0, %v1281
      %v1283 = vpop.f32.mrb[0].mxu0
      %1284 = vmatprep.mubr.bf16.mxu0 0
      %1285 = vmatmul.mubr.bf16.gmra.mrb[0].mxu0 %v846
      %v1286 = vpop.f32.mrb[0].mxu0
      %v1287 = vadd.f32 0.0, %v1286
      %v1288 = vpop.f32.mrb[0].mxu0
      %v1289 = vpop.f32.mrb[0].mxu0
      %v1290 = vadd.f32 0.0, %v1289
      %v1291 = vpop.f32.mrb[0].mxu0
      %1292 = vmatprep.mubr.bf16.mxu0 0
      %1293 = vmatmul.mubr.bf16.gmra.mrb[0].mxu0 %v849
      %v1294 = vpop.f32.mrb[0].mxu0
      %v1295 = vadd.f32 0.0, %v1294
      %v1296 = vpop.f32.mrb[0].mxu0
      %v1297 = vpop.f32.mrb[0].mxu0
      %v1298 = vadd.f32 0.0, %v1297
      %v1299 = vpop.f32.mrb[0].mxu0
      %1300 = vmatprep.mubr.bf16.mxu0 0
      %1301 = vmatmul.mubr.bf16.gmra.mrb[0].mxu0 %v852
      %v1302 = vpop.f32.mrb[0].mxu0
      %v1303 = vadd.f32 0.0, %v1302
      %v1304 = vpop.f32.mrb[0].mxu0
      %v1305 = vpop.f32.mrb[0].mxu0
      %v1306 = vadd.f32 0.0, %v1305
      %v1307 = vpop.f32.mrb[0].mxu0
      %1308 = vmatprep.mubr.bf16.mxu0 0
      %1309 = vmatmul.mubr.bf16.gmra.mrb[0].mxu0 %v855
      %v1310 = vpop.f32.mrb[0].mxu0
      %v1311 = vadd.f32 0.0, %v1310
      %v1312 = vpop.f32.mrb[0].mxu0
      %v1313 = vpop.f32.mrb[0].mxu0
      %v1314 = vadd.f32 0.0, %v1313
      %v1315 = vpop.f32.mrb[0].mxu0
      %1316 = vmatprep.mubr.bf16.mxu0 0
      %1317 = vmatmul.mubr.bf16.gmra.mrb[0].mxu0 %v858
      %v1318 = vpop.f32.mrb[0].mxu0
      %v1319 = vadd.f32 0.0, %v1318
      %v1320 = vpop.f32.mrb[0].mxu0
      %v1321 = vpop.f32.mrb[0].mxu0
      %v1322 = vadd.f32 0.0, %v1321
      %v1323 = vpop.f32.mrb[0].mxu0
      %1324 = vmatprep.mubr.bf16.mxu0 0
      %1325 = vmatmul.mubr.bf16.gmra.mrb[0].mxu0 %v861
      %v1326 = vpop.f32.mrb[0].mxu0
      %v1327 = vadd.f32 0.0, %v1326
      %v1328 = vpop.f32.mrb[0].mxu0
      %v1329 = vpop.f32.mrb[0].mxu0
      %v1330 = vadd.f32 0.0, %v1329
      %v1331 = vpop.f32.mrb[0].mxu0
      %1332 = vmatprep.mubr.bf16.mxu0 0
      %1333 = vmatmul.mubr.bf16.gmra.mrb[0].mxu0 %v864
      %v1334 = vpop.f32.mrb[0].mxu0
      %v1335 = vadd.f32 0.0, %v1334
      %v1336 = vpop.f32.mrb[0].mxu0
      %v1337 = vpop.f32.mrb[0].mxu0
      %v1338 = vadd.f32 0.0, %v1337
      %v1339 = vpop.f32.mrb[0].mxu0
      %1340 = vmatprep.mubr.bf16.mxu0 0
      %1341 = vmatmul.mubr.bf16.gmra.mrb[0].mxu0 %v867
      %v1342 = vpop.f32.mrb[0].mxu0
      %v1343 = vadd.f32 0.0, %v1342
      %v1344 = vpop.f32.mrb[0].mxu0
      %v1345 = vpop.f32.mrb[0].mxu0
      %v1346 = vadd.f32 0.0, %v1345
      %v1347 = vpop.f32.mrb[0].mxu0
      %1348 = vmatprep.mubr.bf16.mxu0 0
      %1349 = vmatmul.mubr.bf16.gmra.mrb[0].mxu0 %v870
      %v1350 = vpop.f32.mrb[0].mxu0
      %v1351 = vadd.f32 0.0, %v1350
      %v1352 = vpop.f32.mrb[0].mxu0
      %v1353 = vpop.f32.mrb[0].mxu0
      %v1354 = vadd.f32 0.0, %v1353
      %v1355 = vpop.f32.mrb[0].mxu0
      %1356 = vmatprep.mubr.bf16.mxu0 0
      %1357 = vmatmul.mubr.bf16.gmra.mrb[0].mxu0 %v873
      %v1358 = vpop.f32.mrb[0].mxu0
      %v1359 = vadd.f32 0.0, %v1358
      %v1360 = vpop.f32.mrb[0].mxu0
      %v1361 = vpop.f32.mrb[0].mxu0
      %v1362 = vadd.f32 0.0, %v1361
      %v1363 = vpop.f32.mrb[0].mxu0
      %1364 = vmatprep.mubr.bf16.mxu0 0
      %1365 = vmatmul.mubr.bf16.gmra.mrb[0].mxu0 %v876
      %v1366 = vpop.f32.mrb[0].mxu0
      %v1367 = vadd.f32 0.0, %v1366
      %v1368 = vpop.f32.mrb[0].mxu0
      %v1369 = vpop.f32.mrb[0].mxu0
      %v1370 = vadd.f32 0.0, %v1369
      %v1371 = vpop.f32.mrb[0].mxu0
      %1372 = vmatprep.mubr.bf16.mxu0 0
      %1373 = vmatmul.mubr.bf16.gmra.mrb[0].mxu0 %v879
      %v1374 = vpop.f32.mrb[0].mxu0
      %v1375 = vadd.f32 0.0, %v1374
      %v1376 = vpop.f32.mrb[0].mxu0
      %v1377 = vpop.f32.mrb[0].mxu0
      %v1378 = vadd.f32 0.0, %v1377
      %v1379 = vpop.f32.mrb[0].mxu0
      %1380 = vmatprep.mubr.bf16.mxu0 0
      %1381 = vmatmul.mubr.bf16.gmra.mrb[0].mxu0 %v882
      %v1382 = vpop.f32.mrb[0].mxu0
      %v1383 = vadd.f32 0.0, %v1382
      %v1384 = vpop.f32.mrb[0].mxu0
      %v1385 = vpop.f32.mrb[0].mxu0
      %v1386 = vadd.f32 0.0, %v1385
      %v1387 = vpop.f32.mrb[0].mxu0
      %1388 = vmatprep.mubr.bf16.mxu0 0
      %1389 = vmatmul.mubr.bf16.gmra.mrb[0].mxu0 %v885
      %v1390 = vpop.f32.mrb[0].mxu0
      %v1391 = vadd.f32 0.0, %v1390
      %v1392 = vpop.f32.mrb[0].mxu0
      %v1393 = vpop.f32.mrb[0].mxu0
      %v1394 = vadd.f32 0.0, %v1393
      %v1395 = vpop.f32.mrb[0].mxu0
      %1396 = vmatprep.mubr.bf16.mxu0 0
      %1397 = vmatmul.mubr.bf16.gmra.mrb[0].mxu0 %v888
      %v1398 = vpop.f32.mrb[0].mxu0
      %v1399 = vadd.f32 0.0, %v1398
      %v1400 = vpop.f32.mrb[0].mxu0
      %v1401 = vpop.f32.mrb[0].mxu0
      %v1402 = vadd.f32 0.0, %v1401
      %v1403 = vpop.f32.mrb[0].mxu0
      %1404 = vmatprep.mubr.bf16.mxu0 0
      %1405 = vmatmul.mubr.bf16.gmra.mrb[0].mxu0 %v891
      %v1406 = vpop.f32.mrb[0].mxu0
      %v1407 = vadd.f32 0.0, %v1406
      %v1408 = vpop.f32.mrb[0].mxu0
      %v1409 = vpop.f32.mrb[0].mxu0
      %v1410 = vadd.f32 0.0, %v1409
      %v1411 = vpop.f32.mrb[0].mxu0
      %1412 = vdwg.mxu0
      %v1413 = vmax.f32 %v935, %v1055
      %v1414 = vmax.f32 %v1413, %v1175
      %v1415 = vmax.f32 %v1414, %v1295
      %v1416 = vmax.f32 %v938, %v1058
      %v1417 = vmax.f32 %v1416, %v1178
      %v1418 = vmax.f32 %v1417, %v1298
      %v1419 = vmax.f32 %v943, %v1063
      %v1420 = vmax.f32 %v1419, %v1183
      %v1421 = vmax.f32 %v1420, %v1303
      %v1422 = vmax.f32 %v946, %v1066
      %v1423 = vmax.f32 %v1422, %v1186
      %v1424 = vmax.f32 %v1423, %v1306
      %v1425 = vmax.f32 %v951, %v1071
      %v1426 = vmax.f32 %v1425, %v1191
      %v1427 = vmax.f32 %v1426, %v1311
      %v1428 = vmax.f32 %v954, %v1074
      %v1429 = vmax.f32 %v1428, %v1194
      %v1430 = vmax.f32 %v1429, %v1314
      %v1431 = vmax.f32 %v959, %v1079
      %v1432 = vmax.f32 %v1431, %v1199
      %v1433 = vmax.f32 %v1432, %v1319
      %v1434 = vmax.f32 %v962, %v1082
      %v1435 = vmax.f32 %v1434, %v1202
      %v1436 = vmax.f32 %v1435, %v1322
      %v1437 = vmax.f32 %v967, %v1087
      %v1438 = vmax.f32 %v1437, %v1207
      %v1439 = vmax.f32 %v1438, %v1327
      %v1440 = vmax.f32 %v970, %v1090
      %v1441 = vmax.f32 %v1440, %v1210
      %v1442 = vmax.f32 %v1441, %v1330
      %v1443 = vmax.f32 %v975, %v1095
      %v1444 = vmax.f32 %v1443, %v1215
      %v1445 = vmax.f32 %v1444, %v1335
      %v1446 = vmax.f32 %v978, %v1098
      %v1447 = vmax.f32 %v1446, %v1218
      %v1448 = vmax.f32 %v1447, %v1338
      %v1449 = vmax.f32 %v983, %v1103
      %v1450 = vmax.f32 %v1449, %v1223
      %v1451 = vmax.f32 %v1450, %v1343
      %v1452 = vmax.f32 %v986, %v1106
      %v1453 = vmax.f32 %v1452, %v1226
      %v1454 = vmax.f32 %v1453, %v1346
      %v1455 = vmax.f32 %v991, %v1111
      %v1456 = vmax.f32 %v1455, %v1231
      %v1457 = vmax.f32 %v1456, %v1351
      %v1458 = vmax.f32 %v994, %v1114
      %v1459 = vmax.f32 %v1458, %v1234
      %v1460 = vmax.f32 %v1459, %v1354
      %v1461 = vmax.f32 %v999, %v1119
      %v1462 = vmax.f32 %v1461, %v1239
      %v1463 = vmax.f32 %v1462, %v1359
      %v1464 = vmax.f32 %v1002, %v1122
      %v1465 = vmax.f32 %v1464, %v1242
      %v1466 = vmax.f32 %v1465, %v1362
      %v1467 = vmax.f32 %v1007, %v1127
      %v1468 = vmax.f32 %v1467, %v1247
      %v1469 = vmax.f32 %v1468, %v1367
      %v1470 = vmax.f32 %v1010, %v1130
      %v1471 = vmax.f32 %v1470, %v1250
      %v1472 = vmax.f32 %v1471, %v1370
      %v1473 = vmax.f32 %v1015, %v1135
      %v1474 = vmax.f32 %v1473, %v1255
      %v1475 = vmax.f32 %v1474, %v1375
      %v1476 = vmax.f32 %v1018, %v1138
      %v1477 = vmax.f32 %v1476, %v1258
      %v1478 = vmax.f32 %v1477, %v1378
      %v1479 = vmax.f32 %v1023, %v1143
      %v1480 = vmax.f32 %v1479, %v1263
      %v1481 = vmax.f32 %v1480, %v1383
      %v1482 = vmax.f32 %v1026, %v1146
      %v1483 = vmax.f32 %v1482, %v1266
      %v1484 = vmax.f32 %v1483, %v1386
      %v1485 = vmax.f32 %v1031, %v1151
      %v1486 = vmax.f32 %v1485, %v1271
      %v1487 = vmax.f32 %v1486, %v1391
      %v1488 = vmax.f32 %v1034, %v1154
      %v1489 = vmax.f32 %v1488, %v1274
      %v1490 = vmax.f32 %v1489, %v1394
      %v1491 = vmax.f32 %v1039, %v1159
      %v1492 = vmax.f32 %v1491, %v1279
      %v1493 = vmax.f32 %v1492, %v1399
      %v1494 = vmax.f32 %v1042, %v1162
      %v1495 = vmax.f32 %v1494, %v1282
      %v1496 = vmax.f32 %v1495, %v1402
      %v1497 = vmax.f32 %v1047, %v1167
      %v1498 = vmax.f32 %v1497, %v1287
      %v1499 = vmax.f32 %v1498, %v1407
      %v1500 = vmax.f32 %v1050, %v1170
      %v1501 = vmax.f32 %v1500, %v1290
      %v1502 = vmax.f32 %v1501, %v1410
      %v1503 = vld [vmem:[%s2] sm:$0x1]
      %v1505 = vlaneseq
      %v1506 = vshrl.u32 %v1505, 7
      %v1507 = vsub.s32 0, %v1506
      %v1508 = vrot.slane %v1503, %v1507
      %v1510 = vadd.f32 %v1415, %v1508
      %v1511 = vadd.f32 %v1418, %v1508
      %v1512 = vadd.f32 %v1421, %v1508
      %v1513 = vadd.f32 %v1424, %v1508
      %v1514 = vadd.f32 %v1427, %v1508
      %v1515 = vadd.f32 %v1430, %v1508
      %v1516 = vadd.f32 %v1433, %v1508
      %v1517 = vadd.f32 %v1436, %v1508
      %v1518 = vadd.f32 %v1439, %v1508
      %v1519 = vadd.f32 %v1442, %v1508
      %v1520 = vadd.f32 %v1445, %v1508
      %v1521 = vadd.f32 %v1448, %v1508
      %v1522 = vadd.f32 %v1451, %v1508
      %v1523 = vadd.f32 %v1454, %v1508
      %v1524 = vadd.f32 %v1457, %v1508
      %v1525 = vadd.f32 %v1460, %v1508
      %v1526 = vadd.f32 %v1463, %v1508
      %v1527 = vadd.f32 %v1466, %v1508
      %v1528 = vadd.f32 %v1469, %v1508
      %v1529 = vadd.f32 %v1472, %v1508
      %v1530 = vadd.f32 %v1475, %v1508
      %v1531 = vadd.f32 %v1478, %v1508
      %v1532 = vadd.f32 %v1481, %v1508
      %v1533 = vadd.f32 %v1484, %v1508
      %v1534 = vadd.f32 %v1487, %v1508
      %v1535 = vadd.f32 %v1490, %v1508
      %v1536 = vadd.f32 %v1493, %v1508
      %v1537 = vadd.f32 %v1496, %v1508
      %v1538 = vadd.f32 %v1499, %v1508
      %v1539 = vadd.f32 %v1502, %v1508
      %v1540 = vmax.f32 %v1510, 0.0
      %v1541 = vmax.f32 %v1511, 0.0
      %v1542 = vmax.f32 %v1512, 0.0
      %v1543 = vmax.f32 %v1513, 0.0
      %v1544 = vmax.f32 %v1514, 0.0
      %v1545 = vmax.f32 %v1515, 0.0
      %v1546 = vmax.f32 %v1516, 0.0
      %v1547 = vmax.f32 %v1517, 0.0
      %v1548 = vmax.f32 %v1518, 0.0
      %v1549 = vmax.f32 %v1519, 0.0
      %v1550 = vmax.f32 %v1520, 0.0
      %v1551 = vmax.f32 %v1521, 0.0
      %v1552 = vmax.f32 %v1522, 0.0
      %v1553 = vmax.f32 %v1523, 0.0
      %v1554 = vmax.f32 %v1524, 0.0
      %v1555 = vmax.f32 %v1525, 0.0
      %v1556 = vmax.f32 %v1526, 0.0
      %v1557 = vmax.f32 %v1527, 0.0
      %v1558 = vmax.f32 %v1528, 0.0
      %v1559 = vmax.f32 %v1529, 0.0
      %v1560 = vmax.f32 %v1530, 0.0
      %v1561 = vmax.f32 %v1531, 0.0
      %v1562 = vmax.f32 %v1532, 0.0
      %v1563 = vmax.f32 %v1533, 0.0
      %v1564 = vmax.f32 %v1534, 0.0
      %v1565 = vmax.f32 %v1535, 0.0
      %v1566 = vmax.f32 %v1536, 0.0
      %v1567 = vmax.f32 %v1537, 0.0
      %v1568 = vmax.f32 %v1538, 0.0
      %v1569 = vmax.f32 %v1539, 0.0
      %v1570 = vpack.c.bf16 %v1541, %v1540
      %v1571 = vpack.c.bf16 %v1543, %v1542
      %v1572 = vpack.c.bf16 %v1545, %v1544
      %v1573 = vpack.c.bf16 %v1547, %v1546
      %v1574 = vpack.c.bf16 %v1549, %v1548
      %v1575 = vpack.c.bf16 %v1551, %v1550
      %v1576 = vpack.c.bf16 %v1553, %v1552
      %v1577 = vpack.c.bf16 %v1555, %v1554
      %v1578 = vpack.c.bf16 %v1557, %v1556
      %v1579 = vpack.c.bf16 %v1559, %v1558
      %v1580 = vpack.c.bf16 %v1561, %v1560
      %v1581 = vpack.c.bf16 %v1563, %v1562
      %v1582 = vpack.c.bf16 %v1565, %v1564
      %v1583 = vpack.c.bf16 %v1567, %v1566
      %v1584 = vpack.c.bf16 %v1569, %v1568
      %1585 = vst [vmem:[#allocation2] sm:$0xff] %v1570
      %1586 = vst [vmem:[#allocation2 + $0x8] sm:$0xff] %v1571
      %1587 = vst [vmem:[#allocation2 + $0x10] sm:$0xff] %v1572
      %1588 = vst [vmem:[#allocation2 + $0x18] sm:$0xff] %v1573
      %1589 = vst [vmem:[#allocation2 + $0x20] sm:$0xff] %v1574
      %1590 = vst [vmem:[#allocation2 + $0x28] sm:$0xff] %v1575
      %1591 = vst [vmem:[#allocation2 + $0x30] sm:$0xff] %v1576
      %1592 = vst [vmem:[#allocation2 + $0x38] sm:$0xff] %v1577
      %1593 = vst [vmem:[#allocation2 + $0x40] sm:$0xff] %v1578
      %1594 = vst [vmem:[#allocation2 + $0x48] sm:$0xff] %v1579
      %1595 = vst [vmem:[#allocation2 + $0x50] sm:$0xff] %v1580
      %1596 = vst [vmem:[#allocation2 + $0x58] sm:$0xff] %v1581
      %1597 = vst [vmem:[#allocation2 + $0x60] sm:$0xff] %v1582
      %1598 = vst [vmem:[#allocation2 + $0x68] sm:$0xff] %v1583
      %1599 = vst [vmem:[#allocation2 + $0x70] sm:$0xff] %v1584
      %1600 = vst [vmem:[#allocation2 + $0x78] sm:$0xff] 0
      %v1601 = vld [vmem:[#allocation2] sm:$0xff]
      %v1602 = vld [vmem:[#allocation2 + $0x8] sm:$0xff]
      %v1603 = vld [vmem:[#allocation2 + $0x10] sm:$0xff]
      %v1604 = vld [vmem:[#allocation2 + $0x18] sm:$0xff]
      %v1605 = vld [vmem:[#allocation2 + $0x20] sm:$0xff]
      %v1606 = vld [vmem:[#allocation2 + $0x28] sm:$0xff]
      %v1607 = vld [vmem:[#allocation2 + $0x30] sm:$0xff]
      %v1608 = vld [vmem:[#allocation2 + $0x38] sm:$0xff]
      %v1609 = vld [vmem:[#allocation2 + $0x40] sm:$0xff]
      %v1610 = vld [vmem:[#allocation2 + $0x48] sm:$0xff]
      %v1611 = vld [vmem:[#allocation2 + $0x50] sm:$0xff]
      %v1612 = vld [vmem:[#allocation2 + $0x58] sm:$0xff]
      %1613 = vst [vmem:[#allocation3] sm:$0xff] %v1601
      %1614 = vst [vmem:[#allocation3 + $0x80] sm:$0xff] %v1602
      %1615 = vst [vmem:[#allocation3 + $0x100] sm:$0xff] %v1603
      %1616 = vst [vmem:[#allocation3 + $0x180] sm:$0xff] %v1604
      %1617 = vst [vmem:[#allocation3 + $0x200] sm:$0xff] %v1605
      %1618 = vst [vmem:[#allocation3 + $0x280] sm:$0xff] %v1606
      %1619 = vst [vmem:[#allocation3 + $0x300] sm:$0xff] %v1607
      %1620 = vst [vmem:[#allocation3 + $0x380] sm:$0xff] %v1608
      %1621 = vst [vmem:[#allocation3 + $0x400] sm:$0xff] %v1609
      %1622 = vst [vmem:[#allocation3 + $0x480] sm:$0xff] %v1610
      %1623 = vst [vmem:[#allocation3 + $0x500] sm:$0xff] %v1611
      %1624 = vst [vmem:[#allocation3 + $0x580] sm:$0xff] %v1612
      %v1625 = vld [vmem:[#allocation2] sm:$0xff]
      %v1626 = vld [vmem:[#allocation2 + $0x8] sm:$0xff]
      %v1627 = vld [vmem:[#allocation2 + $0x10] sm:$0xff]
      %v1628 = vld [vmem:[#allocation2 + $0x18] sm:$0xff]
      %v1629 = vld [vmem:[#allocation2 + $0x20] sm:$0xff]
      %v1630 = vld [vmem:[#allocation2 + $0x28] sm:$0xff]
      %v1631 = vld [vmem:[#allocation2 + $0x30] sm:$0xff]
      %v1632 = vld [vmem:[#allocation2 + $0x38] sm:$0xff]
      %v1633 = vld [vmem:[#allocation2 + $0x40] sm:$0xff]
      %v1634 = vld [vmem:[#allocation2 + $0x48] sm:$0xff]
      %v1635 = vld [vmem:[#allocation2 + $0x50] sm:$0xff]
      %v1636 = vld [vmem:[#allocation2 + $0x58] sm:$0xff]
      %v1637 = vld [vmem:[#allocation2 + $0x60] sm:$0x1]
      %vm1638 = vsmask.f32 7424
      %v1640 = vshrl.u32 %v1625, 16
      %v1642 = vshll.u32 %v1625, 16
      %v1644 = vrot.slane %v1642, 1
      %v1645 = vor.u32 %v1640, %v1644
      %v1647 = vshll.u32 %v1626, 16
      %v1649 = vrot.slane %v1647, 1
      %v1650 = vsel %vm1638, %v1645, %v1649
      %v1651 = vshrl.u32 %v1626, 16
      %v1653 = vor.u32 %v1651, %v1649
      %v1655 = vshll.u32 %v1627, 16
      %v1657 = vrot.slane %v1655, 1
      %v1658 = vsel %vm1638, %v1653, %v1657
      %v1659 = vshrl.u32 %v1627, 16
      %v1661 = vor.u32 %v1659, %v1657
      %v1663 = vshll.u32 %v1628, 16
      %v1665 = vrot.slane %v1663, 1
      %v1666 = vsel %vm1638, %v1661, %v1665
      %v1667 = vshrl.u32 %v1628, 16
      %v1669 = vor.u32 %v1667, %v1665
      %v1671 = vshll.u32 %v1629, 16
      %v1673 = vrot.slane %v1671, 1
      %v1674 = vsel %vm1638, %v1669, %v1673
      %v1675 = vshrl.u32 %v1629, 16
      %v1677 = vor.u32 %v1675, %v1673
      %v1679 = vshll.u32 %v1630, 16
      %v1681 = vrot.slane %v1679, 1
      %v1682 = vsel %vm1638, %v1677, %v1681
      %v1683 = vshrl.u32 %v1630, 16
      %v1685 = vor.u32 %v1683, %v1681
      %v1687 = vshll.u32 %v1631, 16
      %v1689 = vrot.slane %v1687, 1
      %v1690 = vsel %vm1638, %v1685, %v1689
      %v1691 = vshrl.u32 %v1631, 16
      %v1693 = vor.u32 %v1691, %v1689
      %v1695 = vshll.u32 %v1632, 16
      %v1697 = vrot.slane %v1695, 1
      %v1698 = vsel %vm1638, %v1693, %v1697
      %v1699 = vshrl.u32 %v1632, 16
      %v1701 = vor.u32 %v1699, %v1697
      %v1703 = vshll.u32 %v1633, 16
      %v1705 = vrot.slane %v1703, 1
      %v1706 = vsel %vm1638, %v1701, %v1705
      %v1707 = vshrl.u32 %v1633, 16
      %v1709 = vor.u32 %v1707, %v1705
      %v1711 = vshll.u32 %v1634, 16
      %v1713 = vrot.slane %v1711, 1
      %v1714 = vsel %vm1638, %v1709, %v1713
      %v1715 = vshrl.u32 %v1634, 16
      %v1717 = vor.u32 %v1715, %v1713
      %v1719 = vshll.u32 %v1635, 16
      %v1721 = vrot.slane %v1719, 1
      %v1722 = vsel %vm1638, %v1717, %v1721
      %v1723 = vshrl.u32 %v1635, 16
      %v1725 = vor.u32 %v1723, %v1721
      %v1727 = vshll.u32 %v1636, 16
      %v1729 = vrot.slane %v1727, 1
      %v1730 = vsel %vm1638, %v1725, %v1729
      %v1731 = vshrl.u32 %v1636, 16
      %v1733 = vor.u32 %v1731, %v1729
      %v1735 = vshll.u32 %v1637, 16
      %v1737 = vrot.slane %v1735, 1
      %v1738 = vsel %vm1638, %v1733, %v1737
      %1751 = vst [vmem:[#allocation3 + $0x8] sm:$0xff] %v1650
      %1752 = vst [vmem:[#allocation3 + $0x88] sm:$0xff] %v1658
      %1753 = vst [vmem:[#allocation3 + $0x108] sm:$0xff] %v1666
      %1754 = vst [vmem:[#allocation3 + $0x188] sm:$0xff] %v1674
      %1755 = vst [vmem:[#allocation3 + $0x208] sm:$0xff] %v1682
      %1756 = vst [vmem:[#allocation3 + $0x288] sm:$0xff] %v1690
      %1757 = vst [vmem:[#allocation3 + $0x308] sm:$0xff] %v1698
      %1758 = vst [vmem:[#allocation3 + $0x388] sm:$0xff] %v1706
      %1759 = vst [vmem:[#allocation3 + $0x408] sm:$0xff] %v1714
      %1760 = vst [vmem:[#allocation3 + $0x488] sm:$0xff] %v1722
      %1761 = vst [vmem:[#allocation3 + $0x508] sm:$0xff] %v1730
      %1762 = vst [vmem:[#allocation3 + $0x588] sm:$0xff] %v1738
      %v1763 = vld [vmem:[#allocation2] sm:$0xfe]
      %v1764 = vld [vmem:[#allocation2 + $0x8] sm:$0xff]
      %v1765 = vld [vmem:[#allocation2 + $0x10] sm:$0xff]
      %v1766 = vld [vmem:[#allocation2 + $0x18] sm:$0xff]
      %v1767 = vld [vmem:[#allocation2 + $0x20] sm:$0xff]
      %v1768 = vld [vmem:[#allocation2 + $0x28] sm:$0xff]
      %v1769 = vld [vmem:[#allocation2 + $0x30] sm:$0xff]
      %v1770 = vld [vmem:[#allocation2 + $0x38] sm:$0xff]
      %v1771 = vld [vmem:[#allocation2 + $0x40] sm:$0xff]
      %v1772 = vld [vmem:[#allocation2 + $0x48] sm:$0xff]
      %v1773 = vld [vmem:[#allocation2 + $0x50] sm:$0xff]
      %v1774 = vld [vmem:[#allocation2 + $0x58] sm:$0xff]
      %v1775 = vld [vmem:[#allocation2 + $0x60] sm:$0x1]
      %vm1789 = vcmask 1046528
      %v1790 = vrot.slane %v1763, 1
      %v1791 = vrot.slane %v1764, 1
      %v1792 = vsel %vm1789, %v1790, %v1791
      %v1793 = vrot.slane %v1765, 1
      %v1794 = vsel %vm1789, %v1791, %v1793
      %v1795 = vrot.slane %v1766, 1
      %v1796 = vsel %vm1789, %v1793, %v1795
      %v1797 = vrot.slane %v1767, 1
      %v1798 = vsel %vm1789, %v1795, %v1797
      %v1799 = vrot.slane %v1768, 1
      %v1800 = vsel %vm1789, %v1797, %v1799
      %v1801 = vrot.slane %v1769, 1
      %v1802 = vsel %vm1789, %v1799, %v1801
      %v1803 = vrot.slane %v1770, 1
      %v1804 = vsel %vm1789, %v1801, %v1803
      %v1805 = vrot.slane %v1771, 1
      %v1806 = vsel %vm1789, %v1803, %v1805
      %v1807 = vrot.slane %v1772, 1
      %v1808 = vsel %vm1789, %v1805, %v1807
      %v1809 = vrot.slane %v1773, 1
      %v1810 = vsel %vm1789, %v1807, %v1809
      %v1811 = vrot.slane %v1774, 1
      %v1812 = vsel %vm1789, %v1809, %v1811
      %v1813 = vrot.slane %v1775, 1
      %v1814 = vsel %vm1789, %v1811, %v1813
      %1827 = vst [vmem:[#allocation3 + $0x10] sm:$0xff] %v1792
      %1828 = vst [vmem:[#allocation3 + $0x90] sm:$0xff] %v1794
      %1829 = vst [vmem:[#allocation3 + $0x110] sm:$0xff] %v1796
      %1830 = vst [vmem:[#allocation3 + $0x190] sm:$0xff] %v1798
      %1831 = vst [vmem:[#allocation3 + $0x210] sm:$0xff] %v1800
      %1832 = vst [vmem:[#allocation3 + $0x290] sm:$0xff] %v1802
      %1833 = vst [vmem:[#allocation3 + $0x310] sm:$0xff] %v1804
      %1834 = vst [vmem:[#allocation3 + $0x390] sm:$0xff] %v1806
      %1835 = vst [vmem:[#allocation3 + $0x410] sm:$0xff] %v1808
      %1836 = vst [vmem:[#allocation3 + $0x490] sm:$0xff] %v1810
      %1837 = vst [vmem:[#allocation3 + $0x510] sm:$0xff] %v1812
      %1838 = vst [vmem:[#allocation3 + $0x590] sm:$0xff] %v1814
      %v1839 = vld [vmem:[#allocation2] sm:$0xfe]
      %v1840 = vld [vmem:[#allocation2 + $0x8] sm:$0xff]
      %v1841 = vld [vmem:[#allocation2 + $0x10] sm:$0xff]
      %v1842 = vld [vmem:[#allocation2 + $0x18] sm:$0xff]
      %v1843 = vld [vmem:[#allocation2 + $0x20] sm:$0xff]
      %v1844 = vld [vmem:[#allocation2 + $0x28] sm:$0xff]
      %v1845 = vld [vmem:[#allocation2 + $0x30] sm:$0xff]
      %v1846 = vld [vmem:[#allocation2 + $0x38] sm:$0xff]
      %v1847 = vld [vmem:[#allocation2 + $0x40] sm:$0xff]
      %v1848 = vld [vmem:[#allocation2 + $0x48] sm:$0xff]
      %v1849 = vld [vmem:[#allocation2 + $0x50] sm:$0xff]
      %v1850 = vld [vmem:[#allocation2 + $0x58] sm:$0xff]
      %v1851 = vld [vmem:[#allocation2 + $0x60] sm:$0x3]
      %vm1852 = vsmask.f32 6400
      %v1854 = vshrl.u32 %v1839, 16
      %v1856 = vrot.slane %v1854, 1
      %v1857 = vshll.u32 %v1839, 16
      %v1859 = vrot.slane %v1857, 2
      %v1860 = vor.u32 %v1856, %v1859
      %v1862 = vshrl.u32 %v1840, 16
      %v1864 = vrot.slane %v1862, 1
      %v1865 = vshll.u32 %v1840, 16
      %v1867 = vrot.slane %v1865, 2
      %v1868 = vor.u32 %v1864, %v1867
      %v1869 = vsel %vm1852, %v1860, %v1868
      %v1871 = vshrl.u32 %v1841, 16
      %v1873 = vrot.slane %v1871, 1
      %v1874 = vshll.u32 %v1841, 16
      %v1876 = vrot.slane %v1874, 2
      %v1877 = vor.u32 %v1873, %v1876
      %v1878 = vsel %vm1852, %v1868, %v1877
      %v1880 = vshrl.u32 %v1842, 16
      %v1882 = vrot.slane %v1880, 1
      %v1883 = vshll.u32 %v1842, 16
      %v1885 = vrot.slane %v1883, 2
      %v1886 = vor.u32 %v1882, %v1885
      %v1887 = vsel %vm1852, %v1877, %v1886
      %v1889 = vshrl.u32 %v1843, 16
      %v1891 = vrot.slane %v1889, 1
      %v1892 = vshll.u32 %v1843, 16
      %v1894 = vrot.slane %v1892, 2
      %v1895 = vor.u32 %v1891, %v1894
      %v1896 = vsel %vm1852, %v1886, %v1895
      %v1898 = vshrl.u32 %v1844, 16
      %v1900 = vrot.slane %v1898, 1
      %v1901 = vshll.u32 %v1844, 16
      %v1903 = vrot.slane %v1901, 2
      %v1904 = vor.u32 %v1900, %v1903
      %v1905 = vsel %vm1852, %v1895, %v1904
      %v1907 = vshrl.u32 %v1845, 16
      %v1909 = vrot.slane %v1907, 1
      %v1910 = vshll.u32 %v1845, 16
      %v1912 = vrot.slane %v1910, 2
      %v1913 = vor.u32 %v1909, %v1912
      %v1914 = vsel %vm1852, %v1904, %v1913
      %v1916 = vshrl.u32 %v1846, 16
      %v1918 = vrot.slane %v1916, 1
      %v1919 = vshll.u32 %v1846, 16
      %v1921 = vrot.slane %v1919, 2
      %v1922 = vor.u32 %v1918, %v1921
      %v1923 = vsel %vm1852, %v1913, %v1922
      %v1925 = vshrl.u32 %v1847, 16
      %v1927 = vrot.slane %v1925, 1
      %v1928 = vshll.u32 %v1847, 16
      %v1930 = vrot.slane %v1928, 2
      %v1931 = vor.u32 %v1927, %v1930
      %v1932 = vsel %vm1852, %v1922, %v1931
      %v1934 = vshrl.u32 %v1848, 16
      %v1936 = vrot.slane %v1934, 1
      %v1937 = vshll.u32 %v1848, 16
      %v1939 = vrot.slane %v1937, 2
      %v1940 = vor.u32 %v1936, %v1939
      %v1941 = vsel %vm1852, %v1931, %v1940
      %v1943 = vshrl.u32 %v1849, 16
      %v1945 = vrot.slane %v1943, 1
      %v1946 = vshll.u32 %v1849, 16
      %v1948 = vrot.slane %v1946, 2
      %v1949 = vor.u32 %v1945, %v1948
      %v1950 = vsel %vm1852, %v1940, %v1949
      %v1952 = vshrl.u32 %v1850, 16
      %v1954 = vrot.slane %v1952, 1
      %v1955 = vshll.u32 %v1850, 16
      %v1957 = vrot.slane %v1955, 2
      %v1958 = vor.u32 %v1954, %v1957
      %v1959 = vsel %vm1852, %v1949, %v1958
      %v1961 = vshrl.u32 %v1851, 16
      %v1963 = vrot.slane %v1961, 1
      %v1964 = vshll.u32 %v1851, 16
      %v1966 = vrot.slane %v1964, 2
      %v1967 = vor.u32 %v1963, %v1966
      %v1968 = vsel %vm1852, %v1958, %v1967
      %1981 = vst [vmem:[#allocation3 + $0x18] sm:$0xff] %v1869
      %1982 = vst [vmem:[#allocation3 + $0x98] sm:$0xff] %v1878
      %1983 = vst [vmem:[#allocation3 + $0x118] sm:$0xff] %v1887
      %1984 = vst [vmem:[#allocation3 + $0x198] sm:$0xff] %v1896
      %1985 = vst [vmem:[#allocation3 + $0x218] sm:$0xff] %v1905
      %1986 = vst [vmem:[#allocation3 + $0x298] sm:$0xff] %v1914
      %1987 = vst [vmem:[#allocation3 + $0x318] sm:$0xff] %v1923
      %1988 = vst [vmem:[#allocation3 + $0x398] sm:$0xff] %v1932
      %1989 = vst [vmem:[#allocation3 + $0x418] sm:$0xff] %v1941
      %1990 = vst [vmem:[#allocation3 + $0x498] sm:$0xff] %v1950
      %1991 = vst [vmem:[#allocation3 + $0x518] sm:$0xff] %v1959
      %1992 = vst [vmem:[#allocation3 + $0x598] sm:$0xff] %v1968
      %v1993 = vld [vmem:[#allocation2 + $0x8] sm:$0xff]
      %v1994 = vld [vmem:[#allocation2 + $0x10] sm:$0xff]
      %v1995 = vld [vmem:[#allocation2 + $0x18] sm:$0xff]
      %v1996 = vld [vmem:[#allocation2 + $0x20] sm:$0xff]
      %v1997 = vld [vmem:[#allocation2 + $0x28] sm:$0xff]
      %v1998 = vld [vmem:[#allocation2 + $0x30] sm:$0xff]
      %v1999 = vld [vmem:[#allocation2 + $0x38] sm:$0xff]
      %v2000 = vld [vmem:[#allocation2 + $0x40] sm:$0xff]
      %v2001 = vld [vmem:[#allocation2 + $0x48] sm:$0xff]
      %v2002 = vld [vmem:[#allocation2 + $0x50] sm:$0xff]
      %v2003 = vld [vmem:[#allocation2 + $0x58] sm:$0xff]
      %v2004 = vld [vmem:[#allocation2 + $0x60] sm:$0xff]
      %2005 = vst [vmem:[#allocation3 + $0x20] sm:$0xff] %v1993
      %2006 = vst [vmem:[#allocation3 + $0xa0] sm:$0xff] %v1994
      %2007 = vst [vmem:[#allocation3 + $0x120] sm:$0xff] %v1995
      %2008 = vst [vmem:[#allocation3 + $0x1a0] sm:$0xff] %v1996
      %2009 = vst [vmem:[#allocation3 + $0x220] sm:$0xff] %v1997
      %2010 = vst [vmem:[#allocation3 + $0x2a0] sm:$0xff] %v1998
      %2011 = vst [vmem:[#allocation3 + $0x320] sm:$0xff] %v1999
      %2012 = vst [vmem:[#allocation3 + $0x3a0] sm:$0xff] %v2000
      %2013 = vst [vmem:[#allocation3 + $0x420] sm:$0xff] %v2001
      %2014 = vst [vmem:[#allocation3 + $0x4a0] sm:$0xff] %v2002
      %2015 = vst [vmem:[#allocation3 + $0x520] sm:$0xff] %v2003
      %2016 = vst [vmem:[#allocation3 + $0x5a0] sm:$0xff] %v2004
      %v2017 = vld [vmem:[#allocation2 + $0x8] sm:$0xff]
      %v2018 = vld [vmem:[#allocation2 + $0x10] sm:$0xff]
      %v2019 = vld [vmem:[#allocation2 + $0x18] sm:$0xff]
      %v2020 = vld [vmem:[#allocation2 + $0x20] sm:$0xff]
      %v2021 = vld [vmem:[#allocation2 + $0x28] sm:$0xff]
      %v2022 = vld [vmem:[#allocation2 + $0x30] sm:$0xff]
      %v2023 = vld [vmem:[#allocation2 + $0x38] sm:$0xff]
      %v2024 = vld [vmem:[#allocation2 + $0x40] sm:$0xff]
      %v2025 = vld [vmem:[#allocation2 + $0x48] sm:$0xff]
      %v2026 = vld [vmem:[#allocation2 + $0x50] sm:$0xff]
      %v2027 = vld [vmem:[#allocation2 + $0x58] sm:$0xff]
      %v2028 = vld [vmem:[#allocation2 + $0x60] sm:$0xff]
      %v2029 = vld [vmem:[#allocation2 + $0x68] sm:$0x1]
      %v2031 = vshrl.u32 %v2017, 16
      %v2033 = vshll.u32 %v2017, 16
      %v2035 = vrot.slane %v2033, 1
      %v2036 = vor.u32 %v2031, %v2035
      %v2038 = vshll.u32 %v2018, 16
      %v2040 = vrot.slane %v2038, 1
      %v2041 = vsel %vm1638, %v2036, %v2040
      %v2042 = vshrl.u32 %v2018, 16
      %v2044 = vor.u32 %v2042, %v2040
      %v2046 = vshll.u32 %v2019, 16
      %v2048 = vrot.slane %v2046, 1
      %v2049 = vsel %vm1638, %v2044, %v2048
      %v2050 = vshrl.u32 %v2019, 16
      %v2052 = vor.u32 %v2050, %v2048
      %v2054 = vshll.u32 %v2020, 16
      %v2056 = vrot.slane %v2054, 1
      %v2057 = vsel %vm1638, %v2052, %v2056
      %v2058 = vshrl.u32 %v2020, 16
      %v2060 = vor.u32 %v2058, %v2056
      %v2062 = vshll.u32 %v2021, 16
      %v2064 = vrot.slane %v2062, 1
      %v2065 = vsel %vm1638, %v2060, %v2064
      %v2066 = vshrl.u32 %v2021, 16
      %v2068 = vor.u32 %v2066, %v2064
      %v2070 = vshll.u32 %v2022, 16
      %v2072 = vrot.slane %v2070, 1
      %v2073 = vsel %vm1638, %v2068, %v2072
      %v2074 = vshrl.u32 %v2022, 16
      %v2076 = vor.u32 %v2074, %v2072
      %v2078 = vshll.u32 %v2023, 16
      %v2080 = vrot.slane %v2078, 1
      %v2081 = vsel %vm1638, %v2076, %v2080
      %v2082 = vshrl.u32 %v2023, 16
      %v2084 = vor.u32 %v2082, %v2080
      %v2086 = vshll.u32 %v2024, 16
      %v2088 = vrot.slane %v2086, 1
      %v2089 = vsel %vm1638, %v2084, %v2088
      %v2090 = vshrl.u32 %v2024, 16
      %v2092 = vor.u32 %v2090, %v2088
      %v2094 = vshll.u32 %v2025, 16
      %v2096 = vrot.slane %v2094, 1
      %v2097 = vsel %vm1638, %v2092, %v2096
      %v2098 = vshrl.u32 %v2025, 16
      %v2100 = vor.u32 %v2098, %v2096
      %v2102 = vshll.u32 %v2026, 16
      %v2104 = vrot.slane %v2102, 1
      %v2105 = vsel %vm1638, %v2100, %v2104
      %v2106 = vshrl.u32 %v2026, 16
      %v2108 = vor.u32 %v2106, %v2104
      %v2110 = vshll.u32 %v2027, 16
      %v2112 = vrot.slane %v2110, 1
      %v2113 = vsel %vm1638, %v2108, %v2112
      %v2114 = vshrl.u32 %v2027, 16
      %v2116 = vor.u32 %v2114, %v2112
      %v2118 = vshll.u32 %v2028, 16
      %v2120 = vrot.slane %v2118, 1
      %v2121 = vsel %vm1638, %v2116, %v2120
      %v2122 = vshrl.u32 %v2028, 16
      %v2124 = vor.u32 %v2122, %v2120
      %v2126 = vshll.u32 %v2029, 16
      %v2128 = vrot.slane %v2126, 1
      %v2129 = vsel %vm1638, %v2124, %v2128
      %2142 = vst [vmem:[#allocation3 + $0x28] sm:$0xff] %v2041
      %2143 = vst [vmem:[#allocation3 + $0xa8] sm:$0xff] %v2049
      %2144 = vst [vmem:[#allocation3 + $0x128] sm:$0xff] %v2057
      %2145 = vst [vmem:[#allocation3 + $0x1a8] sm:$0xff] %v2065
      %2146 = vst [vmem:[#allocation3 + $0x228] sm:$0xff] %v2073
      %2147 = vst [vmem:[#allocation3 + $0x2a8] sm:$0xff] %v2081
      %2148 = vst [vmem:[#allocation3 + $0x328] sm:$0xff] %v2089
      %2149 = vst [vmem:[#allocation3 + $0x3a8] sm:$0xff] %v2097
      %2150 = vst [vmem:[#allocation3 + $0x428] sm:$0xff] %v2105
      %2151 = vst [vmem:[#allocation3 + $0x4a8] sm:$0xff] %v2113
      %2152 = vst [vmem:[#allocation3 + $0x528] sm:$0xff] %v2121
      %2153 = vst [vmem:[#allocation3 + $0x5a8] sm:$0xff] %v2129
      %v2154 = vld [vmem:[#allocation2 + $0x8] sm:$0xfe]
      %v2155 = vld [vmem:[#allocation2 + $0x10] sm:$0xff]
      %v2156 = vld [vmem:[#allocation2 + $0x18] sm:$0xff]
      %v2157 = vld [vmem:[#allocation2 + $0x20] sm:$0xff]
      %v2158 = vld [vmem:[#allocation2 + $0x28] sm:$0xff]
      %v2159 = vld [vmem:[#allocation2 + $0x30] sm:$0xff]
      %v2160 = vld [vmem:[#allocation2 + $0x38] sm:$0xff]
      %v2161 = vld [vmem:[#allocation2 + $0x40] sm:$0xff]
      %v2162 = vld [vmem:[#allocation2 + $0x48] sm:$0xff]
      %v2163 = vld [vmem:[#allocation2 + $0x50] sm:$0xff]
      %v2164 = vld [vmem:[#allocation2 + $0x58] sm:$0xff]
      %v2165 = vld [vmem:[#allocation2 + $0x60] sm:$0xff]
      %v2166 = vld [vmem:[#allocation2 + $0x68] sm:$0x1]
      %v2180 = vrot.slane %v2154, 1
      %v2181 = vrot.slane %v2155, 1
      %v2182 = vsel %vm1789, %v2180, %v2181
      %v2183 = vrot.slane %v2156, 1
      %v2184 = vsel %vm1789, %v2181, %v2183
      %v2185 = vrot.slane %v2157, 1
      %v2186 = vsel %vm1789, %v2183, %v2185
      %v2187 = vrot.slane %v2158, 1
      %v2188 = vsel %vm1789, %v2185, %v2187
      %v2189 = vrot.slane %v2159, 1
      %v2190 = vsel %vm1789, %v2187, %v2189
      %v2191 = vrot.slane %v2160, 1
      %v2192 = vsel %vm1789, %v2189, %v2191
      %v2193 = vrot.slane %v2161, 1
      %v2194 = vsel %vm1789, %v2191, %v2193
      %v2195 = vrot.slane %v2162, 1
      %v2196 = vsel %vm1789, %v2193, %v2195
      %v2197 = vrot.slane %v2163, 1
      %v2198 = vsel %vm1789, %v2195, %v2197
      %v2199 = vrot.slane %v2164, 1
      %v2200 = vsel %vm1789, %v2197, %v2199
      %v2201 = vrot.slane %v2165, 1
      %v2202 = vsel %vm1789, %v2199, %v2201
      %v2203 = vrot.slane %v2166, 1
      %v2204 = vsel %vm1789, %v2201, %v2203
      %2217 = vst [vmem:[#allocation3 + $0x30] sm:$0xff] %v2182
      %2218 = vst [vmem:[#allocation3 + $0xb0] sm:$0xff] %v2184
      %2219 = vst [vmem:[#allocation3 + $0x130] sm:$0xff] %v2186
      %2220 = vst [vmem:[#allocation3 + $0x1b0] sm:$0xff] %v2188
      %2221 = vst [vmem:[#allocation3 + $0x230] sm:$0xff] %v2190
      %2222 = vst [vmem:[#allocation3 + $0x2b0] sm:$0xff] %v2192
      %2223 = vst [vmem:[#allocation3 + $0x330] sm:$0xff] %v2194
      %2224 = vst [vmem:[#allocation3 + $0x3b0] sm:$0xff] %v2196
      %2225 = vst [vmem:[#allocation3 + $0x430] sm:$0xff] %v2198
      %2226 = vst [vmem:[#allocation3 + $0x4b0] sm:$0xff] %v2200
      %2227 = vst [vmem:[#allocation3 + $0x530] sm:$0xff] %v2202
      %2228 = vst [vmem:[#allocation3 + $0x5b0] sm:$0xff] %v2204
      %v2229 = vld [vmem:[#allocation2 + $0x8] sm:$0xfe]
      %v2230 = vld [vmem:[#allocation2 + $0x10] sm:$0xff]
      %v2231 = vld [vmem:[#allocation2 + $0x18] sm:$0xff]
      %v2232 = vld [vmem:[#allocation2 + $0x20] sm:$0xff]
      %v2233 = vld [vmem:[#allocation2 + $0x28] sm:$0xff]
      %v2234 = vld [vmem:[#allocation2 + $0x30] sm:$0xff]
      %v2235 = vld [vmem:[#allocation2 + $0x38] sm:$0xff]
      %v2236 = vld [vmem:[#allocation2 + $0x40] sm:$0xff]
      %v2237 = vld [vmem:[#allocation2 + $0x48] sm:$0xff]
      %v2238 = vld [vmem:[#allocation2 + $0x50] sm:$0xff]
      %v2239 = vld [vmem:[#allocation2 + $0x58] sm:$0xff]
      %v2240 = vld [vmem:[#allocation2 + $0x60] sm:$0xff]
      %v2241 = vld [vmem:[#allocation2 + $0x68] sm:$0x3]
      %v2243 = vshrl.u32 %v2229, 16
      %v2245 = vrot.slane %v2243, 1
      %v2246 = vshll.u32 %v2229, 16
      %v2248 = vrot.slane %v2246, 2
      %v2249 = vor.u32 %v2245, %v2248
      %v2251 = vshrl.u32 %v2230, 16
      %v2253 = vrot.slane %v2251, 1
      %v2254 = vshll.u32 %v2230, 16
      %v2256 = vrot.slane %v2254, 2
      %v2257 = vor.u32 %v2253, %v2256
      %v2258 = vsel %vm1852, %v2249, %v2257
      %v2260 = vshrl.u32 %v2231, 16
      %v2262 = vrot.slane %v2260, 1
      %v2263 = vshll.u32 %v2231, 16
      %v2265 = vrot.slane %v2263, 2
      %v2266 = vor.u32 %v2262, %v2265
      %v2267 = vsel %vm1852, %v2257, %v2266
      %v2269 = vshrl.u32 %v2232, 16
      %v2271 = vrot.slane %v2269, 1
      %v2272 = vshll.u32 %v2232, 16
      %v2274 = vrot.slane %v2272, 2
      %v2275 = vor.u32 %v2271, %v2274
      %v2276 = vsel %vm1852, %v2266, %v2275
      %v2278 = vshrl.u32 %v2233, 16
      %v2280 = vrot.slane %v2278, 1
      %v2281 = vshll.u32 %v2233, 16
      %v2283 = vrot.slane %v2281, 2
      %v2284 = vor.u32 %v2280, %v2283
      %v2285 = vsel %vm1852, %v2275, %v2284
      %v2287 = vshrl.u32 %v2234, 16
      %v2289 = vrot.slane %v2287, 1
      %v2290 = vshll.u32 %v2234, 16
      %v2292 = vrot.slane %v2290, 2
      %v2293 = vor.u32 %v2289, %v2292
      %v2294 = vsel %vm1852, %v2284, %v2293
      %v2296 = vshrl.u32 %v2235, 16
      %v2298 = vrot.slane %v2296, 1
      %v2299 = vshll.u32 %v2235, 16
      %v2301 = vrot.slane %v2299, 2
      %v2302 = vor.u32 %v2298, %v2301
      %v2303 = vsel %vm1852, %v2293, %v2302
      %v2305 = vshrl.u32 %v2236, 16
      %v2307 = vrot.slane %v2305, 1
      %v2308 = vshll.u32 %v2236, 16
      %v2310 = vrot.slane %v2308, 2
      %v2311 = vor.u32 %v2307, %v2310
      %v2312 = vsel %vm1852, %v2302, %v2311
      %v2314 = vshrl.u32 %v2237, 16
      %v2316 = vrot.slane %v2314, 1
      %v2317 = vshll.u32 %v2237, 16
      %v2319 = vrot.slane %v2317, 2
      %v2320 = vor.u32 %v2316, %v2319
      %v2321 = vsel %vm1852, %v2311, %v2320
      %v2323 = vshrl.u32 %v2238, 16
      %v2325 = vrot.slane %v2323, 1
      %v2326 = vshll.u32 %v2238, 16
      %v2328 = vrot.slane %v2326, 2
      %v2329 = vor.u32 %v2325, %v2328
      %v2330 = vsel %vm1852, %v2320, %v2329
      %v2332 = vshrl.u32 %v2239, 16
      %v2334 = vrot.slane %v2332, 1
      %v2335 = vshll.u32 %v2239, 16
      %v2337 = vrot.slane %v2335, 2
      %v2338 = vor.u32 %v2334, %v2337
      %v2339 = vsel %vm1852, %v2329, %v2338
      %v2341 = vshrl.u32 %v2240, 16
      %v2343 = vrot.slane %v2341, 1
      %v2344 = vshll.u32 %v2240, 16
      %v2346 = vrot.slane %v2344, 2
      %v2347 = vor.u32 %v2343, %v2346
      %v2348 = vsel %vm1852, %v2338, %v2347
      %v2350 = vshrl.u32 %v2241, 16
      %v2352 = vrot.slane %v2350, 1
      %v2353 = vshll.u32 %v2241, 16
      %v2355 = vrot.slane %v2353, 2
      %v2356 = vor.u32 %v2352, %v2355
      %v2357 = vsel %vm1852, %v2347, %v2356
      %2370 = vst [vmem:[#allocation3 + $0x38] sm:$0xff] %v2258
      %2371 = vst [vmem:[#allocation3 + $0xb8] sm:$0xff] %v2267
      %2372 = vst [vmem:[#allocation3 + $0x138] sm:$0xff] %v2276
      %2373 = vst [vmem:[#allocation3 + $0x1b8] sm:$0xff] %v2285
      %2374 = vst [vmem:[#allocation3 + $0x238] sm:$0xff] %v2294
      %2375 = vst [vmem:[#allocation3 + $0x2b8] sm:$0xff] %v2303
      %2376 = vst [vmem:[#allocation3 + $0x338] sm:$0xff] %v2312
      %2377 = vst [vmem:[#allocation3 + $0x3b8] sm:$0xff] %v2321
      %2378 = vst [vmem:[#allocation3 + $0x438] sm:$0xff] %v2330
      %2379 = vst [vmem:[#allocation3 + $0x4b8] sm:$0xff] %v2339
      %2380 = vst [vmem:[#allocation3 + $0x538] sm:$0xff] %v2348
      %2381 = vst [vmem:[#allocation3 + $0x5b8] sm:$0xff] %v2357
      %v2382 = vld [vmem:[#allocation2 + $0x10] sm:$0xff]
      %v2383 = vld [vmem:[#allocation2 + $0x18] sm:$0xff]
      %v2384 = vld [vmem:[#allocation2 + $0x20] sm:$0xff]
      %v2385 = vld [vmem:[#allocation2 + $0x28] sm:$0xff]
      %v2386 = vld [vmem:[#allocation2 + $0x30] sm:$0xff]
      %v2387 = vld [vmem:[#allocation2 + $0x38] sm:$0xff]
      %v2388 = vld [vmem:[#allocation2 + $0x40] sm:$0xff]
      %v2389 = vld [vmem:[#allocation2 + $0x48] sm:$0xff]
      %v2390 = vld [vmem:[#allocation2 + $0x50] sm:$0xff]
      %v2391 = vld [vmem:[#allocation2 + $0x58] sm:$0xff]
      %v2392 = vld [vmem:[#allocation2 + $0x60] sm:$0xff]
      %v2393 = vld [vmem:[#allocation2 + $0x68] sm:$0xff]
      %2394 = vst [vmem:[#allocation3 + $0x40] sm:$0xff] %v2382
      %2395 = vst [vmem:[#allocation3 + $0xc0] sm:$0xff] %v2383
      %2396 = vst [vmem:[#allocation3 + $0x140] sm:$0xff] %v2384
      %2397 = vst [vmem:[#allocation3 + $0x1c0] sm:$0xff] %v2385
      %2398 = vst [vmem:[#allocation3 + $0x240] sm:$0xff] %v2386
      %2399 = vst [vmem:[#allocation3 + $0x2c0] sm:$0xff] %v2387
      %2400 = vst [vmem:[#allocation3 + $0x340] sm:$0xff] %v2388
      %2401 = vst [vmem:[#allocation3 + $0x3c0] sm:$0xff] %v2389
      %2402 = vst [vmem:[#allocation3 + $0x440] sm:$0xff] %v2390
      %2403 = vst [vmem:[#allocation3 + $0x4c0] sm:$0xff] %v2391
      %2404 = vst [vmem:[#allocation3 + $0x540] sm:$0xff] %v2392
      %2405 = vst [vmem:[#allocation3 + $0x5c0] sm:$0xff] %v2393
      %v2406 = vld [vmem:[#allocation2 + $0x10] sm:$0xff]
      %v2407 = vld [vmem:[#allocation2 + $0x18] sm:$0xff]
      %v2408 = vld [vmem:[#allocation2 + $0x20] sm:$0xff]
      %v2409 = vld [vmem:[#allocation2 + $0x28] sm:$0xff]
      %v2410 = vld [vmem:[#allocation2 + $0x30] sm:$0xff]
      %v2411 = vld [vmem:[#allocation2 + $0x38] sm:$0xff]
      %v2412 = vld [vmem:[#allocation2 + $0x40] sm:$0xff]
      %v2413 = vld [vmem:[#allocation2 + $0x48] sm:$0xff]
      %v2414 = vld [vmem:[#allocation2 + $0x50] sm:$0xff]
      %v2415 = vld [vmem:[#allocation2 + $0x58] sm:$0xff]
      %v2416 = vld [vmem:[#allocation2 + $0x60] sm:$0xff]
      %v2417 = vld [vmem:[#allocation2 + $0x68] sm:$0xff]
      %v2418 = vld [vmem:[#allocation2 + $0x70] sm:$0x1]
      %v2420 = vshrl.u32 %v2406, 16
      %v2422 = vshll.u32 %v2406, 16
      %v2424 = vrot.slane %v2422, 1
      %v2425 = vor.u32 %v2420, %v2424
      %v2427 = vshll.u32 %v2407, 16
      %v2429 = vrot.slane %v2427, 1
      %v2430 = vsel %vm1638, %v2425, %v2429
      %v2431 = vshrl.u32 %v2407, 16
      %v2433 = vor.u32 %v2431, %v2429
      %v2435 = vshll.u32 %v2408, 16
      %v2437 = vrot.slane %v2435, 1
      %v2438 = vsel %vm1638, %v2433, %v2437
      %v2439 = vshrl.u32 %v2408, 16
      %v2441 = vor.u32 %v2439, %v2437
      %v2443 = vshll.u32 %v2409, 16
      %v2445 = vrot.slane %v2443, 1
      %v2446 = vsel %vm1638, %v2441, %v2445
      %v2447 = vshrl.u32 %v2409, 16
      %v2449 = vor.u32 %v2447, %v2445
      %v2451 = vshll.u32 %v2410, 16
      %v2453 = vrot.slane %v2451, 1
      %v2454 = vsel %vm1638, %v2449, %v2453
      %v2455 = vshrl.u32 %v2410, 16
      %v2457 = vor.u32 %v2455, %v2453
      %v2459 = vshll.u32 %v2411, 16
      %v2461 = vrot.slane %v2459, 1
      %v2462 = vsel %vm1638, %v2457, %v2461
      %v2463 = vshrl.u32 %v2411, 16
      %v2465 = vor.u32 %v2463, %v2461
      %v2467 = vshll.u32 %v2412, 16
      %v2469 = vrot.slane %v2467, 1
      %v2470 = vsel %vm1638, %v2465, %v2469
      %v2471 = vshrl.u32 %v2412, 16
      %v2473 = vor.u32 %v2471, %v2469
      %v2475 = vshll.u32 %v2413, 16
      %v2477 = vrot.slane %v2475, 1
      %v2478 = vsel %vm1638, %v2473, %v2477
      %v2479 = vshrl.u32 %v2413, 16
      %v2481 = vor.u32 %v2479, %v2477
      %v2483 = vshll.u32 %v2414, 16
      %v2485 = vrot.slane %v2483, 1
      %v2486 = vsel %vm1638, %v2481, %v2485
      %v2487 = vshrl.u32 %v2414, 16
      %v2489 = vor.u32 %v2487, %v2485
      %v2491 = vshll.u32 %v2415, 16
      %v2493 = vrot.slane %v2491, 1
      %v2494 = vsel %vm1638, %v2489, %v2493
      %v2495 = vshrl.u32 %v2415, 16
      %v2497 = vor.u32 %v2495, %v2493
      %v2499 = vshll.u32 %v2416, 16
      %v2501 = vrot.slane %v2499, 1
      %v2502 = vsel %vm1638, %v2497, %v2501
      %v2503 = vshrl.u32 %v2416, 16
      %v2505 = vor.u32 %v2503, %v2501
      %v2507 = vshll.u32 %v2417, 16
      %v2509 = vrot.slane %v2507, 1
      %v2510 = vsel %vm1638, %v2505, %v2509
      %v2511 = vshrl.u32 %v2417, 16
      %v2513 = vor.u32 %v2511, %v2509
      %v2515 = vshll.u32 %v2418, 16
      %v2517 = vrot.slane %v2515, 1
      %v2518 = vsel %vm1638, %v2513, %v2517
      %2531 = vst [vmem:[#allocation3 + $0x48] sm:$0xff] %v2430
      %2532 = vst [vmem:[#allocation3 + $0xc8] sm:$0xff] %v2438
      %2533 = vst [vmem:[#allocation3 + $0x148] sm:$0xff] %v2446
      %2534 = vst [vmem:[#allocation3 + $0x1c8] sm:$0xff] %v2454
      %2535 = vst [vmem:[#allocation3 + $0x248] sm:$0xff] %v2462
      %2536 = vst [vmem:[#allocation3 + $0x2c8] sm:$0xff] %v2470
      %2537 = vst [vmem:[#allocation3 + $0x348] sm:$0xff] %v2478
      %2538 = vst [vmem:[#allocation3 + $0x3c8] sm:$0xff] %v2486
      %2539 = vst [vmem:[#allocation3 + $0x448] sm:$0xff] %v2494
      %2540 = vst [vmem:[#allocation3 + $0x4c8] sm:$0xff] %v2502
      %2541 = vst [vmem:[#allocation3 + $0x548] sm:$0xff] %v2510
      %2542 = vst [vmem:[#allocation3 + $0x5c8] sm:$0xff] %v2518
      %v2543 = vld [vmem:[#allocation2 + $0x10] sm:$0xfe]
      %v2544 = vld [vmem:[#allocation2 + $0x18] sm:$0xff]
      %v2545 = vld [vmem:[#allocation2 + $0x20] sm:$0xff]
      %v2546 = vld [vmem:[#allocation2 + $0x28] sm:$0xff]
      %v2547 = vld [vmem:[#allocation2 + $0x30] sm:$0xff]
      %v2548 = vld [vmem:[#allocation2 + $0x38] sm:$0xff]
      %v2549 = vld [vmem:[#allocation2 + $0x40] sm:$0xff]
      %v2550 = vld [vmem:[#allocation2 + $0x48] sm:$0xff]
      %v2551 = vld [vmem:[#allocation2 + $0x50] sm:$0xff]
      %v2552 = vld [vmem:[#allocation2 + $0x58] sm:$0xff]
      %v2553 = vld [vmem:[#allocation2 + $0x60] sm:$0xff]
      %v2554 = vld [vmem:[#allocation2 + $0x68] sm:$0xff]
      %v2555 = vld [vmem:[#allocation2 + $0x70] sm:$0x1]
      %v2569 = vrot.slane %v2543, 1
      %v2570 = vrot.slane %v2544, 1
      %v2571 = vsel %vm1789, %v2569, %v2570
      %v2572 = vrot.slane %v2545, 1
      %v2573 = vsel %vm1789, %v2570, %v2572
      %v2574 = vrot.slane %v2546, 1
      %v2575 = vsel %vm1789, %v2572, %v2574
      %v2576 = vrot.slane %v2547, 1
      %v2577 = vsel %vm1789, %v2574, %v2576
      %v2578 = vrot.slane %v2548, 1
      %v2579 = vsel %vm1789, %v2576, %v2578
      %v2580 = vrot.slane %v2549, 1
      %v2581 = vsel %vm1789, %v2578, %v2580
      %v2582 = vrot.slane %v2550, 1
      %v2583 = vsel %vm1789, %v2580, %v2582
      %v2584 = vrot.slane %v2551, 1
      %v2585 = vsel %vm1789, %v2582, %v2584
      %v2586 = vrot.slane %v2552, 1
      %v2587 = vsel %vm1789, %v2584, %v2586
      %v2588 = vrot.slane %v2553, 1
      %v2589 = vsel %vm1789, %v2586, %v2588
      %v2590 = vrot.slane %v2554, 1
      %v2591 = vsel %vm1789, %v2588, %v2590
      %v2592 = vrot.slane %v2555, 1
      %v2593 = vsel %vm1789, %v2590, %v2592
      %2606 = vst [vmem:[#allocation3 + $0x50] sm:$0xff] %v2571
      %2607 = vst [vmem:[#allocation3 + $0xd0] sm:$0xff] %v2573
      %2608 = vst [vmem:[#allocation3 + $0x150] sm:$0xff] %v2575
      %2609 = vst [vmem:[#allocation3 + $0x1d0] sm:$0xff] %v2577
      %2610 = vst [vmem:[#allocation3 + $0x250] sm:$0xff] %v2579
      %2611 = vst [vmem:[#allocation3 + $0x2d0] sm:$0xff] %v2581
      %2612 = vst [vmem:[#allocation3 + $0x350] sm:$0xff] %v2583
      %2613 = vst [vmem:[#allocation3 + $0x3d0] sm:$0xff] %v2585
      %2614 = vst [vmem:[#allocation3 + $0x450] sm:$0xff] %v2587
      %2615 = vst [vmem:[#allocation3 + $0x4d0] sm:$0xff] %v2589
      %2616 = vst [vmem:[#allocation3 + $0x550] sm:$0xff] %v2591
      %2617 = vst [vmem:[#allocation3 + $0x5d0] sm:$0xff] %v2593
      %v2618 = vld [vmem:[#allocation2 + $0x10] sm:$0xfe]
      %v2619 = vld [vmem:[#allocation2 + $0x18] sm:$0xff]
      %v2620 = vld [vmem:[#allocation2 + $0x20] sm:$0xff]
      %v2621 = vld [vmem:[#allocation2 + $0x28] sm:$0xff]
      %v2622 = vld [vmem:[#allocation2 + $0x30] sm:$0xff]
      %v2623 = vld [vmem:[#allocation2 + $0x38] sm:$0xff]
      %v2624 = vld [vmem:[#allocation2 + $0x40] sm:$0xff]
      %v2625 = vld [vmem:[#allocation2 + $0x48] sm:$0xff]
      %v2626 = vld [vmem:[#allocation2 + $0x50] sm:$0xff]
      %v2627 = vld [vmem:[#allocation2 + $0x58] sm:$0xff]
      %v2628 = vld [vmem:[#allocation2 + $0x60] sm:$0xff]
      %v2629 = vld [vmem:[#allocation2 + $0x68] sm:$0xff]
      %v2630 = vld [vmem:[#allocation2 + $0x70] sm:$0x3]
      %v2632 = vshrl.u32 %v2618, 16
      %v2634 = vrot.slane %v2632, 1
      %v2635 = vshll.u32 %v2618, 16
      %v2637 = vrot.slane %v2635, 2
      %v2638 = vor.u32 %v2634, %v2637
      %v2640 = vshrl.u32 %v2619, 16
      %v2642 = vrot.slane %v2640, 1
      %v2643 = vshll.u32 %v2619, 16
      %v2645 = vrot.slane %v2643, 2
      %v2646 = vor.u32 %v2642, %v2645
      %v2647 = vsel %vm1852, %v2638, %v2646
      %v2649 = vshrl.u32 %v2620, 16
      %v2651 = vrot.slane %v2649, 1
      %v2652 = vshll.u32 %v2620, 16
      %v2654 = vrot.slane %v2652, 2
      %v2655 = vor.u32 %v2651, %v2654
      %v2656 = vsel %vm1852, %v2646, %v2655
      %v2658 = vshrl.u32 %v2621, 16
      %v2660 = vrot.slane %v2658, 1
      %v2661 = vshll.u32 %v2621, 16
      %v2663 = vrot.slane %v2661, 2
      %v2664 = vor.u32 %v2660, %v2663
      %v2665 = vsel %vm1852, %v2655, %v2664
      %v2667 = vshrl.u32 %v2622, 16
      %v2669 = vrot.slane %v2667, 1
      %v2670 = vshll.u32 %v2622, 16
      %v2672 = vrot.slane %v2670, 2
      %v2673 = vor.u32 %v2669, %v2672
      %v2674 = vsel %vm1852, %v2664, %v2673
      %v2676 = vshrl.u32 %v2623, 16
      %v2678 = vrot.slane %v2676, 1
      %v2679 = vshll.u32 %v2623, 16
      %v2681 = vrot.slane %v2679, 2
      %v2682 = vor.u32 %v2678, %v2681
      %v2683 = vsel %vm1852, %v2673, %v2682
      %v2685 = vshrl.u32 %v2624, 16
      %v2687 = vrot.slane %v2685, 1
      %v2688 = vshll.u32 %v2624, 16
      %v2690 = vrot.slane %v2688, 2
      %v2691 = vor.u32 %v2687, %v2690
      %v2692 = vsel %vm1852, %v2682, %v2691
      %v2694 = vshrl.u32 %v2625, 16
      %v2696 = vrot.slane %v2694, 1
      %v2697 = vshll.u32 %v2625, 16
      %v2699 = vrot.slane %v2697, 2
      %v2700 = vor.u32 %v2696, %v2699
      %v2701 = vsel %vm1852, %v2691, %v2700
      %v2703 = vshrl.u32 %v2626, 16
      %v2705 = vrot.slane %v2703, 1
      %v2706 = vshll.u32 %v2626, 16
      %v2708 = vrot.slane %v2706, 2
      %v2709 = vor.u32 %v2705, %v2708
      %v2710 = vsel %vm1852, %v2700, %v2709
      %v2712 = vshrl.u32 %v2627, 16
      %v2714 = vrot.slane %v2712, 1
      %v2715 = vshll.u32 %v2627, 16
      %v2717 = vrot.slane %v2715, 2
      %v2718 = vor.u32 %v2714, %v2717
      %v2719 = vsel %vm1852, %v2709, %v2718
      %v2721 = vshrl.u32 %v2628, 16
      %v2723 = vrot.slane %v2721, 1
      %v2724 = vshll.u32 %v2628, 16
      %v2726 = vrot.slane %v2724, 2
      %v2727 = vor.u32 %v2723, %v2726
      %v2728 = vsel %vm1852, %v2718, %v2727
      %v2730 = vshrl.u32 %v2629, 16
      %v2732 = vrot.slane %v2730, 1
      %v2733 = vshll.u32 %v2629, 16
      %v2735 = vrot.slane %v2733, 2
      %v2736 = vor.u32 %v2732, %v2735
      %v2737 = vsel %vm1852, %v2727, %v2736
      %v2739 = vshrl.u32 %v2630, 16
      %v2741 = vrot.slane %v2739, 1
      %v2742 = vshll.u32 %v2630, 16
      %v2744 = vrot.slane %v2742, 2
      %v2745 = vor.u32 %v2741, %v2744
      %v2746 = vsel %vm1852, %v2736, %v2745
      %2759 = vst [vmem:[#allocation3 + $0x58] sm:$0xff] %v2647
      %2760 = vst [vmem:[#allocation3 + $0xd8] sm:$0xff] %v2656
      %2761 = vst [vmem:[#allocation3 + $0x158] sm:$0xff] %v2665
      %2762 = vst [vmem:[#allocation3 + $0x1d8] sm:$0xff] %v2674
      %2763 = vst [vmem:[#allocation3 + $0x258] sm:$0xff] %v2683
      %2764 = vst [vmem:[#allocation3 + $0x2d8] sm:$0xff] %v2692
      %2765 = vst [vmem:[#allocation3 + $0x358] sm:$0xff] %v2701
      %2766 = vst [vmem:[#allocation3 + $0x3d8] sm:$0xff] %v2710
      %2767 = vst [vmem:[#allocation3 + $0x458] sm:$0xff] %v2719
      %2768 = vst [vmem:[#allocation3 + $0x4d8] sm:$0xff] %v2728
      %2769 = vst [vmem:[#allocation3 + $0x558] sm:$0xff] %v2737
      %2770 = vst [vmem:[#allocation3 + $0x5d8] sm:$0xff] %v2746
      %v2771 = vld [vmem:[#allocation2 + $0x18] sm:$0xff]
      %v2772 = vld [vmem:[#allocation2 + $0x20] sm:$0xff]
      %v2773 = vld [vmem:[#allocation2 + $0x28] sm:$0xff]
      %v2774 = vld [vmem:[#allocation2 + $0x30] sm:$0xff]
      %v2775 = vld [vmem:[#allocation2 + $0x38] sm:$0xff]
      %v2776 = vld [vmem:[#allocation2 + $0x40] sm:$0xff]
      %v2777 = vld [vmem:[#allocation2 + $0x48] sm:$0xff]
      %v2778 = vld [vmem:[#allocation2 + $0x50] sm:$0xff]
      %v2779 = vld [vmem:[#allocation2 + $0x58] sm:$0xff]
      %v2780 = vld [vmem:[#allocation2 + $0x60] sm:$0xff]
      %v2781 = vld [vmem:[#allocation2 + $0x68] sm:$0xff]
      %v2782 = vld [vmem:[#allocation2 + $0x70] sm:$0xff]
      %2783 = vst [vmem:[#allocation3 + $0x60] sm:$0xff] %v2771
      %2784 = vst [vmem:[#allocation3 + $0xe0] sm:$0xff] %v2772
      %2785 = vst [vmem:[#allocation3 + $0x160] sm:$0xff] %v2773
      %2786 = vst [vmem:[#allocation3 + $0x1e0] sm:$0xff] %v2774
      %2787 = vst [vmem:[#allocation3 + $0x260] sm:$0xff] %v2775
      %2788 = vst [vmem:[#allocation3 + $0x2e0] sm:$0xff] %v2776
      %2789 = vst [vmem:[#allocation3 + $0x360] sm:$0xff] %v2777
      %2790 = vst [vmem:[#allocation3 + $0x3e0] sm:$0xff] %v2778
      %2791 = vst [vmem:[#allocation3 + $0x460] sm:$0xff] %v2779
      %2792 = vst [vmem:[#allocation3 + $0x4e0] sm:$0xff] %v2780
      %2793 = vst [vmem:[#allocation3 + $0x560] sm:$0xff] %v2781
      %2794 = vst [vmem:[#allocation3 + $0x5e0] sm:$0xff] %v2782
      %v2795 = vld [vmem:[#allocation2 + $0x18] sm:$0xff]
      %v2796 = vld [vmem:[#allocation2 + $0x20] sm:$0xff]
      %v2797 = vld [vmem:[#allocation2 + $0x28] sm:$0xff]
      %v2798 = vld [vmem:[#allocation2 + $0x30] sm:$0xff]
      %v2799 = vld [vmem:[#allocation2 + $0x38] sm:$0xff]
      %v2800 = vld [vmem:[#allocation2 + $0x40] sm:$0xff]
      %v2801 = vld [vmem:[#allocation2 + $0x48] sm:$0xff]
      %v2802 = vld [vmem:[#allocation2 + $0x50] sm:$0xff]
      %v2803 = vld [vmem:[#allocation2 + $0x58] sm:$0xff]
      %v2804 = vld [vmem:[#allocation2 + $0x60] sm:$0xff]
      %v2805 = vld [vmem:[#allocation2 + $0x68] sm:$0xff]
      %v2806 = vld [vmem:[#allocation2 + $0x70] sm:$0xff]
      %v2807 = vld [vmem:[#allocation2 + $0x78] sm:$0x1]
      %v2809 = vshrl.u32 %v2795, 16
      %v2811 = vshll.u32 %v2795, 16
      %v2813 = vrot.slane %v2811, 1
      %v2814 = vor.u32 %v2809, %v2813
      %v2816 = vshll.u32 %v2796, 16
      %v2818 = vrot.slane %v2816, 1
      %v2819 = vsel %vm1638, %v2814, %v2818
      %v2820 = vshrl.u32 %v2796, 16
      %v2822 = vor.u32 %v2820, %v2818
      %v2824 = vshll.u32 %v2797, 16
      %v2826 = vrot.slane %v2824, 1
      %v2827 = vsel %vm1638, %v2822, %v2826
      %v2828 = vshrl.u32 %v2797, 16
      %v2830 = vor.u32 %v2828, %v2826
      %v2832 = vshll.u32 %v2798, 16
      %v2834 = vrot.slane %v2832, 1
      %v2835 = vsel %vm1638, %v2830, %v2834
      %v2836 = vshrl.u32 %v2798, 16
      %v2838 = vor.u32 %v2836, %v2834
      %v2840 = vshll.u32 %v2799, 16
      %v2842 = vrot.slane %v2840, 1
      %v2843 = vsel %vm1638, %v2838, %v2842
      %v2844 = vshrl.u32 %v2799, 16
      %v2846 = vor.u32 %v2844, %v2842
      %v2848 = vshll.u32 %v2800, 16
      %v2850 = vrot.slane %v2848, 1
      %v2851 = vsel %vm1638, %v2846, %v2850
      %v2852 = vshrl.u32 %v2800, 16
      %v2854 = vor.u32 %v2852, %v2850
      %v2856 = vshll.u32 %v2801, 16
      %v2858 = vrot.slane %v2856, 1
      %v2859 = vsel %vm1638, %v2854, %v2858
      %v2860 = vshrl.u32 %v2801, 16
      %v2862 = vor.u32 %v2860, %v2858
      %v2864 = vshll.u32 %v2802, 16
      %v2866 = vrot.slane %v2864, 1
      %v2867 = vsel %vm1638, %v2862, %v2866
      %v2868 = vshrl.u32 %v2802, 16
      %v2870 = vor.u32 %v2868, %v2866
      %v2872 = vshll.u32 %v2803, 16
      %v2874 = vrot.slane %v2872, 1
      %v2875 = vsel %vm1638, %v2870, %v2874
      %v2876 = vshrl.u32 %v2803, 16
      %v2878 = vor.u32 %v2876, %v2874
      %v2880 = vshll.u32 %v2804, 16
      %v2882 = vrot.slane %v2880, 1
      %v2883 = vsel %vm1638, %v2878, %v2882
      %v2884 = vshrl.u32 %v2804, 16
      %v2886 = vor.u32 %v2884, %v2882
      %v2888 = vshll.u32 %v2805, 16
      %v2890 = vrot.slane %v2888, 1
      %v2891 = vsel %vm1638, %v2886, %v2890
      %v2892 = vshrl.u32 %v2805, 16
      %v2894 = vor.u32 %v2892, %v2890
      %v2896 = vshll.u32 %v2806, 16
      %v2898 = vrot.slane %v2896, 1
      %v2899 = vsel %vm1638, %v2894, %v2898
      %v2900 = vshrl.u32 %v2806, 16
      %v2902 = vor.u32 %v2900, %v2898
      %v2904 = vshll.u32 %v2807, 16
      %v2906 = vrot.slane %v2904, 1
      %v2907 = vsel %vm1638, %v2902, %v2906
      %2920 = vst [vmem:[#allocation3 + $0x68] sm:$0xff] %v2819
      %2921 = vst [vmem:[#allocation3 + $0xe8] sm:$0xff] %v2827
      %2922 = vst [vmem:[#allocation3 + $0x168] sm:$0xff] %v2835
      %2923 = vst [vmem:[#allocation3 + $0x1e8] sm:$0xff] %v2843
      %2924 = vst [vmem:[#allocation3 + $0x268] sm:$0xff] %v2851
      %2925 = vst [vmem:[#allocation3 + $0x2e8] sm:$0xff] %v2859
      %2926 = vst [vmem:[#allocation3 + $0x368] sm:$0xff] %v2867
      %2927 = vst [vmem:[#allocation3 + $0x3e8] sm:$0xff] %v2875
      %2928 = vst [vmem:[#allocation3 + $0x468] sm:$0xff] %v2883
      %2929 = vst [vmem:[#allocation3 + $0x4e8] sm:$0xff] %v2891
      %2930 = vst [vmem:[#allocation3 + $0x568] sm:$0xff] %v2899
      %2931 = vst [vmem:[#allocation3 + $0x5e8] sm:$0xff] %v2907
      %v2932 = vld [vmem:[#allocation2 + $0x18] sm:$0xfe]
      %v2933 = vld [vmem:[#allocation2 + $0x20] sm:$0xff]
      %v2934 = vld [vmem:[#allocation2 + $0x28] sm:$0xff]
      %v2935 = vld [vmem:[#allocation2 + $0x30] sm:$0xff]
      %v2936 = vld [vmem:[#allocation2 + $0x38] sm:$0xff]
      %v2937 = vld [vmem:[#allocation2 + $0x40] sm:$0xff]
      %v2938 = vld [vmem:[#allocation2 + $0x48] sm:$0xff]
      %v2939 = vld [vmem:[#allocation2 + $0x50] sm:$0xff]
      %v2940 = vld [vmem:[#allocation2 + $0x58] sm:$0xff]
      %v2941 = vld [vmem:[#allocation2 + $0x60] sm:$0xff]
      %v2942 = vld [vmem:[#allocation2 + $0x68] sm:$0xff]
      %v2943 = vld [vmem:[#allocation2 + $0x70] sm:$0xff]
      %v2944 = vld [vmem:[#allocation2 + $0x78] sm:$0x1]
      %v2958 = vrot.slane %v2932, 1
      %v2959 = vrot.slane %v2933, 1
      %v2960 = vsel %vm1789, %v2958, %v2959
      %v2961 = vrot.slane %v2934, 1
      %v2962 = vsel %vm1789, %v2959, %v2961
      %v2963 = vrot.slane %v2935, 1
      %v2964 = vsel %vm1789, %v2961, %v2963
      %v2965 = vrot.slane %v2936, 1
      %v2966 = vsel %vm1789, %v2963, %v2965
      %v2967 = vrot.slane %v2937, 1
      %v2968 = vsel %vm1789, %v2965, %v2967
      %v2969 = vrot.slane %v2938, 1
      %v2970 = vsel %vm1789, %v2967, %v2969
      %v2971 = vrot.slane %v2939, 1
      %v2972 = vsel %vm1789, %v2969, %v2971
      %v2973 = vrot.slane %v2940, 1
      %v2974 = vsel %vm1789, %v2971, %v2973
      %v2975 = vrot.slane %v2941, 1
      %v2976 = vsel %vm1789, %v2973, %v2975
      %v2977 = vrot.slane %v2942, 1
      %v2978 = vsel %vm1789, %v2975, %v2977
      %v2979 = vrot.slane %v2943, 1
      %v2980 = vsel %vm1789, %v2977, %v2979
      %v2981 = vrot.slane %v2944, 1
      %v2982 = vsel %vm1789, %v2979, %v2981
      %2995 = vst [vmem:[#allocation3 + $0x70] sm:$0xff] %v2960
      %2996 = vst [vmem:[#allocation3 + $0xf0] sm:$0xff] %v2962
      %2997 = vst [vmem:[#allocation3 + $0x170] sm:$0xff] %v2964
      %2998 = vst [vmem:[#allocation3 + $0x1f0] sm:$0xff] %v2966
      %2999 = vst [vmem:[#allocation3 + $0x270] sm:$0xff] %v2968
      %3000 = vst [vmem:[#allocation3 + $0x2f0] sm:$0xff] %v2970
      %3001 = vst [vmem:[#allocation3 + $0x370] sm:$0xff] %v2972
      %3002 = vst [vmem:[#allocation3 + $0x3f0] sm:$0xff] %v2974
      %3003 = vst [vmem:[#allocation3 + $0x470] sm:$0xff] %v2976
      %3004 = vst [vmem:[#allocation3 + $0x4f0] sm:$0xff] %v2978
      %3005 = vst [vmem:[#allocation3 + $0x570] sm:$0xff] %v2980
      %3006 = vst [vmem:[#allocation3 + $0x5f0] sm:$0xff] %v2982
      %v3007 = vld [vmem:[#allocation2 + $0x18] sm:$0xfe]
      %v3008 = vld [vmem:[#allocation2 + $0x20] sm:$0xff]
      %v3009 = vld [vmem:[#allocation2 + $0x28] sm:$0xff]
      %v3010 = vld [vmem:[#allocation2 + $0x30] sm:$0xff]
      %v3011 = vld [vmem:[#allocation2 + $0x38] sm:$0xff]
      %v3012 = vld [vmem:[#allocation2 + $0x40] sm:$0xff]
      %v3013 = vld [vmem:[#allocation2 + $0x48] sm:$0xff]
      %v3014 = vld [vmem:[#allocation2 + $0x50] sm:$0xff]
      %v3015 = vld [vmem:[#allocation2 + $0x58] sm:$0xff]
      %v3016 = vld [vmem:[#allocation2 + $0x60] sm:$0xff]
      %v3017 = vld [vmem:[#allocation2 + $0x68] sm:$0xff]
      %v3018 = vld [vmem:[#allocation2 + $0x70] sm:$0xff]
      %v3019 = vld [vmem:[#allocation2 + $0x78] sm:$0x3]
      %v3021 = vshrl.u32 %v3007, 16
      %v3023 = vrot.slane %v3021, 1
      %v3024 = vshll.u32 %v3007, 16
      %v3026 = vrot.slane %v3024, 2
      %v3027 = vor.u32 %v3023, %v3026
      %v3029 = vshrl.u32 %v3008, 16
      %v3031 = vrot.slane %v3029, 1
      %v3032 = vshll.u32 %v3008, 16
      %v3034 = vrot.slane %v3032, 2
      %v3035 = vor.u32 %v3031, %v3034
      %v3036 = vsel %vm1852, %v3027, %v3035
      %v3038 = vshrl.u32 %v3009, 16
      %v3040 = vrot.slane %v3038, 1
      %v3041 = vshll.u32 %v3009, 16
      %v3043 = vrot.slane %v3041, 2
      %v3044 = vor.u32 %v3040, %v3043
      %v3045 = vsel %vm1852, %v3035, %v3044
      %v3047 = vshrl.u32 %v3010, 16
      %v3049 = vrot.slane %v3047, 1
      %v3050 = vshll.u32 %v3010, 16
      %v3052 = vrot.slane %v3050, 2
      %v3053 = vor.u32 %v3049, %v3052
      %v3054 = vsel %vm1852, %v3044, %v3053
      %v3056 = vshrl.u32 %v3011, 16
      %v3058 = vrot.slane %v3056, 1
      %v3059 = vshll.u32 %v3011, 16
      %v3061 = vrot.slane %v3059, 2
      %v3062 = vor.u32 %v3058, %v3061
      %v3063 = vsel %vm1852, %v3053, %v3062
      %v3065 = vshrl.u32 %v3012, 16
      %v3067 = vrot.slane %v3065, 1
      %v3068 = vshll.u32 %v3012, 16
      %v3070 = vrot.slane %v3068, 2
      %v3071 = vor.u32 %v3067, %v3070
      %v3072 = vsel %vm1852, %v3062, %v3071
      %v3074 = vshrl.u32 %v3013, 16
      %v3076 = vrot.slane %v3074, 1
      %v3077 = vshll.u32 %v3013, 16
      %v3079 = vrot.slane %v3077, 2
      %v3080 = vor.u32 %v3076, %v3079
      %v3081 = vsel %vm1852, %v3071, %v3080
      %v3083 = vshrl.u32 %v3014, 16
      %v3085 = vrot.slane %v3083, 1
      %v3086 = vshll.u32 %v3014, 16
      %v3088 = vrot.slane %v3086, 2
      %v3089 = vor.u32 %v3085, %v3088
      %v3090 = vsel %vm1852, %v3080, %v3089
      %v3092 = vshrl.u32 %v3015, 16
      %v3094 = vrot.slane %v3092, 1
      %v3095 = vshll.u32 %v3015, 16
      %v3097 = vrot.slane %v3095, 2
      %v3098 = vor.u32 %v3094, %v3097
      %v3099 = vsel %vm1852, %v3089, %v3098
      %v3101 = vshrl.u32 %v3016, 16
      %v3103 = vrot.slane %v3101, 1
      %v3104 = vshll.u32 %v3016, 16
      %v3106 = vrot.slane %v3104, 2
      %v3107 = vor.u32 %v3103, %v3106
      %v3108 = vsel %vm1852, %v3098, %v3107
      %v3110 = vshrl.u32 %v3017, 16
      %v3112 = vrot.slane %v3110, 1
      %v3113 = vshll.u32 %v3017, 16
      %v3115 = vrot.slane %v3113, 2
      %v3116 = vor.u32 %v3112, %v3115
      %v3117 = vsel %vm1852, %v3107, %v3116
      %v3119 = vshrl.u32 %v3018, 16
      %v3121 = vrot.slane %v3119, 1
      %v3122 = vshll.u32 %v3018, 16
      %v3124 = vrot.slane %v3122, 2
      %v3125 = vor.u32 %v3121, %v3124
      %v3126 = vsel %vm1852, %v3116, %v3125
      %v3128 = vshrl.u32 %v3019, 16
      %v3130 = vrot.slane %v3128, 1
      %v3131 = vshll.u32 %v3019, 16
      %v3133 = vrot.slane %v3131, 2
      %v3134 = vor.u32 %v3130, %v3133
      %v3135 = vsel %vm1852, %v3125, %v3134
      %3148 = vst [vmem:[#allocation3 + $0x78] sm:$0xff] %v3036
      %3149 = vst [vmem:[#allocation3 + $0xf8] sm:$0xff] %v3045
      %3150 = vst [vmem:[#allocation3 + $0x178] sm:$0xff] %v3054
      %3151 = vst [vmem:[#allocation3 + $0x1f8] sm:$0xff] %v3063
      %3152 = vst [vmem:[#allocation3 + $0x278] sm:$0xff] %v3072
      %3153 = vst [vmem:[#allocation3 + $0x2f8] sm:$0xff] %v3081
      %3154 = vst [vmem:[#allocation3 + $0x378] sm:$0xff] %v3090
      %3155 = vst [vmem:[#allocation3 + $0x3f8] sm:$0xff] %v3099
      %3156 = vst [vmem:[#allocation3 + $0x478] sm:$0xff] %v3108
      %3157 = vst [vmem:[#allocation3 + $0x4f8] sm:$0xff] %v3117
      %3158 = vst [vmem:[#allocation3 + $0x578] sm:$0xff] %v3126
      %3159 = vst [vmem:[#allocation3 + $0x5f8] sm:$0xff] %v3135
      %v3160 = vld [vmem:[#allocation3] sm:$0xff]
      %v3161 = vld [vmem:[#allocation3 + $0x8] sm:$0xff]
      %v3162 = vld [vmem:[#allocation3 + $0x10] sm:$0xff]
      %v3163 = vld [vmem:[#allocation3 + $0x18] sm:$0xff]
      %v3164 = vld [vmem:[#allocation3 + $0x20] sm:$0xff]
      %v3165 = vld [vmem:[#allocation3 + $0x28] sm:$0xff]
      %v3166 = vld [vmem:[#allocation3 + $0x30] sm:$0xff]
      %v3167 = vld [vmem:[#allocation3 + $0x38] sm:$0xff]
      %v3168 = vld [vmem:[#allocation3 + $0x40] sm:$0xff]
      %v3169 = vld [vmem:[#allocation3 + $0x48] sm:$0xff]
      %v3170 = vld [vmem:[#allocation3 + $0x50] sm:$0xff]
      %v3171 = vld [vmem:[#allocation3 + $0x58] sm:$0xff]
      %v3172 = vld [vmem:[#allocation3 + $0x60] sm:$0xff]
      %v3173 = vld [vmem:[#allocation3 + $0x68] sm:$0xff]
      %v3174 = vld [vmem:[#allocation3 + $0x70] sm:$0xff]
      %v3175 = vld [vmem:[#allocation3 + $0x78] sm:$0xff]
      %v3176 = vld [vmem:[#allocation3 + $0x80] sm:$0xff]
      %v3177 = vld [vmem:[#allocation3 + $0x88] sm:$0xff]
      %v3178 = vld [vmem:[#allocation3 + $0x90] sm:$0xff]
      %v3179 = vld [vmem:[#allocation3 + $0x98] sm:$0xff]
      %v3180 = vld [vmem:[#allocation3 + $0xa0] sm:$0xff]
      %v3181 = vld [vmem:[#allocation3 + $0xa8] sm:$0xff]
      %v3182 = vld [vmem:[#allocation3 + $0xb0] sm:$0xff]
      %v3183 = vld [vmem:[#allocation3 + $0xb8] sm:$0xff]
      %v3184 = vld [vmem:[#allocation3 + $0xc0] sm:$0xff]
      %v3185 = vld [vmem:[#allocation3 + $0xc8] sm:$0xff]
      %v3186 = vld [vmem:[#allocation3 + $0xd0] sm:$0xff]
      %v3187 = vld [vmem:[#allocation3 + $0xd8] sm:$0xff]
      %v3188 = vld [vmem:[#allocation3 + $0xe0] sm:$0xff]
      %v3189 = vld [vmem:[#allocation3 + $0xe8] sm:$0xff]
      %v3190 = vld [vmem:[#allocation3 + $0xf0] sm:$0xff]
      %v3191 = vld [vmem:[#allocation3 + $0xf8] sm:$0xff]
      %v3192 = vld [vmem:[#allocation3 + $0x100] sm:$0xff]
      %v3193 = vld [vmem:[#allocation3 + $0x108] sm:$0xff]
      %v3194 = vld [vmem:[#allocation3 + $0x110] sm:$0xff]
      %v3195 = vld [vmem:[#allocation3 + $0x118] sm:$0xff]
      %v3196 = vld [vmem:[#allocation3 + $0x120] sm:$0xff]
      %v3197 = vld [vmem:[#allocation3 + $0x128] sm:$0xff]
      %v3198 = vld [vmem:[#allocation3 + $0x130] sm:$0xff]
      %v3199 = vld [vmem:[#allocation3 + $0x138] sm:$0xff]
      %v3200 = vld [vmem:[#allocation3 + $0x140] sm:$0xff]
      %v3201 = vld [vmem:[#allocation3 + $0x148] sm:$0xff]
      %v3202 = vld [vmem:[#allocation3 + $0x150] sm:$0xff]
      %v3203 = vld [vmem:[#allocation3 + $0x158] sm:$0xff]
      %v3204 = vld [vmem:[#allocation3 + $0x160] sm:$0xff]
      %v3205 = vld [vmem:[#allocation3 + $0x168] sm:$0xff]
      %v3206 = vld [vmem:[#allocation3 + $0x170] sm:$0xff]
      %v3207 = vld [vmem:[#allocation3 + $0x178] sm:$0xff]
      %v3208 = vld [vmem:[#allocation3 + $0x180] sm:$0xff]
      %v3209 = vld [vmem:[#allocation3 + $0x188] sm:$0xff]
      %v3210 = vld [vmem:[#allocation3 + $0x190] sm:$0xff]
      %v3211 = vld [vmem:[#allocation3 + $0x198] sm:$0xff]
      %v3212 = vld [vmem:[#allocation3 + $0x1a0] sm:$0xff]
      %v3213 = vld [vmem:[#allocation3 + $0x1a8] sm:$0xff]
      %v3214 = vld [vmem:[#allocation3 + $0x1b0] sm:$0xff]
      %v3215 = vld [vmem:[#allocation3 + $0x1b8] sm:$0xff]
      %v3216 = vld [vmem:[#allocation3 + $0x1c0] sm:$0xff]
      %v3217 = vld [vmem:[#allocation3 + $0x1c8] sm:$0xff]
      %v3218 = vld [vmem:[#allocation3 + $0x1d0] sm:$0xff]
      %v3219 = vld [vmem:[#allocation3 + $0x1d8] sm:$0xff]
      %v3220 = vld [vmem:[#allocation3 + $0x1e0] sm:$0xff]
      %v3221 = vld [vmem:[#allocation3 + $0x1e8] sm:$0xff]
      %v3222 = vld [vmem:[#allocation3 + $0x1f0] sm:$0xff]
      %v3223 = vld [vmem:[#allocation3 + $0x1f8] sm:$0xff]
      %v3224 = vld [vmem:[#allocation3 + $0x200] sm:$0xff]
      %v3225 = vld [vmem:[#allocation3 + $0x208] sm:$0xff]
      %v3226 = vld [vmem:[#allocation3 + $0x210] sm:$0xff]
      %v3227 = vld [vmem:[#allocation3 + $0x218] sm:$0xff]
      %v3228 = vld [vmem:[#allocation3 + $0x220] sm:$0xff]
      %v3229 = vld [vmem:[#allocation3 + $0x228] sm:$0xff]
      %v3230 = vld [vmem:[#allocation3 + $0x230] sm:$0xff]
      %v3231 = vld [vmem:[#allocation3 + $0x238] sm:$0xff]
      %v3232 = vld [vmem:[#allocation3 + $0x240] sm:$0xff]
      %v3233 = vld [vmem:[#allocation3 + $0x248] sm:$0xff]
      %v3234 = vld [vmem:[#allocation3 + $0x250] sm:$0xff]
      %v3235 = vld [vmem:[#allocation3 + $0x258] sm:$0xff]
      %v3236 = vld [vmem:[#allocation3 + $0x260] sm:$0xff]
      %v3237 = vld [vmem:[#allocation3 + $0x268] sm:$0xff]
      %v3238 = vld [vmem:[#allocation3 + $0x270] sm:$0xff]
      %v3239 = vld [vmem:[#allocation3 + $0x278] sm:$0xff]
      %v3240 = vld [vmem:[#allocation3 + $0x280] sm:$0xff]
      %v3241 = vld [vmem:[#allocation3 + $0x288] sm:$0xff]
      %v3242 = vld [vmem:[#allocation3 + $0x290] sm:$0xff]
      %v3243 = vld [vmem:[#allocation3 + $0x298] sm:$0xff]
      %v3244 = vld [vmem:[#allocation3 + $0x2a0] sm:$0xff]
      %v3245 = vld [vmem:[#allocation3 + $0x2a8] sm:$0xff]
      %v3246 = vld [vmem:[#allocation3 + $0x2b0] sm:$0xff]
      %v3247 = vld [vmem:[#allocation3 + $0x2b8] sm:$0xff]
      %v3248 = vld [vmem:[#allocation3 + $0x2c0] sm:$0xff]
      %v3249 = vld [vmem:[#allocation3 + $0x2c8] sm:$0xff]
      %v3250 = vld [vmem:[#allocation3 + $0x2d0] sm:$0xff]
      %v3251 = vld [vmem:[#allocation3 + $0x2d8] sm:$0xff]
      %v3252 = vld [vmem:[#allocation3 + $0x2e0] sm:$0xff]
      %v3253 = vld [vmem:[#allocation3 + $0x2e8] sm:$0xff]
      %v3254 = vld [vmem:[#allocation3 + $0x2f0] sm:$0xff]
      %v3255 = vld [vmem:[#allocation3 + $0x2f8] sm:$0xff]
      %v3256 = vld [vmem:[#allocation3 + $0x300] sm:$0xff]
      %v3257 = vld [vmem:[#allocation3 + $0x308] sm:$0xff]
      %v3258 = vld [vmem:[#allocation3 + $0x310] sm:$0xff]
      %v3259 = vld [vmem:[#allocation3 + $0x318] sm:$0xff]
      %v3260 = vld [vmem:[#allocation3 + $0x320] sm:$0xff]
      %v3261 = vld [vmem:[#allocation3 + $0x328] sm:$0xff]
      %v3262 = vld [vmem:[#allocation3 + $0x330] sm:$0xff]
      %v3263 = vld [vmem:[#allocation3 + $0x338] sm:$0xff]
      %v3264 = vld [vmem:[#allocation3 + $0x340] sm:$0xff]
      %v3265 = vld [vmem:[#allocation3 + $0x348] sm:$0xff]
      %v3266 = vld [vmem:[#allocation3 + $0x350] sm:$0xff]
      %v3267 = vld [vmem:[#allocation3 + $0x358] sm:$0xff]
      %v3268 = vld [vmem:[#allocation3 + $0x360] sm:$0xff]
      %v3269 = vld [vmem:[#allocation3 + $0x368] sm:$0xff]
      %v3270 = vld [vmem:[#allocation3 + $0x370] sm:$0xff]
      %v3271 = vld [vmem:[#allocation3 + $0x378] sm:$0xff]
      %v3272 = vld [vmem:[#allocation3 + $0x380] sm:$0xff]
      %v3273 = vld [vmem:[#allocation3 + $0x388] sm:$0xff]
      %v3274 = vld [vmem:[#allocation3 + $0x390] sm:$0xff]
      %v3275 = vld [vmem:[#allocation3 + $0x398] sm:$0xff]
      %v3276 = vld [vmem:[#allocation3 + $0x3a0] sm:$0xff]
      %v3277 = vld [vmem:[#allocation3 + $0x3a8] sm:$0xff]
      %v3278 = vld [vmem:[#allocation3 + $0x3b0] sm:$0xff]
      %v3279 = vld [vmem:[#allocation3 + $0x3b8] sm:$0xff]
      %v3280 = vld [vmem:[#allocation3 + $0x3c0] sm:$0xff]
      %v3281 = vld [vmem:[#allocation3 + $0x3c8] sm:$0xff]
      %v3282 = vld [vmem:[#allocation3 + $0x3d0] sm:$0xff]
      %v3283 = vld [vmem:[#allocation3 + $0x3d8] sm:$0xff]
      %v3284 = vld [vmem:[#allocation3 + $0x3e0] sm:$0xff]
      %v3285 = vld [vmem:[#allocation3 + $0x3e8] sm:$0xff]
      %v3286 = vld [vmem:[#allocation3 + $0x3f0] sm:$0xff]
      %v3287 = vld [vmem:[#allocation3 + $0x3f8] sm:$0xff]
      %v3288 = vld [vmem:[#allocation3 + $0x400] sm:$0xff]
      %v3289 = vld [vmem:[#allocation3 + $0x408] sm:$0xff]
      %v3290 = vld [vmem:[#allocation3 + $0x410] sm:$0xff]
      %v3291 = vld [vmem:[#allocation3 + $0x418] sm:$0xff]
      %v3292 = vld [vmem:[#allocation3 + $0x420] sm:$0xff]
      %v3293 = vld [vmem:[#allocation3 + $0x428] sm:$0xff]
      %v3294 = vld [vmem:[#allocation3 + $0x430] sm:$0xff]
      %v3295 = vld [vmem:[#allocation3 + $0x438] sm:$0xff]
      %v3296 = vld [vmem:[#allocation3 + $0x440] sm:$0xff]
      %v3297 = vld [vmem:[#allocation3 + $0x448] sm:$0xff]
      %v3298 = vld [vmem:[#allocation3 + $0x450] sm:$0xff]
      %v3299 = vld [vmem:[#allocation3 + $0x458] sm:$0xff]
      %v3300 = vld [vmem:[#allocation3 + $0x460] sm:$0xff]
      %v3301 = vld [vmem:[#allocation3 + $0x468] sm:$0xff]
      %v3302 = vld [vmem:[#allocation3 + $0x470] sm:$0xff]
      %v3303 = vld [vmem:[#allocation3 + $0x478] sm:$0xff]
      %v3304 = vld [vmem:[#allocation3 + $0x480] sm:$0xff]
      %v3305 = vld [vmem:[#allocation3 + $0x488] sm:$0xff]
      %v3306 = vld [vmem:[#allocation3 + $0x490] sm:$0xff]
      %v3307 = vld [vmem:[#allocation3 + $0x498] sm:$0xff]
      %v3308 = vld [vmem:[#allocation3 + $0x4a0] sm:$0xff]
      %v3309 = vld [vmem:[#allocation3 + $0x4a8] sm:$0xff]
      %v3310 = vld [vmem:[#allocation3 + $0x4b0] sm:$0xff]
      %v3311 = vld [vmem:[#allocation3 + $0x4b8] sm:$0xff]
      %v3312 = vld [vmem:[#allocation3 + $0x4c0] sm:$0xff]
      %v3313 = vld [vmem:[#allocation3 + $0x4c8] sm:$0xff]
      %v3314 = vld [vmem:[#allocation3 + $0x4d0] sm:$0xff]
      %v3315 = vld [vmem:[#allocation3 + $0x4d8] sm:$0xff]
      %v3316 = vld [vmem:[#allocation3 + $0x4e0] sm:$0xff]
      %v3317 = vld [vmem:[#allocation3 + $0x4e8] sm:$0xff]
      %v3318 = vld [vmem:[#allocation3 + $0x4f0] sm:$0xff]
      %v3319 = vld [vmem:[#allocation3 + $0x4f8] sm:$0xff]
      %v3320 = vld [vmem:[#allocation3 + $0x500] sm:$0xff]
      %v3321 = vld [vmem:[#allocation3 + $0x508] sm:$0xff]
      %v3322 = vld [vmem:[#allocation3 + $0x510] sm:$0xff]
      %v3323 = vld [vmem:[#allocation3 + $0x518] sm:$0xff]
      %v3324 = vld [vmem:[#allocation3 + $0x520] sm:$0xff]
      %v3325 = vld [vmem:[#allocation3 + $0x528] sm:$0xff]
      %v3326 = vld [vmem:[#allocation3 + $0x530] sm:$0xff]
      %v3327 = vld [vmem:[#allocation3 + $0x538] sm:$0xff]
      %v3328 = vld [vmem:[#allocation3 + $0x540] sm:$0xff]
      %v3329 = vld [vmem:[#allocation3 + $0x548] sm:$0xff]
      %v3330 = vld [vmem:[#allocation3 + $0x550] sm:$0xff]
      %v3331 = vld [vmem:[#allocation3 + $0x558] sm:$0xff]
      %v3332 = vld [vmem:[#allocation3 + $0x560] sm:$0xff]
      %v3333 = vld [vmem:[#allocation3 + $0x568] sm:$0xff]
      %v3334 = vld [vmem:[#allocation3 + $0x570] sm:$0xff]
      %v3335 = vld [vmem:[#allocation3 + $0x578] sm:$0xff]
      %v3336 = vld [vmem:[#allocation3 + $0x580] sm:$0xff]
      %v3337 = vld [vmem:[#allocation3 + $0x588] sm:$0xff]
      %v3338 = vld [vmem:[#allocation3 + $0x590] sm:$0xff]
      %v3339 = vld [vmem:[#allocation3 + $0x598] sm:$0xff]
      %v3340 = vld [vmem:[#allocation3 + $0x5a0] sm:$0xff]
      %v3341 = vld [vmem:[#allocation3 + $0x5a8] sm:$0xff]
      %v3342 = vld [vmem:[#allocation3 + $0x5b0] sm:$0xff]
      %v3343 = vld [vmem:[#allocation3 + $0x5b8] sm:$0xff]
      %v3344 = vld [vmem:[#allocation3 + $0x5c0] sm:$0xff]
      %v3345 = vld [vmem:[#allocation3 + $0x5c8] sm:$0xff]
      %v3346 = vld [vmem:[#allocation3 + $0x5d0] sm:$0xff]
      %v3347 = vld [vmem:[#allocation3 + $0x5d8] sm:$0xff]
      %v3348 = vld [vmem:[#allocation3 + $0x5e0] sm:$0xff]
      %v3349 = vld [vmem:[#allocation3 + $0x5e8] sm:$0xff]
      %v3350 = vld [vmem:[#allocation3 + $0x5f0] sm:$0xff]
      %v3351 = vld [vmem:[#allocation3 + $0x5f8] sm:$0xff]
      %v3352 = vld [vmem:[%s3] sm:$0xf]
      %v3353 = vld [vmem:[%s3 + $0x4] sm:$0xf]
      %v3354 = vld [vmem:[%s3 + $0x8] sm:$0xf]
      %v3355 = vld [vmem:[%s3 + $0xc] sm:$0xf]
      %v3356 = vld [vmem:[%s3 + $0x10] sm:$0xf]
      %v3357 = vld [vmem:[%s3 + $0x14] sm:$0xf]
      %v3358 = vld [vmem:[%s3 + $0x18] sm:$0xf]
      %v3359 = vld [vmem:[%s3 + $0x1c] sm:$0xf]
      %v3360 = vld [vmem:[%s3 + $0x20] sm:$0xf]
      %v3361 = vld [vmem:[%s3 + $0x24] sm:$0xf]
      %v3362 = vld [vmem:[%s3 + $0x28] sm:$0xf]
      %v3363 = vld [vmem:[%s3 + $0x2c] sm:$0xf]
      %v3364 = vld [vmem:[%s3 + $0x30] sm:$0xf]
      %v3365 = vld [vmem:[%s3 + $0x34] sm:$0xf]
      %v3366 = vld [vmem:[%s3 + $0x38] sm:$0xf]
      %v3367 = vld [vmem:[%s3 + $0x3c] sm:$0xf]
      %v3368 = vld [vmem:[%s3 + $0x40] sm:$0xf]
      %v3369 = vld [vmem:[%s3 + $0x44] sm:$0xf]
      %v3370 = vld [vmem:[%s3 + $0x48] sm:$0xf]
      %v3371 = vld [vmem:[%s3 + $0x4c] sm:$0xf]
      %v3372 = vld [vmem:[%s3 + $0x50] sm:$0xf]
      %v3373 = vld [vmem:[%s3 + $0x54] sm:$0xf]
      %v3374 = vld [vmem:[%s3 + $0x58] sm:$0xf]
      %v3375 = vld [vmem:[%s3 + $0x5c] sm:$0xf]
      %v3376 = vld [vmem:[%s3 + $0x60] sm:$0xf]
      %v3377 = vld [vmem:[%s3 + $0x64] sm:$0xf]
      %v3378 = vld [vmem:[%s3 + $0x68] sm:$0xf]
      %v3379 = vld [vmem:[%s3 + $0x6c] sm:$0xf]
      %v3380 = vld [vmem:[%s3 + $0x70] sm:$0xf]
      %v3381 = vld [vmem:[%s3 + $0x74] sm:$0xf]
      %v3382 = vld [vmem:[%s3 + $0x78] sm:$0xf]
      %v3383 = vld [vmem:[%s3 + $0x7c] sm:$0xf]
      %v3384 = vld [vmem:[%s3 + $0x80] sm:$0xf]
      %v3385 = vld [vmem:[%s3 + $0x84] sm:$0xf]
      %v3386 = vld [vmem:[%s3 + $0x88] sm:$0xf]
      %v3387 = vld [vmem:[%s3 + $0x8c] sm:$0xf]
      %v3388 = vld [vmem:[%s3 + $0x90] sm:$0xf]
      %v3389 = vld [vmem:[%s3 + $0x94] sm:$0xf]
      %v3390 = vld [vmem:[%s3 + $0x98] sm:$0xf]
      %v3391 = vld [vmem:[%s3 + $0x9c] sm:$0xf]
      %v3392 = vld [vmem:[%s3 + $0xa0] sm:$0xf]
      %v3393 = vld [vmem:[%s3 + $0xa4] sm:$0xf]
      %v3394 = vld [vmem:[%s3 + $0xa8] sm:$0xf]
      %v3395 = vld [vmem:[%s3 + $0xac] sm:$0xf]
      %v3396 = vld [vmem:[%s3 + $0xb0] sm:$0xf]
      %v3397 = vld [vmem:[%s3 + $0xb4] sm:$0xf]
      %v3398 = vld [vmem:[%s3 + $0xb8] sm:$0xf]
      %v3399 = vld [vmem:[%s3 + $0xbc] sm:$0xf]
      %v3400 = vld [vmem:[%s3 + $0xc0] sm:$0xf]
      %v3401 = vld [vmem:[%s3 + $0xc4] sm:$0xf]
      %v3402 = vld [vmem:[%s3 + $0xc8] sm:$0xf]
      %v3403 = vld [vmem:[%s3 + $0xcc] sm:$0xf]
      %v3404 = vld [vmem:[%s3 + $0xd0] sm:$0xf]
      %v3405 = vld [vmem:[%s3 + $0xd4] sm:$0xf]
      %v3406 = vld [vmem:[%s3 + $0xd8] sm:$0xf]
      %v3407 = vld [vmem:[%s3 + $0xdc] sm:$0xf]
      %v3408 = vld [vmem:[%s3 + $0xe0] sm:$0xf]
      %v3409 = vld [vmem:[%s3 + $0xe4] sm:$0xf]
      %v3410 = vld [vmem:[%s3 + $0xe8] sm:$0xf]
      %v3411 = vld [vmem:[%s3 + $0xec] sm:$0xf]
      %v3412 = vld [vmem:[%s3 + $0xf0] sm:$0xf]
      %v3413 = vld [vmem:[%s3 + $0xf4] sm:$0xf]
      %v3414 = vld [vmem:[%s3 + $0xf8] sm:$0xf]
      %v3415 = vld [vmem:[%s3 + $0xfc] sm:$0xf]
      %v3416 = vld [vmem:[%s3 + $0x100] sm:$0xf]
      %v3417 = vld [vmem:[%s3 + $0x104] sm:$0xf]
      %v3418 = vld [vmem:[%s3 + $0x108] sm:$0xf]
      %v3419 = vld [vmem:[%s3 + $0x10c] sm:$0xf]
      %v3420 = vld [vmem:[%s3 + $0x110] sm:$0xf]
      %v3421 = vld [vmem:[%s3 + $0x114] sm:$0xf]
      %v3422 = vld [vmem:[%s3 + $0x118] sm:$0xf]
      %v3423 = vld [vmem:[%s3 + $0x11c] sm:$0xf]
      %v3424 = vld [vmem:[%s3 + $0x120] sm:$0xf]
      %v3425 = vld [vmem:[%s3 + $0x124] sm:$0xf]
      %v3426 = vld [vmem:[%s3 + $0x128] sm:$0xf]
      %v3427 = vld [vmem:[%s3 + $0x12c] sm:$0xf]
      %v3428 = vld [vmem:[%s3 + $0x130] sm:$0xf]
      %v3429 = vld [vmem:[%s3 + $0x134] sm:$0xf]
      %v3430 = vld [vmem:[%s3 + $0x138] sm:$0xf]
      %v3431 = vld [vmem:[%s3 + $0x13c] sm:$0xf]
      %v3432 = vld [vmem:[%s3 + $0x140] sm:$0xf]
      %v3433 = vld [vmem:[%s3 + $0x144] sm:$0xf]
      %v3434 = vld [vmem:[%s3 + $0x148] sm:$0xf]
      %v3435 = vld [vmem:[%s3 + $0x14c] sm:$0xf]
      %v3436 = vld [vmem:[%s3 + $0x150] sm:$0xf]
      %v3437 = vld [vmem:[%s3 + $0x154] sm:$0xf]
      %v3438 = vld [vmem:[%s3 + $0x158] sm:$0xf]
      %v3439 = vld [vmem:[%s3 + $0x15c] sm:$0xf]
      %v3440 = vld [vmem:[%s3 + $0x160] sm:$0xf]
      %v3441 = vld [vmem:[%s3 + $0x164] sm:$0xf]
      %v3442 = vld [vmem:[%s3 + $0x168] sm:$0xf]
      %v3443 = vld [vmem:[%s3 + $0x16c] sm:$0xf]
      %v3444 = vld [vmem:[%s3 + $0x170] sm:$0xf]
      %v3445 = vld [vmem:[%s3 + $0x174] sm:$0xf]
      %v3446 = vld [vmem:[%s3 + $0x178] sm:$0xf]
      %v3447 = vld [vmem:[%s3 + $0x17c] sm:$0xf]
      %v3448 = vld [vmem:[%s3 + $0x180] sm:$0xf]
      %v3449 = vld [vmem:[%s3 + $0x184] sm:$0xf]
      %v3450 = vld [vmem:[%s3 + $0x188] sm:$0xf]
      %v3451 = vld [vmem:[%s3 + $0x18c] sm:$0xf]
      %v3452 = vld [vmem:[%s3 + $0x190] sm:$0xf]
      %v3453 = vld [vmem:[%s3 + $0x194] sm:$0xf]
      %v3454 = vld [vmem:[%s3 + $0x198] sm:$0xf]
      %v3455 = vld [vmem:[%s3 + $0x19c] sm:$0xf]
      %v3456 = vld [vmem:[%s3 + $0x1a0] sm:$0xf]
      %v3457 = vld [vmem:[%s3 + $0x1a4] sm:$0xf]
      %v3458 = vld [vmem:[%s3 + $0x1a8] sm:$0xf]
      %v3459 = vld [vmem:[%s3 + $0x1ac] sm:$0xf]
      %v3460 = vld [vmem:[%s3 + $0x1b0] sm:$0xf]
      %v3461 = vld [vmem:[%s3 + $0x1b4] sm:$0xf]
      %v3462 = vld [vmem:[%s3 + $0x1b8] sm:$0xf]
      %v3463 = vld [vmem:[%s3 + $0x1bc] sm:$0xf]
      %v3464 = vld [vmem:[%s3 + $0x1c0] sm:$0xf]
      %v3465 = vld [vmem:[%s3 + $0x1c4] sm:$0xf]
      %v3466 = vld [vmem:[%s3 + $0x1c8] sm:$0xf]
      %v3467 = vld [vmem:[%s3 + $0x1cc] sm:$0xf]
      %v3468 = vld [vmem:[%s3 + $0x1d0] sm:$0xf]
      %v3469 = vld [vmem:[%s3 + $0x1d4] sm:$0xf]
      %v3470 = vld [vmem:[%s3 + $0x1d8] sm:$0xf]
      %v3471 = vld [vmem:[%s3 + $0x1dc] sm:$0xf]
      %v3472 = vld [vmem:[%s3 + $0x1e0] sm:$0xf]
      %v3473 = vld [vmem:[%s3 + $0x1e4] sm:$0xf]
      %v3474 = vld [vmem:[%s3 + $0x1e8] sm:$0xf]
      %v3475 = vld [vmem:[%s3 + $0x1ec] sm:$0xf]
      %v3476 = vld [vmem:[%s3 + $0x1f0] sm:$0xf]
      %v3477 = vld [vmem:[%s3 + $0x1f4] sm:$0xf]
      %v3478 = vld [vmem:[%s3 + $0x1f8] sm:$0xf]
      %v3479 = vld [vmem:[%s3 + $0x1fc] sm:$0xf]
      %v3480 = vld [vmem:[%s3 + $0x200] sm:$0xf]
      %v3481 = vld [vmem:[%s3 + $0x204] sm:$0xf]
      %v3482 = vld [vmem:[%s3 + $0x208] sm:$0xf]
      %v3483 = vld [vmem:[%s3 + $0x20c] sm:$0xf]
      %v3484 = vld [vmem:[%s3 + $0x210] sm:$0xf]
      %v3485 = vld [vmem:[%s3 + $0x214] sm:$0xf]
      %v3486 = vld [vmem:[%s3 + $0x218] sm:$0xf]
      %v3487 = vld [vmem:[%s3 + $0x21c] sm:$0xf]
      %v3488 = vld [vmem:[%s3 + $0x220] sm:$0xf]
      %v3489 = vld [vmem:[%s3 + $0x224] sm:$0xf]
      %v3490 = vld [vmem:[%s3 + $0x228] sm:$0xf]
      %v3491 = vld [vmem:[%s3 + $0x22c] sm:$0xf]
      %v3492 = vld [vmem:[%s3 + $0x230] sm:$0xf]
      %v3493 = vld [vmem:[%s3 + $0x234] sm:$0xf]
      %v3494 = vld [vmem:[%s3 + $0x238] sm:$0xf]
      %v3495 = vld [vmem:[%s3 + $0x23c] sm:$0xf]
      %v3496 = vld [vmem:[%s3 + $0x240] sm:$0xf]
      %v3497 = vld [vmem:[%s3 + $0x244] sm:$0xf]
      %v3498 = vld [vmem:[%s3 + $0x248] sm:$0xf]
      %v3499 = vld [vmem:[%s3 + $0x24c] sm:$0xf]
      %v3500 = vld [vmem:[%s3 + $0x250] sm:$0xf]
      %v3501 = vld [vmem:[%s3 + $0x254] sm:$0xf]
      %v3502 = vld [vmem:[%s3 + $0x258] sm:$0xf]
      %v3503 = vld [vmem:[%s3 + $0x25c] sm:$0xf]
      %v3504 = vld [vmem:[%s3 + $0x260] sm:$0xf]
      %v3505 = vld [vmem:[%s3 + $0x264] sm:$0xf]
      %v3506 = vld [vmem:[%s3 + $0x268] sm:$0xf]
      %v3507 = vld [vmem:[%s3 + $0x26c] sm:$0xf]
      %v3508 = vld [vmem:[%s3 + $0x270] sm:$0xf]
      %v3509 = vld [vmem:[%s3 + $0x274] sm:$0xf]
      %v3510 = vld [vmem:[%s3 + $0x278] sm:$0xf]
      %v3511 = vld [vmem:[%s3 + $0x27c] sm:$0xf]
      %v3512 = vld [vmem:[%s3 + $0x280] sm:$0xf]
      %v3513 = vld [vmem:[%s3 + $0x284] sm:$0xf]
      %v3514 = vld [vmem:[%s3 + $0x288] sm:$0xf]
      %v3515 = vld [vmem:[%s3 + $0x28c] sm:$0xf]
      %v3516 = vld [vmem:[%s3 + $0x290] sm:$0xf]
      %v3517 = vld [vmem:[%s3 + $0x294] sm:$0xf]
      %v3518 = vld [vmem:[%s3 + $0x298] sm:$0xf]
      %v3519 = vld [vmem:[%s3 + $0x29c] sm:$0xf]
      %v3520 = vld [vmem:[%s3 + $0x2a0] sm:$0xf]
      %v3521 = vld [vmem:[%s3 + $0x2a4] sm:$0xf]
      %v3522 = vld [vmem:[%s3 + $0x2a8] sm:$0xf]
      %v3523 = vld [vmem:[%s3 + $0x2ac] sm:$0xf]
      %v3524 = vld [vmem:[%s3 + $0x2b0] sm:$0xf]
      %v3525 = vld [vmem:[%s3 + $0x2b4] sm:$0xf]
      %v3526 = vld [vmem:[%s3 + $0x2b8] sm:$0xf]
      %v3527 = vld [vmem:[%s3 + $0x2bc] sm:$0xf]
      %v3528 = vld [vmem:[%s3 + $0x2c0] sm:$0xf]
      %v3529 = vld [vmem:[%s3 + $0x2c4] sm:$0xf]
      %v3530 = vld [vmem:[%s3 + $0x2c8] sm:$0xf]
      %v3531 = vld [vmem:[%s3 + $0x2cc] sm:$0xf]
      %v3532 = vld [vmem:[%s3 + $0x2d0] sm:$0xf]
      %v3533 = vld [vmem:[%s3 + $0x2d4] sm:$0xf]
      %v3534 = vld [vmem:[%s3 + $0x2d8] sm:$0xf]
      %v3535 = vld [vmem:[%s3 + $0x2dc] sm:$0xf]
      %v3536 = vld [vmem:[%s3 + $0x2e0] sm:$0xf]
      %v3537 = vld [vmem:[%s3 + $0x2e4] sm:$0xf]
      %v3538 = vld [vmem:[%s3 + $0x2e8] sm:$0xf]
      %v3539 = vld [vmem:[%s3 + $0x2ec] sm:$0xf]
      %v3540 = vld [vmem:[%s3 + $0x2f0] sm:$0xf]
      %v3541 = vld [vmem:[%s3 + $0x2f4] sm:$0xf]
      %v3542 = vld [vmem:[%s3 + $0x2f8] sm:$0xf]
      %v3543 = vld [vmem:[%s3 + $0x2fc] sm:$0xf]
      %v3544 = vld [vmem:[%s3 + $0x300] sm:$0xf]
      %v3545 = vld [vmem:[%s3 + $0x304] sm:$0xf]
      %v3546 = vld [vmem:[%s3 + $0x308] sm:$0xf]
      %v3547 = vld [vmem:[%s3 + $0x30c] sm:$0xf]
      %v3548 = vld [vmem:[%s3 + $0x310] sm:$0xf]
      %v3549 = vld [vmem:[%s3 + $0x314] sm:$0xf]
      %v3550 = vld [vmem:[%s3 + $0x318] sm:$0xf]
      %v3551 = vld [vmem:[%s3 + $0x31c] sm:$0xf]
      %v3552 = vld [vmem:[%s3 + $0x320] sm:$0xf]
      %v3553 = vld [vmem:[%s3 + $0x324] sm:$0xf]
      %v3554 = vld [vmem:[%s3 + $0x328] sm:$0xf]
      %v3555 = vld [vmem:[%s3 + $0x32c] sm:$0xf]
      %v3556 = vld [vmem:[%s3 + $0x330] sm:$0xf]
      %v3557 = vld [vmem:[%s3 + $0x334] sm:$0xf]
      %v3558 = vld [vmem:[%s3 + $0x338] sm:$0xf]
      %v3559 = vld [vmem:[%s3 + $0x33c] sm:$0xf]
      %v3560 = vld [vmem:[%s3 + $0x340] sm:$0xf]
      %v3561 = vld [vmem:[%s3 + $0x344] sm:$0xf]
      %v3562 = vld [vmem:[%s3 + $0x348] sm:$0xf]
      %v3563 = vld [vmem:[%s3 + $0x34c] sm:$0xf]
      %v3564 = vld [vmem:[%s3 + $0x350] sm:$0xf]
      %v3565 = vld [vmem:[%s3 + $0x354] sm:$0xf]
      %v3566 = vld [vmem:[%s3 + $0x358] sm:$0xf]
      %v3567 = vld [vmem:[%s3 + $0x35c] sm:$0xf]
      %v3568 = vld [vmem:[%s3 + $0x360] sm:$0xf]
      %v3569 = vld [vmem:[%s3 + $0x364] sm:$0xf]
      %v3570 = vld [vmem:[%s3 + $0x368] sm:$0xf]
      %v3571 = vld [vmem:[%s3 + $0x36c] sm:$0xf]
      %v3572 = vld [vmem:[%s3 + $0x370] sm:$0xf]
      %v3573 = vld [vmem:[%s3 + $0x374] sm:$0xf]
      %v3574 = vld [vmem:[%s3 + $0x378] sm:$0xf]
      %v3575 = vld [vmem:[%s3 + $0x37c] sm:$0xf]
      %v3576 = vld [vmem:[%s3 + $0x380] sm:$0xf]
      %v3577 = vld [vmem:[%s3 + $0x384] sm:$0xf]
      %v3578 = vld [vmem:[%s3 + $0x388] sm:$0xf]
      %v3579 = vld [vmem:[%s3 + $0x38c] sm:$0xf]
      %v3580 = vld [vmem:[%s3 + $0x390] sm:$0xf]
      %v3581 = vld [vmem:[%s3 + $0x394] sm:$0xf]
      %v3582 = vld [vmem:[%s3 + $0x398] sm:$0xf]
      %v3583 = vld [vmem:[%s3 + $0x39c] sm:$0xf]
      %v3584 = vld [vmem:[%s3 + $0x3a0] sm:$0xf]
      %v3585 = vld [vmem:[%s3 + $0x3a4] sm:$0xf]
      %v3586 = vld [vmem:[%s3 + $0x3a8] sm:$0xf]
      %v3587 = vld [vmem:[%s3 + $0x3ac] sm:$0xf]
      %v3588 = vld [vmem:[%s3 + $0x3b0] sm:$0xf]
      %v3589 = vld [vmem:[%s3 + $0x3b4] sm:$0xf]
      %v3590 = vld [vmem:[%s3 + $0x3b8] sm:$0xf]
      %v3591 = vld [vmem:[%s3 + $0x3bc] sm:$0xf]
      %v3592 = vld [vmem:[%s3 + $0x3c0] sm:$0xf]
      %v3593 = vld [vmem:[%s3 + $0x3c4] sm:$0xf]
      %v3594 = vld [vmem:[%s3 + $0x3c8] sm:$0xf]
      %v3595 = vld [vmem:[%s3 + $0x3cc] sm:$0xf]
      %v3596 = vld [vmem:[%s3 + $0x3d0] sm:$0xf]
      %v3597 = vld [vmem:[%s3 + $0x3d4] sm:$0xf]
      %v3598 = vld [vmem:[%s3 + $0x3d8] sm:$0xf]
      %v3599 = vld [vmem:[%s3 + $0x3dc] sm:$0xf]
      %v3600 = vld [vmem:[%s3 + $0x3e0] sm:$0xf]
      %v3601 = vld [vmem:[%s3 + $0x3e4] sm:$0xf]
      %v3602 = vld [vmem:[%s3 + $0x3e8] sm:$0xf]
      %v3603 = vld [vmem:[%s3 + $0x3ec] sm:$0xf]
      %v3604 = vld [vmem:[%s3 + $0x3f0] sm:$0xf]
      %v3605 = vld [vmem:[%s3 + $0x3f4] sm:$0xf]
      %v3606 = vld [vmem:[%s3 + $0x3f8] sm:$0xf]
      %v3607 = vld [vmem:[%s3 + $0x3fc] sm:$0xf]
      %v3864 = vunpack.c.l.b16 %v3352
      %v3865 = vunpack.c.l.b16 %v3353
      %v3866 = vunpack.c.l.b16 %v3354
      %v3867 = vunpack.c.l.b16 %v3355
      %v3868 = vunpack.c.l.b16 %v3356
      %v3869 = vunpack.c.l.b16 %v3357
      %v3870 = vunpack.c.l.b16 %v3358
      %v3871 = vunpack.c.l.b16 %v3359
      %v3872 = vunpack.c.l.b16 %v3360
      %v3873 = vunpack.c.l.b16 %v3361
      %v3874 = vunpack.c.l.b16 %v3362
      %v3875 = vunpack.c.l.b16 %v3363
      %v3876 = vunpack.c.l.b16 %v3364
      %v3877 = vunpack.c.l.b16 %v3365
      %v3878 = vunpack.c.l.b16 %v3366
      %v3879 = vunpack.c.l.b16 %v3367
      %v3880 = vunpack.c.l.b16 %v3368
      %v3881 = vunpack.c.l.b16 %v3369
      %v3882 = vunpack.c.l.b16 %v3370
      %v3883 = vunpack.c.l.b16 %v3371
      %v3884 = vunpack.c.l.b16 %v3372
      %v3885 = vunpack.c.l.b16 %v3373
      %v3886 = vunpack.c.l.b16 %v3374
      %v3887 = vunpack.c.l.b16 %v3375
      %v3888 = vunpack.c.l.b16 %v3376
      %v3889 = vunpack.c.l.b16 %v3377
      %v3890 = vunpack.c.l.b16 %v3378
      %v3891 = vunpack.c.l.b16 %v3379
      %v3892 = vunpack.c.l.b16 %v3380
      %v3893 = vunpack.c.l.b16 %v3381
      %v3894 = vunpack.c.l.b16 %v3382
      %v3895 = vunpack.c.l.b16 %v3383
      %v3896 = vunpack.c.l.b16 %v3384
      %v3897 = vunpack.c.l.b16 %v3385
      %v3898 = vunpack.c.l.b16 %v3386
      %v3899 = vunpack.c.l.b16 %v3387
      %v3900 = vunpack.c.l.b16 %v3388
      %v3901 = vunpack.c.l.b16 %v3389
      %v3902 = vunpack.c.l.b16 %v3390
      %v3903 = vunpack.c.l.b16 %v3391
      %v3904 = vunpack.c.l.b16 %v3392
      %v3905 = vunpack.c.l.b16 %v3393
      %v3906 = vunpack.c.l.b16 %v3394
      %v3907 = vunpack.c.l.b16 %v3395
      %v3908 = vunpack.c.l.b16 %v3396
      %v3909 = vunpack.c.l.b16 %v3397
      %v3910 = vunpack.c.l.b16 %v3398
      %v3911 = vunpack.c.l.b16 %v3399
      %v3912 = vunpack.c.l.b16 %v3400
      %v3913 = vunpack.c.l.b16 %v3401
      %v3914 = vunpack.c.l.b16 %v3402
      %v3915 = vunpack.c.l.b16 %v3403
      %v3916 = vunpack.c.l.b16 %v3404
      %v3917 = vunpack.c.l.b16 %v3405
      %v3918 = vunpack.c.l.b16 %v3406
      %v3919 = vunpack.c.l.b16 %v3407
      %v3920 = vunpack.c.l.b16 %v3408
      %v3921 = vunpack.c.l.b16 %v3409
      %v3922 = vunpack.c.l.b16 %v3410
      %v3923 = vunpack.c.l.b16 %v3411
      %v3924 = vunpack.c.l.b16 %v3412
      %v3925 = vunpack.c.l.b16 %v3413
      %v3926 = vunpack.c.l.b16 %v3414
      %v3927 = vunpack.c.l.b16 %v3415
      %v3928 = vunpack.c.l.b16 %v3416
      %v3929 = vunpack.c.l.b16 %v3417
      %v3930 = vunpack.c.l.b16 %v3418
      %v3931 = vunpack.c.l.b16 %v3419
      %v3932 = vunpack.c.l.b16 %v3420
      %v3933 = vunpack.c.l.b16 %v3421
      %v3934 = vunpack.c.l.b16 %v3422
      %v3935 = vunpack.c.l.b16 %v3423
      %v3936 = vunpack.c.l.b16 %v3424
      %v3937 = vunpack.c.l.b16 %v3425
      %v3938 = vunpack.c.l.b16 %v3426
      %v3939 = vunpack.c.l.b16 %v3427
      %v3940 = vunpack.c.l.b16 %v3428
      %v3941 = vunpack.c.l.b16 %v3429
      %v3942 = vunpack.c.l.b16 %v3430
      %v3943 = vunpack.c.l.b16 %v3431
      %v3944 = vunpack.c.l.b16 %v3432
      %v3945 = vunpack.c.l.b16 %v3433
      %v3946 = vunpack.c.l.b16 %v3434
      %v3947 = vunpack.c.l.b16 %v3435
      %v3948 = vunpack.c.l.b16 %v3436
      %v3949 = vunpack.c.l.b16 %v3437
      %v3950 = vunpack.c.l.b16 %v3438
      %v3951 = vunpack.c.l.b16 %v3439
      %v3952 = vunpack.c.l.b16 %v3440
      %v3953 = vunpack.c.l.b16 %v3441
      %v3954 = vunpack.c.l.b16 %v3442
      %v3955 = vunpack.c.l.b16 %v3443
      %v3956 = vunpack.c.l.b16 %v3444
      %v3957 = vunpack.c.l.b16 %v3445
      %v3958 = vunpack.c.l.b16 %v3446
      %v3959 = vunpack.c.l.b16 %v3447
      %v3960 = vunpack.c.l.b16 %v3448
      %v3961 = vunpack.c.l.b16 %v3449
      %v3962 = vunpack.c.l.b16 %v3450
      %v3963 = vunpack.c.l.b16 %v3451
      %v3964 = vunpack.c.l.b16 %v3452
      %v3965 = vunpack.c.l.b16 %v3453
      %v3966 = vunpack.c.l.b16 %v3454
      %v3967 = vunpack.c.l.b16 %v3455
      %v3968 = vunpack.c.l.b16 %v3456
      %v3969 = vunpack.c.l.b16 %v3457
      %v3970 = vunpack.c.l.b16 %v3458
      %v3971 = vunpack.c.l.b16 %v3459
      %v3972 = vunpack.c.l.b16 %v3460
      %v3973 = vunpack.c.l.b16 %v3461
      %v3974 = vunpack.c.l.b16 %v3462
      %v3975 = vunpack.c.l.b16 %v3463
      %v3976 = vunpack.c.l.b16 %v3464
      %v3977 = vunpack.c.l.b16 %v3465
      %v3978 = vunpack.c.l.b16 %v3466
      %v3979 = vunpack.c.l.b16 %v3467
      %v3980 = vunpack.c.l.b16 %v3468
      %v3981 = vunpack.c.l.b16 %v3469
      %v3982 = vunpack.c.l.b16 %v3470
      %v3983 = vunpack.c.l.b16 %v3471
      %v3984 = vunpack.c.l.b16 %v3472
      %v3985 = vunpack.c.l.b16 %v3473
      %v3986 = vunpack.c.l.b16 %v3474
      %v3987 = vunpack.c.l.b16 %v3475
      %v3988 = vunpack.c.l.b16 %v3476
      %v3989 = vunpack.c.l.b16 %v3477
      %v3990 = vunpack.c.l.b16 %v3478
      %v3991 = vunpack.c.l.b16 %v3479
      %v3992 = vunpack.c.l.b16 %v3480
      %v3993 = vunpack.c.l.b16 %v3481
      %v3994 = vunpack.c.l.b16 %v3482
      %v3995 = vunpack.c.l.b16 %v3483
      %v3996 = vunpack.c.l.b16 %v3484
      %v3997 = vunpack.c.l.b16 %v3485
      %v3998 = vunpack.c.l.b16 %v3486
      %v3999 = vunpack.c.l.b16 %v3487
      %v4000 = vunpack.c.l.b16 %v3488
      %v4001 = vunpack.c.l.b16 %v3489
      %v4002 = vunpack.c.l.b16 %v3490
      %v4003 = vunpack.c.l.b16 %v3491
      %v4004 = vunpack.c.l.b16 %v3492
      %v4005 = vunpack.c.l.b16 %v3493
      %v4006 = vunpack.c.l.b16 %v3494
      %v4007 = vunpack.c.l.b16 %v3495
      %v4008 = vunpack.c.l.b16 %v3496
      %v4009 = vunpack.c.l.b16 %v3497
      %v4010 = vunpack.c.l.b16 %v3498
      %v4011 = vunpack.c.l.b16 %v3499
      %v4012 = vunpack.c.l.b16 %v3500
      %v4013 = vunpack.c.l.b16 %v3501
      %v4014 = vunpack.c.l.b16 %v3502
      %v4015 = vunpack.c.l.b16 %v3503
      %v4016 = vunpack.c.l.b16 %v3504
      %v4017 = vunpack.c.l.b16 %v3505
      %v4018 = vunpack.c.l.b16 %v3506
      %v4019 = vunpack.c.l.b16 %v3507
      %v4020 = vunpack.c.l.b16 %v3508
      %v4021 = vunpack.c.l.b16 %v3509
      %v4022 = vunpack.c.l.b16 %v3510
      %v4023 = vunpack.c.l.b16 %v3511
      %v4024 = vunpack.c.l.b16 %v3512
      %v4025 = vunpack.c.l.b16 %v3513
      %v4026 = vunpack.c.l.b16 %v3514
      %v4027 = vunpack.c.l.b16 %v3515
      %v4028 = vunpack.c.l.b16 %v3516
      %v4029 = vunpack.c.l.b16 %v3517
      %v4030 = vunpack.c.l.b16 %v3518
      %v4031 = vunpack.c.l.b16 %v3519
      %v4032 = vunpack.c.l.b16 %v3520
      %v4033 = vunpack.c.l.b16 %v3521
      %v4034 = vunpack.c.l.b16 %v3522
      %v4035 = vunpack.c.l.b16 %v3523
      %v4036 = vunpack.c.l.b16 %v3524
      %v4037 = vunpack.c.l.b16 %v3525
      %v4038 = vunpack.c.l.b16 %v3526
      %v4039 = vunpack.c.l.b16 %v3527
      %v4040 = vunpack.c.l.b16 %v3528
      %v4041 = vunpack.c.l.b16 %v3529
      %v4042 = vunpack.c.l.b16 %v3530
      %v4043 = vunpack.c.l.b16 %v3531
      %v4044 = vunpack.c.l.b16 %v3532
      %v4045 = vunpack.c.l.b16 %v3533
      %v4046 = vunpack.c.l.b16 %v3534
      %v4047 = vunpack.c.l.b16 %v3535
      %v4048 = vunpack.c.l.b16 %v3536
      %v4049 = vunpack.c.l.b16 %v3537
      %v4050 = vunpack.c.l.b16 %v3538
      %v4051 = vunpack.c.l.b16 %v3539
      %v4052 = vunpack.c.l.b16 %v3540
      %v4053 = vunpack.c.l.b16 %v3541
      %v4054 = vunpack.c.l.b16 %v3542
      %v4055 = vunpack.c.l.b16 %v3543
      %v4056 = vunpack.c.l.b16 %v3544
      %v4057 = vunpack.c.l.b16 %v3545
      %v4058 = vunpack.c.l.b16 %v3546
      %v4059 = vunpack.c.l.b16 %v3547
      %v4060 = vunpack.c.l.b16 %v3548
      %v4061 = vunpack.c.l.b16 %v3549
      %v4062 = vunpack.c.l.b16 %v3550
      %v4063 = vunpack.c.l.b16 %v3551
      %v4064 = vunpack.c.l.b16 %v3552
      %v4065 = vunpack.c.l.b16 %v3553
      %v4066 = vunpack.c.l.b16 %v3554
      %v4067 = vunpack.c.l.b16 %v3555
      %v4068 = vunpack.c.l.b16 %v3556
      %v4069 = vunpack.c.l.b16 %v3557
      %v4070 = vunpack.c.l.b16 %v3558
      %v4071 = vunpack.c.l.b16 %v3559
      %v4072 = vunpack.c.l.b16 %v3560
      %v4073 = vunpack.c.l.b16 %v3561
      %v4074 = vunpack.c.l.b16 %v3562
      %v4075 = vunpack.c.l.b16 %v3563
      %v4076 = vunpack.c.l.b16 %v3564
      %v4077 = vunpack.c.l.b16 %v3565
      %v4078 = vunpack.c.l.b16 %v3566
      %v4079 = vunpack.c.l.b16 %v3567
      %v4080 = vunpack.c.l.b16 %v3568
      %v4081 = vunpack.c.l.b16 %v3569
      %v4082 = vunpack.c.l.b16 %v3570
      %v4083 = vunpack.c.l.b16 %v3571
      %v4084 = vunpack.c.l.b16 %v3572
      %v4085 = vunpack.c.l.b16 %v3573
      %v4086 = vunpack.c.l.b16 %v3574
      %v4087 = vunpack.c.l.b16 %v3575
      %v4088 = vunpack.c.l.b16 %v3576
      %v4089 = vunpack.c.l.b16 %v3577
      %v4090 = vunpack.c.l.b16 %v3578
      %v4091 = vunpack.c.l.b16 %v3579
      %v4092 = vunpack.c.l.b16 %v3580
      %v4093 = vunpack.c.l.b16 %v3581
      %v4094 = vunpack.c.l.b16 %v3582
      %v4095 = vunpack.c.l.b16 %v3583
      %v4096 = vunpack.c.l.b16 %v3584
      %v4097 = vunpack.c.l.b16 %v3585
      %v4098 = vunpack.c.l.b16 %v3586
      %v4099 = vunpack.c.l.b16 %v3587
      %v4100 = vunpack.c.l.b16 %v3588
      %v4101 = vunpack.c.l.b16 %v3589
      %v4102 = vunpack.c.l.b16 %v3590
      %v4103 = vunpack.c.l.b16 %v3591
      %v4104 = vunpack.c.l.b16 %v3592
      %v4105 = vunpack.c.l.b16 %v3593
      %v4106 = vunpack.c.l.b16 %v3594
      %v4107 = vunpack.c.l.b16 %v3595
      %v4108 = vunpack.c.l.b16 %v3596
      %v4109 = vunpack.c.l.b16 %v3597
      %v4110 = vunpack.c.l.b16 %v3598
      %v4111 = vunpack.c.l.b16 %v3599
      %v4112 = vunpack.c.l.b16 %v3600
      %v4113 = vunpack.c.l.b16 %v3601
      %v4114 = vunpack.c.l.b16 %v3602
      %v4115 = vunpack.c.l.b16 %v3603
      %v4116 = vunpack.c.l.b16 %v3604
      %v4117 = vunpack.c.l.b16 %v3605
      %v4118 = vunpack.c.l.b16 %v3606
      %v4119 = vunpack.c.l.b16 %v3607
      %v4120 = vpack.c.b16 %v3865, %v3864
      %v4121 = vpack.c.b16 %v3867, %v3866
      %v4122 = vpack.c.b16 %v3869, %v3868
      %v4123 = vpack.c.b16 %v3871, %v3870
      %v4124 = vpack.c.b16 %v3873, %v3872
      %v4125 = vpack.c.b16 %v3875, %v3874
      %v4126 = vpack.c.b16 %v3877, %v3876
      %v4127 = vpack.c.b16 %v3879, %v3878
      %v4128 = vpack.c.b16 %v3881, %v3880
      %v4129 = vpack.c.b16 %v3883, %v3882
      %v4130 = vpack.c.b16 %v3885, %v3884
      %v4131 = vpack.c.b16 %v3887, %v3886
      %v4132 = vpack.c.b16 %v3889, %v3888
      %v4133 = vpack.c.b16 %v3891, %v3890
      %v4134 = vpack.c.b16 %v3893, %v3892
      %v4135 = vpack.c.b16 %v3895, %v3894
      %v4136 = vpack.c.b16 %v3897, %v3896
      %v4137 = vpack.c.b16 %v3899, %v3898
      %v4138 = vpack.c.b16 %v3901, %v3900
      %v4139 = vpack.c.b16 %v3903, %v3902
      %v4140 = vpack.c.b16 %v3905, %v3904
      %v4141 = vpack.c.b16 %v3907, %v3906
      %v4142 = vpack.c.b16 %v3909, %v3908
      %v4143 = vpack.c.b16 %v3911, %v3910
      %v4144 = vpack.c.b16 %v3913, %v3912
      %v4145 = vpack.c.b16 %v3915, %v3914
      %v4146 = vpack.c.b16 %v3917, %v3916
      %v4147 = vpack.c.b16 %v3919, %v3918
      %v4148 = vpack.c.b16 %v3921, %v3920
      %v4149 = vpack.c.b16 %v3923, %v3922
      %v4150 = vpack.c.b16 %v3925, %v3924
      %v4151 = vpack.c.b16 %v3927, %v3926
      %v4152 = vpack.c.b16 %v3929, %v3928
      %v4153 = vpack.c.b16 %v3931, %v3930
      %v4154 = vpack.c.b16 %v3933, %v3932
      %v4155 = vpack.c.b16 %v3935, %v3934
      %v4156 = vpack.c.b16 %v3937, %v3936
      %v4157 = vpack.c.b16 %v3939, %v3938
      %v4158 = vpack.c.b16 %v3941, %v3940
      %v4159 = vpack.c.b16 %v3943, %v3942
      %v4160 = vpack.c.b16 %v3945, %v3944
      %v4161 = vpack.c.b16 %v3947, %v3946
      %v4162 = vpack.c.b16 %v3949, %v3948
      %v4163 = vpack.c.b16 %v3951, %v3950
      %v4164 = vpack.c.b16 %v3953, %v3952
      %v4165 = vpack.c.b16 %v3955, %v3954
      %v4166 = vpack.c.b16 %v3957, %v3956
      %v4167 = vpack.c.b16 %v3959, %v3958
      %v4168 = vpack.c.b16 %v3961, %v3960
      %v4169 = vpack.c.b16 %v3963, %v3962
      %v4170 = vpack.c.b16 %v3965, %v3964
      %v4171 = vpack.c.b16 %v3967, %v3966
      %v4172 = vpack.c.b16 %v3969, %v3968
      %v4173 = vpack.c.b16 %v3971, %v3970
      %v4174 = vpack.c.b16 %v3973, %v3972
      %v4175 = vpack.c.b16 %v3975, %v3974
      %v4176 = vpack.c.b16 %v3977, %v3976
      %v4177 = vpack.c.b16 %v3979, %v3978
      %v4178 = vpack.c.b16 %v3981, %v3980
      %v4179 = vpack.c.b16 %v3983, %v3982
      %v4180 = vpack.c.b16 %v3985, %v3984
      %v4181 = vpack.c.b16 %v3987, %v3986
      %v4182 = vpack.c.b16 %v3989, %v3988
      %v4183 = vpack.c.b16 %v3991, %v3990
      %v4184 = vpack.c.b16 %v3993, %v3992
      %v4185 = vpack.c.b16 %v3995, %v3994
      %v4186 = vpack.c.b16 %v3997, %v3996
      %v4187 = vpack.c.b16 %v3999, %v3998
      %v4188 = vpack.c.b16 %v4001, %v4000
      %v4189 = vpack.c.b16 %v4003, %v4002
      %v4190 = vpack.c.b16 %v4005, %v4004
      %v4191 = vpack.c.b16 %v4007, %v4006
      %v4192 = vpack.c.b16 %v4009, %v4008
      %v4193 = vpack.c.b16 %v4011, %v4010
      %v4194 = vpack.c.b16 %v4013, %v4012
      %v4195 = vpack.c.b16 %v4015, %v4014
      %v4196 = vpack.c.b16 %v4017, %v4016
      %v4197 = vpack.c.b16 %v4019, %v4018
      %v4198 = vpack.c.b16 %v4021, %v4020
      %v4199 = vpack.c.b16 %v4023, %v4022
      %v4200 = vpack.c.b16 %v4025, %v4024
      %v4201 = vpack.c.b16 %v4027, %v4026
      %v4202 = vpack.c.b16 %v4029, %v4028
      %v4203 = vpack.c.b16 %v4031, %v4030
      %v4204 = vpack.c.b16 %v4033, %v4032
      %v4205 = vpack.c.b16 %v4035, %v4034
      %v4206 = vpack.c.b16 %v4037, %v4036
      %v4207 = vpack.c.b16 %v4039, %v4038
      %v4208 = vpack.c.b16 %v4041, %v4040
      %v4209 = vpack.c.b16 %v4043, %v4042
      %v4210 = vpack.c.b16 %v4045, %v4044
      %v4211 = vpack.c.b16 %v4047, %v4046
      %v4212 = vpack.c.b16 %v4049, %v4048
      %v4213 = vpack.c.b16 %v4051, %v4050
      %v4214 = vpack.c.b16 %v4053, %v4052
      %v4215 = vpack.c.b16 %v4055, %v4054
      %v4216 = vpack.c.b16 %v4057, %v4056
      %v4217 = vpack.c.b16 %v4059, %v4058
      %v4218 = vpack.c.b16 %v4061, %v4060
      %v4219 = vpack.c.b16 %v4063, %v4062
      %v4220 = vpack.c.b16 %v4065, %v4064
      %v4221 = vpack.c.b16 %v4067, %v4066
      %v4222 = vpack.c.b16 %v4069, %v4068
      %v4223 = vpack.c.b16 %v4071, %v4070
      %v4224 = vpack.c.b16 %v4073, %v4072
      %v4225 = vpack.c.b16 %v4075, %v4074
      %v4226 = vpack.c.b16 %v4077, %v4076
      %v4227 = vpack.c.b16 %v4079, %v4078
      %v4228 = vpack.c.b16 %v4081, %v4080
      %v4229 = vpack.c.b16 %v4083, %v4082
      %v4230 = vpack.c.b16 %v4085, %v4084
      %v4231 = vpack.c.b16 %v4087, %v4086
      %v4232 = vpack.c.b16 %v4089, %v4088
      %v4233 = vpack.c.b16 %v4091, %v4090
      %v4234 = vpack.c.b16 %v4093, %v4092
      %v4235 = vpack.c.b16 %v4095, %v4094
      %v4236 = vpack.c.b16 %v4097, %v4096
      %v4237 = vpack.c.b16 %v4099, %v4098
      %v4238 = vpack.c.b16 %v4101, %v4100
      %v4239 = vpack.c.b16 %v4103, %v4102
      %v4240 = vpack.c.b16 %v4105, %v4104
      %v4241 = vpack.c.b16 %v4107, %v4106
      %v4242 = vpack.c.b16 %v4109, %v4108
      %v4243 = vpack.c.b16 %v4111, %v4110
      %v4244 = vpack.c.b16 %v4113, %v4112
      %v4245 = vpack.c.b16 %v4115, %v4114
      %v4246 = vpack.c.b16 %v4117, %v4116
      %v4247 = vpack.c.b16 %v4119, %v4118
      %4376 = vmatprep.subr.bf16.mxu0 0
      %4377 = vmatpush1.bf16.msra.mxu0 %v4120
      %4378 = vmatprep.subr.bf16.mxu0 0
      %4379 = vmatpush1.bf16.msra.mxu0 %v4121
      %4380 = vmatprep.subr.bf16.mxu0 0
      %4381 = vmatpush1.bf16.msra.mxu0 %v4122
      %4382 = vmatprep.subr.bf16.mxu0 0
      %4383 = vmatpush1.bf16.msra.mxu0 %v4123
      %4384 = vmatprep.subr.bf16.mxu0 0
      %4385 = vmatpush1.bf16.msra.mxu0 %v4124
      %4386 = vmatprep.subr.bf16.mxu0 0
      %4387 = vmatpush1.bf16.msra.mxu0 %v4125
      %4388 = vmatprep.subr.bf16.mxu0 0
      %4389 = vmatpush1.bf16.msra.mxu0 %v4126
      %4390 = vmatprep.subr.bf16.mxu0 0
      %4391 = vmatpush1.bf16.msra.mxu0 %v4127
      %4392 = vmatprep.subr.bf16.mxu0 0
      %4393 = vmatpush1.bf16.msra.mxu0 %v4128
      %4394 = vmatprep.subr.bf16.mxu0 0
      %4395 = vmatpush1.bf16.msra.mxu0 %v4129
      %4396 = vmatprep.subr.bf16.mxu0 0
      %4397 = vmatpush1.bf16.msra.mxu0 %v4130
      %4398 = vmatprep.subr.bf16.mxu0 0
      %4399 = vmatpush1.bf16.msra.mxu0 %v4131
      %4400 = vmatprep.subr.bf16.mxu0 0
      %4401 = vmatpush1.bf16.msra.mxu0 %v4132
      %4402 = vmatprep.subr.bf16.mxu0 0
      %4403 = vmatpush1.bf16.msra.mxu0 %v4133
      %4404 = vmatprep.subr.bf16.mxu0 0
      %4405 = vmatpush1.bf16.msra.mxu0 %v4134
      %4406 = vmatprep.subr.bf16.mxu0 0
      %4407 = vmatpush1.bf16.msra.mxu0 %v4135
      %4408 = vmatprep.mubr.bf16.mxu0 %v3161
      %4409 = vmatmul.mubr.bf16.gmra.mrb[0].mxu0 %v3160
      %v4410 = vpop.f32.mrb[0].mxu0
      %v4411 = vadd.f32 0.0, %v4410
      %v4412 = vpop.f32.mrb[0].mxu0
      %v4413 = vpop.f32.mrb[0].mxu0
      %v4414 = vadd.f32 0.0, %v4413
      %v4415 = vpop.f32.mrb[0].mxu0
      %4416 = vmatprep.mubr.bf16.mxu0 %v3177
      %4417 = vmatmul.mubr.bf16.gmra.mrb[0].mxu0 %v3176
      %v4418 = vpop.f32.mrb[0].mxu0
      %v4419 = vadd.f32 0.0, %v4418
      %v4420 = vpop.f32.mrb[0].mxu0
      %v4421 = vpop.f32.mrb[0].mxu0
      %v4422 = vadd.f32 0.0, %v4421
      %v4423 = vpop.f32.mrb[0].mxu0
      %4424 = vmatprep.mubr.bf16.mxu0 %v3193
      %4425 = vmatmul.mubr.bf16.gmra.mrb[0].mxu0 %v3192
      %v4426 = vpop.f32.mrb[0].mxu0
      %v4427 = vadd.f32 0.0, %v4426
      %v4428 = vpop.f32.mrb[0].mxu0
      %v4429 = vpop.f32.mrb[0].mxu0
      %v4430 = vadd.f32 0.0, %v4429
      %v4431 = vpop.f32.mrb[0].mxu0
      %4432 = vmatprep.mubr.bf16.mxu0 %v3209
      %4433 = vmatmul.mubr.bf16.gmra.mrb[0].mxu0 %v3208
      %v4434 = vpop.f32.mrb[0].mxu0
      %v4435 = vadd.f32 0.0, %v4434
      %v4436 = vpop.f32.mrb[0].mxu0
      %v4437 = vpop.f32.mrb[0].mxu0
      %v4438 = vadd.f32 0.0, %v4437
      %v4439 = vpop.f32.mrb[0].mxu0
      %4440 = vmatprep.mubr.bf16.mxu0 %v3225
      %4441 = vmatmul.mubr.bf16.gmra.mrb[0].mxu0 %v3224
      %v4442 = vpop.f32.mrb[0].mxu0
      %v4443 = vadd.f32 0.0, %v4442
      %v4444 = vpop.f32.mrb[0].mxu0
      %v4445 = vpop.f32.mrb[0].mxu0
      %v4446 = vadd.f32 0.0, %v4445
      %v4447 = vpop.f32.mrb[0].mxu0
      %4448 = vmatprep.mubr.bf16.mxu0 %v3241
      %4449 = vmatmul.mubr.bf16.gmra.mrb[0].mxu0 %v3240
      %v4450 = vpop.f32.mrb[0].mxu0
      %v4451 = vadd.f32 0.0, %v4450
      %v4452 = vpop.f32.mrb[0].mxu0
      %v4453 = vpop.f32.mrb[0].mxu0
      %v4454 = vadd.f32 0.0, %v4453
      %v4455 = vpop.f32.mrb[0].mxu0
      %4456 = vmatprep.mubr.bf16.mxu0 %v3257
      %4457 = vmatmul.mubr.bf16.gmra.mrb[0].mxu0 %v3256
      %v4458 = vpop.f32.mrb[0].mxu0
      %v4459 = vadd.f32 0.0, %v4458
      %v4460 = vpop.f32.mrb[0].mxu0
      %v4461 = vpop.f32.mrb[0].mxu0
      %v4462 = vadd.f32 0.0, %v4461
      %v4463 = vpop.f32.mrb[0].mxu0
      %4464 = vmatprep.mubr.bf16.mxu0 %v3273
      %4465 = vmatmul.mubr.bf16.gmra.mrb[0].mxu0 %v3272
      %v4466 = vpop.f32.mrb[0].mxu0
      %v4467 = vadd.f32 0.0, %v4466
      %v4468 = vpop.f32.mrb[0].mxu0
      %v4469 = vpop.f32.mrb[0].mxu0
      %v4470 = vadd.f32 0.0, %v4469
      %v4471 = vpop.f32.mrb[0].mxu0
      %4472 = vmatprep.mubr.bf16.mxu0 %v3289
      %4473 = vmatmul.mubr.bf16.gmra.mrb[0].mxu0 %v3288
      %v4474 = vpop.f32.mrb[0].mxu0
      %v4475 = vadd.f32 0.0, %v4474
      %v4476 = vpop.f32.mrb[0].mxu0
      %v4477 = vpop.f32.mrb[0].mxu0
      %v4478 = vadd.f32 0.0, %v4477
      %v4479 = vpop.f32.mrb[0].mxu0
      %4480 = vmatprep.mubr.bf16.mxu0 %v3305
      %4481 = vmatmul.mubr.bf16.gmra.mrb[0].mxu0 %v3304
      %v4482 = vpop.f32.mrb[0].mxu0
      %v4483 = vadd.f32 0.0, %v4482
      %v4484 = vpop.f32.mrb[0].mxu0
      %v4485 = vpop.f32.mrb[0].mxu0
      %v4486 = vadd.f32 0.0, %v4485
      %v4487 = vpop.f32.mrb[0].mxu0
      %4488 = vmatprep.mubr.bf16.mxu0 %v3321
      %4489 = vmatmul.mubr.bf16.gmra.mrb[0].mxu0 %v3320
      %v4490 = vpop.f32.mrb[0].mxu0
      %v4491 = vadd.f32 0.0, %v4490
      %v4492 = vpop.f32.mrb[0].mxu0
      %v4493 = vpop.f32.mrb[0].mxu0
      %v4494 = vadd.f32 0.0, %v4493
      %v4495 = vpop.f32.mrb[0].mxu0
      %4496 = vmatprep.mubr.bf16.mxu0 %v3337
      %4497 = vmatmul.mubr.bf16.gmra.mrb[0].mxu0 %v3336
      %v4498 = vpop.f32.mrb[0].mxu0
      %v4499 = vadd.f32 0.0, %v4498
      %v4500 = vpop.f32.mrb[0].mxu0
      %v4501 = vpop.f32.mrb[0].mxu0
      %v4502 = vadd.f32 0.0, %v4501
      %v4503 = vpop.f32.mrb[0].mxu0
      %4504 = vdwg.mxu0
      %4505 = vmatprep.subr.bf16.mxu0 0
      %4506 = vmatpush1.bf16.msra.mxu0 %v4136
      %4507 = vmatprep.subr.bf16.mxu0 0
      %4508 = vmatpush1.bf16.msra.mxu0 %v4137
      %4509 = vmatprep.subr.bf16.mxu0 0
      %4510 = vmatpush1.bf16.msra.mxu0 %v4138
      %4511 = vmatprep.subr.bf16.mxu0 0
      %4512 = vmatpush1.bf16.msra.mxu0 %v4139
      %4513 = vmatprep.subr.bf16.mxu0 0
      %4514 = vmatpush1.bf16.msra.mxu0 %v4140
      %4515 = vmatprep.subr.bf16.mxu0 0
      %4516 = vmatpush1.bf16.msra.mxu0 %v4141
      %4517 = vmatprep.subr.bf16.mxu0 0
      %4518 = vmatpush1.bf16.msra.mxu0 %v4142
      %4519 = vmatprep.subr.bf16.mxu0 0
      %4520 = vmatpush1.bf16.msra.mxu0 %v4143
      %4521 = vmatprep.subr.bf16.mxu0 0
      %4522 = vmatpush1.bf16.msra.mxu0 %v4144
      %4523 = vmatprep.subr.bf16.mxu0 0
      %4524 = vmatpush1.bf16.msra.mxu0 %v4145
      %4525 = vmatprep.subr.bf16.mxu0 0
      %4526 = vmatpush1.bf16.msra.mxu0 %v4146
      %4527 = vmatprep.subr.bf16.mxu0 0
      %4528 = vmatpush1.bf16.msra.mxu0 %v4147
      %4529 = vmatprep.subr.bf16.mxu0 0
      %4530 = vmatpush1.bf16.msra.mxu0 %v4148
      %4531 = vmatprep.subr.bf16.mxu0 0
      %4532 = vmatpush1.bf16.msra.mxu0 %v4149
      %4533 = vmatprep.subr.bf16.mxu0 0
      %4534 = vmatpush1.bf16.msra.mxu0 %v4150
      %4535 = vmatprep.subr.bf16.mxu0 0
      %4536 = vmatpush1.bf16.msra.mxu0 %v4151
      %4537 = vmatprep.mubr.bf16.mxu0 %v3163
      %4538 = vmatmul.mubr.bf16.gmra.mrb[0].mxu0 %v3162
      %v4539 = vpop.f32.mrb[0].mxu0
      %v4540 = vadd.f32 %v4411, %v4539
      %v4541 = vpop.f32.mrb[0].mxu0
      %v4542 = vpop.f32.mrb[0].mxu0
      %v4543 = vadd.f32 %v4414, %v4542
      %v4544 = vpop.f32.mrb[0].mxu0
      %4545 = vmatprep.mubr.bf16.mxu0 %v3179
      %4546 = vmatmul.mubr.bf16.gmra.mrb[0].mxu0 %v3178
      %v4547 = vpop.f32.mrb[0].mxu0
      %v4548 = vadd.f32 %v4419, %v4547
      %v4549 = vpop.f32.mrb[0].mxu0
      %v4550 = vpop.f32.mrb[0].mxu0
      %v4551 = vadd.f32 %v4422, %v4550
      %v4552 = vpop.f32.mrb[0].mxu0
      %4553 = vmatprep.mubr.bf16.mxu0 %v3195
      %4554 = vmatmul.mubr.bf16.gmra.mrb[0].mxu0 %v3194
      %v4555 = vpop.f32.mrb[0].mxu0
      %v4556 = vadd.f32 %v4427, %v4555
      %v4557 = vpop.f32.mrb[0].mxu0
      %v4558 = vpop.f32.mrb[0].mxu0
      %v4559 = vadd.f32 %v4430, %v4558
      %v4560 = vpop.f32.mrb[0].mxu0
      %4561 = vmatprep.mubr.bf16.mxu0 %v3211
      %4562 = vmatmul.mubr.bf16.gmra.mrb[0].mxu0 %v3210
      %v4563 = vpop.f32.mrb[0].mxu0
      %v4564 = vadd.f32 %v4435, %v4563
      %v4565 = vpop.f32.mrb[0].mxu0
      %v4566 = vpop.f32.mrb[0].mxu0
      %v4567 = vadd.f32 %v4438, %v4566
      %v4568 = vpop.f32.mrb[0].mxu0
      %4569 = vmatprep.mubr.bf16.mxu0 %v3227
      %4570 = vmatmul.mubr.bf16.gmra.mrb[0].mxu0 %v3226
      %v4571 = vpop.f32.mrb[0].mxu0
      %v4572 = vadd.f32 %v4443, %v4571
      %v4573 = vpop.f32.mrb[0].mxu0
      %v4574 = vpop.f32.mrb[0].mxu0
      %v4575 = vadd.f32 %v4446, %v4574
      %v4576 = vpop.f32.mrb[0].mxu0
      %4577 = vmatprep.mubr.bf16.mxu0 %v3243
      %4578 = vmatmul.mubr.bf16.gmra.mrb[0].mxu0 %v3242
      %v4579 = vpop.f32.mrb[0].mxu0
      %v4580 = vadd.f32 %v4451, %v4579
      %v4581 = vpop.f32.mrb[0].mxu0
      %v4582 = vpop.f32.mrb[0].mxu0
      %v4583 = vadd.f32 %v4454, %v4582
      %v4584 = vpop.f32.mrb[0].mxu0
      %4585 = vmatprep.mubr.bf16.mxu0 %v3259
      %4586 = vmatmul.mubr.bf16.gmra.mrb[0].mxu0 %v3258
      %v4587 = vpop.f32.mrb[0].mxu0
      %v4588 = vadd.f32 %v4459, %v4587
      %v4589 = vpop.f32.mrb[0].mxu0
      %v4590 = vpop.f32.mrb[0].mxu0
      %v4591 = vadd.f32 %v4462, %v4590
      %v4592 = vpop.f32.mrb[0].mxu0
      %4593 = vmatprep.mubr.bf16.mxu0 %v3275
      %4594 = vmatmul.mubr.bf16.gmra.mrb[0].mxu0 %v3274
      %v4595 = vpop.f32.mrb[0].mxu0
      %v4596 = vadd.f32 %v4467, %v4595
      %v4597 = vpop.f32.mrb[0].mxu0
      %v4598 = vpop.f32.mrb[0].mxu0
      %v4599 = vadd.f32 %v4470, %v4598
      %v4600 = vpop.f32.mrb[0].mxu0
      %4601 = vmatprep.mubr.bf16.mxu0 %v3291
      %4602 = vmatmul.mubr.bf16.gmra.mrb[0].mxu0 %v3290
      %v4603 = vpop.f32.mrb[0].mxu0
      %v4604 = vadd.f32 %v4475, %v4603
      %v4605 = vpop.f32.mrb[0].mxu0
      %v4606 = vpop.f32.mrb[0].mxu0
      %v4607 = vadd.f32 %v4478, %v4606
      %v4608 = vpop.f32.mrb[0].mxu0
      %4609 = vmatprep.mubr.bf16.mxu0 %v3307
      %4610 = vmatmul.mubr.bf16.gmra.mrb[0].mxu0 %v3306
      %v4611 = vpop.f32.mrb[0].mxu0
      %v4612 = vadd.f32 %v4483, %v4611
      %v4613 = vpop.f32.mrb[0].mxu0
      %v4614 = vpop.f32.mrb[0].mxu0
      %v4615 = vadd.f32 %v4486, %v4614
      %v4616 = vpop.f32.mrb[0].mxu0
      %4617 = vmatprep.mubr.bf16.mxu0 %v3323
      %4618 = vmatmul.mubr.bf16.gmra.mrb[0].mxu0 %v3322
      %v4619 = vpop.f32.mrb[0].mxu0
      %v4620 = vadd.f32 %v4491, %v4619
      %v4621 = vpop.f32.mrb[0].mxu0
      %v4622 = vpop.f32.mrb[0].mxu0
      %v4623 = vadd.f32 %v4494, %v4622
      %v4624 = vpop.f32.mrb[0].mxu0
      %4625 = vmatprep.mubr.bf16.mxu0 %v3339
      %4626 = vmatmul.mubr.bf16.gmra.mrb[0].mxu0 %v3338
      %v4627 = vpop.f32.mrb[0].mxu0
      %v4628 = vadd.f32 %v4499, %v4627
      %v4629 = vpop.f32.mrb[0].mxu0
      %v4630 = vpop.f32.mrb[0].mxu0
      %v4631 = vadd.f32 %v4502, %v4630
      %v4632 = vpop.f32.mrb[0].mxu0
      %4633 = vdwg.mxu0
      %4634 = vmatprep.subr.bf16.mxu0 0
      %4635 = vmatpush1.bf16.msra.mxu0 %v4152
      %4636 = vmatprep.subr.bf16.mxu0 0
      %4637 = vmatpush1.bf16.msra.mxu0 %v4153
      %4638 = vmatprep.subr.bf16.mxu0 0
      %4639 = vmatpush1.bf16.msra.mxu0 %v4154
      %4640 = vmatprep.subr.bf16.mxu0 0
      %4641 = vmatpush1.bf16.msra.mxu0 %v4155
      %4642 = vmatprep.subr.bf16.mxu0 0
      %4643 = vmatpush1.bf16.msra.mxu0 %v4156
      %4644 = vmatprep.subr.bf16.mxu0 0
      %4645 = vmatpush1.bf16.msra.mxu0 %v4157
      %4646 = vmatprep.subr.bf16.mxu0 0
      %4647 = vmatpush1.bf16.msra.mxu0 %v4158
      %4648 = vmatprep.subr.bf16.mxu0 0
      %4649 = vmatpush1.bf16.msra.mxu0 %v4159
      %4650 = vmatprep.subr.bf16.mxu0 0
      %4651 = vmatpush1.bf16.msra.mxu0 %v4160
      %4652 = vmatprep.subr.bf16.mxu0 0
      %4653 = vmatpush1.bf16.msra.mxu0 %v4161
      %4654 = vmatprep.subr.bf16.mxu0 0
      %4655 = vmatpush1.bf16.msra.mxu0 %v4162
      %4656 = vmatprep.subr.bf16.mxu0 0
      %4657 = vmatpush1.bf16.msra.mxu0 %v4163
      %4658 = vmatprep.subr.bf16.mxu0 0
      %4659 = vmatpush1.bf16.msra.mxu0 %v4164
      %4660 = vmatprep.subr.bf16.mxu0 0
      %4661 = vmatpush1.bf16.msra.mxu0 %v4165
      %4662 = vmatprep.subr.bf16.mxu0 0
      %4663 = vmatpush1.bf16.msra.mxu0 %v4166
      %4664 = vmatprep.subr.bf16.mxu0 0
      %4665 = vmatpush1.bf16.msra.mxu0 %v4167
      %4666 = vmatprep.mubr.bf16.mxu0 %v3165
      %4667 = vmatmul.mubr.bf16.gmra.mrb[0].mxu0 %v3164
      %v4668 = vpop.f32.mrb[0].mxu0
      %v4669 = vadd.f32 %v4540, %v4668
      %v4670 = vpop.f32.mrb[0].mxu0
      %v4671 = vpop.f32.mrb[0].mxu0
      %v4672 = vadd.f32 %v4543, %v4671
      %v4673 = vpop.f32.mrb[0].mxu0
      %4674 = vmatprep.mubr.bf16.mxu0 %v3181
      %4675 = vmatmul.mubr.bf16.gmra.mrb[0].mxu0 %v3180
      %v4676 = vpop.f32.mrb[0].mxu0
      %v4677 = vadd.f32 %v4548, %v4676
      %v4678 = vpop.f32.mrb[0].mxu0
      %v4679 = vpop.f32.mrb[0].mxu0
      %v4680 = vadd.f32 %v4551, %v4679
      %v4681 = vpop.f32.mrb[0].mxu0
      %4682 = vmatprep.mubr.bf16.mxu0 %v3197
      %4683 = vmatmul.mubr.bf16.gmra.mrb[0].mxu0 %v3196
      %v4684 = vpop.f32.mrb[0].mxu0
      %v4685 = vadd.f32 %v4556, %v4684
      %v4686 = vpop.f32.mrb[0].mxu0
      %v4687 = vpop.f32.mrb[0].mxu0
      %v4688 = vadd.f32 %v4559, %v4687
      %v4689 = vpop.f32.mrb[0].mxu0
      %4690 = vmatprep.mubr.bf16.mxu0 %v3213
      %4691 = vmatmul.mubr.bf16.gmra.mrb[0].mxu0 %v3212
      %v4692 = vpop.f32.mrb[0].mxu0
      %v4693 = vadd.f32 %v4564, %v4692
      %v4694 = vpop.f32.mrb[0].mxu0
      %v4695 = vpop.f32.mrb[0].mxu0
      %v4696 = vadd.f32 %v4567, %v4695
      %v4697 = vpop.f32.mrb[0].mxu0
      %4698 = vmatprep.mubr.bf16.mxu0 %v3229
      %4699 = vmatmul.mubr.bf16.gmra.mrb[0].mxu0 %v3228
      %v4700 = vpop.f32.mrb[0].mxu0
      %v4701 = vadd.f32 %v4572, %v4700
      %v4702 = vpop.f32.mrb[0].mxu0
      %v4703 = vpop.f32.mrb[0].mxu0
      %v4704 = vadd.f32 %v4575, %v4703
      %v4705 = vpop.f32.mrb[0].mxu0
      %4706 = vmatprep.mubr.bf16.mxu0 %v3245
      %4707 = vmatmul.mubr.bf16.gmra.mrb[0].mxu0 %v3244
      %v4708 = vpop.f32.mrb[0].mxu0
      %v4709 = vadd.f32 %v4580, %v4708
      %v4710 = vpop.f32.mrb[0].mxu0
      %v4711 = vpop.f32.mrb[0].mxu0
      %v4712 = vadd.f32 %v4583, %v4711
      %v4713 = vpop.f32.mrb[0].mxu0
      %4714 = vmatprep.mubr.bf16.mxu0 %v3261
      %4715 = vmatmul.mubr.bf16.gmra.mrb[0].mxu0 %v3260
      %v4716 = vpop.f32.mrb[0].mxu0
      %v4717 = vadd.f32 %v4588, %v4716
      %v4718 = vpop.f32.mrb[0].mxu0
      %v4719 = vpop.f32.mrb[0].mxu0
      %v4720 = vadd.f32 %v4591, %v4719
      %v4721 = vpop.f32.mrb[0].mxu0
      %4722 = vmatprep.mubr.bf16.mxu0 %v3277
      %4723 = vmatmul.mubr.bf16.gmra.mrb[0].mxu0 %v3276
      %v4724 = vpop.f32.mrb[0].mxu0
      %v4725 = vadd.f32 %v4596, %v4724
      %v4726 = vpop.f32.mrb[0].mxu0
      %v4727 = vpop.f32.mrb[0].mxu0
      %v4728 = vadd.f32 %v4599, %v4727
      %v4729 = vpop.f32.mrb[0].mxu0
      %4730 = vmatprep.mubr.bf16.mxu0 %v3293
      %4731 = vmatmul.mubr.bf16.gmra.mrb[0].mxu0 %v3292
      %v4732 = vpop.f32.mrb[0].mxu0
      %v4733 = vadd.f32 %v4604, %v4732
      %v4734 = vpop.f32.mrb[0].mxu0
      %v4735 = vpop.f32.mrb[0].mxu0
      %v4736 = vadd.f32 %v4607, %v4735
      %v4737 = vpop.f32.mrb[0].mxu0
      %4738 = vmatprep.mubr.bf16.mxu0 %v3309
      %4739 = vmatmul.mubr.bf16.gmra.mrb[0].mxu0 %v3308
      %v4740 = vpop.f32.mrb[0].mxu0
      %v4741 = vadd.f32 %v4612, %v4740
      %v4742 = vpop.f32.mrb[0].mxu0
      %v4743 = vpop.f32.mrb[0].mxu0
      %v4744 = vadd.f32 %v4615, %v4743
      %v4745 = vpop.f32.mrb[0].mxu0
      %4746 = vmatprep.mubr.bf16.mxu0 %v3325
      %4747 = vmatmul.mubr.bf16.gmra.mrb[0].mxu0 %v3324
      %v4748 = vpop.f32.mrb[0].mxu0
      %v4749 = vadd.f32 %v4620, %v4748
      %v4750 = vpop.f32.mrb[0].mxu0
      %v4751 = vpop.f32.mrb[0].mxu0
      %v4752 = vadd.f32 %v4623, %v4751
      %v4753 = vpop.f32.mrb[0].mxu0
      %4754 = vmatprep.mubr.bf16.mxu0 %v3341
      %4755 = vmatmul.mubr.bf16.gmra.mrb[0].mxu0 %v3340
      %v4756 = vpop.f32.mrb[0].mxu0
      %v4757 = vadd.f32 %v4628, %v4756
      %v4758 = vpop.f32.mrb[0].mxu0
      %v4759 = vpop.f32.mrb[0].mxu0
      %v4760 = vadd.f32 %v4631, %v4759
      %v4761 = vpop.f32.mrb[0].mxu0
      %4762 = vdwg.mxu0
      %4763 = vmatprep.subr.bf16.mxu0 0
      %4764 = vmatpush1.bf16.msra.mxu0 %v4168
      %4765 = vmatprep.subr.bf16.mxu0 0
      %4766 = vmatpush1.bf16.msra.mxu0 %v4169
      %4767 = vmatprep.subr.bf16.mxu0 0
      %4768 = vmatpush1.bf16.msra.mxu0 %v4170
      %4769 = vmatprep.subr.bf16.mxu0 0
      %4770 = vmatpush1.bf16.msra.mxu0 %v4171
      %4771 = vmatprep.subr.bf16.mxu0 0
      %4772 = vmatpush1.bf16.msra.mxu0 %v4172
      %4773 = vmatprep.subr.bf16.mxu0 0
      %4774 = vmatpush1.bf16.msra.mxu0 %v4173
      %4775 = vmatprep.subr.bf16.mxu0 0
      %4776 = vmatpush1.bf16.msra.mxu0 %v4174
      %4777 = vmatprep.subr.bf16.mxu0 0
      %4778 = vmatpush1.bf16.msra.mxu0 %v4175
      %4779 = vmatprep.subr.bf16.mxu0 0
      %4780 = vmatpush1.bf16.msra.mxu0 %v4176
      %4781 = vmatprep.subr.bf16.mxu0 0
      %4782 = vmatpush1.bf16.msra.mxu0 %v4177
      %4783 = vmatprep.subr.bf16.mxu0 0
      %4784 = vmatpush1.bf16.msra.mxu0 %v4178
      %4785 = vmatprep.subr.bf16.mxu0 0
      %4786 = vmatpush1.bf16.msra.mxu0 %v4179
      %4787 = vmatprep.subr.bf16.mxu0 0
      %4788 = vmatpush1.bf16.msra.mxu0 %v4180
      %4789 = vmatprep.subr.bf16.mxu0 0
      %4790 = vmatpush1.bf16.msra.mxu0 %v4181
      %4791 = vmatprep.subr.bf16.mxu0 0
      %4792 = vmatpush1.bf16.msra.mxu0 %v4182
      %4793 = vmatprep.subr.bf16.mxu0 0
      %4794 = vmatpush1.bf16.msra.mxu0 %v4183
      %4795 = vmatprep.mubr.bf16.mxu0 %v3167
      %4796 = vmatmul.mubr.bf16.gmra.mrb[0].mxu0 %v3166
      %v4797 = vpop.f32.mrb[0].mxu0
      %v4798 = vadd.f32 %v4669, %v4797
      %v4799 = vpop.f32.mrb[0].mxu0
      %v4800 = vpop.f32.mrb[0].mxu0
      %v4801 = vadd.f32 %v4672, %v4800
      %v4802 = vpop.f32.mrb[0].mxu0
      %4803 = vmatprep.mubr.bf16.mxu0 %v3183
      %4804 = vmatmul.mubr.bf16.gmra.mrb[0].mxu0 %v3182
      %v4805 = vpop.f32.mrb[0].mxu0
      %v4806 = vadd.f32 %v4677, %v4805
      %v4807 = vpop.f32.mrb[0].mxu0
      %v4808 = vpop.f32.mrb[0].mxu0
      %v4809 = vadd.f32 %v4680, %v4808
      %v4810 = vpop.f32.mrb[0].mxu0
      %4811 = vmatprep.mubr.bf16.mxu0 %v3199
      %4812 = vmatmul.mubr.bf16.gmra.mrb[0].mxu0 %v3198
      %v4813 = vpop.f32.mrb[0].mxu0
      %v4814 = vadd.f32 %v4685, %v4813
      %v4815 = vpop.f32.mrb[0].mxu0
      %v4816 = vpop.f32.mrb[0].mxu0
      %v4817 = vadd.f32 %v4688, %v4816
      %v4818 = vpop.f32.mrb[0].mxu0
      %4819 = vmatprep.mubr.bf16.mxu0 %v3215
      %4820 = vmatmul.mubr.bf16.gmra.mrb[0].mxu0 %v3214
      %v4821 = vpop.f32.mrb[0].mxu0
      %v4822 = vadd.f32 %v4693, %v4821
      %v4823 = vpop.f32.mrb[0].mxu0
      %v4824 = vpop.f32.mrb[0].mxu0
      %v4825 = vadd.f32 %v4696, %v4824
      %v4826 = vpop.f32.mrb[0].mxu0
      %4827 = vmatprep.mubr.bf16.mxu0 %v3231
      %4828 = vmatmul.mubr.bf16.gmra.mrb[0].mxu0 %v3230
      %v4829 = vpop.f32.mrb[0].mxu0
      %v4830 = vadd.f32 %v4701, %v4829
      %v4831 = vpop.f32.mrb[0].mxu0
      %v4832 = vpop.f32.mrb[0].mxu0
      %v4833 = vadd.f32 %v4704, %v4832
      %v4834 = vpop.f32.mrb[0].mxu0
      %4835 = vmatprep.mubr.bf16.mxu0 %v3247
      %4836 = vmatmul.mubr.bf16.gmra.mrb[0].mxu0 %v3246
      %v4837 = vpop.f32.mrb[0].mxu0
      %v4838 = vadd.f32 %v4709, %v4837
      %v4839 = vpop.f32.mrb[0].mxu0
      %v4840 = vpop.f32.mrb[0].mxu0
      %v4841 = vadd.f32 %v4712, %v4840
      %v4842 = vpop.f32.mrb[0].mxu0
      %4843 = vmatprep.mubr.bf16.mxu0 %v3263
      %4844 = vmatmul.mubr.bf16.gmra.mrb[0].mxu0 %v3262
      %v4845 = vpop.f32.mrb[0].mxu0
      %v4846 = vadd.f32 %v4717, %v4845
      %v4847 = vpop.f32.mrb[0].mxu0
      %v4848 = vpop.f32.mrb[0].mxu0
      %v4849 = vadd.f32 %v4720, %v4848
      %v4850 = vpop.f32.mrb[0].mxu0
      %4851 = vmatprep.mubr.bf16.mxu0 %v3279
      %4852 = vmatmul.mubr.bf16.gmra.mrb[0].mxu0 %v3278
      %v4853 = vpop.f32.mrb[0].mxu0
      %v4854 = vadd.f32 %v4725, %v4853
      %v4855 = vpop.f32.mrb[0].mxu0
      %v4856 = vpop.f32.mrb[0].mxu0
      %v4857 = vadd.f32 %v4728, %v4856
      %v4858 = vpop.f32.mrb[0].mxu0
      %4859 = vmatprep.mubr.bf16.mxu0 %v3295
      %4860 = vmatmul.mubr.bf16.gmra.mrb[0].mxu0 %v3294
      %v4861 = vpop.f32.mrb[0].mxu0
      %v4862 = vadd.f32 %v4733, %v4861
      %v4863 = vpop.f32.mrb[0].mxu0
      %v4864 = vpop.f32.mrb[0].mxu0
      %v4865 = vadd.f32 %v4736, %v4864
      %v4866 = vpop.f32.mrb[0].mxu0
      %4867 = vmatprep.mubr.bf16.mxu0 %v3311
      %4868 = vmatmul.mubr.bf16.gmra.mrb[0].mxu0 %v3310
      %v4869 = vpop.f32.mrb[0].mxu0
      %v4870 = vadd.f32 %v4741, %v4869
      %v4871 = vpop.f32.mrb[0].mxu0
      %v4872 = vpop.f32.mrb[0].mxu0
      %v4873 = vadd.f32 %v4744, %v4872
      %v4874 = vpop.f32.mrb[0].mxu0
      %4875 = vmatprep.mubr.bf16.mxu0 %v3327
      %4876 = vmatmul.mubr.bf16.gmra.mrb[0].mxu0 %v3326
      %v4877 = vpop.f32.mrb[0].mxu0
      %v4878 = vadd.f32 %v4749, %v4877
      %v4879 = vpop.f32.mrb[0].mxu0
      %v4880 = vpop.f32.mrb[0].mxu0
      %v4881 = vadd.f32 %v4752, %v4880
      %v4882 = vpop.f32.mrb[0].mxu0
      %4883 = vmatprep.mubr.bf16.mxu0 %v3343
      %4884 = vmatmul.mubr.bf16.gmra.mrb[0].mxu0 %v3342
      %v4885 = vpop.f32.mrb[0].mxu0
      %v4886 = vadd.f32 %v4757, %v4885
      %v4887 = vpop.f32.mrb[0].mxu0
      %v4888 = vpop.f32.mrb[0].mxu0
      %v4889 = vadd.f32 %v4760, %v4888
      %v4890 = vpop.f32.mrb[0].mxu0
      %4891 = vdwg.mxu0
      %4892 = vmatprep.subr.bf16.mxu0 0
      %4893 = vmatpush1.bf16.msra.mxu0 %v4184
      %4894 = vmatprep.subr.bf16.mxu0 0
      %4895 = vmatpush1.bf16.msra.mxu0 %v4185
      %4896 = vmatprep.subr.bf16.mxu0 0
      %4897 = vmatpush1.bf16.msra.mxu0 %v4186
      %4898 = vmatprep.subr.bf16.mxu0 0
      %4899 = vmatpush1.bf16.msra.mxu0 %v4187
      %4900 = vmatprep.subr.bf16.mxu0 0
      %4901 = vmatpush1.bf16.msra.mxu0 %v4188
      %4902 = vmatprep.subr.bf16.mxu0 0
      %4903 = vmatpush1.bf16.msra.mxu0 %v4189
      %4904 = vmatprep.subr.bf16.mxu0 0
      %4905 = vmatpush1.bf16.msra.mxu0 %v4190
      %4906 = vmatprep.subr.bf16.mxu0 0
      %4907 = vmatpush1.bf16.msra.mxu0 %v4191
      %4908 = vmatprep.subr.bf16.mxu0 0
      %4909 = vmatpush1.bf16.msra.mxu0 %v4192
      %4910 = vmatprep.subr.bf16.mxu0 0
      %4911 = vmatpush1.bf16.msra.mxu0 %v4193
      %4912 = vmatprep.subr.bf16.mxu0 0
      %4913 = vmatpush1.bf16.msra.mxu0 %v4194
      %4914 = vmatprep.subr.bf16.mxu0 0
      %4915 = vmatpush1.bf16.msra.mxu0 %v4195
      %4916 = vmatprep.subr.bf16.mxu0 0
      %4917 = vmatpush1.bf16.msra.mxu0 %v4196
      %4918 = vmatprep.subr.bf16.mxu0 0
      %4919 = vmatpush1.bf16.msra.mxu0 %v4197
      %4920 = vmatprep.subr.bf16.mxu0 0
      %4921 = vmatpush1.bf16.msra.mxu0 %v4198
      %4922 = vmatprep.subr.bf16.mxu0 0
      %4923 = vmatpush1.bf16.msra.mxu0 %v4199
      %4924 = vmatprep.mubr.bf16.mxu0 %v3169
      %4925 = vmatmul.mubr.bf16.gmra.mrb[0].mxu0 %v3168
      %v4926 = vpop.f32.mrb[0].mxu0
      %v4927 = vadd.f32 %v4798, %v4926
      %v4928 = vpop.f32.mrb[0].mxu0
      %v4929 = vpop.f32.mrb[0].mxu0
      %v4930 = vadd.f32 %v4801, %v4929
      %v4931 = vpop.f32.mrb[0].mxu0
      %4932 = vmatprep.mubr.bf16.mxu0 %v3185
      %4933 = vmatmul.mubr.bf16.gmra.mrb[0].mxu0 %v3184
      %v4934 = vpop.f32.mrb[0].mxu0
      %v4935 = vadd.f32 %v4806, %v4934
      %v4936 = vpop.f32.mrb[0].mxu0
      %v4937 = vpop.f32.mrb[0].mxu0
      %v4938 = vadd.f32 %v4809, %v4937
      %v4939 = vpop.f32.mrb[0].mxu0
      %4940 = vmatprep.mubr.bf16.mxu0 %v3201
      %4941 = vmatmul.mubr.bf16.gmra.mrb[0].mxu0 %v3200
      %v4942 = vpop.f32.mrb[0].mxu0
      %v4943 = vadd.f32 %v4814, %v4942
      %v4944 = vpop.f32.mrb[0].mxu0
      %v4945 = vpop.f32.mrb[0].mxu0
      %v4946 = vadd.f32 %v4817, %v4945
      %v4947 = vpop.f32.mrb[0].mxu0
      %4948 = vmatprep.mubr.bf16.mxu0 %v3217
      %4949 = vmatmul.mubr.bf16.gmra.mrb[0].mxu0 %v3216
      %v4950 = vpop.f32.mrb[0].mxu0
      %v4951 = vadd.f32 %v4822, %v4950
      %v4952 = vpop.f32.mrb[0].mxu0
      %v4953 = vpop.f32.mrb[0].mxu0
      %v4954 = vadd.f32 %v4825, %v4953
      %v4955 = vpop.f32.mrb[0].mxu0
      %4956 = vmatprep.mubr.bf16.mxu0 %v3233
      %4957 = vmatmul.mubr.bf16.gmra.mrb[0].mxu0 %v3232
      %v4958 = vpop.f32.mrb[0].mxu0
      %v4959 = vadd.f32 %v4830, %v4958
      %v4960 = vpop.f32.mrb[0].mxu0
      %v4961 = vpop.f32.mrb[0].mxu0
      %v4962 = vadd.f32 %v4833, %v4961
      %v4963 = vpop.f32.mrb[0].mxu0
      %4964 = vmatprep.mubr.bf16.mxu0 %v3249
      %4965 = vmatmul.mubr.bf16.gmra.mrb[0].mxu0 %v3248
      %v4966 = vpop.f32.mrb[0].mxu0
      %v4967 = vadd.f32 %v4838, %v4966
      %v4968 = vpop.f32.mrb[0].mxu0
      %v4969 = vpop.f32.mrb[0].mxu0
      %v4970 = vadd.f32 %v4841, %v4969
      %v4971 = vpop.f32.mrb[0].mxu0
      %4972 = vmatprep.mubr.bf16.mxu0 %v3265
      %4973 = vmatmul.mubr.bf16.gmra.mrb[0].mxu0 %v3264
      %v4974 = vpop.f32.mrb[0].mxu0
      %v4975 = vadd.f32 %v4846, %v4974
      %v4976 = vpop.f32.mrb[0].mxu0
      %v4977 = vpop.f32.mrb[0].mxu0
      %v4978 = vadd.f32 %v4849, %v4977
      %v4979 = vpop.f32.mrb[0].mxu0
      %4980 = vmatprep.mubr.bf16.mxu0 %v3281
      %4981 = vmatmul.mubr.bf16.gmra.mrb[0].mxu0 %v3280
      %v4982 = vpop.f32.mrb[0].mxu0
      %v4983 = vadd.f32 %v4854, %v4982
      %v4984 = vpop.f32.mrb[0].mxu0
      %v4985 = vpop.f32.mrb[0].mxu0
      %v4986 = vadd.f32 %v4857, %v4985
      %v4987 = vpop.f32.mrb[0].mxu0
      %4988 = vmatprep.mubr.bf16.mxu0 %v3297
      %4989 = vmatmul.mubr.bf16.gmra.mrb[0].mxu0 %v3296
      %v4990 = vpop.f32.mrb[0].mxu0
      %v4991 = vadd.f32 %v4862, %v4990
      %v4992 = vpop.f32.mrb[0].mxu0
      %v4993 = vpop.f32.mrb[0].mxu0
      %v4994 = vadd.f32 %v4865, %v4993
      %v4995 = vpop.f32.mrb[0].mxu0
      %4996 = vmatprep.mubr.bf16.mxu0 %v3313
      %4997 = vmatmul.mubr.bf16.gmra.mrb[0].mxu0 %v3312
      %v4998 = vpop.f32.mrb[0].mxu0
      %v4999 = vadd.f32 %v4870, %v4998
      %v5000 = vpop.f32.mrb[0].mxu0
      %v5001 = vpop.f32.mrb[0].mxu0
      %v5002 = vadd.f32 %v4873, %v5001
      %v5003 = vpop.f32.mrb[0].mxu0
      %5004 = vmatprep.mubr.bf16.mxu0 %v3329
      %5005 = vmatmul.mubr.bf16.gmra.mrb[0].mxu0 %v3328
      %v5006 = vpop.f32.mrb[0].mxu0
      %v5007 = vadd.f32 %v4878, %v5006
      %v5008 = vpop.f32.mrb[0].mxu0
      %v5009 = vpop.f32.mrb[0].mxu0
      %v5010 = vadd.f32 %v4881, %v5009
      %v5011 = vpop.f32.mrb[0].mxu0
      %5012 = vmatprep.mubr.bf16.mxu0 %v3345
      %5013 = vmatmul.mubr.bf16.gmra.mrb[0].mxu0 %v3344
      %v5014 = vpop.f32.mrb[0].mxu0
      %v5015 = vadd.f32 %v4886, %v5014
      %v5016 = vpop.f32.mrb[0].mxu0
      %v5017 = vpop.f32.mrb[0].mxu0
      %v5018 = vadd.f32 %v4889, %v5017
      %v5019 = vpop.f32.mrb[0].mxu0
      %5020 = vdwg.mxu0
      %5021 = vmatprep.subr.bf16.mxu0 0
      %5022 = vmatpush1.bf16.msra.mxu0 %v4200
      %5023 = vmatprep.subr.bf16.mxu0 0
      %5024 = vmatpush1.bf16.msra.mxu0 %v4201
      %5025 = vmatprep.subr.bf16.mxu0 0
      %5026 = vmatpush1.bf16.msra.mxu0 %v4202
      %5027 = vmatprep.subr.bf16.mxu0 0
      %5028 = vmatpush1.bf16.msra.mxu0 %v4203
      %5029 = vmatprep.subr.bf16.mxu0 0
      %5030 = vmatpush1.bf16.msra.mxu0 %v4204
      %5031 = vmatprep.subr.bf16.mxu0 0
      %5032 = vmatpush1.bf16.msra.mxu0 %v4205
      %5033 = vmatprep.subr.bf16.mxu0 0
      %5034 = vmatpush1.bf16.msra.mxu0 %v4206
      %5035 = vmatprep.subr.bf16.mxu0 0
      %5036 = vmatpush1.bf16.msra.mxu0 %v4207
      %5037 = vmatprep.subr.bf16.mxu0 0
      %5038 = vmatpush1.bf16.msra.mxu0 %v4208
      %5039 = vmatprep.subr.bf16.mxu0 0
      %5040 = vmatpush1.bf16.msra.mxu0 %v4209
      %5041 = vmatprep.subr.bf16.mxu0 0
      %5042 = vmatpush1.bf16.msra.mxu0 %v4210
      %5043 = vmatprep.subr.bf16.mxu0 0
      %5044 = vmatpush1.bf16.msra.mxu0 %v4211
      %5045 = vmatprep.subr.bf16.mxu0 0
      %5046 = vmatpush1.bf16.msra.mxu0 %v4212
      %5047 = vmatprep.subr.bf16.mxu0 0
      %5048 = vmatpush1.bf16.msra.mxu0 %v4213
      %5049 = vmatprep.subr.bf16.mxu0 0
      %5050 = vmatpush1.bf16.msra.mxu0 %v4214
      %5051 = vmatprep.subr.bf16.mxu0 0
      %5052 = vmatpush1.bf16.msra.mxu0 %v4215
      %5053 = vmatprep.mubr.bf16.mxu0 %v3171
      %5054 = vmatmul.mubr.bf16.gmra.mrb[0].mxu0 %v3170
      %v5055 = vpop.f32.mrb[0].mxu0
      %v5056 = vadd.f32 %v4927, %v5055
      %v5057 = vpop.f32.mrb[0].mxu0
      %v5058 = vpop.f32.mrb[0].mxu0
      %v5059 = vadd.f32 %v4930, %v5058
      %v5060 = vpop.f32.mrb[0].mxu0
      %5061 = vmatprep.mubr.bf16.mxu0 %v3187
      %5062 = vmatmul.mubr.bf16.gmra.mrb[0].mxu0 %v3186
      %v5063 = vpop.f32.mrb[0].mxu0
      %v5064 = vadd.f32 %v4935, %v5063
      %v5065 = vpop.f32.mrb[0].mxu0
      %v5066 = vpop.f32.mrb[0].mxu0
      %v5067 = vadd.f32 %v4938, %v5066
      %v5068 = vpop.f32.mrb[0].mxu0
      %5069 = vmatprep.mubr.bf16.mxu0 %v3203
      %5070 = vmatmul.mubr.bf16.gmra.mrb[0].mxu0 %v3202
      %v5071 = vpop.f32.mrb[0].mxu0
      %v5072 = vadd.f32 %v4943, %v5071
      %v5073 = vpop.f32.mrb[0].mxu0
      %v5074 = vpop.f32.mrb[0].mxu0
      %v5075 = vadd.f32 %v4946, %v5074
      %v5076 = vpop.f32.mrb[0].mxu0
      %5077 = vmatprep.mubr.bf16.mxu0 %v3219
      %5078 = vmatmul.mubr.bf16.gmra.mrb[0].mxu0 %v3218
      %v5079 = vpop.f32.mrb[0].mxu0
      %v5080 = vadd.f32 %v4951, %v5079
      %v5081 = vpop.f32.mrb[0].mxu0
      %v5082 = vpop.f32.mrb[0].mxu0
      %v5083 = vadd.f32 %v4954, %v5082
      %v5084 = vpop.f32.mrb[0].mxu0
      %5085 = vmatprep.mubr.bf16.mxu0 %v3235
      %5086 = vmatmul.mubr.bf16.gmra.mrb[0].mxu0 %v3234
      %v5087 = vpop.f32.mrb[0].mxu0
      %v5088 = vadd.f32 %v4959, %v5087
      %v5089 = vpop.f32.mrb[0].mxu0
      %v5090 = vpop.f32.mrb[0].mxu0
      %v5091 = vadd.f32 %v4962, %v5090
      %v5092 = vpop.f32.mrb[0].mxu0
      %5093 = vmatprep.mubr.bf16.mxu0 %v3251
      %5094 = vmatmul.mubr.bf16.gmra.mrb[0].mxu0 %v3250
      %v5095 = vpop.f32.mrb[0].mxu0
      %v5096 = vadd.f32 %v4967, %v5095
      %v5097 = vpop.f32.mrb[0].mxu0
      %v5098 = vpop.f32.mrb[0].mxu0
      %v5099 = vadd.f32 %v4970, %v5098
      %v5100 = vpop.f32.mrb[0].mxu0
      %5101 = vmatprep.mubr.bf16.mxu0 %v3267
      %5102 = vmatmul.mubr.bf16.gmra.mrb[0].mxu0 %v3266
      %v5103 = vpop.f32.mrb[0].mxu0
      %v5104 = vadd.f32 %v4975, %v5103
      %v5105 = vpop.f32.mrb[0].mxu0
      %v5106 = vpop.f32.mrb[0].mxu0
      %v5107 = vadd.f32 %v4978, %v5106
      %v5108 = vpop.f32.mrb[0].mxu0
      %5109 = vmatprep.mubr.bf16.mxu0 %v3283
      %5110 = vmatmul.mubr.bf16.gmra.mrb[0].mxu0 %v3282
      %v5111 = vpop.f32.mrb[0].mxu0
      %v5112 = vadd.f32 %v4983, %v5111
      %v5113 = vpop.f32.mrb[0].mxu0
      %v5114 = vpop.f32.mrb[0].mxu0
      %v5115 = vadd.f32 %v4986, %v5114
      %v5116 = vpop.f32.mrb[0].mxu0
      %5117 = vmatprep.mubr.bf16.mxu0 %v3299
      %5118 = vmatmul.mubr.bf16.gmra.mrb[0].mxu0 %v3298
      %v5119 = vpop.f32.mrb[0].mxu0
      %v5120 = vadd.f32 %v4991, %v5119
      %v5121 = vpop.f32.mrb[0].mxu0
      %v5122 = vpop.f32.mrb[0].mxu0
      %v5123 = vadd.f32 %v4994, %v5122
      %v5124 = vpop.f32.mrb[0].mxu0
      %5125 = vmatprep.mubr.bf16.mxu0 %v3315
      %5126 = vmatmul.mubr.bf16.gmra.mrb[0].mxu0 %v3314
      %v5127 = vpop.f32.mrb[0].mxu0
      %v5128 = vadd.f32 %v4999, %v5127
      %v5129 = vpop.f32.mrb[0].mxu0
      %v5130 = vpop.f32.mrb[0].mxu0
      %v5131 = vadd.f32 %v5002, %v5130
      %v5132 = vpop.f32.mrb[0].mxu0
      %5133 = vmatprep.mubr.bf16.mxu0 %v3331
      %5134 = vmatmul.mubr.bf16.gmra.mrb[0].mxu0 %v3330
      %v5135 = vpop.f32.mrb[0].mxu0
      %v5136 = vadd.f32 %v5007, %v5135
      %v5137 = vpop.f32.mrb[0].mxu0
      %v5138 = vpop.f32.mrb[0].mxu0
      %v5139 = vadd.f32 %v5010, %v5138
      %v5140 = vpop.f32.mrb[0].mxu0
      %5141 = vmatprep.mubr.bf16.mxu0 %v3347
      %5142 = vmatmul.mubr.bf16.gmra.mrb[0].mxu0 %v3346
      %v5143 = vpop.f32.mrb[0].mxu0
      %v5144 = vadd.f32 %v5015, %v5143
      %v5145 = vpop.f32.mrb[0].mxu0
      %v5146 = vpop.f32.mrb[0].mxu0
      %v5147 = vadd.f32 %v5018, %v5146
      %v5148 = vpop.f32.mrb[0].mxu0
      %5149 = vdwg.mxu0
      %5150 = vmatprep.subr.bf16.mxu0 0
      %5151 = vmatpush1.bf16.msra.mxu0 %v4216
      %5152 = vmatprep.subr.bf16.mxu0 0
      %5153 = vmatpush1.bf16.msra.mxu0 %v4217
      %5154 = vmatprep.subr.bf16.mxu0 0
      %5155 = vmatpush1.bf16.msra.mxu0 %v4218
      %5156 = vmatprep.subr.bf16.mxu0 0
      %5157 = vmatpush1.bf16.msra.mxu0 %v4219
      %5158 = vmatprep.subr.bf16.mxu0 0
      %5159 = vmatpush1.bf16.msra.mxu0 %v4220
      %5160 = vmatprep.subr.bf16.mxu0 0
      %5161 = vmatpush1.bf16.msra.mxu0 %v4221
      %5162 = vmatprep.subr.bf16.mxu0 0
      %5163 = vmatpush1.bf16.msra.mxu0 %v4222
      %5164 = vmatprep.subr.bf16.mxu0 0
      %5165 = vmatpush1.bf16.msra.mxu0 %v4223
      %5166 = vmatprep.subr.bf16.mxu0 0
      %5167 = vmatpush1.bf16.msra.mxu0 %v4224
      %5168 = vmatprep.subr.bf16.mxu0 0
      %5169 = vmatpush1.bf16.msra.mxu0 %v4225
      %5170 = vmatprep.subr.bf16.mxu0 0
      %5171 = vmatpush1.bf16.msra.mxu0 %v4226
      %5172 = vmatprep.subr.bf16.mxu0 0
      %5173 = vmatpush1.bf16.msra.mxu0 %v4227
      %5174 = vmatprep.subr.bf16.mxu0 0
      %5175 = vmatpush1.bf16.msra.mxu0 %v4228
      %5176 = vmatprep.subr.bf16.mxu0 0
      %5177 = vmatpush1.bf16.msra.mxu0 %v4229
      %5178 = vmatprep.subr.bf16.mxu0 0
      %5179 = vmatpush1.bf16.msra.mxu0 %v4230
      %5180 = vmatprep.subr.bf16.mxu0 0
      %5181 = vmatpush1.bf16.msra.mxu0 %v4231
      %5182 = vmatprep.mubr.bf16.mxu0 %v3173
      %5183 = vmatmul.mubr.bf16.gmra.mrb[0].mxu0 %v3172
      %v5184 = vpop.f32.mrb[0].mxu0
      %v5185 = vadd.f32 %v5056, %v5184
      %v5186 = vpop.f32.mrb[0].mxu0
      %v5187 = vpop.f32.mrb[0].mxu0
      %v5188 = vadd.f32 %v5059, %v5187
      %v5189 = vpop.f32.mrb[0].mxu0
      %5190 = vmatprep.mubr.bf16.mxu0 %v3189
      %5191 = vmatmul.mubr.bf16.gmra.mrb[0].mxu0 %v3188
      %v5192 = vpop.f32.mrb[0].mxu0
      %v5193 = vadd.f32 %v5064, %v5192
      %v5194 = vpop.f32.mrb[0].mxu0
      %v5195 = vpop.f32.mrb[0].mxu0
      %v5196 = vadd.f32 %v5067, %v5195
      %v5197 = vpop.f32.mrb[0].mxu0
      %5198 = vmatprep.mubr.bf16.mxu0 %v3205
      %5199 = vmatmul.mubr.bf16.gmra.mrb[0].mxu0 %v3204
      %v5200 = vpop.f32.mrb[0].mxu0
      %v5201 = vadd.f32 %v5072, %v5200
      %v5202 = vpop.f32.mrb[0].mxu0
      %v5203 = vpop.f32.mrb[0].mxu0
      %v5204 = vadd.f32 %v5075, %v5203
      %v5205 = vpop.f32.mrb[0].mxu0
      %5206 = vmatprep.mubr.bf16.mxu0 %v3221
      %5207 = vmatmul.mubr.bf16.gmra.mrb[0].mxu0 %v3220
      %v5208 = vpop.f32.mrb[0].mxu0
      %v5209 = vadd.f32 %v5080, %v5208
      %v5210 = vpop.f32.mrb[0].mxu0
      %v5211 = vpop.f32.mrb[0].mxu0
      %v5212 = vadd.f32 %v5083, %v5211
      %v5213 = vpop.f32.mrb[0].mxu0
      %5214 = vmatprep.mubr.bf16.mxu0 %v3237
      %5215 = vmatmul.mubr.bf16.gmra.mrb[0].mxu0 %v3236
      %v5216 = vpop.f32.mrb[0].mxu0
      %v5217 = vadd.f32 %v5088, %v5216
      %v5218 = vpop.f32.mrb[0].mxu0
      %v5219 = vpop.f32.mrb[0].mxu0
      %v5220 = vadd.f32 %v5091, %v5219
      %v5221 = vpop.f32.mrb[0].mxu0
      %5222 = vmatprep.mubr.bf16.mxu0 %v3253
      %5223 = vmatmul.mubr.bf16.gmra.mrb[0].mxu0 %v3252
      %v5224 = vpop.f32.mrb[0].mxu0
      %v5225 = vadd.f32 %v5096, %v5224
      %v5226 = vpop.f32.mrb[0].mxu0
      %v5227 = vpop.f32.mrb[0].mxu0
      %v5228 = vadd.f32 %v5099, %v5227
      %v5229 = vpop.f32.mrb[0].mxu0
      %5230 = vmatprep.mubr.bf16.mxu0 %v3269
      %5231 = vmatmul.mubr.bf16.gmra.mrb[0].mxu0 %v3268
      %v5232 = vpop.f32.mrb[0].mxu0
      %v5233 = vadd.f32 %v5104, %v5232
      %v5234 = vpop.f32.mrb[0].mxu0
      %v5235 = vpop.f32.mrb[0].mxu0
      %v5236 = vadd.f32 %v5107, %v5235
      %v5237 = vpop.f32.mrb[0].mxu0
      %5238 = vmatprep.mubr.bf16.mxu0 %v3285
      %5239 = vmatmul.mubr.bf16.gmra.mrb[0].mxu0 %v3284
      %v5240 = vpop.f32.mrb[0].mxu0
      %v5241 = vadd.f32 %v5112, %v5240
      %v5242 = vpop.f32.mrb[0].mxu0
      %v5243 = vpop.f32.mrb[0].mxu0
      %v5244 = vadd.f32 %v5115, %v5243
      %v5245 = vpop.f32.mrb[0].mxu0
      %5246 = vmatprep.mubr.bf16.mxu0 %v3301
      %5247 = vmatmul.mubr.bf16.gmra.mrb[0].mxu0 %v3300
      %v5248 = vpop.f32.mrb[0].mxu0
      %v5249 = vadd.f32 %v5120, %v5248
      %v5250 = vpop.f32.mrb[0].mxu0
      %v5251 = vpop.f32.mrb[0].mxu0
      %v5252 = vadd.f32 %v5123, %v5251
      %v5253 = vpop.f32.mrb[0].mxu0
      %5254 = vmatprep.mubr.bf16.mxu0 %v3317
      %5255 = vmatmul.mubr.bf16.gmra.mrb[0].mxu0 %v3316
      %v5256 = vpop.f32.mrb[0].mxu0
      %v5257 = vadd.f32 %v5128, %v5256
      %v5258 = vpop.f32.mrb[0].mxu0
      %v5259 = vpop.f32.mrb[0].mxu0
      %v5260 = vadd.f32 %v5131, %v5259
      %v5261 = vpop.f32.mrb[0].mxu0
      %5262 = vmatprep.mubr.bf16.mxu0 %v3333
      %5263 = vmatmul.mubr.bf16.gmra.mrb[0].mxu0 %v3332
      %v5264 = vpop.f32.mrb[0].mxu0
      %v5265 = vadd.f32 %v5136, %v5264
      %v5266 = vpop.f32.mrb[0].mxu0
      %v5267 = vpop.f32.mrb[0].mxu0
      %v5268 = vadd.f32 %v5139, %v5267
      %v5269 = vpop.f32.mrb[0].mxu0
      %5270 = vmatprep.mubr.bf16.mxu0 %v3349
      %5271 = vmatmul.mubr.bf16.gmra.mrb[0].mxu0 %v3348
      %v5272 = vpop.f32.mrb[0].mxu0
      %v5273 = vadd.f32 %v5144, %v5272
      %v5274 = vpop.f32.mrb[0].mxu0
      %v5275 = vpop.f32.mrb[0].mxu0
      %v5276 = vadd.f32 %v5147, %v5275
      %v5277 = vpop.f32.mrb[0].mxu0
      %5278 = vdwg.mxu0
      %5279 = vmatprep.subr.bf16.mxu0 0
      %5280 = vmatpush1.bf16.msra.mxu0 %v4232
      %5281 = vmatprep.subr.bf16.mxu0 0
      %5282 = vmatpush1.bf16.msra.mxu0 %v4233
      %5283 = vmatprep.subr.bf16.mxu0 0
      %5284 = vmatpush1.bf16.msra.mxu0 %v4234
      %5285 = vmatprep.subr.bf16.mxu0 0
      %5286 = vmatpush1.bf16.msra.mxu0 %v4235
      %5287 = vmatprep.subr.bf16.mxu0 0
      %5288 = vmatpush1.bf16.msra.mxu0 %v4236
      %5289 = vmatprep.subr.bf16.mxu0 0
      %5290 = vmatpush1.bf16.msra.mxu0 %v4237
      %5291 = vmatprep.subr.bf16.mxu0 0
      %5292 = vmatpush1.bf16.msra.mxu0 %v4238
      %5293 = vmatprep.subr.bf16.mxu0 0
      %5294 = vmatpush1.bf16.msra.mxu0 %v4239
      %5295 = vmatprep.subr.bf16.mxu0 0
      %5296 = vmatpush1.bf16.msra.mxu0 %v4240
      %5297 = vmatprep.subr.bf16.mxu0 0
      %5298 = vmatpush1.bf16.msra.mxu0 %v4241
      %5299 = vmatprep.subr.bf16.mxu0 0
      %5300 = vmatpush1.bf16.msra.mxu0 %v4242
      %5301 = vmatprep.subr.bf16.mxu0 0
      %5302 = vmatpush1.bf16.msra.mxu0 %v4243
      %5303 = vmatprep.subr.bf16.mxu0 0
      %5304 = vmatpush1.bf16.msra.mxu0 %v4244
      %5305 = vmatprep.subr.bf16.mxu0 0
      %5306 = vmatpush1.bf16.msra.mxu0 %v4245
      %5307 = vmatprep.subr.bf16.mxu0 0
      %5308 = vmatpush1.bf16.msra.mxu0 %v4246
      %5309 = vmatprep.subr.bf16.mxu0 0
      %5310 = vmatpush1.bf16.msra.mxu0 %v4247
      %5311 = vmatprep.mubr.bf16.mxu0 %v3175
      %5312 = vmatmul.mubr.bf16.gmra.mrb[0].mxu0 %v3174
      %v5313 = vpop.f32.mrb[0].mxu0
      %v5314 = vadd.f32 %v5185, %v5313
      %v5315 = vpop.f32.mrb[0].mxu0
      %v5316 = vpop.f32.mrb[0].mxu0
      %v5317 = vadd.f32 %v5188, %v5316
      %v5318 = vpop.f32.mrb[0].mxu0
      %5319 = vmatprep.mubr.bf16.mxu0 %v3191
      %5320 = vmatmul.mubr.bf16.gmra.mrb[0].mxu0 %v3190
      %v5321 = vpop.f32.mrb[0].mxu0
      %v5322 = vadd.f32 %v5193, %v5321
      %v5323 = vpop.f32.mrb[0].mxu0
      %v5324 = vpop.f32.mrb[0].mxu0
      %v5325 = vadd.f32 %v5196, %v5324
      %v5326 = vpop.f32.mrb[0].mxu0
      %5327 = vmatprep.mubr.bf16.mxu0 %v3207
      %5328 = vmatmul.mubr.bf16.gmra.mrb[0].mxu0 %v3206
      %v5329 = vpop.f32.mrb[0].mxu0
      %v5330 = vadd.f32 %v5201, %v5329
      %v5331 = vpop.f32.mrb[0].mxu0
      %v5332 = vpop.f32.mrb[0].mxu0
      %v5333 = vadd.f32 %v5204, %v5332
      %v5334 = vpop.f32.mrb[0].mxu0
      %5335 = vmatprep.mubr.bf16.mxu0 %v3223
      %5336 = vmatmul.mubr.bf16.gmra.mrb[0].mxu0 %v3222
      %v5337 = vpop.f32.mrb[0].mxu0
      %v5338 = vadd.f32 %v5209, %v5337
      %v5339 = vpop.f32.mrb[0].mxu0
      %v5340 = vpop.f32.mrb[0].mxu0
      %v5341 = vadd.f32 %v5212, %v5340
      %v5342 = vpop.f32.mrb[0].mxu0
      %5343 = vmatprep.mubr.bf16.mxu0 %v3239
      %5344 = vmatmul.mubr.bf16.gmra.mrb[0].mxu0 %v3238
      %v5345 = vpop.f32.mrb[0].mxu0
      %v5346 = vadd.f32 %v5217, %v5345
      %v5347 = vpop.f32.mrb[0].mxu0
      %v5348 = vpop.f32.mrb[0].mxu0
      %v5349 = vadd.f32 %v5220, %v5348
      %v5350 = vpop.f32.mrb[0].mxu0
      %5351 = vmatprep.mubr.bf16.mxu0 %v3255
      %5352 = vmatmul.mubr.bf16.gmra.mrb[0].mxu0 %v3254
      %v5353 = vpop.f32.mrb[0].mxu0
      %v5354 = vadd.f32 %v5225, %v5353
      %v5355 = vpop.f32.mrb[0].mxu0
      %v5356 = vpop.f32.mrb[0].mxu0
      %v5357 = vadd.f32 %v5228, %v5356
      %v5358 = vpop.f32.mrb[0].mxu0
      %5359 = vmatprep.mubr.bf16.mxu0 %v3271
      %5360 = vmatmul.mubr.bf16.gmra.mrb[0].mxu0 %v3270
      %v5361 = vpop.f32.mrb[0].mxu0
      %v5362 = vadd.f32 %v5233, %v5361
      %v5363 = vpop.f32.mrb[0].mxu0
      %v5364 = vpop.f32.mrb[0].mxu0
      %v5365 = vadd.f32 %v5236, %v5364
      %v5366 = vpop.f32.mrb[0].mxu0
      %5367 = vmatprep.mubr.bf16.mxu0 %v3287
      %5368 = vmatmul.mubr.bf16.gmra.mrb[0].mxu0 %v3286
      %v5369 = vpop.f32.mrb[0].mxu0
      %v5370 = vadd.f32 %v5241, %v5369
      %v5371 = vpop.f32.mrb[0].mxu0
      %v5372 = vpop.f32.mrb[0].mxu0
      %v5373 = vadd.f32 %v5244, %v5372
      %v5374 = vpop.f32.mrb[0].mxu0
      %5375 = vmatprep.mubr.bf16.mxu0 %v3303
      %5376 = vmatmul.mubr.bf16.gmra.mrb[0].mxu0 %v3302
      %v5377 = vpop.f32.mrb[0].mxu0
      %v5378 = vadd.f32 %v5249, %v5377
      %v5379 = vpop.f32.mrb[0].mxu0
      %v5380 = vpop.f32.mrb[0].mxu0
      %v5381 = vadd.f32 %v5252, %v5380
      %v5382 = vpop.f32.mrb[0].mxu0
      %5383 = vmatprep.mubr.bf16.mxu0 %v3319
      %5384 = vmatmul.mubr.bf16.gmra.mrb[0].mxu0 %v3318
      %v5385 = vpop.f32.mrb[0].mxu0
      %v5386 = vadd.f32 %v5257, %v5385
      %v5387 = vpop.f32.mrb[0].mxu0
      %v5388 = vpop.f32.mrb[0].mxu0
      %v5389 = vadd.f32 %v5260, %v5388
      %v5390 = vpop.f32.mrb[0].mxu0
      %5391 = vmatprep.mubr.bf16.mxu0 %v3335
      %5392 = vmatmul.mubr.bf16.gmra.mrb[0].mxu0 %v3334
      %v5393 = vpop.f32.mrb[0].mxu0
      %v5394 = vadd.f32 %v5265, %v5393
      %v5395 = vpop.f32.mrb[0].mxu0
      %v5396 = vpop.f32.mrb[0].mxu0
      %v5397 = vadd.f32 %v5268, %v5396
      %v5398 = vpop.f32.mrb[0].mxu0
      %5399 = vmatprep.mubr.bf16.mxu0 %v3351
      %5400 = vmatmul.mubr.bf16.gmra.mrb[0].mxu0 %v3350
      %v5401 = vpop.f32.mrb[0].mxu0
      %v5402 = vadd.f32 %v5273, %v5401
      %v5403 = vpop.f32.mrb[0].mxu0
      %v5404 = vpop.f32.mrb[0].mxu0
      %v5405 = vadd.f32 %v5276, %v5404
      %v5406 = vpop.f32.mrb[0].mxu0
      %5407 = vdwg.mxu0
      %v5408 = vld [vmem:[%s5] sm:$0xff]
      %v5409 = vld [vmem:[%s5 + $0x8] sm:$0xff]
      %v5410 = vld [vmem:[%s5 + $0x10] sm:$0xff]
      %v5411 = vld [vmem:[%s5 + $0x18] sm:$0xff]
      %v5412 = vld [vmem:[%s5 + $0x20] sm:$0xff]
      %v5413 = vld [vmem:[%s5 + $0x28] sm:$0xff]
      %v5414 = vld [vmem:[%s5 + $0x30] sm:$0xff]
      %v5415 = vld [vmem:[%s5 + $0x38] sm:$0xff]
      %v5416 = vld [vmem:[%s5 + $0x40] sm:$0xf]
      %v5417 = vld [vmem:[%s5 + $0x48] sm:$0xf]
      %vm5418 = vcmask 523264
      %v5420 = vsel %vm5418, %v5409, 0
      %v5423 = vsel %vm5418, %v5411, 0
      %v5426 = vsel %vm5418, %v5413, 0
      %v5429 = vsel %vm5418, %v5415, 0
      %v5432 = vsel %vm5418, %v5417, 0
      %5434 = vmatprep.subr.mxu0 0.0
      %5435 = vmatpush1.msra.mxu0 %v5314
      %5436 = vmatprep.subr.mxu0 0.0
      %5437 = vmatpush1.msra.mxu0 %v5317
      %5438 = vmatprep.subr.mxu0 0.0
      %5439 = vmatpush1.msra.mxu0 %v5322
      %5440 = vmatprep.subr.mxu0 0.0
      %5441 = vmatpush1.msra.mxu0 %v5325
      %5442 = vmatprep.subr.mxu0 0.0
      %5443 = vmatpush1.msra.mxu0 %v5330
      %5444 = vmatprep.subr.mxu0 0.0
      %5445 = vmatpush1.msra.mxu0 %v5333
      %5446 = vmatprep.subr.mxu0 0.0
      %5447 = vmatpush1.msra.mxu0 %v5338
      %5448 = vmatprep.subr.mxu0 0.0
      %5449 = vmatpush1.msra.mxu0 %v5341
      %5450 = vmatprep.subr.mxu0 0.0
      %5451 = vmatpush1.msra.mxu0 %v5346
      %5452 = vmatprep.subr.mxu0 0.0
      %5453 = vmatpush1.msra.mxu0 %v5349
      %5454 = vmatprep.subr.mxu0 0.0
      %5455 = vmatpush1.msra.mxu0 %v5354
      %5456 = vmatprep.subr.mxu0 0.0
      %5457 = vmatpush1.msra.mxu0 %v5357
      %5458 = vmatprep.subr.mxu0 0.0
      %5459 = vmatpush1.msra.mxu0 %v5362
      %5460 = vmatprep.subr.mxu0 0.0
      %5461 = vmatpush1.msra.mxu0 %v5365
      %5462 = vmatprep.subr.mxu0 0.0
      %5463 = vmatpush1.msra.mxu0 %v5370
      %5464 = vmatprep.subr.mxu0 0.0
      %5465 = vmatpush1.msra.mxu0 %v5373
      %5466 = vmatprep.subr.mxu0 0.0
      %5467 = vmatpush1.msra.mxu0 %v5378
      %5468 = vmatprep.subr.mxu0 0.0
      %5469 = vmatpush1.msra.mxu0 %v5381
      %5470 = vmatprep.subr.mxu0 0.0
      %5471 = vmatpush1.msra.mxu0 %v5386
      %5472 = vmatprep.subr.mxu0 0.0
      %5473 = vmatpush1.msra.mxu0 %v5389
      %5474 = vmatprep.subr.mxu0 0.0
      %5475 = vmatpush1.msra.mxu0 %v5394
      %5476 = vmatprep.subr.mxu0 0.0
      %5477 = vmatpush1.msra.mxu0 %v5397
      %5478 = vmatprep.subr.mxu0 0.0
      %5479 = vmatpush1.msra.mxu0 %v5402
      %5480 = vmatprep.subr.mxu0 0.0
      %5481 = vmatpush1.msra.mxu0 %v5405
      %5482 = vmatprep.subr.mxu0 0.0
      %5483 = vmatpush1.msra.mxu0 0.0
      %5484 = vmatprep.subr.mxu0 0.0
      %5485 = vmatpush1.msra.mxu0 0.0
      %5486 = vmatprep.subr.mxu0 0.0
      %5487 = vmatpush1.msra.mxu0 0.0
      %5488 = vmatprep.subr.mxu0 0.0
      %5489 = vmatpush1.msra.mxu0 0.0
      %5490 = vmatprep.subr.mxu0 0.0
      %5491 = vmatpush1.msra.mxu0 0.0
      %5492 = vmatprep.subr.mxu0 0.0
      %5493 = vmatpush1.msra.mxu0 0.0
      %5494 = vmatprep.subr.mxu0 0.0
      %5495 = vmatpush1.msra.mxu0 0.0
      %5496 = vmatprep.subr.mxu0 0.0
      %5497 = vmatpush1.msra.mxu0 0.0
      %5498 = vmatprep.mubr.f32.mxu0 %v5420
      %5499 = vmatmul.mubr.f32.gmra.mrb[0].mxu0 %v5408
      %v5500 = vpop.f32.mrb[0].mxu0
      %v5501 = vadd.f32 0.0, %v5500
      %v5502 = vpop.f32.mrb[0].mxu0
      %5503 = vmatprep.mubr.f32.mxu0 %v5423
      %5504 = vmatmul.mubr.f32.gmra.mrb[0].mxu0 %v5410
      %v5505 = vpop.f32.mrb[0].mxu0
      %v5506 = vadd.f32 0.0, %v5505
      %v5507 = vpop.f32.mrb[0].mxu0
      %5508 = vmatprep.mubr.f32.mxu0 %v5426
      %5509 = vmatmul.mubr.f32.gmra.mrb[0].mxu0 %v5412
      %v5510 = vpop.f32.mrb[0].mxu0
      %v5511 = vadd.f32 0.0, %v5510
      %v5512 = vpop.f32.mrb[0].mxu0
      %5513 = vmatprep.mubr.f32.mxu0 %v5429
      %5514 = vmatmul.mubr.f32.gmra.mrb[0].mxu0 %v5414
      %v5515 = vpop.f32.mrb[0].mxu0
      %v5516 = vadd.f32 0.0, %v5515
      %v5517 = vpop.f32.mrb[0].mxu0
      %5518 = vmatprep.mubr.f32.mxu0 %v5432
      %5519 = vmatmul.mubr.f32.gmra.mrb[0].mxu0 %v5416
      %v5520 = vpop.f32.mrb[0].mxu0
      %v5521 = vadd.f32 0.0, %v5520
      %v5522 = vpop.f32.mrb[0].mxu0
      %5523 = vdwg.mxu0
      %s5524 = scalar_lea.vmem %s5, 80
      %v5525 = vld [vmem:[%s5524] sm:$0xff]
      %v5526 = vld [vmem:[%s5524 + $0x8] sm:$0xff]
      %v5527 = vld [vmem:[%s5524 + $0x10] sm:$0xff]
      %v5528 = vld [vmem:[%s5524 + $0x18] sm:$0xff]
      %v5529 = vld [vmem:[%s5524 + $0x20] sm:$0xff]
      %v5530 = vld [vmem:[%s5524 + $0x28] sm:$0xff]
      %v5531 = vld [vmem:[%s5524 + $0x30] sm:$0xff]
      %v5532 = vld [vmem:[%s5524 + $0x38] sm:$0xff]
      %v5533 = vld [vmem:[%s5524 + $0x40] sm:$0xf]
      %v5534 = vld [vmem:[%s5524 + $0x48] sm:$0xf]
      %v5536 = vsel %vm5418, %v5526, 0
      %v5539 = vsel %vm5418, %v5528, 0
      %v5542 = vsel %vm5418, %v5530, 0
      %v5545 = vsel %vm5418, %v5532, 0
      %v5548 = vsel %vm5418, %v5534, 0
      %5550 = vmatprep.subr.mxu0 0.0
      %5551 = vmatpush1.msra.mxu0 %v5314
      %5552 = vmatprep.subr.mxu0 0.0
      %5553 = vmatpush1.msra.mxu0 %v5317
      %5554 = vmatprep.subr.mxu0 0.0
      %5555 = vmatpush1.msra.mxu0 %v5322
      %5556 = vmatprep.subr.mxu0 0.0
      %5557 = vmatpush1.msra.mxu0 %v5325
      %5558 = vmatprep.subr.mxu0 0.0
      %5559 = vmatpush1.msra.mxu0 %v5330
      %5560 = vmatprep.subr.mxu0 0.0
      %5561 = vmatpush1.msra.mxu0 %v5333
      %5562 = vmatprep.subr.mxu0 0.0
      %5563 = vmatpush1.msra.mxu0 %v5338
      %5564 = vmatprep.subr.mxu0 0.0
      %5565 = vmatpush1.msra.mxu0 %v5341
      %5566 = vmatprep.subr.mxu0 0.0
      %5567 = vmatpush1.msra.mxu0 %v5346
      %5568 = vmatprep.subr.mxu0 0.0
      %5569 = vmatpush1.msra.mxu0 %v5349
      %5570 = vmatprep.subr.mxu0 0.0
      %5571 = vmatpush1.msra.mxu0 %v5354
      %5572 = vmatprep.subr.mxu0 0.0
      %5573 = vmatpush1.msra.mxu0 %v5357
      %5574 = vmatprep.subr.mxu0 0.0
      %5575 = vmatpush1.msra.mxu0 %v5362
      %5576 = vmatprep.subr.mxu0 0.0
      %5577 = vmatpush1.msra.mxu0 %v5365
      %5578 = vmatprep.subr.mxu0 0.0
      %5579 = vmatpush1.msra.mxu0 %v5370
      %5580 = vmatprep.subr.mxu0 0.0
      %5581 = vmatpush1.msra.mxu0 %v5373
      %5582 = vmatprep.subr.mxu0 0.0
      %5583 = vmatpush1.msra.mxu0 %v5378
      %5584 = vmatprep.subr.mxu0 0.0
      %5585 = vmatpush1.msra.mxu0 %v5381
      %5586 = vmatprep.subr.mxu0 0.0
      %5587 = vmatpush1.msra.mxu0 %v5386
      %5588 = vmatprep.subr.mxu0 0.0
      %5589 = vmatpush1.msra.mxu0 %v5389
      %5590 = vmatprep.subr.mxu0 0.0
      %5591 = vmatpush1.msra.mxu0 %v5394
      %5592 = vmatprep.subr.mxu0 0.0
      %5593 = vmatpush1.msra.mxu0 %v5397
      %5594 = vmatprep.subr.mxu0 0.0
      %5595 = vmatpush1.msra.mxu0 %v5402
      %5596 = vmatprep.subr.mxu0 0.0
      %5597 = vmatpush1.msra.mxu0 %v5405
      %5598 = vmatprep.subr.mxu0 0.0
      %5599 = vmatpush1.msra.mxu0 0.0
      %5600 = vmatprep.subr.mxu0 0.0
      %5601 = vmatpush1.msra.mxu0 0.0
      %5602 = vmatprep.subr.mxu0 0.0
      %5603 = vmatpush1.msra.mxu0 0.0
      %5604 = vmatprep.subr.mxu0 0.0
      %5605 = vmatpush1.msra.mxu0 0.0
      %5606 = vmatprep.subr.mxu0 0.0
      %5607 = vmatpush1.msra.mxu0 0.0
      %5608 = vmatprep.subr.mxu0 0.0
      %5609 = vmatpush1.msra.mxu0 0.0
      %5610 = vmatprep.subr.mxu0 0.0
      %5611 = vmatpush1.msra.mxu0 0.0
      %5612 = vmatprep.subr.mxu0 0.0
      %5613 = vmatpush1.msra.mxu0 0.0
      %5614 = vmatprep.mubr.f32.mxu0 %v5536
      %5615 = vmatmul.mubr.f32.gmra.mrb[0].mxu0 %v5525
      %v5616 = vpop.f32.mrb[0].mxu0
      %v5617 = vadd.f32 0.0, %v5616
      %v5618 = vpop.f32.mrb[0].mxu0
      %5619 = vmatprep.mubr.f32.mxu0 %v5539
      %5620 = vmatmul.mubr.f32.gmra.mrb[0].mxu0 %v5527
      %v5621 = vpop.f32.mrb[0].mxu0
      %v5622 = vadd.f32 0.0, %v5621
      %v5623 = vpop.f32.mrb[0].mxu0
      %5624 = vmatprep.mubr.f32.mxu0 %v5542
      %5625 = vmatmul.mubr.f32.gmra.mrb[0].mxu0 %v5529
      %v5626 = vpop.f32.mrb[0].mxu0
      %v5627 = vadd.f32 0.0, %v5626
      %v5628 = vpop.f32.mrb[0].mxu0
      %5629 = vmatprep.mubr.f32.mxu0 %v5545
      %5630 = vmatmul.mubr.f32.gmra.mrb[0].mxu0 %v5531
      %v5631 = vpop.f32.mrb[0].mxu0
      %v5632 = vadd.f32 0.0, %v5631
      %v5633 = vpop.f32.mrb[0].mxu0
      %5634 = vmatprep.mubr.f32.mxu0 %v5548
      %5635 = vmatmul.mubr.f32.gmra.mrb[0].mxu0 %v5533
      %v5636 = vpop.f32.mrb[0].mxu0
      %v5637 = vadd.f32 0.0, %v5636
      %v5638 = vpop.f32.mrb[0].mxu0
      %5639 = vdwg.mxu0
      %v5640 = vmax.f32 %v5501, %v5617
      %v5641 = vmax.f32 %v5506, %v5622
      %v5642 = vmax.f32 %v5511, %v5627
      %v5643 = vmax.f32 %v5516, %v5632
      %v5644 = vmax.f32 %v5521, %v5637
      %s5645 = scalar_lea.vmem %s5, 160
      %v5646 = vld [vmem:[%s5645] sm:$0xff]
      %v5647 = vld [vmem:[%s5645 + $0x8] sm:$0xff]
      %v5648 = vld [vmem:[%s5645 + $0x10] sm:$0xff]
      %v5649 = vld [vmem:[%s5645 + $0x18] sm:$0xff]
      %v5650 = vld [vmem:[%s5645 + $0x20] sm:$0xff]
      %v5651 = vld [vmem:[%s5645 + $0x28] sm:$0xff]
      %v5652 = vld [vmem:[%s5645 + $0x30] sm:$0xff]
      %v5653 = vld [vmem:[%s5645 + $0x38] sm:$0xff]
      %v5654 = vld [vmem:[%s5645 + $0x40] sm:$0xf]
      %v5655 = vld [vmem:[%s5645 + $0x48] sm:$0xf]
      %v5657 = vsel %vm5418, %v5647, 0
      %v5660 = vsel %vm5418, %v5649, 0
      %v5663 = vsel %vm5418, %v5651, 0
      %v5666 = vsel %vm5418, %v5653, 0
      %v5669 = vsel %vm5418, %v5655, 0
      %5671 = vmatprep.subr.mxu0 0.0
      %5672 = vmatpush1.msra.mxu0 %v5314
      %5673 = vmatprep.subr.mxu0 0.0
      %5674 = vmatpush1.msra.mxu0 %v5317
      %5675 = vmatprep.subr.mxu0 0.0
      %5676 = vmatpush1.msra.mxu0 %v5322
      %5677 = vmatprep.subr.mxu0 0.0
      %5678 = vmatpush1.msra.mxu0 %v5325
      %5679 = vmatprep.subr.mxu0 0.0
      %5680 = vmatpush1.msra.mxu0 %v5330
      %5681 = vmatprep.subr.mxu0 0.0
      %5682 = vmatpush1.msra.mxu0 %v5333
      %5683 = vmatprep.subr.mxu0 0.0
      %5684 = vmatpush1.msra.mxu0 %v5338
      %5685 = vmatprep.subr.mxu0 0.0
      %5686 = vmatpush1.msra.mxu0 %v5341
      %5687 = vmatprep.subr.mxu0 0.0
      %5688 = vmatpush1.msra.mxu0 %v5346
      %5689 = vmatprep.subr.mxu0 0.0
      %5690 = vmatpush1.msra.mxu0 %v5349
      %5691 = vmatprep.subr.mxu0 0.0
      %5692 = vmatpush1.msra.mxu0 %v5354
      %5693 = vmatprep.subr.mxu0 0.0
      %5694 = vmatpush1.msra.mxu0 %v5357
      %5695 = vmatprep.subr.mxu0 0.0
      %5696 = vmatpush1.msra.mxu0 %v5362
      %5697 = vmatprep.subr.mxu0 0.0
      %5698 = vmatpush1.msra.mxu0 %v5365
      %5699 = vmatprep.subr.mxu0 0.0
      %5700 = vmatpush1.msra.mxu0 %v5370
      %5701 = vmatprep.subr.mxu0 0.0
      %5702 = vmatpush1.msra.mxu0 %v5373
      %5703 = vmatprep.subr.mxu0 0.0
      %5704 = vmatpush1.msra.mxu0 %v5378
      %5705 = vmatprep.subr.mxu0 0.0
      %5706 = vmatpush1.msra.mxu0 %v5381
      %5707 = vmatprep.subr.mxu0 0.0
      %5708 = vmatpush1.msra.mxu0 %v5386
      %5709 = vmatprep.subr.mxu0 0.0
      %5710 = vmatpush1.msra.mxu0 %v5389
      %5711 = vmatprep.subr.mxu0 0.0
      %5712 = vmatpush1.msra.mxu0 %v5394
      %5713 = vmatprep.subr.mxu0 0.0
      %5714 = vmatpush1.msra.mxu0 %v5397
      %5715 = vmatprep.subr.mxu0 0.0
      %5716 = vmatpush1.msra.mxu0 %v5402
      %5717 = vmatprep.subr.mxu0 0.0
      %5718 = vmatpush1.msra.mxu0 %v5405
      %5719 = vmatprep.subr.mxu0 0.0
      %5720 = vmatpush1.msra.mxu0 0.0
      %5721 = vmatprep.subr.mxu0 0.0
      %5722 = vmatpush1.msra.mxu0 0.0
      %5723 = vmatprep.subr.mxu0 0.0
      %5724 = vmatpush1.msra.mxu0 0.0
      %5725 = vmatprep.subr.mxu0 0.0
      %5726 = vmatpush1.msra.mxu0 0.0
      %5727 = vmatprep.subr.mxu0 0.0
      %5728 = vmatpush1.msra.mxu0 0.0
      %5729 = vmatprep.subr.mxu0 0.0
      %5730 = vmatpush1.msra.mxu0 0.0
      %5731 = vmatprep.subr.mxu0 0.0
      %5732 = vmatpush1.msra.mxu0 0.0
      %5733 = vmatprep.subr.mxu0 0.0
      %5734 = vmatpush1.msra.mxu0 0.0
      %5735 = vmatprep.mubr.f32.mxu0 %v5657
      %5736 = vmatmul.mubr.f32.gmra.mrb[0].mxu0 %v5646
      %v5737 = vpop.f32.mrb[0].mxu0
      %v5738 = vadd.f32 0.0, %v5737
      %v5739 = vpop.f32.mrb[0].mxu0
      %5740 = vmatprep.mubr.f32.mxu0 %v5660
      %5741 = vmatmul.mubr.f32.gmra.mrb[0].mxu0 %v5648
      %v5742 = vpop.f32.mrb[0].mxu0
      %v5743 = vadd.f32 0.0, %v5742
      %v5744 = vpop.f32.mrb[0].mxu0
      %5745 = vmatprep.mubr.f32.mxu0 %v5663
      %5746 = vmatmul.mubr.f32.gmra.mrb[0].mxu0 %v5650
      %v5747 = vpop.f32.mrb[0].mxu0
      %v5748 = vadd.f32 0.0, %v5747
      %v5749 = vpop.f32.mrb[0].mxu0
      %5750 = vmatprep.mubr.f32.mxu0 %v5666
      %5751 = vmatmul.mubr.f32.gmra.mrb[0].mxu0 %v5652
      %v5752 = vpop.f32.mrb[0].mxu0
      %v5753 = vadd.f32 0.0, %v5752
      %v5754 = vpop.f32.mrb[0].mxu0
      %5755 = vmatprep.mubr.f32.mxu0 %v5669
      %5756 = vmatmul.mubr.f32.gmra.mrb[0].mxu0 %v5654
      %v5757 = vpop.f32.mrb[0].mxu0
      %v5758 = vadd.f32 0.0, %v5757
      %v5759 = vpop.f32.mrb[0].mxu0
      %5760 = vdwg.mxu0
      %v5761 = vmax.f32 %v5640, %v5738
      %v5762 = vmax.f32 %v5641, %v5743
      %v5763 = vmax.f32 %v5642, %v5748
      %v5764 = vmax.f32 %v5643, %v5753
      %v5765 = vmax.f32 %v5644, %v5758
      %s5766 = scalar_lea.vmem %s5, 240
      %v5767 = vld [vmem:[%s5766] sm:$0xff]
      %v5768 = vld [vmem:[%s5766 + $0x8] sm:$0xff]
      %v5769 = vld [vmem:[%s5766 + $0x10] sm:$0xff]
      %v5770 = vld [vmem:[%s5766 + $0x18] sm:$0xff]
      %v5771 = vld [vmem:[%s5766 + $0x20] sm:$0xff]
      %v5772 = vld [vmem:[%s5766 + $0x28] sm:$0xff]
      %v5773 = vld [vmem:[%s5766 + $0x30] sm:$0xff]
      %v5774 = vld [vmem:[%s5766 + $0x38] sm:$0xff]
      %v5775 = vld [vmem:[%s5766 + $0x40] sm:$0xf]
      %v5776 = vld [vmem:[%s5766 + $0x48] sm:$0xf]
      %v5778 = vsel %vm5418, %v5768, 0
      %v5781 = vsel %vm5418, %v5770, 0
      %v5784 = vsel %vm5418, %v5772, 0
      %v5787 = vsel %vm5418, %v5774, 0
      %v5790 = vsel %vm5418, %v5776, 0
      %5792 = vmatprep.subr.mxu0 0.0
      %5793 = vmatpush1.msra.mxu0 %v5314
      %5794 = vmatprep.subr.mxu0 0.0
      %5795 = vmatpush1.msra.mxu0 %v5317
      %5796 = vmatprep.subr.mxu0 0.0
      %5797 = vmatpush1.msra.mxu0 %v5322
      %5798 = vmatprep.subr.mxu0 0.0
      %5799 = vmatpush1.msra.mxu0 %v5325
      %5800 = vmatprep.subr.mxu0 0.0
      %5801 = vmatpush1.msra.mxu0 %v5330
      %5802 = vmatprep.subr.mxu0 0.0
      %5803 = vmatpush1.msra.mxu0 %v5333
      %5804 = vmatprep.subr.mxu0 0.0
      %5805 = vmatpush1.msra.mxu0 %v5338
      %5806 = vmatprep.subr.mxu0 0.0
      %5807 = vmatpush1.msra.mxu0 %v5341
      %5808 = vmatprep.subr.mxu0 0.0
      %5809 = vmatpush1.msra.mxu0 %v5346
      %5810 = vmatprep.subr.mxu0 0.0
      %5811 = vmatpush1.msra.mxu0 %v5349
      %5812 = vmatprep.subr.mxu0 0.0
      %5813 = vmatpush1.msra.mxu0 %v5354
      %5814 = vmatprep.subr.mxu0 0.0
      %5815 = vmatpush1.msra.mxu0 %v5357
      %5816 = vmatprep.subr.mxu0 0.0
      %5817 = vmatpush1.msra.mxu0 %v5362
      %5818 = vmatprep.subr.mxu0 0.0
      %5819 = vmatpush1.msra.mxu0 %v5365
      %5820 = vmatprep.subr.mxu0 0.0
      %5821 = vmatpush1.msra.mxu0 %v5370
      %5822 = vmatprep.subr.mxu0 0.0
      %5823 = vmatpush1.msra.mxu0 %v5373
      %5824 = vmatprep.subr.mxu0 0.0
      %5825 = vmatpush1.msra.mxu0 %v5378
      %5826 = vmatprep.subr.mxu0 0.0
      %5827 = vmatpush1.msra.mxu0 %v5381
      %5828 = vmatprep.subr.mxu0 0.0
      %5829 = vmatpush1.msra.mxu0 %v5386
      %5830 = vmatprep.subr.mxu0 0.0
      %5831 = vmatpush1.msra.mxu0 %v5389
      %5832 = vmatprep.subr.mxu0 0.0
      %5833 = vmatpush1.msra.mxu0 %v5394
      %5834 = vmatprep.subr.mxu0 0.0
      %5835 = vmatpush1.msra.mxu0 %v5397
      %5836 = vmatprep.subr.mxu0 0.0
      %5837 = vmatpush1.msra.mxu0 %v5402
      %5838 = vmatprep.subr.mxu0 0.0
      %5839 = vmatpush1.msra.mxu0 %v5405
      %5840 = vmatprep.subr.mxu0 0.0
      %5841 = vmatpush1.msra.mxu0 0.0
      %5842 = vmatprep.subr.mxu0 0.0
      %5843 = vmatpush1.msra.mxu0 0.0
      %5844 = vmatprep.subr.mxu0 0.0
      %5845 = vmatpush1.msra.mxu0 0.0
      %5846 = vmatprep.subr.mxu0 0.0
      %5847 = vmatpush1.msra.mxu0 0.0
      %5848 = vmatprep.subr.mxu0 0.0
      %5849 = vmatpush1.msra.mxu0 0.0
      %5850 = vmatprep.subr.mxu0 0.0
      %5851 = vmatpush1.msra.mxu0 0.0
      %5852 = vmatprep.subr.mxu0 0.0
      %5853 = vmatpush1.msra.mxu0 0.0
      %5854 = vmatprep.subr.mxu0 0.0
      %5855 = vmatpush1.msra.mxu0 0.0
      %5856 = vmatprep.mubr.f32.mxu0 %v5778
      %5857 = vmatmul.mubr.f32.gmra.mrb[0].mxu0 %v5767
      %v5858 = vpop.f32.mrb[0].mxu0
      %v5859 = vadd.f32 0.0, %v5858
      %v5860 = vpop.f32.mrb[0].mxu0
      %5861 = vmatprep.mubr.f32.mxu0 %v5781
      %5862 = vmatmul.mubr.f32.gmra.mrb[0].mxu0 %v5769
      %v5863 = vpop.f32.mrb[0].mxu0
      %v5864 = vadd.f32 0.0, %v5863
      %v5865 = vpop.f32.mrb[0].mxu0
      %5866 = vmatprep.mubr.f32.mxu0 %v5784
      %5867 = vmatmul.mubr.f32.gmra.mrb[0].mxu0 %v5771
      %v5868 = vpop.f32.mrb[0].mxu0
      %v5869 = vadd.f32 0.0, %v5868
      %v5870 = vpop.f32.mrb[0].mxu0
      %5871 = vmatprep.mubr.f32.mxu0 %v5787
      %5872 = vmatmul.mubr.f32.gmra.mrb[0].mxu0 %v5773
      %v5873 = vpop.f32.mrb[0].mxu0
      %v5874 = vadd.f32 0.0, %v5873
      %v5875 = vpop.f32.mrb[0].mxu0
      %5876 = vmatprep.mubr.f32.mxu0 %v5790
      %5877 = vmatmul.mubr.f32.gmra.mrb[0].mxu0 %v5775
      %v5878 = vpop.f32.mrb[0].mxu0
      %v5879 = vadd.f32 0.0, %v5878
      %v5880 = vpop.f32.mrb[0].mxu0
      %5881 = vdwg.mxu0
      %v5882 = vmax.f32 %v5761, %v5859
      %v5883 = vmax.f32 %v5762, %v5864
      %v5884 = vmax.f32 %v5763, %v5869
      %v5885 = vmax.f32 %v5764, %v5874
      %v5886 = vmax.f32 %v5765, %v5879
      %v5887 = vld [vmem:[%s4] sm:$0x1]
      %v5889 = vlaneseq
      %v5890 = vshrl.u32 %v5889, 7
      %v5891 = vsub.s32 0, %v5890
      %v5892 = vrot.slane %v5887, %v5891
      %v5894 = vadd.f32 %v5882, %v5892
      %v5895 = vadd.f32 %v5883, %v5892
      %v5896 = vadd.f32 %v5884, %v5892
      %v5897 = vadd.f32 %v5885, %v5892
      %v5898 = vadd.f32 %v5886, %v5892
      %v5899 = vmax.f32 %v5894, 0.0
      %v5900 = vmax.f32 %v5895, 0.0
      %v5901 = vmax.f32 %v5896, 0.0
      %v5902 = vmax.f32 %v5897, 0.0
      %v5903 = vmax.f32 %v5898, 0.0
      %v5904 = vpack.c.bf16 %v5900, %v5899
      %v5905 = vpack.c.bf16 %v5902, %v5901
      %v5906 = vpack.c.bf16 %v5903, %v5903
      %v5910 = vunpack.c.l.b16 %v5904
      %v5911 = vunpack.c.h.b16 %v5904
      %v5912 = vunpack.c.l.b16 %v5905
      %v5913 = vunpack.c.h.b16 %v5905
      %v5914 = vunpack.c.l.b16 %v5906
      %v5915 = vpack.c.b16 %v5910, %v5910
      %v5916 = vpack.c.b16 %v5911, %v5911
      %v5917 = vpack.c.b16 %v5912, %v5912
      %v5918 = vpack.c.b16 %v5913, %v5913
      %v5919 = vpack.c.b16 %v5914, %v5914
      %5925 = vst [vmem:[%s251] sm:$0xf] %v5915
      %5926 = vst [vmem:[%s251 + $0x4] sm:$0xf] %v5916
      %5927 = vst [vmem:[%s251 + $0x8] sm:$0xf] %v5917
      %5928 = vst [vmem:[%s251 + $0xc] sm:$0xf] %v5918
      %5929 = vst [vmem:[%s251 + $0x10] sm:$0x3] %v5919
      %p5930 = scmp.lt.s32.totalorder %s17, 1
      %s5931 = scalar_select %p5930, %s17, 1
      %s5932 = smul.addr %s5931, 5
      %s5933 = smul.addr %s5932, 4
      %s5934 = scalar_lea.vmem %s6, %s5933
      // Predicated region
      $region45: #{cnn_forward.2} parent=43 // pred_check
        %p5935 = pneg %p166
      $region46: #{cnn_forward.2} parent=43 // pred_check_branch
        %5937 = sbr.rel (%p5935) target = $region48
      $region47: #{cnn_forward.2} parent=43 // pred_region
        _
      $region48: #{cnn_forward.2} parent=43 // pred_fallthru
        _
    $region44: #{cnn_forward.2} parent=5 // pred_fallthru
      _
    %p5938 = scmp.le.s32.totalorder 2, %s12
    // Predicated region
    $region49: #{cnn_forward.2} parent=5 // pred_check
      %p5939 = pneg %p5938
    $region50: #{cnn_forward.2} parent=5 // pred_check_branch
      %5941 = sbr.rel (%p5939) target = $region52
    $region51: #{cnn_forward.2} parent=5 // pred_region
      %s5942 = ssub.s32 %s12, 2
      // Predicated region
      $region53: #{cnn_forward.2} parent=51 // pred_check
        %p5943 = pneg %p172
      $region54: #{cnn_forward.2} parent=51 // pred_check_branch
        %5945 = sbr.rel (%p5943) target = $region56
      $region55: #{cnn_forward.2} parent=51 // pred_region
        %p5946 = scmp.lt.s32.totalorder %s18, 1
        %s5947 = scalar_select %p5946, %s18, 1
        %s5948 = smul.addr %s5947, 5
        %s5949 = smul.addr %s5948, 4
        %s5950 = scalar_lea.vmem %s6, %s5949
      $region56: #{cnn_forward.2} parent=51 // pred_fallthru
        _
    $region52: #{cnn_forward.2} parent=5 // pred_fallthru
      _
  $region6: #{cnn_forward.2} parent=0 // loop_footer
    %s16 = sadd.s32 1, %s12
  $region7: #{cnn_forward.2} parent=0 // loop_footer_branch
    %11 = sbr.rel target = $region3
  $region8: #{cnn_forward.2} parent=0 // loop_exit
    _

// kernel: cnn_forward.3
$region0: #{cnn_forward.3}
  #allocation0 [shape = 'u32[]', space=smem, size = 0x4, offset = 0x4, fixed_abs, tag = 'smem constant byte address 0x4 - core index']
  #allocation1 [shape = 'u32[144,128]{1,0:T(1,128)}', space=vmem, size = 0x12000, scoped, tag = 'internal scratch']
  %s0 = inlined_call_operand.vmem [shape: bf16[2,4608], index: 0, kind: input, shape index: {}]
  %s1 = inlined_call_operand.vmem [shape: bf16[4608,200], index: 1, kind: input, shape index: {}]
  %s2 = inlined_call_operand.vmem [shape: f32[1,200], index: 2, kind: input, shape index: {}]
  %s3 = inlined_call_operand.vmem [shape: bf16[200,2], index: 3, kind: input, shape index: {}]
  %s4 = inlined_call_operand.vmem [shape: f32[1,2], index: 4, kind: input, shape index: {}]
  %s5 = inlined_call_operand.hbm [shape: f32[2,2], index: 5, kind: output, shape index: {}]
  %s6 = sld [smem:[#allocation0]]
  $region30: #{cnn_forward.3} parent=0
    _
  %s8 = ssub.s32 1, %s6
  %s9 = scalar_select 0, %s8, %s6
  $region1: #{cnn_forward.3} parent=0
    #allocation2 [shape = 'u8[1024]{0}', space=vmem, size = 0x400, scoped, tag = 'output window, operand 0, single buffered']
    #allocation3 [shape = 's32[1]{0}', space=sflag, size = 0x4, scoped, tag = 'scoped memory for cnn_forward.3']
    %10 = vsyncpa [#allocation3], 0
    // Predicated region
    $region2: #{cnn_forward.3} parent=1 // pred_check
      _
    $region3: #{cnn_forward.3} parent=1 // pred_check_branch
      %12 = sbr.rel (0) target = $region5
    $region4: #{cnn_forward.3} parent=1 // pred_region
      _
    $region5: #{cnn_forward.3} parent=1 // pred_fallthru
      _
    // Predicated region
    $region6: #{cnn_forward.3} parent=1 // pred_check
      _
    $region7: #{cnn_forward.3} parent=1 // pred_check_branch
      %14 = sbr.rel (0) target = $region9
    $region8: #{cnn_forward.3} parent=1 // pred_region
      _
    $region9: #{cnn_forward.3} parent=1 // pred_fallthru
      _
    // Predicated region
    $region10: #{cnn_forward.3} parent=1 // pred_check
      _
    $region11: #{cnn_forward.3} parent=1 // pred_check_branch
      %16 = sbr.rel (0) target = $region13
    $region12: #{cnn_forward.3} parent=1 // pred_region
      _
    $region13: #{cnn_forward.3} parent=1 // pred_fallthru
      _
    // Predicated region
    $region14: #{cnn_forward.3} parent=1 // pred_check
      _
    $region15: #{cnn_forward.3} parent=1 // pred_check_branch
      %18 = sbr.rel (0) target = $region17
    $region16: #{cnn_forward.3} parent=1 // pred_region
      _
    $region17: #{cnn_forward.3} parent=1 // pred_fallthru
      _
    // Predicated region
    $region18: #{cnn_forward.3} parent=1 // pred_check
      _
    $region19: #{cnn_forward.3} parent=1 // pred_check_branch
      %20 = sbr.rel (0) target = $region21
    $region20: #{cnn_forward.3} parent=1 // pred_region
      _
    $region21: #{cnn_forward.3} parent=1 // pred_fallthru
      _
    %v22 = vld [vmem:[%s0] sm:$0xff]
    %v23 = vld [vmem:[%s0 + $0x8] sm:$0xff]
    %v24 = vld [vmem:[%s0 + $0x10] sm:$0xff]
    %v25 = vld [vmem:[%s0 + $0x18] sm:$0xff]
    %v26 = vld [vmem:[%s0 + $0x20] sm:$0xf]
    %v27 = vld [vmem:[%s1] sm:$0xff]
    %v28 = vld [vmem:[%s1 + $0x8] sm:$0xff]
    %v29 = vld [vmem:[%s1 + $0x10] sm:$0xff]
    %v30 = vld [vmem:[%s1 + $0x18] sm:$0xff]
    %v31 = vld [vmem:[%s1 + $0x20] sm:$0xff]
    %v32 = vld [vmem:[%s1 + $0x28] sm:$0xff]
    %v33 = vld [vmem:[%s1 + $0x30] sm:$0xff]
    %v34 = vld [vmem:[%s1 + $0x38] sm:$0xff]
    %v35 = vld [vmem:[%s1 + $0x40] sm:$0xff]
    %v36 = vld [vmem:[%s1 + $0x48] sm:$0xff]
    %v37 = vld [vmem:[%s1 + $0x50] sm:$0xff]
    %v38 = vld [vmem:[%s1 + $0x58] sm:$0xff]
    %v39 = vld [vmem:[%s1 + $0x60] sm:$0xff]
    %v40 = vld [vmem:[%s1 + $0x68] sm:$0xff]
    %v41 = vld [vmem:[%s1 + $0x70] sm:$0xff]
    %v42 = vld [vmem:[%s1 + $0x78] sm:$0xff]
    %v43 = vld [vmem:[%s1 + $0x80] sm:$0xff]
    %v44 = vld [vmem:[%s1 + $0x88] sm:$0xff]
    %v45 = vld [vmem:[%s1 + $0x90] sm:$0xff]
    %v46 = vld [vmem:[%s1 + $0x98] sm:$0xff]
    %v47 = vld [vmem:[%s1 + $0xa0] sm:$0xff]
    %v48 = vld [vmem:[%s1 + $0xa8] sm:$0xff]
    %v49 = vld [vmem:[%s1 + $0xb0] sm:$0xff]
    %v50 = vld [vmem:[%s1 + $0xb8] sm:$0xff]
    %v51 = vld [vmem:[%s1 + $0xc0] sm:$0xff]
    %v52 = vld [vmem:[%s1 + $0xc8] sm:$0xff]
    %v53 = vld [vmem:[%s1 + $0xd0] sm:$0xff]
    %v54 = vld [vmem:[%s1 + $0xd8] sm:$0xff]
    %v55 = vld [vmem:[%s1 + $0xe0] sm:$0xff]
    %v56 = vld [vmem:[%s1 + $0xe8] sm:$0xff]
    %v57 = vld [vmem:[%s1 + $0xf0] sm:$0xff]
    %v58 = vld [vmem:[%s1 + $0xf8] sm:$0xff]
    %v59 = vld [vmem:[%s1 + $0x100] sm:$0xff]
    %v60 = vld [vmem:[%s1 + $0x108] sm:$0xff]
    %v61 = vld [vmem:[%s1 + $0x110] sm:$0xff]
    %v62 = vld [vmem:[%s1 + $0x118] sm:$0xff]
    %v63 = vld [vmem:[%s1 + $0x120] sm:$0xff]
    %v64 = vld [vmem:[%s1 + $0x128] sm:$0xff]
    %v65 = vld [vmem:[%s1 + $0x130] sm:$0xff]
    %v66 = vld [vmem:[%s1 + $0x138] sm:$0xff]
    %v67 = vld [vmem:[%s1 + $0x140] sm:$0xff]
    %v68 = vld [vmem:[%s1 + $0x148] sm:$0xff]
    %v69 = vld [vmem:[%s1 + $0x150] sm:$0xff]
    %v70 = vld [vmem:[%s1 + $0x158] sm:$0xff]
    %v71 = vld [vmem:[%s1 + $0x160] sm:$0xff]
    %v72 = vld [vmem:[%s1 + $0x168] sm:$0xff]
    %v73 = vld [vmem:[%s1 + $0x170] sm:$0xff]
    %v74 = vld [vmem:[%s1 + $0x178] sm:$0xff]
    %v75 = vld [vmem:[%s1 + $0x180] sm:$0xff]
    %v76 = vld [vmem:[%s1 + $0x188] sm:$0xff]
    %v77 = vld [vmem:[%s1 + $0x190] sm:$0xff]
    %v78 = vld [vmem:[%s1 + $0x198] sm:$0xff]
    %v79 = vld [vmem:[%s1 + $0x1a0] sm:$0xff]
    %v80 = vld [vmem:[%s1 + $0x1a8] sm:$0xff]
    %v81 = vld [vmem:[%s1 + $0x1b0] sm:$0xff]
    %v82 = vld [vmem:[%s1 + $0x1b8] sm:$0xff]
    %v83 = vld [vmem:[%s1 + $0x1c0] sm:$0xff]
    %v84 = vld [vmem:[%s1 + $0x1c8] sm:$0xff]
    %v85 = vld [vmem:[%s1 + $0x1d0] sm:$0xff]
    %v86 = vld [vmem:[%s1 + $0x1d8] sm:$0xff]
    %v87 = vld [vmem:[%s1 + $0x1e0] sm:$0xff]
    %v88 = vld [vmem:[%s1 + $0x1e8] sm:$0xff]
    %v89 = vld [vmem:[%s1 + $0x1f0] sm:$0xff]
    %v90 = vld [vmem:[%s1 + $0x1f8] sm:$0xff]
    %v91 = vld [vmem:[%s1 + $0x200] sm:$0xff]
    %v92 = vld [vmem:[%s1 + $0x208] sm:$0xff]
    %v93 = vld [vmem:[%s1 + $0x210] sm:$0xff]
    %v94 = vld [vmem:[%s1 + $0x218] sm:$0xff]
    %v95 = vld [vmem:[%s1 + $0x220] sm:$0xff]
    %v96 = vld [vmem:[%s1 + $0x228] sm:$0xff]
    %v97 = vld [vmem:[%s1 + $0x230] sm:$0xff]
    %v98 = vld [vmem:[%s1 + $0x238] sm:$0xff]
    %v99 = vld [vmem:[%s1 + $0x240] sm:$0xff]
    %v100 = vld [vmem:[%s1 + $0x248] sm:$0xff]
    %v101 = vld [vmem:[%s1 + $0x250] sm:$0xff]
    %v102 = vld [vmem:[%s1 + $0x258] sm:$0xff]
    %v103 = vld [vmem:[%s1 + $0x260] sm:$0xff]
    %v104 = vld [vmem:[%s1 + $0x268] sm:$0xff]
    %v105 = vld [vmem:[%s1 + $0x270] sm:$0xff]
    %v106 = vld [vmem:[%s1 + $0x278] sm:$0xff]
    %v107 = vld [vmem:[%s1 + $0x280] sm:$0xff]
    %v108 = vld [vmem:[%s1 + $0x288] sm:$0xff]
    %v109 = vld [vmem:[%s1 + $0x290] sm:$0xff]
    %v110 = vld [vmem:[%s1 + $0x298] sm:$0xff]
    %v111 = vld [vmem:[%s1 + $0x2a0] sm:$0xff]
    %v112 = vld [vmem:[%s1 + $0x2a8] sm:$0xff]
    %v113 = vld [vmem:[%s1 + $0x2b0] sm:$0xff]
    %v114 = vld [vmem:[%s1 + $0x2b8] sm:$0xff]
    %v115 = vld [vmem:[%s1 + $0x2c0] sm:$0xff]
    %v116 = vld [vmem:[%s1 + $0x2c8] sm:$0xff]
    %v117 = vld [vmem:[%s1 + $0x2d0] sm:$0xff]
    %v118 = vld [vmem:[%s1 + $0x2d8] sm:$0xff]
    %v119 = vld [vmem:[%s1 + $0x2e0] sm:$0xff]
    %v120 = vld [vmem:[%s1 + $0x2e8] sm:$0xff]
    %v121 = vld [vmem:[%s1 + $0x2f0] sm:$0xff]
    %v122 = vld [vmem:[%s1 + $0x2f8] sm:$0xff]
    %v123 = vld [vmem:[%s1 + $0x300] sm:$0xff]
    %v124 = vld [vmem:[%s1 + $0x308] sm:$0xff]
    %v125 = vld [vmem:[%s1 + $0x310] sm:$0xff]
    %v126 = vld [vmem:[%s1 + $0x318] sm:$0xff]
    %v127 = vld [vmem:[%s1 + $0x320] sm:$0xff]
    %v128 = vld [vmem:[%s1 + $0x328] sm:$0xff]
    %v129 = vld [vmem:[%s1 + $0x330] sm:$0xff]
    %v130 = vld [vmem:[%s1 + $0x338] sm:$0xff]
    %v131 = vld [vmem:[%s1 + $0x340] sm:$0xff]
    %v132 = vld [vmem:[%s1 + $0x348] sm:$0xff]
    %v133 = vld [vmem:[%s1 + $0x350] sm:$0xff]
    %v134 = vld [vmem:[%s1 + $0x358] sm:$0xff]
    %v135 = vld [vmem:[%s1 + $0x360] sm:$0xff]
    %v136 = vld [vmem:[%s1 + $0x368] sm:$0xff]
    %v137 = vld [vmem:[%s1 + $0x370] sm:$0xff]
    %v138 = vld [vmem:[%s1 + $0x378] sm:$0xff]
    %v139 = vld [vmem:[%s1 + $0x380] sm:$0xff]
    %v140 = vld [vmem:[%s1 + $0x388] sm:$0xff]
    %v141 = vld [vmem:[%s1 + $0x390] sm:$0xff]
    %v142 = vld [vmem:[%s1 + $0x398] sm:$0xff]
    %v143 = vld [vmem:[%s1 + $0x3a0] sm:$0xff]
    %v144 = vld [vmem:[%s1 + $0x3a8] sm:$0xff]
    %v145 = vld [vmem:[%s1 + $0x3b0] sm:$0xff]
    %v146 = vld [vmem:[%s1 + $0x3b8] sm:$0xff]
    %v147 = vld [vmem:[%s1 + $0x3c0] sm:$0xff]
    %v148 = vld [vmem:[%s1 + $0x3c8] sm:$0xff]
    %v149 = vld [vmem:[%s1 + $0x3d0] sm:$0xff]
    %v150 = vld [vmem:[%s1 + $0x3d8] sm:$0xff]
    %v151 = vld [vmem:[%s1 + $0x3e0] sm:$0xff]
    %v152 = vld [vmem:[%s1 + $0x3e8] sm:$0xff]
    %v153 = vld [vmem:[%s1 + $0x3f0] sm:$0xff]
    %v154 = vld [vmem:[%s1 + $0x3f8] sm:$0xff]
    %v155 = vld [vmem:[%s1 + $0x400] sm:$0xff]
    %v156 = vld [vmem:[%s1 + $0x408] sm:$0xff]
    %v157 = vld [vmem:[%s1 + $0x410] sm:$0xff]
    %v158 = vld [vmem:[%s1 + $0x418] sm:$0xff]
    %v159 = vld [vmem:[%s1 + $0x420] sm:$0xff]
    %v160 = vld [vmem:[%s1 + $0x428] sm:$0xff]
    %v161 = vld [vmem:[%s1 + $0x430] sm:$0xff]
    %v162 = vld [vmem:[%s1 + $0x438] sm:$0xff]
    %v163 = vld [vmem:[%s1 + $0x440] sm:$0xff]
    %v164 = vld [vmem:[%s1 + $0x448] sm:$0xff]
    %v165 = vld [vmem:[%s1 + $0x450] sm:$0xff]
    %v166 = vld [vmem:[%s1 + $0x458] sm:$0xff]
    %v167 = vld [vmem:[%s1 + $0x460] sm:$0xff]
    %v168 = vld [vmem:[%s1 + $0x468] sm:$0xff]
    %v169 = vld [vmem:[%s1 + $0x470] sm:$0xff]
    %v170 = vld [vmem:[%s1 + $0x478] sm:$0xff]
    %v171 = vld [vmem:[%s1 + $0x480] sm:$0xff]
    %v172 = vld [vmem:[%s1 + $0x488] sm:$0xff]
    %v173 = vld [vmem:[%s1 + $0x490] sm:$0xff]
    %v174 = vld [vmem:[%s1 + $0x498] sm:$0xff]
    %v175 = vld [vmem:[%s1 + $0x4a0] sm:$0xff]
    %v176 = vld [vmem:[%s1 + $0x4a8] sm:$0xff]
    %v177 = vld [vmem:[%s1 + $0x4b0] sm:$0xff]
    %v178 = vld [vmem:[%s1 + $0x4b8] sm:$0xff]
    %v179 = vld [vmem:[%s1 + $0x4c0] sm:$0xff]
    %v180 = vld [vmem:[%s1 + $0x4c8] sm:$0xff]
    %v181 = vld [vmem:[%s1 + $0x4d0] sm:$0xff]
    %v182 = vld [vmem:[%s1 + $0x4d8] sm:$0xff]
    %v183 = vld [vmem:[%s1 + $0x4e0] sm:$0xff]
    %v184 = vld [vmem:[%s1 + $0x4e8] sm:$0xff]
    %v185 = vld [vmem:[%s1 + $0x4f0] sm:$0xff]
    %v186 = vld [vmem:[%s1 + $0x4f8] sm:$0xff]
    %v187 = vld [vmem:[%s1 + $0x500] sm:$0xff]
    %v188 = vld [vmem:[%s1 + $0x508] sm:$0xff]
    %v189 = vld [vmem:[%s1 + $0x510] sm:$0xff]
    %v190 = vld [vmem:[%s1 + $0x518] sm:$0xff]
    %v191 = vld [vmem:[%s1 + $0x520] sm:$0xff]
    %v192 = vld [vmem:[%s1 + $0x528] sm:$0xff]
    %v193 = vld [vmem:[%s1 + $0x530] sm:$0xff]
    %v194 = vld [vmem:[%s1 + $0x538] sm:$0xff]
    %v195 = vld [vmem:[%s1 + $0x540] sm:$0xff]
    %v196 = vld [vmem:[%s1 + $0x548] sm:$0xff]
    %v197 = vld [vmem:[%s1 + $0x550] sm:$0xff]
    %v198 = vld [vmem:[%s1 + $0x558] sm:$0xff]
    %v199 = vld [vmem:[%s1 + $0x560] sm:$0xff]
    %v200 = vld [vmem:[%s1 + $0x568] sm:$0xff]
    %v201 = vld [vmem:[%s1 + $0x570] sm:$0xff]
    %v202 = vld [vmem:[%s1 + $0x578] sm:$0xff]
    %v203 = vld [vmem:[%s1 + $0x580] sm:$0xff]
    %v204 = vld [vmem:[%s1 + $0x588] sm:$0xff]
    %v205 = vld [vmem:[%s1 + $0x590] sm:$0xff]
    %v206 = vld [vmem:[%s1 + $0x598] sm:$0xff]
    %v207 = vld [vmem:[%s1 + $0x5a0] sm:$0xff]
    %v208 = vld [vmem:[%s1 + $0x5a8] sm:$0xff]
    %v209 = vld [vmem:[%s1 + $0x5b0] sm:$0xff]
    %v210 = vld [vmem:[%s1 + $0x5b8] sm:$0xff]
    %v211 = vld [vmem:[%s1 + $0x5c0] sm:$0xff]
    %v212 = vld [vmem:[%s1 + $0x5c8] sm:$0xff]
    %v213 = vld [vmem:[%s1 + $0x5d0] sm:$0xff]
    %v214 = vld [vmem:[%s1 + $0x5d8] sm:$0xff]
    %v215 = vld [vmem:[%s1 + $0x5e0] sm:$0xff]
    %v216 = vld [vmem:[%s1 + $0x5e8] sm:$0xff]
    %v217 = vld [vmem:[%s1 + $0x5f0] sm:$0xff]
    %v218 = vld [vmem:[%s1 + $0x5f8] sm:$0xff]
    %v219 = vld [vmem:[%s1 + $0x600] sm:$0xff]
    %v220 = vld [vmem:[%s1 + $0x608] sm:$0xff]
    %v221 = vld [vmem:[%s1 + $0x610] sm:$0xff]
    %v222 = vld [vmem:[%s1 + $0x618] sm:$0xff]
    %v223 = vld [vmem:[%s1 + $0x620] sm:$0xff]
    %v224 = vld [vmem:[%s1 + $0x628] sm:$0xff]
    %v225 = vld [vmem:[%s1 + $0x630] sm:$0xff]
    %v226 = vld [vmem:[%s1 + $0x638] sm:$0xff]
    %v227 = vld [vmem:[%s1 + $0x640] sm:$0xff]
    %v228 = vld [vmem:[%s1 + $0x648] sm:$0xff]
    %v229 = vld [vmem:[%s1 + $0x650] sm:$0xff]
    %v230 = vld [vmem:[%s1 + $0x658] sm:$0xff]
    %v231 = vld [vmem:[%s1 + $0x660] sm:$0xff]
    %v232 = vld [vmem:[%s1 + $0x668] sm:$0xff]
    %v233 = vld [vmem:[%s1 + $0x670] sm:$0xff]
    %v234 = vld [vmem:[%s1 + $0x678] sm:$0xff]
    %v235 = vld [vmem:[%s1 + $0x680] sm:$0xff]
    %v236 = vld [vmem:[%s1 + $0x688] sm:$0xff]
    %v237 = vld [vmem:[%s1 + $0x690] sm:$0xff]
    %v238 = vld [vmem:[%s1 + $0x698] sm:$0xff]
    %v239 = vld [vmem:[%s1 + $0x6a0] sm:$0xff]
    %v240 = vld [vmem:[%s1 + $0x6a8] sm:$0xff]
    %v241 = vld [vmem:[%s1 + $0x6b0] sm:$0xff]
    %v242 = vld [vmem:[%s1 + $0x6b8] sm:$0xff]
    %v243 = vld [vmem:[%s1 + $0x6c0] sm:$0xff]
    %v244 = vld [vmem:[%s1 + $0x6c8] sm:$0xff]
    %v245 = vld [vmem:[%s1 + $0x6d0] sm:$0xff]
    %v246 = vld [vmem:[%s1 + $0x6d8] sm:$0xff]
    %v247 = vld [vmem:[%s1 + $0x6e0] sm:$0xff]
    %v248 = vld [vmem:[%s1 + $0x6e8] sm:$0xff]
    %v249 = vld [vmem:[%s1 + $0x6f0] sm:$0xff]
    %v250 = vld [vmem:[%s1 + $0x6f8] sm:$0xff]
    %v251 = vld [vmem:[%s1 + $0x700] sm:$0xff]
    %v252 = vld [vmem:[%s1 + $0x708] sm:$0xff]
    %v253 = vld [vmem:[%s1 + $0x710] sm:$0xff]
    %v254 = vld [vmem:[%s1 + $0x718] sm:$0xff]
    %v255 = vld [vmem:[%s1 + $0x720] sm:$0xff]
    %v256 = vld [vmem:[%s1 + $0x728] sm:$0xff]
    %v257 = vld [vmem:[%s1 + $0x730] sm:$0xff]
    %v258 = vld [vmem:[%s1 + $0x738] sm:$0xff]
    %v259 = vld [vmem:[%s1 + $0x740] sm:$0xff]
    %v260 = vld [vmem:[%s1 + $0x748] sm:$0xff]
    %v261 = vld [vmem:[%s1 + $0x750] sm:$0xff]
    %v262 = vld [vmem:[%s1 + $0x758] sm:$0xff]
    %v263 = vld [vmem:[%s1 + $0x760] sm:$0xff]
    %v264 = vld [vmem:[%s1 + $0x768] sm:$0xff]
    %v265 = vld [vmem:[%s1 + $0x770] sm:$0xff]
    %v266 = vld [vmem:[%s1 + $0x778] sm:$0xff]
    %v267 = vld [vmem:[%s1 + $0x780] sm:$0xff]
    %v268 = vld [vmem:[%s1 + $0x788] sm:$0xff]
    %v269 = vld [vmem:[%s1 + $0x790] sm:$0xff]
    %v270 = vld [vmem:[%s1 + $0x798] sm:$0xff]
    %v271 = vld [vmem:[%s1 + $0x7a0] sm:$0xff]
    %v272 = vld [vmem:[%s1 + $0x7a8] sm:$0xff]
    %v273 = vld [vmem:[%s1 + $0x7b0] sm:$0xff]
    %v274 = vld [vmem:[%s1 + $0x7b8] sm:$0xff]
    %v275 = vld [vmem:[%s1 + $0x7c0] sm:$0xff]
    %v276 = vld [vmem:[%s1 + $0x7c8] sm:$0xff]
    %v277 = vld [vmem:[%s1 + $0x7d0] sm:$0xff]
    %v278 = vld [vmem:[%s1 + $0x7d8] sm:$0xff]
    %v279 = vld [vmem:[%s1 + $0x7e0] sm:$0xff]
    %v280 = vld [vmem:[%s1 + $0x7e8] sm:$0xff]
    %v281 = vld [vmem:[%s1 + $0x7f0] sm:$0xff]
    %v282 = vld [vmem:[%s1 + $0x7f8] sm:$0xff]
    %v283 = vld [vmem:[%s1 + $0x800] sm:$0xff]
    %v284 = vld [vmem:[%s1 + $0x808] sm:$0xff]
    %v285 = vld [vmem:[%s1 + $0x810] sm:$0xff]
    %v286 = vld [vmem:[%s1 + $0x818] sm:$0xff]
    %v287 = vld [vmem:[%s1 + $0x820] sm:$0xff]
    %v288 = vld [vmem:[%s1 + $0x828] sm:$0xff]
    %v289 = vld [vmem:[%s1 + $0x830] sm:$0xff]
    %v290 = vld [vmem:[%s1 + $0x838] sm:$0xff]
    %v291 = vld [vmem:[%s1 + $0x840] sm:$0xff]
    %v292 = vld [vmem:[%s1 + $0x848] sm:$0xff]
    %v293 = vld [vmem:[%s1 + $0x850] sm:$0xff]
    %v294 = vld [vmem:[%s1 + $0x858] sm:$0xff]
    %v295 = vld [vmem:[%s1 + $0x860] sm:$0xff]
    %v296 = vld [vmem:[%s1 + $0x868] sm:$0xff]
    %v297 = vld [vmem:[%s1 + $0x870] sm:$0xff]
    %v298 = vld [vmem:[%s1 + $0x878] sm:$0xff]
    %v299 = vld [vmem:[%s1 + $0x880] sm:$0xff]
    %v300 = vld [vmem:[%s1 + $0x888] sm:$0xff]
    %v301 = vld [vmem:[%s1 + $0x890] sm:$0xff]
    %v302 = vld [vmem:[%s1 + $0x898] sm:$0xff]
    %v303 = vld [vmem:[%s1 + $0x8a0] sm:$0xff]
    %v304 = vld [vmem:[%s1 + $0x8a8] sm:$0xff]
    %v305 = vld [vmem:[%s1 + $0x8b0] sm:$0xff]
    %v306 = vld [vmem:[%s1 + $0x8b8] sm:$0xff]
    %v307 = vld [vmem:[%s1 + $0x8c0] sm:$0xff]
    %v308 = vld [vmem:[%s1 + $0x8c8] sm:$0xff]
    %v309 = vld [vmem:[%s1 + $0x8d0] sm:$0xff]
    %v310 = vld [vmem:[%s1 + $0x8d8] sm:$0xff]
    %v311 = vld [vmem:[%s1 + $0x8e0] sm:$0xff]
    %v312 = vld [vmem:[%s1 + $0x8e8] sm:$0xff]
    %v313 = vld [vmem:[%s1 + $0x8f0] sm:$0xff]
    %v314 = vld [vmem:[%s1 + $0x8f8] sm:$0xff]
    %v315 = vld [vmem:[%s1 + $0x900] sm:$0xff]
    %v316 = vld [vmem:[%s1 + $0x908] sm:$0xff]
    %v317 = vld [vmem:[%s1 + $0x910] sm:$0xff]
    %v318 = vld [vmem:[%s1 + $0x918] sm:$0xff]
    %v319 = vld [vmem:[%s1 + $0x920] sm:$0xff]
    %v320 = vld [vmem:[%s1 + $0x928] sm:$0xff]
    %v321 = vld [vmem:[%s1 + $0x930] sm:$0xff]
    %v322 = vld [vmem:[%s1 + $0x938] sm:$0xff]
    %v323 = vld [vmem:[%s1 + $0x940] sm:$0xff]
    %v324 = vld [vmem:[%s1 + $0x948] sm:$0xff]
    %v325 = vld [vmem:[%s1 + $0x950] sm:$0xff]
    %v326 = vld [vmem:[%s1 + $0x958] sm:$0xff]
    %v327 = vld [vmem:[%s1 + $0x960] sm:$0xff]
    %v328 = vld [vmem:[%s1 + $0x968] sm:$0xff]
    %v329 = vld [vmem:[%s1 + $0x970] sm:$0xff]
    %v330 = vld [vmem:[%s1 + $0x978] sm:$0xff]
    %v331 = vld [vmem:[%s1 + $0x980] sm:$0xff]
    %v332 = vld [vmem:[%s1 + $0x988] sm:$0xff]
    %v333 = vld [vmem:[%s1 + $0x990] sm:$0xff]
    %v334 = vld [vmem:[%s1 + $0x998] sm:$0xff]
    %v335 = vld [vmem:[%s1 + $0x9a0] sm:$0xff]
    %v336 = vld [vmem:[%s1 + $0x9a8] sm:$0xff]
    %v337 = vld [vmem:[%s1 + $0x9b0] sm:$0xff]
    %v338 = vld [vmem:[%s1 + $0x9b8] sm:$0xff]
    %v339 = vld [vmem:[%s1 + $0x9c0] sm:$0xff]
    %v340 = vld [vmem:[%s1 + $0x9c8] sm:$0xff]
    %v341 = vld [vmem:[%s1 + $0x9d0] sm:$0xff]
    %v342 = vld [vmem:[%s1 + $0x9d8] sm:$0xff]
    %v343 = vld [vmem:[%s1 + $0x9e0] sm:$0xff]
    %v344 = vld [vmem:[%s1 + $0x9e8] sm:$0xff]
    %v345 = vld [vmem:[%s1 + $0x9f0] sm:$0xff]
    %v346 = vld [vmem:[%s1 + $0x9f8] sm:$0xff]
    %v347 = vld [vmem:[%s1 + $0xa00] sm:$0xff]
    %v348 = vld [vmem:[%s1 + $0xa08] sm:$0xff]
    %v349 = vld [vmem:[%s1 + $0xa10] sm:$0xff]
    %v350 = vld [vmem:[%s1 + $0xa18] sm:$0xff]
    %v351 = vld [vmem:[%s1 + $0xa20] sm:$0xff]
    %v352 = vld [vmem:[%s1 + $0xa28] sm:$0xff]
    %v353 = vld [vmem:[%s1 + $0xa30] sm:$0xff]
    %v354 = vld [vmem:[%s1 + $0xa38] sm:$0xff]
    %v355 = vld [vmem:[%s1 + $0xa40] sm:$0xff]
    %v356 = vld [vmem:[%s1 + $0xa48] sm:$0xff]
    %v357 = vld [vmem:[%s1 + $0xa50] sm:$0xff]
    %v358 = vld [vmem:[%s1 + $0xa58] sm:$0xff]
    %v359 = vld [vmem:[%s1 + $0xa60] sm:$0xff]
    %v360 = vld [vmem:[%s1 + $0xa68] sm:$0xff]
    %v361 = vld [vmem:[%s1 + $0xa70] sm:$0xff]
    %v362 = vld [vmem:[%s1 + $0xa78] sm:$0xff]
    %v363 = vld [vmem:[%s1 + $0xa80] sm:$0xff]
    %v364 = vld [vmem:[%s1 + $0xa88] sm:$0xff]
    %v365 = vld [vmem:[%s1 + $0xa90] sm:$0xff]
    %v366 = vld [vmem:[%s1 + $0xa98] sm:$0xff]
    %v367 = vld [vmem:[%s1 + $0xaa0] sm:$0xff]
    %v368 = vld [vmem:[%s1 + $0xaa8] sm:$0xff]
    %v369 = vld [vmem:[%s1 + $0xab0] sm:$0xff]
    %v370 = vld [vmem:[%s1 + $0xab8] sm:$0xff]
    %v371 = vld [vmem:[%s1 + $0xac0] sm:$0xff]
    %v372 = vld [vmem:[%s1 + $0xac8] sm:$0xff]
    %v373 = vld [vmem:[%s1 + $0xad0] sm:$0xff]
    %v374 = vld [vmem:[%s1 + $0xad8] sm:$0xff]
    %v375 = vld [vmem:[%s1 + $0xae0] sm:$0xff]
    %v376 = vld [vmem:[%s1 + $0xae8] sm:$0xff]
    %v377 = vld [vmem:[%s1 + $0xaf0] sm:$0xff]
    %v378 = vld [vmem:[%s1 + $0xaf8] sm:$0xff]
    %v379 = vld [vmem:[%s1 + $0xb00] sm:$0xff]
    %v380 = vld [vmem:[%s1 + $0xb08] sm:$0xff]
    %v381 = vld [vmem:[%s1 + $0xb10] sm:$0xff]
    %v382 = vld [vmem:[%s1 + $0xb18] sm:$0xff]
    %v383 = vld [vmem:[%s1 + $0xb20] sm:$0xff]
    %v384 = vld [vmem:[%s1 + $0xb28] sm:$0xff]
    %v385 = vld [vmem:[%s1 + $0xb30] sm:$0xff]
    %v386 = vld [vmem:[%s1 + $0xb38] sm:$0xff]
    %v387 = vld [vmem:[%s1 + $0xb40] sm:$0xff]
    %v388 = vld [vmem:[%s1 + $0xb48] sm:$0xff]
    %v389 = vld [vmem:[%s1 + $0xb50] sm:$0xff]
    %v390 = vld [vmem:[%s1 + $0xb58] sm:$0xff]
    %v391 = vld [vmem:[%s1 + $0xb60] sm:$0xff]
    %v392 = vld [vmem:[%s1 + $0xb68] sm:$0xff]
    %v393 = vld [vmem:[%s1 + $0xb70] sm:$0xff]
    %v394 = vld [vmem:[%s1 + $0xb78] sm:$0xff]
    %v395 = vld [vmem:[%s1 + $0xb80] sm:$0xff]
    %v396 = vld [vmem:[%s1 + $0xb88] sm:$0xff]
    %v397 = vld [vmem:[%s1 + $0xb90] sm:$0xff]
    %v398 = vld [vmem:[%s1 + $0xb98] sm:$0xff]
    %v399 = vld [vmem:[%s1 + $0xba0] sm:$0xff]
    %v400 = vld [vmem:[%s1 + $0xba8] sm:$0xff]
    %v401 = vld [vmem:[%s1 + $0xbb0] sm:$0xff]
    %v402 = vld [vmem:[%s1 + $0xbb8] sm:$0xff]
    %v403 = vld [vmem:[%s1 + $0xbc0] sm:$0xff]
    %v404 = vld [vmem:[%s1 + $0xbc8] sm:$0xff]
    %v405 = vld [vmem:[%s1 + $0xbd0] sm:$0xff]
    %v406 = vld [vmem:[%s1 + $0xbd8] sm:$0xff]
    %v407 = vld [vmem:[%s1 + $0xbe0] sm:$0xff]
    %v408 = vld [vmem:[%s1 + $0xbe8] sm:$0xff]
    %v409 = vld [vmem:[%s1 + $0xbf0] sm:$0xff]
    %v410 = vld [vmem:[%s1 + $0xbf8] sm:$0xff]
    %v411 = vld [vmem:[%s1 + $0xc00] sm:$0xff]
    %v412 = vld [vmem:[%s1 + $0xc08] sm:$0xff]
    %v413 = vld [vmem:[%s1 + $0xc10] sm:$0xff]
    %v414 = vld [vmem:[%s1 + $0xc18] sm:$0xff]
    %v415 = vld [vmem:[%s1 + $0xc20] sm:$0xff]
    %v416 = vld [vmem:[%s1 + $0xc28] sm:$0xff]
    %v417 = vld [vmem:[%s1 + $0xc30] sm:$0xff]
    %v418 = vld [vmem:[%s1 + $0xc38] sm:$0xff]
    %v419 = vld [vmem:[%s1 + $0xc40] sm:$0xff]
    %v420 = vld [vmem:[%s1 + $0xc48] sm:$0xff]
    %v421 = vld [vmem:[%s1 + $0xc50] sm:$0xff]
    %v422 = vld [vmem:[%s1 + $0xc58] sm:$0xff]
    %v423 = vld [vmem:[%s1 + $0xc60] sm:$0xff]
    %v424 = vld [vmem:[%s1 + $0xc68] sm:$0xff]
    %v425 = vld [vmem:[%s1 + $0xc70] sm:$0xff]
    %v426 = vld [vmem:[%s1 + $0xc78] sm:$0xff]
    %v427 = vld [vmem:[%s1 + $0xc80] sm:$0xff]
    %v428 = vld [vmem:[%s1 + $0xc88] sm:$0xff]
    %v429 = vld [vmem:[%s1 + $0xc90] sm:$0xff]
    %v430 = vld [vmem:[%s1 + $0xc98] sm:$0xff]
    %v431 = vld [vmem:[%s1 + $0xca0] sm:$0xff]
    %v432 = vld [vmem:[%s1 + $0xca8] sm:$0xff]
    %v433 = vld [vmem:[%s1 + $0xcb0] sm:$0xff]
    %v434 = vld [vmem:[%s1 + $0xcb8] sm:$0xff]
    %v435 = vld [vmem:[%s1 + $0xcc0] sm:$0xff]
    %v436 = vld [vmem:[%s1 + $0xcc8] sm:$0xff]
    %v437 = vld [vmem:[%s1 + $0xcd0] sm:$0xff]
    %v438 = vld [vmem:[%s1 + $0xcd8] sm:$0xff]
    %v439 = vld [vmem:[%s1 + $0xce0] sm:$0xff]
    %v440 = vld [vmem:[%s1 + $0xce8] sm:$0xff]
    %v441 = vld [vmem:[%s1 + $0xcf0] sm:$0xff]
    %v442 = vld [vmem:[%s1 + $0xcf8] sm:$0xff]
    %v443 = vld [vmem:[%s1 + $0xd00] sm:$0xff]
    %v444 = vld [vmem:[%s1 + $0xd08] sm:$0xff]
    %v445 = vld [vmem:[%s1 + $0xd10] sm:$0xff]
    %v446 = vld [vmem:[%s1 + $0xd18] sm:$0xff]
    %v447 = vld [vmem:[%s1 + $0xd20] sm:$0xff]
    %v448 = vld [vmem:[%s1 + $0xd28] sm:$0xff]
    %v449 = vld [vmem:[%s1 + $0xd30] sm:$0xff]
    %v450 = vld [vmem:[%s1 + $0xd38] sm:$0xff]
    %v451 = vld [vmem:[%s1 + $0xd40] sm:$0xff]
    %v452 = vld [vmem:[%s1 + $0xd48] sm:$0xff]
    %v453 = vld [vmem:[%s1 + $0xd50] sm:$0xff]
    %v454 = vld [vmem:[%s1 + $0xd58] sm:$0xff]
    %v455 = vld [vmem:[%s1 + $0xd60] sm:$0xff]
    %v456 = vld [vmem:[%s1 + $0xd68] sm:$0xff]
    %v457 = vld [vmem:[%s1 + $0xd70] sm:$0xff]
    %v458 = vld [vmem:[%s1 + $0xd78] sm:$0xff]
    %v459 = vld [vmem:[%s1 + $0xd80] sm:$0xff]
    %v460 = vld [vmem:[%s1 + $0xd88] sm:$0xff]
    %v461 = vld [vmem:[%s1 + $0xd90] sm:$0xff]
    %v462 = vld [vmem:[%s1 + $0xd98] sm:$0xff]
    %v463 = vld [vmem:[%s1 + $0xda0] sm:$0xff]
    %v464 = vld [vmem:[%s1 + $0xda8] sm:$0xff]
    %v465 = vld [vmem:[%s1 + $0xdb0] sm:$0xff]
    %v466 = vld [vmem:[%s1 + $0xdb8] sm:$0xff]
    %v467 = vld [vmem:[%s1 + $0xdc0] sm:$0xff]
    %v468 = vld [vmem:[%s1 + $0xdc8] sm:$0xff]
    %v469 = vld [vmem:[%s1 + $0xdd0] sm:$0xff]
    %v470 = vld [vmem:[%s1 + $0xdd8] sm:$0xff]
    %v471 = vld [vmem:[%s1 + $0xde0] sm:$0xff]
    %v472 = vld [vmem:[%s1 + $0xde8] sm:$0xff]
    %v473 = vld [vmem:[%s1 + $0xdf0] sm:$0xff]
    %v474 = vld [vmem:[%s1 + $0xdf8] sm:$0xff]
    %v475 = vld [vmem:[%s1 + $0xe00] sm:$0xff]
    %v476 = vld [vmem:[%s1 + $0xe08] sm:$0xff]
    %v477 = vld [vmem:[%s1 + $0xe10] sm:$0xff]
    %v478 = vld [vmem:[%s1 + $0xe18] sm:$0xff]
    %v479 = vld [vmem:[%s1 + $0xe20] sm:$0xff]
    %v480 = vld [vmem:[%s1 + $0xe28] sm:$0xff]
    %v481 = vld [vmem:[%s1 + $0xe30] sm:$0xff]
    %v482 = vld [vmem:[%s1 + $0xe38] sm:$0xff]
    %v483 = vld [vmem:[%s1 + $0xe40] sm:$0xff]
    %v484 = vld [vmem:[%s1 + $0xe48] sm:$0xff]
    %v485 = vld [vmem:[%s1 + $0xe50] sm:$0xff]
    %v486 = vld [vmem:[%s1 + $0xe58] sm:$0xff]
    %v487 = vld [vmem:[%s1 + $0xe60] sm:$0xff]
    %v488 = vld [vmem:[%s1 + $0xe68] sm:$0xff]
    %v489 = vld [vmem:[%s1 + $0xe70] sm:$0xff]
    %v490 = vld [vmem:[%s1 + $0xe78] sm:$0xff]
    %v491 = vld [vmem:[%s1 + $0xe80] sm:$0xff]
    %v492 = vld [vmem:[%s1 + $0xe88] sm:$0xff]
    %v493 = vld [vmem:[%s1 + $0xe90] sm:$0xff]
    %v494 = vld [vmem:[%s1 + $0xe98] sm:$0xff]
    %v495 = vld [vmem:[%s1 + $0xea0] sm:$0xff]
    %v496 = vld [vmem:[%s1 + $0xea8] sm:$0xff]
    %v497 = vld [vmem:[%s1 + $0xeb0] sm:$0xff]
    %v498 = vld [vmem:[%s1 + $0xeb8] sm:$0xff]
    %v499 = vld [vmem:[%s1 + $0xec0] sm:$0xff]
    %v500 = vld [vmem:[%s1 + $0xec8] sm:$0xff]
    %v501 = vld [vmem:[%s1 + $0xed0] sm:$0xff]
    %v502 = vld [vmem:[%s1 + $0xed8] sm:$0xff]
    %v503 = vld [vmem:[%s1 + $0xee0] sm:$0xff]
    %v504 = vld [vmem:[%s1 + $0xee8] sm:$0xff]
    %v505 = vld [vmem:[%s1 + $0xef0] sm:$0xff]
    %v506 = vld [vmem:[%s1 + $0xef8] sm:$0xff]
    %v507 = vld [vmem:[%s1 + $0xf00] sm:$0xff]
    %v508 = vld [vmem:[%s1 + $0xf08] sm:$0xff]
    %v509 = vld [vmem:[%s1 + $0xf10] sm:$0xff]
    %v510 = vld [vmem:[%s1 + $0xf18] sm:$0xff]
    %v511 = vld [vmem:[%s1 + $0xf20] sm:$0xff]
    %v512 = vld [vmem:[%s1 + $0xf28] sm:$0xff]
    %v513 = vld [vmem:[%s1 + $0xf30] sm:$0xff]
    %v514 = vld [vmem:[%s1 + $0xf38] sm:$0xff]
    %v515 = vld [vmem:[%s1 + $0xf40] sm:$0xff]
    %v516 = vld [vmem:[%s1 + $0xf48] sm:$0xff]
    %v517 = vld [vmem:[%s1 + $0xf50] sm:$0xff]
    %v518 = vld [vmem:[%s1 + $0xf58] sm:$0xff]
    %v519 = vld [vmem:[%s1 + $0xf60] sm:$0xff]
    %v520 = vld [vmem:[%s1 + $0xf68] sm:$0xff]
    %v521 = vld [vmem:[%s1 + $0xf70] sm:$0xff]
    %v522 = vld [vmem:[%s1 + $0xf78] sm:$0xff]
    %v523 = vld [vmem:[%s1 + $0xf80] sm:$0xff]
    %v524 = vld [vmem:[%s1 + $0xf88] sm:$0xff]
    %v525 = vld [vmem:[%s1 + $0xf90] sm:$0xff]
    %v526 = vld [vmem:[%s1 + $0xf98] sm:$0xff]
    %v527 = vld [vmem:[%s1 + $0xfa0] sm:$0xff]
    %v528 = vld [vmem:[%s1 + $0xfa8] sm:$0xff]
    %v529 = vld [vmem:[%s1 + $0xfb0] sm:$0xff]
    %v530 = vld [vmem:[%s1 + $0xfb8] sm:$0xff]
    %v531 = vld [vmem:[%s1 + $0xfc0] sm:$0xff]
    %v532 = vld [vmem:[%s1 + $0xfc8] sm:$0xff]
    %v533 = vld [vmem:[%s1 + $0xfd0] sm:$0xff]
    %v534 = vld [vmem:[%s1 + $0xfd8] sm:$0xff]
    %v535 = vld [vmem:[%s1 + $0xfe0] sm:$0xff]
    %v536 = vld [vmem:[%s1 + $0xfe8] sm:$0xff]
    %v537 = vld [vmem:[%s1 + $0xff0] sm:$0xff]
    %v538 = vld [vmem:[%s1 + $0xff8] sm:$0xff]
    %v539 = vld [vmem:[%s1 + $0x1000] sm:$0xff]
    %v540 = vld [vmem:[%s1 + $0x1008] sm:$0xff]
    %v541 = vld [vmem:[%s1 + $0x1010] sm:$0xff]
    %v542 = vld [vmem:[%s1 + $0x1018] sm:$0xff]
    %v543 = vld [vmem:[%s1 + $0x1020] sm:$0xff]
    %v544 = vld [vmem:[%s1 + $0x1028] sm:$0xff]
    %v545 = vld [vmem:[%s1 + $0x1030] sm:$0xff]
    %v546 = vld [vmem:[%s1 + $0x1038] sm:$0xff]
    %v547 = vld [vmem:[%s1 + $0x1040] sm:$0xff]
    %v548 = vld [vmem:[%s1 + $0x1048] sm:$0xff]
    %v549 = vld [vmem:[%s1 + $0x1050] sm:$0xff]
    %v550 = vld [vmem:[%s1 + $0x1058] sm:$0xff]
    %v551 = vld [vmem:[%s1 + $0x1060] sm:$0xff]
    %v552 = vld [vmem:[%s1 + $0x1068] sm:$0xff]
    %v553 = vld [vmem:[%s1 + $0x1070] sm:$0xff]
    %v554 = vld [vmem:[%s1 + $0x1078] sm:$0xff]
    %v555 = vld [vmem:[%s1 + $0x1080] sm:$0xff]
    %v556 = vld [vmem:[%s1 + $0x1088] sm:$0xff]
    %v557 = vld [vmem:[%s1 + $0x1090] sm:$0xff]
    %v558 = vld [vmem:[%s1 + $0x1098] sm:$0xff]
    %v559 = vld [vmem:[%s1 + $0x10a0] sm:$0xff]
    %v560 = vld [vmem:[%s1 + $0x10a8] sm:$0xff]
    %v561 = vld [vmem:[%s1 + $0x10b0] sm:$0xff]
    %v562 = vld [vmem:[%s1 + $0x10b8] sm:$0xff]
    %v563 = vld [vmem:[%s1 + $0x10c0] sm:$0xff]
    %v564 = vld [vmem:[%s1 + $0x10c8] sm:$0xff]
    %v565 = vld [vmem:[%s1 + $0x10d0] sm:$0xff]
    %v566 = vld [vmem:[%s1 + $0x10d8] sm:$0xff]
    %v567 = vld [vmem:[%s1 + $0x10e0] sm:$0xff]
    %v568 = vld [vmem:[%s1 + $0x10e8] sm:$0xff]
    %v569 = vld [vmem:[%s1 + $0x10f0] sm:$0xff]
    %v570 = vld [vmem:[%s1 + $0x10f8] sm:$0xff]
    %v571 = vld [vmem:[%s1 + $0x1100] sm:$0xff]
    %v572 = vld [vmem:[%s1 + $0x1108] sm:$0xff]
    %v573 = vld [vmem:[%s1 + $0x1110] sm:$0xff]
    %v574 = vld [vmem:[%s1 + $0x1118] sm:$0xff]
    %v575 = vld [vmem:[%s1 + $0x1120] sm:$0xff]
    %v576 = vld [vmem:[%s1 + $0x1128] sm:$0xff]
    %v577 = vld [vmem:[%s1 + $0x1130] sm:$0xff]
    %v578 = vld [vmem:[%s1 + $0x1138] sm:$0xff]
    %v579 = vld [vmem:[%s1 + $0x1140] sm:$0xff]
    %v580 = vld [vmem:[%s1 + $0x1148] sm:$0xff]
    %v581 = vld [vmem:[%s1 + $0x1150] sm:$0xff]
    %v582 = vld [vmem:[%s1 + $0x1158] sm:$0xff]
    %v583 = vld [vmem:[%s1 + $0x1160] sm:$0xff]
    %v584 = vld [vmem:[%s1 + $0x1168] sm:$0xff]
    %v585 = vld [vmem:[%s1 + $0x1170] sm:$0xff]
    %v586 = vld [vmem:[%s1 + $0x1178] sm:$0xff]
    %v587 = vld [vmem:[%s1 + $0x1180] sm:$0xff]
    %v588 = vld [vmem:[%s1 + $0x1188] sm:$0xff]
    %v589 = vld [vmem:[%s1 + $0x1190] sm:$0xff]
    %v590 = vld [vmem:[%s1 + $0x1198] sm:$0xff]
    %v591 = vld [vmem:[%s1 + $0x11a0] sm:$0xff]
    %v592 = vld [vmem:[%s1 + $0x11a8] sm:$0xff]
    %v593 = vld [vmem:[%s1 + $0x11b0] sm:$0xff]
    %v594 = vld [vmem:[%s1 + $0x11b8] sm:$0xff]
    %v595 = vld [vmem:[%s1 + $0x11c0] sm:$0xff]
    %v596 = vld [vmem:[%s1 + $0x11c8] sm:$0xff]
    %v597 = vld [vmem:[%s1 + $0x11d0] sm:$0xff]
    %v598 = vld [vmem:[%s1 + $0x11d8] sm:$0xff]
    %v599 = vld [vmem:[%s1 + $0x11e0] sm:$0xff]
    %v600 = vld [vmem:[%s1 + $0x11e8] sm:$0xff]
    %v601 = vld [vmem:[%s1 + $0x11f0] sm:$0xff]
    %v602 = vld [vmem:[%s1 + $0x11f8] sm:$0xff]
    %v603 = vld [vmem:[%s2] sm:$0x3]
    %v605 = vlaneseq
    %v606 = vshrl.u32 %v605, 7
    %v607 = vsub.s32 0, %v606
    %v608 = vrot.slane %v603, %v607
    %v609 = vlaneseq
    %v610 = vshrl.u32 %v609, 7
    %v611 = vsub.s32 1, %v610
    %v612 = vrot.slane %v603, %v611
    %v620 = vcombine.high %v22, %v22
    %v622 = vunpack.c.l.s4 1966171168
    %v623 = vunpack.c.0.s8 %v622
    %v624 = vlaneseq
    %v625 = vshrl.u32 %v624, 7
    %v626 = vsub.s32 %v623, %v625
    %v627 = vrot.slane %v22, %v626
    %v629 = vunpack.c.l.s4 1966171168
    %v630 = vunpack.c.0.s8 %v629
    %v631 = vlaneseq
    %v632 = vshrl.u32 %v631, 7
    %v633 = vsub.s32 %v630, %v632
    %v634 = vrot.slane %v620, %v633
    %v635 = vcombine.high %v627, %v627
    %v636 = vcombine.high %v634, %v634
    %v638 = vunpack.c.l.s4 1966171168
    %v639 = vunpack.c.0.s8 %v638
    %v640 = vlaneseq
    %v641 = vshrl.u32 %v640, 7
    %v642 = vsub.s32 %v639, %v641
    %v643 = vrot.slane %v627, %v642
    %v645 = vunpack.c.l.s4 1966171168
    %v646 = vunpack.c.0.s8 %v645
    %v647 = vlaneseq
    %v648 = vshrl.u32 %v647, 7
    %v649 = vsub.s32 %v646, %v648
    %v650 = vrot.slane %v634, %v649
    %v652 = vunpack.c.l.s4 1966171168
    %v653 = vunpack.c.0.s8 %v652
    %v654 = vlaneseq
    %v655 = vshrl.u32 %v654, 7
    %v656 = vsub.s32 %v653, %v655
    %v657 = vrot.slane %v635, %v656
    %v659 = vunpack.c.l.s4 1966171168
    %v660 = vunpack.c.0.s8 %v659
    %v661 = vlaneseq
    %v662 = vshrl.u32 %v661, 7
    %v663 = vsub.s32 %v660, %v662
    %v664 = vrot.slane %v636, %v663
    %v665 = vcombine.high %v643, %v643
    %v666 = vcombine.high %v650, %v650
    %v667 = vcombine.high %v657, %v657
    %v668 = vcombine.high %v664, %v664
    %v669 = vcombine.high %v23, %v23
    %v671 = vunpack.c.l.s4 1966171168
    %v672 = vunpack.c.0.s8 %v671
    %v673 = vlaneseq
    %v674 = vshrl.u32 %v673, 7
    %v675 = vsub.s32 %v672, %v674
    %v676 = vrot.slane %v23, %v675
    %v678 = vunpack.c.l.s4 1966171168
    %v679 = vunpack.c.0.s8 %v678
    %v680 = vlaneseq
    %v681 = vshrl.u32 %v680, 7
    %v682 = vsub.s32 %v679, %v681
    %v683 = vrot.slane %v669, %v682
    %v684 = vcombine.high %v676, %v676
    %v685 = vcombine.high %v683, %v683
    %v687 = vunpack.c.l.s4 1966171168
    %v688 = vunpack.c.0.s8 %v687
    %v689 = vlaneseq
    %v690 = vshrl.u32 %v689, 7
    %v691 = vsub.s32 %v688, %v690
    %v692 = vrot.slane %v676, %v691
    %v694 = vunpack.c.l.s4 1966171168
    %v695 = vunpack.c.0.s8 %v694
    %v696 = vlaneseq
    %v697 = vshrl.u32 %v696, 7
    %v698 = vsub.s32 %v695, %v697
    %v699 = vrot.slane %v683, %v698
    %v701 = vunpack.c.l.s4 1966171168
    %v702 = vunpack.c.0.s8 %v701
    %v703 = vlaneseq
    %v704 = vshrl.u32 %v703, 7
    %v705 = vsub.s32 %v702, %v704
    %v706 = vrot.slane %v684, %v705
    %v708 = vunpack.c.l.s4 1966171168
    %v709 = vunpack.c.0.s8 %v708
    %v710 = vlaneseq
    %v711 = vshrl.u32 %v710, 7
    %v712 = vsub.s32 %v709, %v711
    %v713 = vrot.slane %v685, %v712
    %v714 = vcombine.high %v692, %v692
    %v715 = vcombine.high %v699, %v699
    %v716 = vcombine.high %v706, %v706
    %v717 = vcombine.high %v713, %v713
    %v718 = vcombine.high %v24, %v24
    %v720 = vunpack.c.l.s4 1966171168
    %v721 = vunpack.c.0.s8 %v720
    %v722 = vlaneseq
    %v723 = vshrl.u32 %v722, 7
    %v724 = vsub.s32 %v721, %v723
    %v725 = vrot.slane %v24, %v724
    %v727 = vunpack.c.l.s4 1966171168
    %v728 = vunpack.c.0.s8 %v727
    %v729 = vlaneseq
    %v730 = vshrl.u32 %v729, 7
    %v731 = vsub.s32 %v728, %v730
    %v732 = vrot.slane %v718, %v731
    %v733 = vcombine.high %v725, %v725
    %v734 = vcombine.high %v732, %v732
    %v736 = vunpack.c.l.s4 1966171168
    %v737 = vunpack.c.0.s8 %v736
    %v738 = vlaneseq
    %v739 = vshrl.u32 %v738, 7
    %v740 = vsub.s32 %v737, %v739
    %v741 = vrot.slane %v725, %v740
    %v743 = vunpack.c.l.s4 1966171168
    %v744 = vunpack.c.0.s8 %v743
    %v745 = vlaneseq
    %v746 = vshrl.u32 %v745, 7
    %v747 = vsub.s32 %v744, %v746
    %v748 = vrot.slane %v732, %v747
    %v750 = vunpack.c.l.s4 1966171168
    %v751 = vunpack.c.0.s8 %v750
    %v752 = vlaneseq
    %v753 = vshrl.u32 %v752, 7
    %v754 = vsub.s32 %v751, %v753
    %v755 = vrot.slane %v733, %v754
    %v757 = vunpack.c.l.s4 1966171168
    %v758 = vunpack.c.0.s8 %v757
    %v759 = vlaneseq
    %v760 = vshrl.u32 %v759, 7
    %v761 = vsub.s32 %v758, %v760
    %v762 = vrot.slane %v734, %v761
    %v763 = vcombine.high %v741, %v741
    %v764 = vcombine.high %v748, %v748
    %v765 = vcombine.high %v755, %v755
    %v766 = vcombine.high %v762, %v762
    %v767 = vcombine.high %v25, %v25
    %v769 = vunpack.c.l.s4 1966171168
    %v770 = vunpack.c.0.s8 %v769
    %v771 = vlaneseq
    %v772 = vshrl.u32 %v771, 7
    %v773 = vsub.s32 %v770, %v772
    %v774 = vrot.slane %v25, %v773
    %v776 = vunpack.c.l.s4 1966171168
    %v777 = vunpack.c.0.s8 %v776
    %v778 = vlaneseq
    %v779 = vshrl.u32 %v778, 7
    %v780 = vsub.s32 %v777, %v779
    %v781 = vrot.slane %v767, %v780
    %v782 = vcombine.high %v774, %v774
    %v783 = vcombine.high %v781, %v781
    %v785 = vunpack.c.l.s4 1966171168
    %v786 = vunpack.c.0.s8 %v785
    %v787 = vlaneseq
    %v788 = vshrl.u32 %v787, 7
    %v789 = vsub.s32 %v786, %v788
    %v790 = vrot.slane %v774, %v789
    %v792 = vunpack.c.l.s4 1966171168
    %v793 = vunpack.c.0.s8 %v792
    %v794 = vlaneseq
    %v795 = vshrl.u32 %v794, 7
    %v796 = vsub.s32 %v793, %v795
    %v797 = vrot.slane %v781, %v796
    %v799 = vunpack.c.l.s4 1966171168
    %v800 = vunpack.c.0.s8 %v799
    %v801 = vlaneseq
    %v802 = vshrl.u32 %v801, 7
    %v803 = vsub.s32 %v800, %v802
    %v804 = vrot.slane %v782, %v803
    %v806 = vunpack.c.l.s4 1966171168
    %v807 = vunpack.c.0.s8 %v806
    %v808 = vlaneseq
    %v809 = vshrl.u32 %v808, 7
    %v810 = vsub.s32 %v807, %v809
    %v811 = vrot.slane %v783, %v810
    %v812 = vcombine.high %v790, %v790
    %v813 = vcombine.high %v797, %v797
    %v814 = vcombine.high %v804, %v804
    %v815 = vcombine.high %v811, %v811
    %v817 = vunpack.c.l.s4 1966171168
    %v818 = vunpack.c.0.s8 %v817
    %v819 = vlaneseq
    %v820 = vshrl.u32 %v819, 7
    %v821 = vsub.s32 %v818, %v820
    %v822 = vrot.slane %v26, %v821
    %v823 = vcombine.high %v822, %v822
    %v825 = vunpack.c.l.s4 1966171168
    %v826 = vunpack.c.0.s8 %v825
    %v827 = vlaneseq
    %v828 = vshrl.u32 %v827, 7
    %v829 = vsub.s32 %v826, %v828
    %v830 = vrot.slane %v822, %v829
    %v832 = vunpack.c.l.s4 1966171168
    %v833 = vunpack.c.0.s8 %v832
    %v834 = vlaneseq
    %v835 = vshrl.u32 %v834, 7
    %v836 = vsub.s32 %v833, %v835
    %v837 = vrot.slane %v823, %v836
    %v838 = vcombine.high %v830, %v830
    %v839 = vcombine.high %v837, %v837
    %v1452 = vunpack.c.l.b16 %v27
    %v1453 = vunpack.c.h.b16 %v27
    %v1454 = vunpack.c.l.b16 %v28
    %v1455 = vunpack.c.h.b16 %v28
    %v1456 = vunpack.c.l.b16 %v29
    %v1457 = vunpack.c.h.b16 %v29
    %v1458 = vunpack.c.l.b16 %v30
    %v1459 = vunpack.c.h.b16 %v30
    %v1460 = vunpack.c.l.b16 %v31
    %v1461 = vunpack.c.h.b16 %v31
    %v1462 = vunpack.c.l.b16 %v32
    %v1463 = vunpack.c.h.b16 %v32
    %v1464 = vunpack.c.l.b16 %v33
    %v1465 = vunpack.c.h.b16 %v33
    %v1466 = vunpack.c.l.b16 %v34
    %v1467 = vunpack.c.h.b16 %v34
    %v1468 = vunpack.c.l.b16 %v35
    %v1469 = vunpack.c.h.b16 %v35
    %v1470 = vunpack.c.l.b16 %v36
    %v1471 = vunpack.c.h.b16 %v36
    %v1472 = vunpack.c.l.b16 %v37
    %v1473 = vunpack.c.h.b16 %v37
    %v1474 = vunpack.c.l.b16 %v38
    %v1475 = vunpack.c.h.b16 %v38
    %v1476 = vunpack.c.l.b16 %v39
    %v1477 = vunpack.c.h.b16 %v39
    %v1478 = vunpack.c.l.b16 %v40
    %v1479 = vunpack.c.h.b16 %v40
    %v1480 = vunpack.c.l.b16 %v41
    %v1481 = vunpack.c.h.b16 %v41
    %v1482 = vunpack.c.l.b16 %v42
    %v1483 = vunpack.c.h.b16 %v42
    %v1484 = vunpack.c.l.b16 %v43
    %v1485 = vunpack.c.h.b16 %v43
    %v1486 = vunpack.c.l.b16 %v44
    %v1487 = vunpack.c.h.b16 %v44
    %v1488 = vunpack.c.l.b16 %v45
    %v1489 = vunpack.c.h.b16 %v45
    %v1490 = vunpack.c.l.b16 %v46
    %v1491 = vunpack.c.h.b16 %v46
    %v1492 = vunpack.c.l.b16 %v47
    %v1493 = vunpack.c.h.b16 %v47
    %v1494 = vunpack.c.l.b16 %v48
    %v1495 = vunpack.c.h.b16 %v48
    %v1496 = vunpack.c.l.b16 %v49
    %v1497 = vunpack.c.h.b16 %v49
    %v1498 = vunpack.c.l.b16 %v50
    %v1499 = vunpack.c.h.b16 %v50
    %v1500 = vunpack.c.l.b16 %v51
    %v1501 = vunpack.c.h.b16 %v51
    %v1502 = vunpack.c.l.b16 %v52
    %v1503 = vunpack.c.h.b16 %v52
    %v1504 = vunpack.c.l.b16 %v53
    %v1505 = vunpack.c.h.b16 %v53
    %v1506 = vunpack.c.l.b16 %v54
    %v1507 = vunpack.c.h.b16 %v54
    %v1508 = vunpack.c.l.b16 %v55
    %v1509 = vunpack.c.h.b16 %v55
    %v1510 = vunpack.c.l.b16 %v56
    %v1511 = vunpack.c.h.b16 %v56
    %v1512 = vunpack.c.l.b16 %v57
    %v1513 = vunpack.c.h.b16 %v57
    %v1514 = vunpack.c.l.b16 %v58
    %v1515 = vunpack.c.h.b16 %v58
    %v1516 = vunpack.c.l.b16 %v59
    %v1517 = vunpack.c.h.b16 %v59
    %v1518 = vunpack.c.l.b16 %v60
    %v1519 = vunpack.c.h.b16 %v60
    %v1520 = vunpack.c.l.b16 %v61
    %v1521 = vunpack.c.h.b16 %v61
    %v1522 = vunpack.c.l.b16 %v62
    %v1523 = vunpack.c.h.b16 %v62
    %v1524 = vunpack.c.l.b16 %v63
    %v1525 = vunpack.c.h.b16 %v63
    %v1526 = vunpack.c.l.b16 %v64
    %v1527 = vunpack.c.h.b16 %v64
    %v1528 = vunpack.c.l.b16 %v65
    %v1529 = vunpack.c.h.b16 %v65
    %v1530 = vunpack.c.l.b16 %v66
    %v1531 = vunpack.c.h.b16 %v66
    %v1532 = vunpack.c.l.b16 %v67
    %v1533 = vunpack.c.h.b16 %v67
    %v1534 = vunpack.c.l.b16 %v68
    %v1535 = vunpack.c.h.b16 %v68
    %v1536 = vunpack.c.l.b16 %v69
    %v1537 = vunpack.c.h.b16 %v69
    %v1538 = vunpack.c.l.b16 %v70
    %v1539 = vunpack.c.h.b16 %v70
    %v1540 = vunpack.c.l.b16 %v71
    %v1541 = vunpack.c.h.b16 %v71
    %v1542 = vunpack.c.l.b16 %v72
    %v1543 = vunpack.c.h.b16 %v72
    %v1544 = vunpack.c.l.b16 %v73
    %v1545 = vunpack.c.h.b16 %v73
    %v1546 = vunpack.c.l.b16 %v74
    %v1547 = vunpack.c.h.b16 %v74
    %v1548 = vunpack.c.l.b16 %v75
    %v1549 = vunpack.c.h.b16 %v75
    %v1550 = vunpack.c.l.b16 %v76
    %v1551 = vunpack.c.h.b16 %v76
    %v1552 = vunpack.c.l.b16 %v77
    %v1553 = vunpack.c.h.b16 %v77
    %v1554 = vunpack.c.l.b16 %v78
    %v1555 = vunpack.c.h.b16 %v78
    %v1556 = vunpack.c.l.b16 %v79
    %v1557 = vunpack.c.h.b16 %v79
    %v1558 = vunpack.c.l.b16 %v80
    %v1559 = vunpack.c.h.b16 %v80
    %v1560 = vunpack.c.l.b16 %v81
    %v1561 = vunpack.c.h.b16 %v81
    %v1562 = vunpack.c.l.b16 %v82
    %v1563 = vunpack.c.h.b16 %v82
    %v1564 = vunpack.c.l.b16 %v83
    %v1565 = vunpack.c.h.b16 %v83
    %v1566 = vunpack.c.l.b16 %v84
    %v1567 = vunpack.c.h.b16 %v84
    %v1568 = vunpack.c.l.b16 %v85
    %v1569 = vunpack.c.h.b16 %v85
    %v1570 = vunpack.c.l.b16 %v86
    %v1571 = vunpack.c.h.b16 %v86
    %v1572 = vunpack.c.l.b16 %v87
    %v1573 = vunpack.c.h.b16 %v87
    %v1574 = vunpack.c.l.b16 %v88
    %v1575 = vunpack.c.h.b16 %v88
    %v1576 = vunpack.c.l.b16 %v89
    %v1577 = vunpack.c.h.b16 %v89
    %v1578 = vunpack.c.l.b16 %v90
    %v1579 = vunpack.c.h.b16 %v90
    %v1580 = vunpack.c.l.b16 %v91
    %v1581 = vunpack.c.h.b16 %v91
    %v1582 = vunpack.c.l.b16 %v92
    %v1583 = vunpack.c.h.b16 %v92
    %v1584 = vunpack.c.l.b16 %v93
    %v1585 = vunpack.c.h.b16 %v93
    %v1586 = vunpack.c.l.b16 %v94
    %v1587 = vunpack.c.h.b16 %v94
    %v1588 = vunpack.c.l.b16 %v95
    %v1589 = vunpack.c.h.b16 %v95
    %v1590 = vunpack.c.l.b16 %v96
    %v1591 = vunpack.c.h.b16 %v96
    %v1592 = vunpack.c.l.b16 %v97
    %v1593 = vunpack.c.h.b16 %v97
    %v1594 = vunpack.c.l.b16 %v98
    %v1595 = vunpack.c.h.b16 %v98
    %v1596 = vunpack.c.l.b16 %v99
    %v1597 = vunpack.c.h.b16 %v99
    %v1598 = vunpack.c.l.b16 %v100
    %v1599 = vunpack.c.h.b16 %v100
    %v1600 = vunpack.c.l.b16 %v101
    %v1601 = vunpack.c.h.b16 %v101
    %v1602 = vunpack.c.l.b16 %v102
    %v1603 = vunpack.c.h.b16 %v102
    %v1604 = vunpack.c.l.b16 %v103
    %v1605 = vunpack.c.h.b16 %v103
    %v1606 = vunpack.c.l.b16 %v104
    %v1607 = vunpack.c.h.b16 %v104
    %v1608 = vunpack.c.l.b16 %v105
    %v1609 = vunpack.c.h.b16 %v105
    %v1610 = vunpack.c.l.b16 %v106
    %v1611 = vunpack.c.h.b16 %v106
    %v1612 = vunpack.c.l.b16 %v107
    %v1613 = vunpack.c.h.b16 %v107
    %v1614 = vunpack.c.l.b16 %v108
    %v1615 = vunpack.c.h.b16 %v108
    %v1616 = vunpack.c.l.b16 %v109
    %v1617 = vunpack.c.h.b16 %v109
    %v1618 = vunpack.c.l.b16 %v110
    %v1619 = vunpack.c.h.b16 %v110
    %v1620 = vunpack.c.l.b16 %v111
    %v1621 = vunpack.c.h.b16 %v111
    %v1622 = vunpack.c.l.b16 %v112
    %v1623 = vunpack.c.h.b16 %v112
    %v1624 = vunpack.c.l.b16 %v113
    %v1625 = vunpack.c.h.b16 %v113
    %v1626 = vunpack.c.l.b16 %v114
    %v1627 = vunpack.c.h.b16 %v114
    %v1628 = vunpack.c.l.b16 %v115
    %v1629 = vunpack.c.h.b16 %v115
    %v1630 = vunpack.c.l.b16 %v116
    %v1631 = vunpack.c.h.b16 %v116
    %v1632 = vunpack.c.l.b16 %v117
    %v1633 = vunpack.c.h.b16 %v117
    %v1634 = vunpack.c.l.b16 %v118
    %v1635 = vunpack.c.h.b16 %v118
    %v1636 = vunpack.c.l.b16 %v119
    %v1637 = vunpack.c.h.b16 %v119
    %v1638 = vunpack.c.l.b16 %v120
    %v1639 = vunpack.c.h.b16 %v120
    %v1640 = vunpack.c.l.b16 %v121
    %v1641 = vunpack.c.h.b16 %v121
    %v1642 = vunpack.c.l.b16 %v122
    %v1643 = vunpack.c.h.b16 %v122
    %v1644 = vunpack.c.l.b16 %v123
    %v1645 = vunpack.c.h.b16 %v123
    %v1646 = vunpack.c.l.b16 %v124
    %v1647 = vunpack.c.h.b16 %v124
    %v1648 = vunpack.c.l.b16 %v125
    %v1649 = vunpack.c.h.b16 %v125
    %v1650 = vunpack.c.l.b16 %v126
    %v1651 = vunpack.c.h.b16 %v126
    %v1652 = vunpack.c.l.b16 %v127
    %v1653 = vunpack.c.h.b16 %v127
    %v1654 = vunpack.c.l.b16 %v128
    %v1655 = vunpack.c.h.b16 %v128
    %v1656 = vunpack.c.l.b16 %v129
    %v1657 = vunpack.c.h.b16 %v129
    %v1658 = vunpack.c.l.b16 %v130
    %v1659 = vunpack.c.h.b16 %v130
    %v1660 = vunpack.c.l.b16 %v131
    %v1661 = vunpack.c.h.b16 %v131
    %v1662 = vunpack.c.l.b16 %v132
    %v1663 = vunpack.c.h.b16 %v132
    %v1664 = vunpack.c.l.b16 %v133
    %v1665 = vunpack.c.h.b16 %v133
    %v1666 = vunpack.c.l.b16 %v134
    %v1667 = vunpack.c.h.b16 %v134
    %v1668 = vunpack.c.l.b16 %v135
    %v1669 = vunpack.c.h.b16 %v135
    %v1670 = vunpack.c.l.b16 %v136
    %v1671 = vunpack.c.h.b16 %v136
    %v1672 = vunpack.c.l.b16 %v137
    %v1673 = vunpack.c.h.b16 %v137
    %v1674 = vunpack.c.l.b16 %v138
    %v1675 = vunpack.c.h.b16 %v138
    %v1676 = vunpack.c.l.b16 %v139
    %v1677 = vunpack.c.h.b16 %v139
    %v1678 = vunpack.c.l.b16 %v140
    %v1679 = vunpack.c.h.b16 %v140
    %v1680 = vunpack.c.l.b16 %v141
    %v1681 = vunpack.c.h.b16 %v141
    %v1682 = vunpack.c.l.b16 %v142
    %v1683 = vunpack.c.h.b16 %v142
    %v1684 = vunpack.c.l.b16 %v143
    %v1685 = vunpack.c.h.b16 %v143
    %v1686 = vunpack.c.l.b16 %v144
    %v1687 = vunpack.c.h.b16 %v144
    %v1688 = vunpack.c.l.b16 %v145
    %v1689 = vunpack.c.h.b16 %v145
    %v1690 = vunpack.c.l.b16 %v146
    %v1691 = vunpack.c.h.b16 %v146
    %v1692 = vunpack.c.l.b16 %v147
    %v1693 = vunpack.c.h.b16 %v147
    %v1694 = vunpack.c.l.b16 %v148
    %v1695 = vunpack.c.h.b16 %v148
    %v1696 = vunpack.c.l.b16 %v149
    %v1697 = vunpack.c.h.b16 %v149
    %v1698 = vunpack.c.l.b16 %v150
    %v1699 = vunpack.c.h.b16 %v150
    %v1700 = vunpack.c.l.b16 %v151
    %v1701 = vunpack.c.h.b16 %v151
    %v1702 = vunpack.c.l.b16 %v152
    %v1703 = vunpack.c.h.b16 %v152
    %v1704 = vunpack.c.l.b16 %v153
    %v1705 = vunpack.c.h.b16 %v153
    %v1706 = vunpack.c.l.b16 %v154
    %v1707 = vunpack.c.h.b16 %v154
    %v1708 = vunpack.c.l.b16 %v155
    %v1709 = vunpack.c.h.b16 %v155
    %v1710 = vunpack.c.l.b16 %v156
    %v1711 = vunpack.c.h.b16 %v156
    %v1712 = vunpack.c.l.b16 %v157
    %v1713 = vunpack.c.h.b16 %v157
    %v1714 = vunpack.c.l.b16 %v158
    %v1715 = vunpack.c.h.b16 %v158
    %v1716 = vunpack.c.l.b16 %v159
    %v1717 = vunpack.c.h.b16 %v159
    %v1718 = vunpack.c.l.b16 %v160
    %v1719 = vunpack.c.h.b16 %v160
    %v1720 = vunpack.c.l.b16 %v161
    %v1721 = vunpack.c.h.b16 %v161
    %v1722 = vunpack.c.l.b16 %v162
    %v1723 = vunpack.c.h.b16 %v162
    %v1724 = vunpack.c.l.b16 %v163
    %v1725 = vunpack.c.h.b16 %v163
    %v1726 = vunpack.c.l.b16 %v164
    %v1727 = vunpack.c.h.b16 %v164
    %v1728 = vunpack.c.l.b16 %v165
    %v1729 = vunpack.c.h.b16 %v165
    %v1730 = vunpack.c.l.b16 %v166
    %v1731 = vunpack.c.h.b16 %v166
    %v1732 = vunpack.c.l.b16 %v167
    %v1733 = vunpack.c.h.b16 %v167
    %v1734 = vunpack.c.l.b16 %v168
    %v1735 = vunpack.c.h.b16 %v168
    %v1736 = vunpack.c.l.b16 %v169
    %v1737 = vunpack.c.h.b16 %v169
    %v1738 = vunpack.c.l.b16 %v170
    %v1739 = vunpack.c.h.b16 %v170
    %v1740 = vunpack.c.l.b16 %v171
    %v1741 = vunpack.c.h.b16 %v171
    %v1742 = vunpack.c.l.b16 %v172
    %v1743 = vunpack.c.h.b16 %v172
    %v1744 = vunpack.c.l.b16 %v173
    %v1745 = vunpack.c.h.b16 %v173
    %v1746 = vunpack.c.l.b16 %v174
    %v1747 = vunpack.c.h.b16 %v174
    %v1748 = vunpack.c.l.b16 %v175
    %v1749 = vunpack.c.h.b16 %v175
    %v1750 = vunpack.c.l.b16 %v176
    %v1751 = vunpack.c.h.b16 %v176
    %v1752 = vunpack.c.l.b16 %v177
    %v1753 = vunpack.c.h.b16 %v177
    %v1754 = vunpack.c.l.b16 %v178
    %v1755 = vunpack.c.h.b16 %v178
    %v1756 = vunpack.c.l.b16 %v179
    %v1757 = vunpack.c.h.b16 %v179
    %v1758 = vunpack.c.l.b16 %v180
    %v1759 = vunpack.c.h.b16 %v180
    %v1760 = vunpack.c.l.b16 %v181
    %v1761 = vunpack.c.h.b16 %v181
    %v1762 = vunpack.c.l.b16 %v182
    %v1763 = vunpack.c.h.b16 %v182
    %v1764 = vunpack.c.l.b16 %v183
    %v1765 = vunpack.c.h.b16 %v183
    %v1766 = vunpack.c.l.b16 %v184
    %v1767 = vunpack.c.h.b16 %v184
    %v1768 = vunpack.c.l.b16 %v185
    %v1769 = vunpack.c.h.b16 %v185
    %v1770 = vunpack.c.l.b16 %v186
    %v1771 = vunpack.c.h.b16 %v186
    %v1772 = vunpack.c.l.b16 %v187
    %v1773 = vunpack.c.h.b16 %v187
    %v1774 = vunpack.c.l.b16 %v188
    %v1775 = vunpack.c.h.b16 %v188
    %v1776 = vunpack.c.l.b16 %v189
    %v1777 = vunpack.c.h.b16 %v189
    %v1778 = vunpack.c.l.b16 %v190
    %v1779 = vunpack.c.h.b16 %v190
    %v1780 = vunpack.c.l.b16 %v191
    %v1781 = vunpack.c.h.b16 %v191
    %v1782 = vunpack.c.l.b16 %v192
    %v1783 = vunpack.c.h.b16 %v192
    %v1784 = vunpack.c.l.b16 %v193
    %v1785 = vunpack.c.h.b16 %v193
    %v1786 = vunpack.c.l.b16 %v194
    %v1787 = vunpack.c.h.b16 %v194
    %v1788 = vunpack.c.l.b16 %v195
    %v1789 = vunpack.c.h.b16 %v195
    %v1790 = vunpack.c.l.b16 %v196
    %v1791 = vunpack.c.h.b16 %v196
    %v1792 = vunpack.c.l.b16 %v197
    %v1793 = vunpack.c.h.b16 %v197
    %v1794 = vunpack.c.l.b16 %v198
    %v1795 = vunpack.c.h.b16 %v198
    %v1796 = vunpack.c.l.b16 %v199
    %v1797 = vunpack.c.h.b16 %v199
    %v1798 = vunpack.c.l.b16 %v200
    %v1799 = vunpack.c.h.b16 %v200
    %v1800 = vunpack.c.l.b16 %v201
    %v1801 = vunpack.c.h.b16 %v201
    %v1802 = vunpack.c.l.b16 %v202
    %v1803 = vunpack.c.h.b16 %v202
    %v1804 = vunpack.c.l.b16 %v203
    %v1805 = vunpack.c.h.b16 %v203
    %v1806 = vunpack.c.l.b16 %v204
    %v1807 = vunpack.c.h.b16 %v204
    %v1808 = vunpack.c.l.b16 %v205
    %v1809 = vunpack.c.h.b16 %v205
    %v1810 = vunpack.c.l.b16 %v206
    %v1811 = vunpack.c.h.b16 %v206
    %v1812 = vunpack.c.l.b16 %v207
    %v1813 = vunpack.c.h.b16 %v207
    %v1814 = vunpack.c.l.b16 %v208
    %v1815 = vunpack.c.h.b16 %v208
    %v1816 = vunpack.c.l.b16 %v209
    %v1817 = vunpack.c.h.b16 %v209
    %v1818 = vunpack.c.l.b16 %v210
    %v1819 = vunpack.c.h.b16 %v210
    %v1820 = vunpack.c.l.b16 %v211
    %v1821 = vunpack.c.h.b16 %v211
    %v1822 = vunpack.c.l.b16 %v212
    %v1823 = vunpack.c.h.b16 %v212
    %v1824 = vunpack.c.l.b16 %v213
    %v1825 = vunpack.c.h.b16 %v213
    %v1826 = vunpack.c.l.b16 %v214
    %v1827 = vunpack.c.h.b16 %v214
    %v1828 = vunpack.c.l.b16 %v215
    %v1829 = vunpack.c.h.b16 %v215
    %v1830 = vunpack.c.l.b16 %v216
    %v1831 = vunpack.c.h.b16 %v216
    %v1832 = vunpack.c.l.b16 %v217
    %v1833 = vunpack.c.h.b16 %v217
    %v1834 = vunpack.c.l.b16 %v218
    %v1835 = vunpack.c.h.b16 %v218
    %v1836 = vunpack.c.l.b16 %v219
    %v1837 = vunpack.c.h.b16 %v219
    %v1838 = vunpack.c.l.b16 %v220
    %v1839 = vunpack.c.h.b16 %v220
    %v1840 = vunpack.c.l.b16 %v221
    %v1841 = vunpack.c.h.b16 %v221
    %v1842 = vunpack.c.l.b16 %v222
    %v1843 = vunpack.c.h.b16 %v222
    %v1844 = vunpack.c.l.b16 %v223
    %v1845 = vunpack.c.h.b16 %v223
    %v1846 = vunpack.c.l.b16 %v224
    %v1847 = vunpack.c.h.b16 %v224
    %v1848 = vunpack.c.l.b16 %v225
    %v1849 = vunpack.c.h.b16 %v225
    %v1850 = vunpack.c.l.b16 %v226
    %v1851 = vunpack.c.h.b16 %v226
    %v1852 = vunpack.c.l.b16 %v227
    %v1853 = vunpack.c.h.b16 %v227
    %v1854 = vunpack.c.l.b16 %v228
    %v1855 = vunpack.c.h.b16 %v228
    %v1856 = vunpack.c.l.b16 %v229
    %v1857 = vunpack.c.h.b16 %v229
    %v1858 = vunpack.c.l.b16 %v230
    %v1859 = vunpack.c.h.b16 %v230
    %v1860 = vunpack.c.l.b16 %v231
    %v1861 = vunpack.c.h.b16 %v231
    %v1862 = vunpack.c.l.b16 %v232
    %v1863 = vunpack.c.h.b16 %v232
    %v1864 = vunpack.c.l.b16 %v233
    %v1865 = vunpack.c.h.b16 %v233
    %v1866 = vunpack.c.l.b16 %v234
    %v1867 = vunpack.c.h.b16 %v234
    %v1868 = vunpack.c.l.b16 %v235
    %v1869 = vunpack.c.h.b16 %v235
    %v1870 = vunpack.c.l.b16 %v236
    %v1871 = vunpack.c.h.b16 %v236
    %v1872 = vunpack.c.l.b16 %v237
    %v1873 = vunpack.c.h.b16 %v237
    %v1874 = vunpack.c.l.b16 %v238
    %v1875 = vunpack.c.h.b16 %v238
    %v1876 = vunpack.c.l.b16 %v239
    %v1877 = vunpack.c.h.b16 %v239
    %v1878 = vunpack.c.l.b16 %v240
    %v1879 = vunpack.c.h.b16 %v240
    %v1880 = vunpack.c.l.b16 %v241
    %v1881 = vunpack.c.h.b16 %v241
    %v1882 = vunpack.c.l.b16 %v242
    %v1883 = vunpack.c.h.b16 %v242
    %v1884 = vunpack.c.l.b16 %v243
    %v1885 = vunpack.c.h.b16 %v243
    %v1886 = vunpack.c.l.b16 %v244
    %v1887 = vunpack.c.h.b16 %v244
    %v1888 = vunpack.c.l.b16 %v245
    %v1889 = vunpack.c.h.b16 %v245
    %v1890 = vunpack.c.l.b16 %v246
    %v1891 = vunpack.c.h.b16 %v246
    %v1892 = vunpack.c.l.b16 %v247
    %v1893 = vunpack.c.h.b16 %v247
    %v1894 = vunpack.c.l.b16 %v248
    %v1895 = vunpack.c.h.b16 %v248
    %v1896 = vunpack.c.l.b16 %v249
    %v1897 = vunpack.c.h.b16 %v249
    %v1898 = vunpack.c.l.b16 %v250
    %v1899 = vunpack.c.h.b16 %v250
    %v1900 = vunpack.c.l.b16 %v251
    %v1901 = vunpack.c.h.b16 %v251
    %v1902 = vunpack.c.l.b16 %v252
    %v1903 = vunpack.c.h.b16 %v252
    %v1904 = vunpack.c.l.b16 %v253
    %v1905 = vunpack.c.h.b16 %v253
    %v1906 = vunpack.c.l.b16 %v254
    %v1907 = vunpack.c.h.b16 %v254
    %v1908 = vunpack.c.l.b16 %v255
    %v1909 = vunpack.c.h.b16 %v255
    %v1910 = vunpack.c.l.b16 %v256
    %v1911 = vunpack.c.h.b16 %v256
    %v1912 = vunpack.c.l.b16 %v257
    %v1913 = vunpack.c.h.b16 %v257
    %v1914 = vunpack.c.l.b16 %v258
    %v1915 = vunpack.c.h.b16 %v258
    %v1916 = vunpack.c.l.b16 %v259
    %v1917 = vunpack.c.h.b16 %v259
    %v1918 = vunpack.c.l.b16 %v260
    %v1919 = vunpack.c.h.b16 %v260
    %v1920 = vunpack.c.l.b16 %v261
    %v1921 = vunpack.c.h.b16 %v261
    %v1922 = vunpack.c.l.b16 %v262
    %v1923 = vunpack.c.h.b16 %v262
    %v1924 = vunpack.c.l.b16 %v263
    %v1925 = vunpack.c.h.b16 %v263
    %v1926 = vunpack.c.l.b16 %v264
    %v1927 = vunpack.c.h.b16 %v264
    %v1928 = vunpack.c.l.b16 %v265
    %v1929 = vunpack.c.h.b16 %v265
    %v1930 = vunpack.c.l.b16 %v266
    %v1931 = vunpack.c.h.b16 %v266
    %v1932 = vunpack.c.l.b16 %v267
    %v1933 = vunpack.c.h.b16 %v267
    %v1934 = vunpack.c.l.b16 %v268
    %v1935 = vunpack.c.h.b16 %v268
    %v1936 = vunpack.c.l.b16 %v269
    %v1937 = vunpack.c.h.b16 %v269
    %v1938 = vunpack.c.l.b16 %v270
    %v1939 = vunpack.c.h.b16 %v270
    %v1940 = vunpack.c.l.b16 %v271
    %v1941 = vunpack.c.h.b16 %v271
    %v1942 = vunpack.c.l.b16 %v272
    %v1943 = vunpack.c.h.b16 %v272
    %v1944 = vunpack.c.l.b16 %v273
    %v1945 = vunpack.c.h.b16 %v273
    %v1946 = vunpack.c.l.b16 %v274
    %v1947 = vunpack.c.h.b16 %v274
    %v1948 = vunpack.c.l.b16 %v275
    %v1949 = vunpack.c.h.b16 %v275
    %v1950 = vunpack.c.l.b16 %v276
    %v1951 = vunpack.c.h.b16 %v276
    %v1952 = vunpack.c.l.b16 %v277
    %v1953 = vunpack.c.h.b16 %v277
    %v1954 = vunpack.c.l.b16 %v278
    %v1955 = vunpack.c.h.b16 %v278
    %v1956 = vunpack.c.l.b16 %v279
    %v1957 = vunpack.c.h.b16 %v279
    %v1958 = vunpack.c.l.b16 %v280
    %v1959 = vunpack.c.h.b16 %v280
    %v1960 = vunpack.c.l.b16 %v281
    %v1961 = vunpack.c.h.b16 %v281
    %v1962 = vunpack.c.l.b16 %v282
    %v1963 = vunpack.c.h.b16 %v282
    %v1964 = vunpack.c.l.b16 %v283
    %v1965 = vunpack.c.h.b16 %v283
    %v1966 = vunpack.c.l.b16 %v284
    %v1967 = vunpack.c.h.b16 %v284
    %v1968 = vunpack.c.l.b16 %v285
    %v1969 = vunpack.c.h.b16 %v285
    %v1970 = vunpack.c.l.b16 %v286
    %v1971 = vunpack.c.h.b16 %v286
    %v1972 = vunpack.c.l.b16 %v287
    %v1973 = vunpack.c.h.b16 %v287
    %v1974 = vunpack.c.l.b16 %v288
    %v1975 = vunpack.c.h.b16 %v288
    %v1976 = vunpack.c.l.b16 %v289
    %v1977 = vunpack.c.h.b16 %v289
    %v1978 = vunpack.c.l.b16 %v290
    %v1979 = vunpack.c.h.b16 %v290
    %v1980 = vunpack.c.l.b16 %v291
    %v1981 = vunpack.c.h.b16 %v291
    %v1982 = vunpack.c.l.b16 %v292
    %v1983 = vunpack.c.h.b16 %v292
    %v1984 = vunpack.c.l.b16 %v293
    %v1985 = vunpack.c.h.b16 %v293
    %v1986 = vunpack.c.l.b16 %v294
    %v1987 = vunpack.c.h.b16 %v294
    %v1988 = vunpack.c.l.b16 %v295
    %v1989 = vunpack.c.h.b16 %v295
    %v1990 = vunpack.c.l.b16 %v296
    %v1991 = vunpack.c.h.b16 %v296
    %v1992 = vunpack.c.l.b16 %v297
    %v1993 = vunpack.c.h.b16 %v297
    %v1994 = vunpack.c.l.b16 %v298
    %v1995 = vunpack.c.h.b16 %v298
    %v1996 = vunpack.c.l.b16 %v299
    %v1997 = vunpack.c.h.b16 %v299
    %v1998 = vunpack.c.l.b16 %v300
    %v1999 = vunpack.c.h.b16 %v300
    %v2000 = vunpack.c.l.b16 %v301
    %v2001 = vunpack.c.h.b16 %v301
    %v2002 = vunpack.c.l.b16 %v302
    %v2003 = vunpack.c.h.b16 %v302
    %v2004 = vunpack.c.l.b16 %v303
    %v2005 = vunpack.c.h.b16 %v303
    %v2006 = vunpack.c.l.b16 %v304
    %v2007 = vunpack.c.h.b16 %v304
    %v2008 = vunpack.c.l.b16 %v305
    %v2009 = vunpack.c.h.b16 %v305
    %v2010 = vunpack.c.l.b16 %v306
    %v2011 = vunpack.c.h.b16 %v306
    %v2012 = vunpack.c.l.b16 %v307
    %v2013 = vunpack.c.h.b16 %v307
    %v2014 = vunpack.c.l.b16 %v308
    %v2015 = vunpack.c.h.b16 %v308
    %v2016 = vunpack.c.l.b16 %v309
    %v2017 = vunpack.c.h.b16 %v309
    %v2018 = vunpack.c.l.b16 %v310
    %v2019 = vunpack.c.h.b16 %v310
    %v2020 = vunpack.c.l.b16 %v311
    %v2021 = vunpack.c.h.b16 %v311
    %v2022 = vunpack.c.l.b16 %v312
    %v2023 = vunpack.c.h.b16 %v312
    %v2024 = vunpack.c.l.b16 %v313
    %v2025 = vunpack.c.h.b16 %v313
    %v2026 = vunpack.c.l.b16 %v314
    %v2027 = vunpack.c.h.b16 %v314
    %v2028 = vunpack.c.l.b16 %v315
    %v2029 = vunpack.c.h.b16 %v315
    %v2030 = vunpack.c.l.b16 %v316
    %v2031 = vunpack.c.h.b16 %v316
    %v2032 = vunpack.c.l.b16 %v317
    %v2033 = vunpack.c.h.b16 %v317
    %v2034 = vunpack.c.l.b16 %v318
    %v2035 = vunpack.c.h.b16 %v318
    %v2036 = vunpack.c.l.b16 %v319
    %v2037 = vunpack.c.h.b16 %v319
    %v2038 = vunpack.c.l.b16 %v320
    %v2039 = vunpack.c.h.b16 %v320
    %v2040 = vunpack.c.l.b16 %v321
    %v2041 = vunpack.c.h.b16 %v321
    %v2042 = vunpack.c.l.b16 %v322
    %v2043 = vunpack.c.h.b16 %v322
    %v2044 = vunpack.c.l.b16 %v323
    %v2045 = vunpack.c.h.b16 %v323
    %v2046 = vunpack.c.l.b16 %v324
    %v2047 = vunpack.c.h.b16 %v324
    %v2048 = vunpack.c.l.b16 %v325
    %v2049 = vunpack.c.h.b16 %v325
    %v2050 = vunpack.c.l.b16 %v326
    %v2051 = vunpack.c.h.b16 %v326
    %v2052 = vunpack.c.l.b16 %v327
    %v2053 = vunpack.c.h.b16 %v327
    %v2054 = vunpack.c.l.b16 %v328
    %v2055 = vunpack.c.h.b16 %v328
    %v2056 = vunpack.c.l.b16 %v329
    %v2057 = vunpack.c.h.b16 %v329
    %v2058 = vunpack.c.l.b16 %v330
    %v2059 = vunpack.c.h.b16 %v330
    %v2060 = vunpack.c.l.b16 %v331
    %v2061 = vunpack.c.h.b16 %v331
    %v2062 = vunpack.c.l.b16 %v332
    %v2063 = vunpack.c.h.b16 %v332
    %v2064 = vunpack.c.l.b16 %v333
    %v2065 = vunpack.c.h.b16 %v333
    %v2066 = vunpack.c.l.b16 %v334
    %v2067 = vunpack.c.h.b16 %v334
    %v2068 = vunpack.c.l.b16 %v335
    %v2069 = vunpack.c.h.b16 %v335
    %v2070 = vunpack.c.l.b16 %v336
    %v2071 = vunpack.c.h.b16 %v336
    %v2072 = vunpack.c.l.b16 %v337
    %v2073 = vunpack.c.h.b16 %v337
    %v2074 = vunpack.c.l.b16 %v338
    %v2075 = vunpack.c.h.b16 %v338
    %v2076 = vunpack.c.l.b16 %v339
    %v2077 = vunpack.c.h.b16 %v339
    %v2078 = vunpack.c.l.b16 %v340
    %v2079 = vunpack.c.h.b16 %v340
    %v2080 = vunpack.c.l.b16 %v341
    %v2081 = vunpack.c.h.b16 %v341
    %v2082 = vunpack.c.l.b16 %v342
    %v2083 = vunpack.c.h.b16 %v342
    %v2084 = vunpack.c.l.b16 %v343
    %v2085 = vunpack.c.h.b16 %v343
    %v2086 = vunpack.c.l.b16 %v344
    %v2087 = vunpack.c.h.b16 %v344
    %v2088 = vunpack.c.l.b16 %v345
    %v2089 = vunpack.c.h.b16 %v345
    %v2090 = vunpack.c.l.b16 %v346
    %v2091 = vunpack.c.h.b16 %v346
    %v2092 = vunpack.c.l.b16 %v347
    %v2093 = vunpack.c.h.b16 %v347
    %v2094 = vunpack.c.l.b16 %v348
    %v2095 = vunpack.c.h.b16 %v348
    %v2096 = vunpack.c.l.b16 %v349
    %v2097 = vunpack.c.h.b16 %v349
    %v2098 = vunpack.c.l.b16 %v350
    %v2099 = vunpack.c.h.b16 %v350
    %v2100 = vunpack.c.l.b16 %v351
    %v2101 = vunpack.c.h.b16 %v351
    %v2102 = vunpack.c.l.b16 %v352
    %v2103 = vunpack.c.h.b16 %v352
    %v2104 = vunpack.c.l.b16 %v353
    %v2105 = vunpack.c.h.b16 %v353
    %v2106 = vunpack.c.l.b16 %v354
    %v2107 = vunpack.c.h.b16 %v354
    %v2108 = vunpack.c.l.b16 %v355
    %v2109 = vunpack.c.h.b16 %v355
    %v2110 = vunpack.c.l.b16 %v356
    %v2111 = vunpack.c.h.b16 %v356
    %v2112 = vunpack.c.l.b16 %v357
    %v2113 = vunpack.c.h.b16 %v357
    %v2114 = vunpack.c.l.b16 %v358
    %v2115 = vunpack.c.h.b16 %v358
    %v2116 = vunpack.c.l.b16 %v359
    %v2117 = vunpack.c.h.b16 %v359
    %v2118 = vunpack.c.l.b16 %v360
    %v2119 = vunpack.c.h.b16 %v360
    %v2120 = vunpack.c.l.b16 %v361
    %v2121 = vunpack.c.h.b16 %v361
    %v2122 = vunpack.c.l.b16 %v362
    %v2123 = vunpack.c.h.b16 %v362
    %v2124 = vunpack.c.l.b16 %v363
    %v2125 = vunpack.c.h.b16 %v363
    %v2126 = vunpack.c.l.b16 %v364
    %v2127 = vunpack.c.h.b16 %v364
    %v2128 = vunpack.c.l.b16 %v365
    %v2129 = vunpack.c.h.b16 %v365
    %v2130 = vunpack.c.l.b16 %v366
    %v2131 = vunpack.c.h.b16 %v366
    %v2132 = vunpack.c.l.b16 %v367
    %v2133 = vunpack.c.h.b16 %v367
    %v2134 = vunpack.c.l.b16 %v368
    %v2135 = vunpack.c.h.b16 %v368
    %v2136 = vunpack.c.l.b16 %v369
    %v2137 = vunpack.c.h.b16 %v369
    %v2138 = vunpack.c.l.b16 %v370
    %v2139 = vunpack.c.h.b16 %v370
    %v2140 = vunpack.c.l.b16 %v371
    %v2141 = vunpack.c.h.b16 %v371
    %v2142 = vunpack.c.l.b16 %v372
    %v2143 = vunpack.c.h.b16 %v372
    %v2144 = vunpack.c.l.b16 %v373
    %v2145 = vunpack.c.h.b16 %v373
    %v2146 = vunpack.c.l.b16 %v374
    %v2147 = vunpack.c.h.b16 %v374
    %v2148 = vunpack.c.l.b16 %v375
    %v2149 = vunpack.c.h.b16 %v375
    %v2150 = vunpack.c.l.b16 %v376
    %v2151 = vunpack.c.h.b16 %v376
    %v2152 = vunpack.c.l.b16 %v377
    %v2153 = vunpack.c.h.b16 %v377
    %v2154 = vunpack.c.l.b16 %v378
    %v2155 = vunpack.c.h.b16 %v378
    %v2156 = vunpack.c.l.b16 %v379
    %v2157 = vunpack.c.h.b16 %v379
    %v2158 = vunpack.c.l.b16 %v380
    %v2159 = vunpack.c.h.b16 %v380
    %v2160 = vunpack.c.l.b16 %v381
    %v2161 = vunpack.c.h.b16 %v381
    %v2162 = vunpack.c.l.b16 %v382
    %v2163 = vunpack.c.h.b16 %v382
    %v2164 = vunpack.c.l.b16 %v383
    %v2165 = vunpack.c.h.b16 %v383
    %v2166 = vunpack.c.l.b16 %v384
    %v2167 = vunpack.c.h.b16 %v384
    %v2168 = vunpack.c.l.b16 %v385
    %v2169 = vunpack.c.h.b16 %v385
    %v2170 = vunpack.c.l.b16 %v386
    %v2171 = vunpack.c.h.b16 %v386
    %v2172 = vunpack.c.l.b16 %v387
    %v2173 = vunpack.c.h.b16 %v387
    %v2174 = vunpack.c.l.b16 %v388
    %v2175 = vunpack.c.h.b16 %v388
    %v2176 = vunpack.c.l.b16 %v389
    %v2177 = vunpack.c.h.b16 %v389
    %v2178 = vunpack.c.l.b16 %v390
    %v2179 = vunpack.c.h.b16 %v390
    %v2180 = vunpack.c.l.b16 %v391
    %v2181 = vunpack.c.h.b16 %v391
    %v2182 = vunpack.c.l.b16 %v392
    %v2183 = vunpack.c.h.b16 %v392
    %v2184 = vunpack.c.l.b16 %v393
    %v2185 = vunpack.c.h.b16 %v393
    %v2186 = vunpack.c.l.b16 %v394
    %v2187 = vunpack.c.h.b16 %v394
    %v2188 = vunpack.c.l.b16 %v395
    %v2189 = vunpack.c.h.b16 %v395
    %v2190 = vunpack.c.l.b16 %v396
    %v2191 = vunpack.c.h.b16 %v396
    %v2192 = vunpack.c.l.b16 %v397
    %v2193 = vunpack.c.h.b16 %v397
    %v2194 = vunpack.c.l.b16 %v398
    %v2195 = vunpack.c.h.b16 %v398
    %v2196 = vunpack.c.l.b16 %v399
    %v2197 = vunpack.c.h.b16 %v399
    %v2198 = vunpack.c.l.b16 %v400
    %v2199 = vunpack.c.h.b16 %v400
    %v2200 = vunpack.c.l.b16 %v401
    %v2201 = vunpack.c.h.b16 %v401
    %v2202 = vunpack.c.l.b16 %v402
    %v2203 = vunpack.c.h.b16 %v402
    %v2204 = vunpack.c.l.b16 %v403
    %v2205 = vunpack.c.h.b16 %v403
    %v2206 = vunpack.c.l.b16 %v404
    %v2207 = vunpack.c.h.b16 %v404
    %v2208 = vunpack.c.l.b16 %v405
    %v2209 = vunpack.c.h.b16 %v405
    %v2210 = vunpack.c.l.b16 %v406
    %v2211 = vunpack.c.h.b16 %v406
    %v2212 = vunpack.c.l.b16 %v407
    %v2213 = vunpack.c.h.b16 %v407
    %v2214 = vunpack.c.l.b16 %v408
    %v2215 = vunpack.c.h.b16 %v408
    %v2216 = vunpack.c.l.b16 %v409
    %v2217 = vunpack.c.h.b16 %v409
    %v2218 = vunpack.c.l.b16 %v410
    %v2219 = vunpack.c.h.b16 %v410
    %v2220 = vunpack.c.l.b16 %v411
    %v2221 = vunpack.c.h.b16 %v411
    %v2222 = vunpack.c.l.b16 %v412
    %v2223 = vunpack.c.h.b16 %v412
    %v2224 = vunpack.c.l.b16 %v413
    %v2225 = vunpack.c.h.b16 %v413
    %v2226 = vunpack.c.l.b16 %v414
    %v2227 = vunpack.c.h.b16 %v414
    %v2228 = vunpack.c.l.b16 %v415
    %v2229 = vunpack.c.h.b16 %v415
    %v2230 = vunpack.c.l.b16 %v416
    %v2231 = vunpack.c.h.b16 %v416
    %v2232 = vunpack.c.l.b16 %v417
    %v2233 = vunpack.c.h.b16 %v417
    %v2234 = vunpack.c.l.b16 %v418
    %v2235 = vunpack.c.h.b16 %v418
    %v2236 = vunpack.c.l.b16 %v419
    %v2237 = vunpack.c.h.b16 %v419
    %v2238 = vunpack.c.l.b16 %v420
    %v2239 = vunpack.c.h.b16 %v420
    %v2240 = vunpack.c.l.b16 %v421
    %v2241 = vunpack.c.h.b16 %v421
    %v2242 = vunpack.c.l.b16 %v422
    %v2243 = vunpack.c.h.b16 %v422
    %v2244 = vunpack.c.l.b16 %v423
    %v2245 = vunpack.c.h.b16 %v423
    %v2246 = vunpack.c.l.b16 %v424
    %v2247 = vunpack.c.h.b16 %v424
    %v2248 = vunpack.c.l.b16 %v425
    %v2249 = vunpack.c.h.b16 %v425
    %v2250 = vunpack.c.l.b16 %v426
    %v2251 = vunpack.c.h.b16 %v426
    %v2252 = vunpack.c.l.b16 %v427
    %v2253 = vunpack.c.h.b16 %v427
    %v2254 = vunpack.c.l.b16 %v428
    %v2255 = vunpack.c.h.b16 %v428
    %v2256 = vunpack.c.l.b16 %v429
    %v2257 = vunpack.c.h.b16 %v429
    %v2258 = vunpack.c.l.b16 %v430
    %v2259 = vunpack.c.h.b16 %v430
    %v2260 = vunpack.c.l.b16 %v431
    %v2261 = vunpack.c.h.b16 %v431
    %v2262 = vunpack.c.l.b16 %v432
    %v2263 = vunpack.c.h.b16 %v432
    %v2264 = vunpack.c.l.b16 %v433
    %v2265 = vunpack.c.h.b16 %v433
    %v2266 = vunpack.c.l.b16 %v434
    %v2267 = vunpack.c.h.b16 %v434
    %v2268 = vunpack.c.l.b16 %v435
    %v2269 = vunpack.c.h.b16 %v435
    %v2270 = vunpack.c.l.b16 %v436
    %v2271 = vunpack.c.h.b16 %v436
    %v2272 = vunpack.c.l.b16 %v437
    %v2273 = vunpack.c.h.b16 %v437
    %v2274 = vunpack.c.l.b16 %v438
    %v2275 = vunpack.c.h.b16 %v438
    %v2276 = vunpack.c.l.b16 %v439
    %v2277 = vunpack.c.h.b16 %v439
    %v2278 = vunpack.c.l.b16 %v440
    %v2279 = vunpack.c.h.b16 %v440
    %v2280 = vunpack.c.l.b16 %v441
    %v2281 = vunpack.c.h.b16 %v441
    %v2282 = vunpack.c.l.b16 %v442
    %v2283 = vunpack.c.h.b16 %v442
    %v2284 = vunpack.c.l.b16 %v443
    %v2285 = vunpack.c.h.b16 %v443
    %v2286 = vunpack.c.l.b16 %v444
    %v2287 = vunpack.c.h.b16 %v444
    %v2288 = vunpack.c.l.b16 %v445
    %v2289 = vunpack.c.h.b16 %v445
    %v2290 = vunpack.c.l.b16 %v446
    %v2291 = vunpack.c.h.b16 %v446
    %v2292 = vunpack.c.l.b16 %v447
    %v2293 = vunpack.c.h.b16 %v447
    %v2294 = vunpack.c.l.b16 %v448
    %v2295 = vunpack.c.h.b16 %v448
    %v2296 = vunpack.c.l.b16 %v449
    %v2297 = vunpack.c.h.b16 %v449
    %v2298 = vunpack.c.l.b16 %v450
    %v2299 = vunpack.c.h.b16 %v450
    %v2300 = vunpack.c.l.b16 %v451
    %v2301 = vunpack.c.h.b16 %v451
    %v2302 = vunpack.c.l.b16 %v452
    %v2303 = vunpack.c.h.b16 %v452
    %v2304 = vunpack.c.l.b16 %v453
    %v2305 = vunpack.c.h.b16 %v453
    %v2306 = vunpack.c.l.b16 %v454
    %v2307 = vunpack.c.h.b16 %v454
    %v2308 = vunpack.c.l.b16 %v455
    %v2309 = vunpack.c.h.b16 %v455
    %v2310 = vunpack.c.l.b16 %v456
    %v2311 = vunpack.c.h.b16 %v456
    %v2312 = vunpack.c.l.b16 %v457
    %v2313 = vunpack.c.h.b16 %v457
    %v2314 = vunpack.c.l.b16 %v458
    %v2315 = vunpack.c.h.b16 %v458
    %v2316 = vunpack.c.l.b16 %v459
    %v2317 = vunpack.c.h.b16 %v459
    %v2318 = vunpack.c.l.b16 %v460
    %v2319 = vunpack.c.h.b16 %v460
    %v2320 = vunpack.c.l.b16 %v461
    %v2321 = vunpack.c.h.b16 %v461
    %v2322 = vunpack.c.l.b16 %v462
    %v2323 = vunpack.c.h.b16 %v462
    %v2324 = vunpack.c.l.b16 %v463
    %v2325 = vunpack.c.h.b16 %v463
    %v2326 = vunpack.c.l.b16 %v464
    %v2327 = vunpack.c.h.b16 %v464
    %v2328 = vunpack.c.l.b16 %v465
    %v2329 = vunpack.c.h.b16 %v465
    %v2330 = vunpack.c.l.b16 %v466
    %v2331 = vunpack.c.h.b16 %v466
    %v2332 = vunpack.c.l.b16 %v467
    %v2333 = vunpack.c.h.b16 %v467
    %v2334 = vunpack.c.l.b16 %v468
    %v2335 = vunpack.c.h.b16 %v468
    %v2336 = vunpack.c.l.b16 %v469
    %v2337 = vunpack.c.h.b16 %v469
    %v2338 = vunpack.c.l.b16 %v470
    %v2339 = vunpack.c.h.b16 %v470
    %v2340 = vunpack.c.l.b16 %v471
    %v2341 = vunpack.c.h.b16 %v471
    %v2342 = vunpack.c.l.b16 %v472
    %v2343 = vunpack.c.h.b16 %v472
    %v2344 = vunpack.c.l.b16 %v473
    %v2345 = vunpack.c.h.b16 %v473
    %v2346 = vunpack.c.l.b16 %v474
    %v2347 = vunpack.c.h.b16 %v474
    %v2348 = vunpack.c.l.b16 %v475
    %v2349 = vunpack.c.h.b16 %v475
    %v2350 = vunpack.c.l.b16 %v476
    %v2351 = vunpack.c.h.b16 %v476
    %v2352 = vunpack.c.l.b16 %v477
    %v2353 = vunpack.c.h.b16 %v477
    %v2354 = vunpack.c.l.b16 %v478
    %v2355 = vunpack.c.h.b16 %v478
    %v2356 = vunpack.c.l.b16 %v479
    %v2357 = vunpack.c.h.b16 %v479
    %v2358 = vunpack.c.l.b16 %v480
    %v2359 = vunpack.c.h.b16 %v480
    %v2360 = vunpack.c.l.b16 %v481
    %v2361 = vunpack.c.h.b16 %v481
    %v2362 = vunpack.c.l.b16 %v482
    %v2363 = vunpack.c.h.b16 %v482
    %v2364 = vunpack.c.l.b16 %v483
    %v2365 = vunpack.c.h.b16 %v483
    %v2366 = vunpack.c.l.b16 %v484
    %v2367 = vunpack.c.h.b16 %v484
    %v2368 = vunpack.c.l.b16 %v485
    %v2369 = vunpack.c.h.b16 %v485
    %v2370 = vunpack.c.l.b16 %v486
    %v2371 = vunpack.c.h.b16 %v486
    %v2372 = vunpack.c.l.b16 %v487
    %v2373 = vunpack.c.h.b16 %v487
    %v2374 = vunpack.c.l.b16 %v488
    %v2375 = vunpack.c.h.b16 %v488
    %v2376 = vunpack.c.l.b16 %v489
    %v2377 = vunpack.c.h.b16 %v489
    %v2378 = vunpack.c.l.b16 %v490
    %v2379 = vunpack.c.h.b16 %v490
    %v2380 = vunpack.c.l.b16 %v491
    %v2381 = vunpack.c.h.b16 %v491
    %v2382 = vunpack.c.l.b16 %v492
    %v2383 = vunpack.c.h.b16 %v492
    %v2384 = vunpack.c.l.b16 %v493
    %v2385 = vunpack.c.h.b16 %v493
    %v2386 = vunpack.c.l.b16 %v494
    %v2387 = vunpack.c.h.b16 %v494
    %v2388 = vunpack.c.l.b16 %v495
    %v2389 = vunpack.c.h.b16 %v495
    %v2390 = vunpack.c.l.b16 %v496
    %v2391 = vunpack.c.h.b16 %v496
    %v2392 = vunpack.c.l.b16 %v497
    %v2393 = vunpack.c.h.b16 %v497
    %v2394 = vunpack.c.l.b16 %v498
    %v2395 = vunpack.c.h.b16 %v498
    %v2396 = vunpack.c.l.b16 %v499
    %v2397 = vunpack.c.h.b16 %v499
    %v2398 = vunpack.c.l.b16 %v500
    %v2399 = vunpack.c.h.b16 %v500
    %v2400 = vunpack.c.l.b16 %v501
    %v2401 = vunpack.c.h.b16 %v501
    %v2402 = vunpack.c.l.b16 %v502
    %v2403 = vunpack.c.h.b16 %v502
    %v2404 = vunpack.c.l.b16 %v503
    %v2405 = vunpack.c.h.b16 %v503
    %v2406 = vunpack.c.l.b16 %v504
    %v2407 = vunpack.c.h.b16 %v504
    %v2408 = vunpack.c.l.b16 %v505
    %v2409 = vunpack.c.h.b16 %v505
    %v2410 = vunpack.c.l.b16 %v506
    %v2411 = vunpack.c.h.b16 %v506
    %v2412 = vunpack.c.l.b16 %v507
    %v2413 = vunpack.c.h.b16 %v507
    %v2414 = vunpack.c.l.b16 %v508
    %v2415 = vunpack.c.h.b16 %v508
    %v2416 = vunpack.c.l.b16 %v509
    %v2417 = vunpack.c.h.b16 %v509
    %v2418 = vunpack.c.l.b16 %v510
    %v2419 = vunpack.c.h.b16 %v510
    %v2420 = vunpack.c.l.b16 %v511
    %v2421 = vunpack.c.h.b16 %v511
    %v2422 = vunpack.c.l.b16 %v512
    %v2423 = vunpack.c.h.b16 %v512
    %v2424 = vunpack.c.l.b16 %v513
    %v2425 = vunpack.c.h.b16 %v513
    %v2426 = vunpack.c.l.b16 %v514
    %v2427 = vunpack.c.h.b16 %v514
    %v2428 = vunpack.c.l.b16 %v515
    %v2429 = vunpack.c.h.b16 %v515
    %v2430 = vunpack.c.l.b16 %v516
    %v2431 = vunpack.c.h.b16 %v516
    %v2432 = vunpack.c.l.b16 %v517
    %v2433 = vunpack.c.h.b16 %v517
    %v2434 = vunpack.c.l.b16 %v518
    %v2435 = vunpack.c.h.b16 %v518
    %v2436 = vunpack.c.l.b16 %v519
    %v2437 = vunpack.c.h.b16 %v519
    %v2438 = vunpack.c.l.b16 %v520
    %v2439 = vunpack.c.h.b16 %v520
    %v2440 = vunpack.c.l.b16 %v521
    %v2441 = vunpack.c.h.b16 %v521
    %v2442 = vunpack.c.l.b16 %v522
    %v2443 = vunpack.c.h.b16 %v522
    %v2444 = vunpack.c.l.b16 %v523
    %v2445 = vunpack.c.h.b16 %v523
    %v2446 = vunpack.c.l.b16 %v524
    %v2447 = vunpack.c.h.b16 %v524
    %v2448 = vunpack.c.l.b16 %v525
    %v2449 = vunpack.c.h.b16 %v525
    %v2450 = vunpack.c.l.b16 %v526
    %v2451 = vunpack.c.h.b16 %v526
    %v2452 = vunpack.c.l.b16 %v527
    %v2453 = vunpack.c.h.b16 %v527
    %v2454 = vunpack.c.l.b16 %v528
    %v2455 = vunpack.c.h.b16 %v528
    %v2456 = vunpack.c.l.b16 %v529
    %v2457 = vunpack.c.h.b16 %v529
    %v2458 = vunpack.c.l.b16 %v530
    %v2459 = vunpack.c.h.b16 %v530
    %v2460 = vunpack.c.l.b16 %v531
    %v2461 = vunpack.c.h.b16 %v531
    %v2462 = vunpack.c.l.b16 %v532
    %v2463 = vunpack.c.h.b16 %v532
    %v2464 = vunpack.c.l.b16 %v533
    %v2465 = vunpack.c.h.b16 %v533
    %v2466 = vunpack.c.l.b16 %v534
    %v2467 = vunpack.c.h.b16 %v534
    %v2468 = vunpack.c.l.b16 %v535
    %v2469 = vunpack.c.h.b16 %v535
    %v2470 = vunpack.c.l.b16 %v536
    %v2471 = vunpack.c.h.b16 %v536
    %v2472 = vunpack.c.l.b16 %v537
    %v2473 = vunpack.c.h.b16 %v537
    %v2474 = vunpack.c.l.b16 %v538
    %v2475 = vunpack.c.h.b16 %v538
    %v2476 = vunpack.c.l.b16 %v539
    %v2477 = vunpack.c.h.b16 %v539
    %v2478 = vunpack.c.l.b16 %v540
    %v2479 = vunpack.c.h.b16 %v540
    %v2480 = vunpack.c.l.b16 %v541
    %v2481 = vunpack.c.h.b16 %v541
    %v2482 = vunpack.c.l.b16 %v542
    %v2483 = vunpack.c.h.b16 %v542
    %v2484 = vunpack.c.l.b16 %v543
    %v2485 = vunpack.c.h.b16 %v543
    %v2486 = vunpack.c.l.b16 %v544
    %v2487 = vunpack.c.h.b16 %v544
    %v2488 = vunpack.c.l.b16 %v545
    %v2489 = vunpack.c.h.b16 %v545
    %v2490 = vunpack.c.l.b16 %v546
    %v2491 = vunpack.c.h.b16 %v546
    %v2492 = vunpack.c.l.b16 %v547
    %v2493 = vunpack.c.h.b16 %v547
    %v2494 = vunpack.c.l.b16 %v548
    %v2495 = vunpack.c.h.b16 %v548
    %v2496 = vunpack.c.l.b16 %v549
    %v2497 = vunpack.c.h.b16 %v549
    %v2498 = vunpack.c.l.b16 %v550
    %v2499 = vunpack.c.h.b16 %v550
    %v2500 = vunpack.c.l.b16 %v551
    %v2501 = vunpack.c.h.b16 %v551
    %v2502 = vunpack.c.l.b16 %v552
    %v2503 = vunpack.c.h.b16 %v552
    %v2504 = vunpack.c.l.b16 %v553
    %v2505 = vunpack.c.h.b16 %v553
    %v2506 = vunpack.c.l.b16 %v554
    %v2507 = vunpack.c.h.b16 %v554
    %v2508 = vunpack.c.l.b16 %v555
    %v2509 = vunpack.c.h.b16 %v555
    %v2510 = vunpack.c.l.b16 %v556
    %v2511 = vunpack.c.h.b16 %v556
    %v2512 = vunpack.c.l.b16 %v557
    %v2513 = vunpack.c.h.b16 %v557
    %v2514 = vunpack.c.l.b16 %v558
    %v2515 = vunpack.c.h.b16 %v558
    %v2516 = vunpack.c.l.b16 %v559
    %v2517 = vunpack.c.h.b16 %v559
    %v2518 = vunpack.c.l.b16 %v560
    %v2519 = vunpack.c.h.b16 %v560
    %v2520 = vunpack.c.l.b16 %v561
    %v2521 = vunpack.c.h.b16 %v561
    %v2522 = vunpack.c.l.b16 %v562
    %v2523 = vunpack.c.h.b16 %v562
    %v2524 = vunpack.c.l.b16 %v563
    %v2525 = vunpack.c.h.b16 %v563
    %v2526 = vunpack.c.l.b16 %v564
    %v2527 = vunpack.c.h.b16 %v564
    %v2528 = vunpack.c.l.b16 %v565
    %v2529 = vunpack.c.h.b16 %v565
    %v2530 = vunpack.c.l.b16 %v566
    %v2531 = vunpack.c.h.b16 %v566
    %v2532 = vunpack.c.l.b16 %v567
    %v2533 = vunpack.c.h.b16 %v567
    %v2534 = vunpack.c.l.b16 %v568
    %v2535 = vunpack.c.h.b16 %v568
    %v2536 = vunpack.c.l.b16 %v569
    %v2537 = vunpack.c.h.b16 %v569
    %v2538 = vunpack.c.l.b16 %v570
    %v2539 = vunpack.c.h.b16 %v570
    %v2540 = vunpack.c.l.b16 %v571
    %v2541 = vunpack.c.h.b16 %v571
    %v2542 = vunpack.c.l.b16 %v572
    %v2543 = vunpack.c.h.b16 %v572
    %v2544 = vunpack.c.l.b16 %v573
    %v2545 = vunpack.c.h.b16 %v573
    %v2546 = vunpack.c.l.b16 %v574
    %v2547 = vunpack.c.h.b16 %v574
    %v2548 = vunpack.c.l.b16 %v575
    %v2549 = vunpack.c.h.b16 %v575
    %v2550 = vunpack.c.l.b16 %v576
    %v2551 = vunpack.c.h.b16 %v576
    %v2552 = vunpack.c.l.b16 %v577
    %v2553 = vunpack.c.h.b16 %v577
    %v2554 = vunpack.c.l.b16 %v578
    %v2555 = vunpack.c.h.b16 %v578
    %v2556 = vunpack.c.l.b16 %v579
    %v2557 = vunpack.c.h.b16 %v579
    %v2558 = vunpack.c.l.b16 %v580
    %v2559 = vunpack.c.h.b16 %v580
    %v2560 = vunpack.c.l.b16 %v581
    %v2561 = vunpack.c.h.b16 %v581
    %v2562 = vunpack.c.l.b16 %v582
    %v2563 = vunpack.c.h.b16 %v582
    %v2564 = vunpack.c.l.b16 %v583
    %v2565 = vunpack.c.h.b16 %v583
    %v2566 = vunpack.c.l.b16 %v584
    %v2567 = vunpack.c.h.b16 %v584
    %v2568 = vunpack.c.l.b16 %v585
    %v2569 = vunpack.c.h.b16 %v585
    %v2570 = vunpack.c.l.b16 %v586
    %v2571 = vunpack.c.h.b16 %v586
    %v2572 = vunpack.c.l.b16 %v587
    %v2573 = vunpack.c.h.b16 %v587
    %v2574 = vunpack.c.l.b16 %v588
    %v2575 = vunpack.c.h.b16 %v588
    %v2576 = vunpack.c.l.b16 %v589
    %v2577 = vunpack.c.h.b16 %v589
    %v2578 = vunpack.c.l.b16 %v590
    %v2579 = vunpack.c.h.b16 %v590
    %v2580 = vunpack.c.l.b16 %v591
    %v2581 = vunpack.c.h.b16 %v591
    %v2582 = vunpack.c.l.b16 %v592
    %v2583 = vunpack.c.h.b16 %v592
    %v2584 = vunpack.c.l.b16 %v593
    %v2585 = vunpack.c.h.b16 %v593
    %v2586 = vunpack.c.l.b16 %v594
    %v2587 = vunpack.c.h.b16 %v594
    %v2588 = vunpack.c.l.b16 %v595
    %v2589 = vunpack.c.h.b16 %v595
    %v2590 = vunpack.c.l.b16 %v596
    %v2591 = vunpack.c.h.b16 %v596
    %v2592 = vunpack.c.l.b16 %v597
    %v2593 = vunpack.c.h.b16 %v597
    %v2594 = vunpack.c.l.b16 %v598
    %v2595 = vunpack.c.h.b16 %v598
    %v2596 = vunpack.c.l.b16 %v599
    %v2597 = vunpack.c.h.b16 %v599
    %v2598 = vunpack.c.l.b16 %v600
    %v2599 = vunpack.c.h.b16 %v600
    %v2600 = vunpack.c.l.b16 %v601
    %v2601 = vunpack.c.h.b16 %v601
    %v2602 = vunpack.c.l.b16 %v602
    %v2603 = vunpack.c.h.b16 %v602
    %v2604 = vpack.c.b16 %v1454, %v1452
    %v2605 = vpack.c.b16 %v1455, %v1453
    %v2606 = vpack.c.b16 %v1458, %v1456
    %v2607 = vpack.c.b16 %v1459, %v1457
    %v2608 = vpack.c.b16 %v1462, %v1460
    %v2609 = vpack.c.b16 %v1463, %v1461
    %v2610 = vpack.c.b16 %v1466, %v1464
    %v2611 = vpack.c.b16 %v1467, %v1465
    %v2612 = vpack.c.b16 %v1470, %v1468
    %v2613 = vpack.c.b16 %v1471, %v1469
    %v2614 = vpack.c.b16 %v1474, %v1472
    %v2615 = vpack.c.b16 %v1475, %v1473
    %v2616 = vpack.c.b16 %v1478, %v1476
    %v2617 = vpack.c.b16 %v1479, %v1477
    %v2618 = vpack.c.b16 %v1482, %v1480
    %v2619 = vpack.c.b16 %v1483, %v1481
    %v2620 = vpack.c.b16 %v1486, %v1484
    %v2621 = vpack.c.b16 %v1487, %v1485
    %v2622 = vpack.c.b16 %v1490, %v1488
    %v2623 = vpack.c.b16 %v1491, %v1489
    %v2624 = vpack.c.b16 %v1494, %v1492
    %v2625 = vpack.c.b16 %v1495, %v1493
    %v2626 = vpack.c.b16 %v1498, %v1496
    %v2627 = vpack.c.b16 %v1499, %v1497
    %v2628 = vpack.c.b16 %v1502, %v1500
    %v2629 = vpack.c.b16 %v1503, %v1501
    %v2630 = vpack.c.b16 %v1506, %v1504
    %v2631 = vpack.c.b16 %v1507, %v1505
    %v2632 = vpack.c.b16 %v1510, %v1508
    %v2633 = vpack.c.b16 %v1511, %v1509
    %v2634 = vpack.c.b16 %v1514, %v1512
    %v2635 = vpack.c.b16 %v1515, %v1513
    %v2636 = vpack.c.b16 %v1518, %v1516
    %v2637 = vpack.c.b16 %v1519, %v1517
    %v2638 = vpack.c.b16 %v1522, %v1520
    %v2639 = vpack.c.b16 %v1523, %v1521
    %v2640 = vpack.c.b16 %v1526, %v1524
    %v2641 = vpack.c.b16 %v1527, %v1525
    %v2642 = vpack.c.b16 %v1530, %v1528
    %v2643 = vpack.c.b16 %v1531, %v1529
    %v2644 = vpack.c.b16 %v1534, %v1532
    %v2645 = vpack.c.b16 %v1535, %v1533
    %v2646 = vpack.c.b16 %v1538, %v1536
    %v2647 = vpack.c.b16 %v1539, %v1537
    %v2648 = vpack.c.b16 %v1542, %v1540
    %v2649 = vpack.c.b16 %v1543, %v1541
    %v2650 = vpack.c.b16 %v1546, %v1544
    %v2651 = vpack.c.b16 %v1547, %v1545
    %v2652 = vpack.c.b16 %v1550, %v1548
    %v2653 = vpack.c.b16 %v1551, %v1549
    %v2654 = vpack.c.b16 %v1554, %v1552
    %v2655 = vpack.c.b16 %v1555, %v1553
    %v2656 = vpack.c.b16 %v1558, %v1556
    %v2657 = vpack.c.b16 %v1559, %v1557
    %v2658 = vpack.c.b16 %v1562, %v1560
    %v2659 = vpack.c.b16 %v1563, %v1561
    %v2660 = vpack.c.b16 %v1566, %v1564
    %v2661 = vpack.c.b16 %v1567, %v1565
    %v2662 = vpack.c.b16 %v1570, %v1568
    %v2663 = vpack.c.b16 %v1571, %v1569
    %v2664 = vpack.c.b16 %v1574, %v1572
    %v2665 = vpack.c.b16 %v1575, %v1573
    %v2666 = vpack.c.b16 %v1578, %v1576
    %v2667 = vpack.c.b16 %v1579, %v1577
    %v2668 = vpack.c.b16 %v1582, %v1580
    %v2669 = vpack.c.b16 %v1583, %v1581
    %v2670 = vpack.c.b16 %v1586, %v1584
    %v2671 = vpack.c.b16 %v1587, %v1585
    %v2672 = vpack.c.b16 %v1590, %v1588
    %v2673 = vpack.c.b16 %v1591, %v1589
    %v2674 = vpack.c.b16 %v1594, %v1592
    %v2675 = vpack.c.b16 %v1595, %v1593
    %v2676 = vpack.c.b16 %v1598, %v1596
    %v2677 = vpack.c.b16 %v1599, %v1597
    %v2678 = vpack.c.b16 %v1602, %v1600
    %v2679 = vpack.c.b16 %v1603, %v1601
    %v2680 = vpack.c.b16 %v1606, %v1604
    %v2681 = vpack.c.b16 %v1607, %v1605
    %v2682 = vpack.c.b16 %v1610, %v1608
    %v2683 = vpack.c.b16 %v1611, %v1609
    %v2684 = vpack.c.b16 %v1614, %v1612
    %v2685 = vpack.c.b16 %v1615, %v1613
    %v2686 = vpack.c.b16 %v1618, %v1616
    %v2687 = vpack.c.b16 %v1619, %v1617
    %v2688 = vpack.c.b16 %v1622, %v1620
    %v2689 = vpack.c.b16 %v1623, %v1621
    %v2690 = vpack.c.b16 %v1626, %v1624
    %v2691 = vpack.c.b16 %v1627, %v1625
    %v2692 = vpack.c.b16 %v1630, %v1628
    %v2693 = vpack.c.b16 %v1631, %v1629
    %v2694 = vpack.c.b16 %v1634, %v1632
    %v2695 = vpack.c.b16 %v1635, %v1633
    %v2696 = vpack.c.b16 %v1638, %v1636
    %v2697 = vpack.c.b16 %v1639, %v1637
    %v2698 = vpack.c.b16 %v1642, %v1640
    %v2699 = vpack.c.b16 %v1643, %v1641
    %v2700 = vpack.c.b16 %v1646, %v1644
    %v2701 = vpack.c.b16 %v1647, %v1645
    %v2702 = vpack.c.b16 %v1650, %v1648
    %v2703 = vpack.c.b16 %v1651, %v1649
    %v2704 = vpack.c.b16 %v1654, %v1652
    %v2705 = vpack.c.b16 %v1655, %v1653
    %v2706 = vpack.c.b16 %v1658, %v1656
    %v2707 = vpack.c.b16 %v1659, %v1657
    %v2708 = vpack.c.b16 %v1662, %v1660
    %v2709 = vpack.c.b16 %v1663, %v1661
    %v2710 = vpack.c.b16 %v1666, %v1664
    %v2711 = vpack.c.b16 %v1667, %v1665
    %v2712 = vpack.c.b16 %v1670, %v1668
    %v2713 = vpack.c.b16 %v1671, %v1669
    %v2714 = vpack.c.b16 %v1674, %v1672
    %v2715 = vpack.c.b16 %v1675, %v1673
    %v2716 = vpack.c.b16 %v1678, %v1676
    %v2717 = vpack.c.b16 %v1679, %v1677
    %v2718 = vpack.c.b16 %v1682, %v1680
    %v2719 = vpack.c.b16 %v1683, %v1681
    %v2720 = vpack.c.b16 %v1686, %v1684
    %v2721 = vpack.c.b16 %v1687, %v1685
    %v2722 = vpack.c.b16 %v1690, %v1688
    %v2723 = vpack.c.b16 %v1691, %v1689
    %v2724 = vpack.c.b16 %v1694, %v1692
    %v2725 = vpack.c.b16 %v1695, %v1693
    %v2726 = vpack.c.b16 %v1698, %v1696
    %v2727 = vpack.c.b16 %v1699, %v1697
    %v2728 = vpack.c.b16 %v1702, %v1700
    %v2729 = vpack.c.b16 %v1703, %v1701
    %v2730 = vpack.c.b16 %v1706, %v1704
    %v2731 = vpack.c.b16 %v1707, %v1705
    %v2732 = vpack.c.b16 %v1710, %v1708
    %v2733 = vpack.c.b16 %v1711, %v1709
    %v2734 = vpack.c.b16 %v1714, %v1712
    %v2735 = vpack.c.b16 %v1715, %v1713
    %v2736 = vpack.c.b16 %v1718, %v1716
    %v2737 = vpack.c.b16 %v1719, %v1717
    %v2738 = vpack.c.b16 %v1722, %v1720
    %v2739 = vpack.c.b16 %v1723, %v1721
    %v2740 = vpack.c.b16 %v1726, %v1724
    %v2741 = vpack.c.b16 %v1727, %v1725
    %v2742 = vpack.c.b16 %v1730, %v1728
    %v2743 = vpack.c.b16 %v1731, %v1729
    %v2744 = vpack.c.b16 %v1734, %v1732
    %v2745 = vpack.c.b16 %v1735, %v1733
    %v2746 = vpack.c.b16 %v1738, %v1736
    %v2747 = vpack.c.b16 %v1739, %v1737
    %v2748 = vpack.c.b16 %v1742, %v1740
    %v2749 = vpack.c.b16 %v1743, %v1741
    %v2750 = vpack.c.b16 %v1746, %v1744
    %v2751 = vpack.c.b16 %v1747, %v1745
    %v2752 = vpack.c.b16 %v1750, %v1748
    %v2753 = vpack.c.b16 %v1751, %v1749
    %v2754 = vpack.c.b16 %v1754, %v1752
    %v2755 = vpack.c.b16 %v1755, %v1753
    %v2756 = vpack.c.b16 %v1758, %v1756
    %v2757 = vpack.c.b16 %v1759, %v1757
    %v2758 = vpack.c.b16 %v1762, %v1760
    %v2759 = vpack.c.b16 %v1763, %v1761
    %v2760 = vpack.c.b16 %v1766, %v1764
    %v2761 = vpack.c.b16 %v1767, %v1765
    %v2762 = vpack.c.b16 %v1770, %v1768
    %v2763 = vpack.c.b16 %v1771, %v1769
    %v2764 = vpack.c.b16 %v1774, %v1772
    %v2765 = vpack.c.b16 %v1775, %v1773
    %v2766 = vpack.c.b16 %v1778, %v1776
    %v2767 = vpack.c.b16 %v1779, %v1777
    %v2768 = vpack.c.b16 %v1782, %v1780
    %v2769 = vpack.c.b16 %v1783, %v1781
    %v2770 = vpack.c.b16 %v1786, %v1784
    %v2771 = vpack.c.b16 %v1787, %v1785
    %v2772 = vpack.c.b16 %v1790, %v1788
    %v2773 = vpack.c.b16 %v1791, %v1789
    %v2774 = vpack.c.b16 %v1794, %v1792
    %v2775 = vpack.c.b16 %v1795, %v1793
    %v2776 = vpack.c.b16 %v1798, %v1796
    %v2777 = vpack.c.b16 %v1799, %v1797
    %v2778 = vpack.c.b16 %v1802, %v1800
    %v2779 = vpack.c.b16 %v1803, %v1801
    %v2780 = vpack.c.b16 %v1806, %v1804
    %v2781 = vpack.c.b16 %v1807, %v1805
    %v2782 = vpack.c.b16 %v1810, %v1808
    %v2783 = vpack.c.b16 %v1811, %v1809
    %v2784 = vpack.c.b16 %v1814, %v1812
    %v2785 = vpack.c.b16 %v1815, %v1813
    %v2786 = vpack.c.b16 %v1818, %v1816
    %v2787 = vpack.c.b16 %v1819, %v1817
    %v2788 = vpack.c.b16 %v1822, %v1820
    %v2789 = vpack.c.b16 %v1823, %v1821
    %v2790 = vpack.c.b16 %v1826, %v1824
    %v2791 = vpack.c.b16 %v1827, %v1825
    %v2792 = vpack.c.b16 %v1830, %v1828
    %v2793 = vpack.c.b16 %v1831, %v1829
    %v2794 = vpack.c.b16 %v1834, %v1832
    %v2795 = vpack.c.b16 %v1835, %v1833
    %v2796 = vpack.c.b16 %v1838, %v1836
    %v2797 = vpack.c.b16 %v1839, %v1837
    %v2798 = vpack.c.b16 %v1842, %v1840
    %v2799 = vpack.c.b16 %v1843, %v1841
    %v2800 = vpack.c.b16 %v1846, %v1844
    %v2801 = vpack.c.b16 %v1847, %v1845
    %v2802 = vpack.c.b16 %v1850, %v1848
    %v2803 = vpack.c.b16 %v1851, %v1849
    %v2804 = vpack.c.b16 %v1854, %v1852
    %v2805 = vpack.c.b16 %v1855, %v1853
    %v2806 = vpack.c.b16 %v1858, %v1856
    %v2807 = vpack.c.b16 %v1859, %v1857
    %v2808 = vpack.c.b16 %v1862, %v1860
    %v2809 = vpack.c.b16 %v1863, %v1861
    %v2810 = vpack.c.b16 %v1866, %v1864
    %v2811 = vpack.c.b16 %v1867, %v1865
    %v2812 = vpack.c.b16 %v1870, %v1868
    %v2813 = vpack.c.b16 %v1871, %v1869
    %v2814 = vpack.c.b16 %v1874, %v1872
    %v2815 = vpack.c.b16 %v1875, %v1873
    %v2816 = vpack.c.b16 %v1878, %v1876
    %v2817 = vpack.c.b16 %v1879, %v1877
    %v2818 = vpack.c.b16 %v1882, %v1880
    %v2819 = vpack.c.b16 %v1883, %v1881
    %v2820 = vpack.c.b16 %v1886, %v1884
    %v2821 = vpack.c.b16 %v1887, %v1885
    %v2822 = vpack.c.b16 %v1890, %v1888
    %v2823 = vpack.c.b16 %v1891, %v1889
    %v2824 = vpack.c.b16 %v1894, %v1892
    %v2825 = vpack.c.b16 %v1895, %v1893
    %v2826 = vpack.c.b16 %v1898, %v1896
    %v2827 = vpack.c.b16 %v1899, %v1897
    %v2828 = vpack.c.b16 %v1902, %v1900
    %v2829 = vpack.c.b16 %v1903, %v1901
    %v2830 = vpack.c.b16 %v1906, %v1904
    %v2831 = vpack.c.b16 %v1907, %v1905
    %v2832 = vpack.c.b16 %v1910, %v1908
    %v2833 = vpack.c.b16 %v1911, %v1909
    %v2834 = vpack.c.b16 %v1914, %v1912
    %v2835 = vpack.c.b16 %v1915, %v1913
    %v2836 = vpack.c.b16 %v1918, %v1916
    %v2837 = vpack.c.b16 %v1919, %v1917
    %v2838 = vpack.c.b16 %v1922, %v1920
    %v2839 = vpack.c.b16 %v1923, %v1921
    %v2840 = vpack.c.b16 %v1926, %v1924
    %v2841 = vpack.c.b16 %v1927, %v1925
    %v2842 = vpack.c.b16 %v1930, %v1928
    %v2843 = vpack.c.b16 %v1931, %v1929
    %v2844 = vpack.c.b16 %v1934, %v1932
    %v2845 = vpack.c.b16 %v1935, %v1933
    %v2846 = vpack.c.b16 %v1938, %v1936
    %v2847 = vpack.c.b16 %v1939, %v1937
    %v2848 = vpack.c.b16 %v1942, %v1940
    %v2849 = vpack.c.b16 %v1943, %v1941
    %v2850 = vpack.c.b16 %v1946, %v1944
    %v2851 = vpack.c.b16 %v1947, %v1945
    %v2852 = vpack.c.b16 %v1950, %v1948
    %v2853 = vpack.c.b16 %v1951, %v1949
    %v2854 = vpack.c.b16 %v1954, %v1952
    %v2855 = vpack.c.b16 %v1955, %v1953
    %v2856 = vpack.c.b16 %v1958, %v1956
    %v2857 = vpack.c.b16 %v1959, %v1957
    %v2858 = vpack.c.b16 %v1962, %v1960
    %v2859 = vpack.c.b16 %v1963, %v1961
    %v2860 = vpack.c.b16 %v1966, %v1964
    %v2861 = vpack.c.b16 %v1967, %v1965
    %v2862 = vpack.c.b16 %v1970, %v1968
    %v2863 = vpack.c.b16 %v1971, %v1969
    %v2864 = vpack.c.b16 %v1974, %v1972
    %v2865 = vpack.c.b16 %v1975, %v1973
    %v2866 = vpack.c.b16 %v1978, %v1976
    %v2867 = vpack.c.b16 %v1979, %v1977
    %v2868 = vpack.c.b16 %v1982, %v1980
    %v2869 = vpack.c.b16 %v1983, %v1981
    %v2870 = vpack.c.b16 %v1986, %v1984
    %v2871 = vpack.c.b16 %v1987, %v1985
    %v2872 = vpack.c.b16 %v1990, %v1988
    %v2873 = vpack.c.b16 %v1991, %v1989
    %v2874 = vpack.c.b16 %v1994, %v1992
    %v2875 = vpack.c.b16 %v1995, %v1993
    %v2876 = vpack.c.b16 %v1998, %v1996
    %v2877 = vpack.c.b16 %v1999, %v1997
    %v2878 = vpack.c.b16 %v2002, %v2000
    %v2879 = vpack.c.b16 %v2003, %v2001
    %v2880 = vpack.c.b16 %v2006, %v2004
    %v2881 = vpack.c.b16 %v2007, %v2005
    %v2882 = vpack.c.b16 %v2010, %v2008
    %v2883 = vpack.c.b16 %v2011, %v2009
    %v2884 = vpack.c.b16 %v2014, %v2012
    %v2885 = vpack.c.b16 %v2015, %v2013
    %v2886 = vpack.c.b16 %v2018, %v2016
    %v2887 = vpack.c.b16 %v2019, %v2017
    %v2888 = vpack.c.b16 %v2022, %v2020
    %v2889 = vpack.c.b16 %v2023, %v2021
    %v2890 = vpack.c.b16 %v2026, %v2024
    %v2891 = vpack.c.b16 %v2027, %v2025
    %v2892 = vpack.c.b16 %v2030, %v2028
    %v2893 = vpack.c.b16 %v2031, %v2029
    %v2894 = vpack.c.b16 %v2034, %v2032
    %v2895 = vpack.c.b16 %v2035, %v2033
    %v2896 = vpack.c.b16 %v2038, %v2036
    %v2897 = vpack.c.b16 %v2039, %v2037
    %v2898 = vpack.c.b16 %v2042, %v2040
    %v2899 = vpack.c.b16 %v2043, %v2041
    %v2900 = vpack.c.b16 %v2046, %v2044
    %v2901 = vpack.c.b16 %v2047, %v2045
    %v2902 = vpack.c.b16 %v2050, %v2048
    %v2903 = vpack.c.b16 %v2051, %v2049
    %v2904 = vpack.c.b16 %v2054, %v2052
    %v2905 = vpack.c.b16 %v2055, %v2053
    %v2906 = vpack.c.b16 %v2058, %v2056
    %v2907 = vpack.c.b16 %v2059, %v2057
    %v2908 = vpack.c.b16 %v2062, %v2060
    %v2909 = vpack.c.b16 %v2063, %v2061
    %v2910 = vpack.c.b16 %v2066, %v2064
    %v2911 = vpack.c.b16 %v2067, %v2065
    %v2912 = vpack.c.b16 %v2070, %v2068
    %v2913 = vpack.c.b16 %v2071, %v2069
    %v2914 = vpack.c.b16 %v2074, %v2072
    %v2915 = vpack.c.b16 %v2075, %v2073
    %v2916 = vpack.c.b16 %v2078, %v2076
    %v2917 = vpack.c.b16 %v2079, %v2077
    %v2918 = vpack.c.b16 %v2082, %v2080
    %v2919 = vpack.c.b16 %v2083, %v2081
    %v2920 = vpack.c.b16 %v2086, %v2084
    %v2921 = vpack.c.b16 %v2087, %v2085
    %v2922 = vpack.c.b16 %v2090, %v2088
    %v2923 = vpack.c.b16 %v2091, %v2089
    %v2924 = vpack.c.b16 %v2094, %v2092
    %v2925 = vpack.c.b16 %v2095, %v2093
    %v2926 = vpack.c.b16 %v2098, %v2096
    %v2927 = vpack.c.b16 %v2099, %v2097
    %v2928 = vpack.c.b16 %v2102, %v2100
    %v2929 = vpack.c.b16 %v2103, %v2101
    %v2930 = vpack.c.b16 %v2106, %v2104
    %v2931 = vpack.c.b16 %v2107, %v2105
    %v2932 = vpack.c.b16 %v2110, %v2108
    %v2933 = vpack.c.b16 %v2111, %v2109
    %v2934 = vpack.c.b16 %v2114, %v2112
    %v2935 = vpack.c.b16 %v2115, %v2113
    %v2936 = vpack.c.b16 %v2118, %v2116
    %v2937 = vpack.c.b16 %v2119, %v2117
    %v2938 = vpack.c.b16 %v2122, %v2120
    %v2939 = vpack.c.b16 %v2123, %v2121
    %v2940 = vpack.c.b16 %v2126, %v2124
    %v2941 = vpack.c.b16 %v2127, %v2125
    %v2942 = vpack.c.b16 %v2130, %v2128
    %v2943 = vpack.c.b16 %v2131, %v2129
    %v2944 = vpack.c.b16 %v2134, %v2132
    %v2945 = vpack.c.b16 %v2135, %v2133
    %v2946 = vpack.c.b16 %v2138, %v2136
    %v2947 = vpack.c.b16 %v2139, %v2137
    %v2948 = vpack.c.b16 %v2142, %v2140
    %v2949 = vpack.c.b16 %v2143, %v2141
    %v2950 = vpack.c.b16 %v2146, %v2144
    %v2951 = vpack.c.b16 %v2147, %v2145
    %v2952 = vpack.c.b16 %v2150, %v2148
    %v2953 = vpack.c.b16 %v2151, %v2149
    %v2954 = vpack.c.b16 %v2154, %v2152
    %v2955 = vpack.c.b16 %v2155, %v2153
    %v2956 = vpack.c.b16 %v2158, %v2156
    %v2957 = vpack.c.b16 %v2159, %v2157
    %v2958 = vpack.c.b16 %v2162, %v2160
    %v2959 = vpack.c.b16 %v2163, %v2161
    %v2960 = vpack.c.b16 %v2166, %v2164
    %v2961 = vpack.c.b16 %v2167, %v2165
    %v2962 = vpack.c.b16 %v2170, %v2168
    %v2963 = vpack.c.b16 %v2171, %v2169
    %v2964 = vpack.c.b16 %v2174, %v2172
    %v2965 = vpack.c.b16 %v2175, %v2173
    %v2966 = vpack.c.b16 %v2178, %v2176
    %v2967 = vpack.c.b16 %v2179, %v2177
    %v2968 = vpack.c.b16 %v2182, %v2180
    %v2969 = vpack.c.b16 %v2183, %v2181
    %v2970 = vpack.c.b16 %v2186, %v2184
    %v2971 = vpack.c.b16 %v2187, %v2185
    %v2972 = vpack.c.b16 %v2190, %v2188
    %v2973 = vpack.c.b16 %v2191, %v2189
    %v2974 = vpack.c.b16 %v2194, %v2192
    %v2975 = vpack.c.b16 %v2195, %v2193
    %v2976 = vpack.c.b16 %v2198, %v2196
    %v2977 = vpack.c.b16 %v2199, %v2197
    %v2978 = vpack.c.b16 %v2202, %v2200
    %v2979 = vpack.c.b16 %v2203, %v2201
    %v2980 = vpack.c.b16 %v2206, %v2204
    %v2981 = vpack.c.b16 %v2207, %v2205
    %v2982 = vpack.c.b16 %v2210, %v2208
    %v2983 = vpack.c.b16 %v2211, %v2209
    %v2984 = vpack.c.b16 %v2214, %v2212
    %v2985 = vpack.c.b16 %v2215, %v2213
    %v2986 = vpack.c.b16 %v2218, %v2216
    %v2987 = vpack.c.b16 %v2219, %v2217
    %v2988 = vpack.c.b16 %v2222, %v2220
    %v2989 = vpack.c.b16 %v2223, %v2221
    %v2990 = vpack.c.b16 %v2226, %v2224
    %v2991 = vpack.c.b16 %v2227, %v2225
    %v2992 = vpack.c.b16 %v2230, %v2228
    %v2993 = vpack.c.b16 %v2231, %v2229
    %v2994 = vpack.c.b16 %v2234, %v2232
    %v2995 = vpack.c.b16 %v2235, %v2233
    %v2996 = vpack.c.b16 %v2238, %v2236
    %v2997 = vpack.c.b16 %v2239, %v2237
    %v2998 = vpack.c.b16 %v2242, %v2240
    %v2999 = vpack.c.b16 %v2243, %v2241
    %v3000 = vpack.c.b16 %v2246, %v2244
    %v3001 = vpack.c.b16 %v2247, %v2245
    %v3002 = vpack.c.b16 %v2250, %v2248
    %v3003 = vpack.c.b16 %v2251, %v2249
    %v3004 = vpack.c.b16 %v2254, %v2252
    %v3005 = vpack.c.b16 %v2255, %v2253
    %v3006 = vpack.c.b16 %v2258, %v2256
    %v3007 = vpack.c.b16 %v2259, %v2257
    %v3008 = vpack.c.b16 %v2262, %v2260
    %v3009 = vpack.c.b16 %v2263, %v2261
    %v3010 = vpack.c.b16 %v2266, %v2264
    %v3011 = vpack.c.b16 %v2267, %v2265
    %v3012 = vpack.c.b16 %v2270, %v2268
    %v3013 = vpack.c.b16 %v2271, %v2269
    %v3014 = vpack.c.b16 %v2274, %v2272
    %v3015 = vpack.c.b16 %v2275, %v2273
    %v3016 = vpack.c.b16 %v2278, %v2276
    %v3017 = vpack.c.b16 %v2279, %v2277
    %v3018 = vpack.c.b16 %v2282, %v2280
    %v3019 = vpack.c.b16 %v2283, %v2281
    %v3020 = vpack.c.b16 %v2286, %v2284
    %v3021 = vpack.c.b16 %v2287, %v2285
    %v3022 = vpack.c.b16 %v2290, %v2288
    %v3023 = vpack.c.b16 %v2291, %v2289
    %v3024 = vpack.c.b16 %v2294, %v2292
    %v3025 = vpack.c.b16 %v2295, %v2293
    %v3026 = vpack.c.b16 %v2298, %v2296
    %v3027 = vpack.c.b16 %v2299, %v2297
    %v3028 = vpack.c.b16 %v2302, %v2300
    %v3029 = vpack.c.b16 %v2303, %v2301
    %v3030 = vpack.c.b16 %v2306, %v2304
    %v3031 = vpack.c.b16 %v2307, %v2305
    %v3032 = vpack.c.b16 %v2310, %v2308
    %v3033 = vpack.c.b16 %v2311, %v2309
    %v3034 = vpack.c.b16 %v2314, %v2312
    %v3035 = vpack.c.b16 %v2315, %v2313
    %v3036 = vpack.c.b16 %v2318, %v2316
    %v3037 = vpack.c.b16 %v2319, %v2317
    %v3038 = vpack.c.b16 %v2322, %v2320
    %v3039 = vpack.c.b16 %v2323, %v2321
    %v3040 = vpack.c.b16 %v2326, %v2324
    %v3041 = vpack.c.b16 %v2327, %v2325
    %v3042 = vpack.c.b16 %v2330, %v2328
    %v3043 = vpack.c.b16 %v2331, %v2329
    %v3044 = vpack.c.b16 %v2334, %v2332
    %v3045 = vpack.c.b16 %v2335, %v2333
    %v3046 = vpack.c.b16 %v2338, %v2336
    %v3047 = vpack.c.b16 %v2339, %v2337
    %v3048 = vpack.c.b16 %v2342, %v2340
    %v3049 = vpack.c.b16 %v2343, %v2341
    %v3050 = vpack.c.b16 %v2346, %v2344
    %v3051 = vpack.c.b16 %v2347, %v2345
    %v3052 = vpack.c.b16 %v2350, %v2348
    %v3053 = vpack.c.b16 %v2351, %v2349
    %v3054 = vpack.c.b16 %v2354, %v2352
    %v3055 = vpack.c.b16 %v2355, %v2353
    %v3056 = vpack.c.b16 %v2358, %v2356
    %v3057 = vpack.c.b16 %v2359, %v2357
    %v3058 = vpack.c.b16 %v2362, %v2360
    %v3059 = vpack.c.b16 %v2363, %v2361
    %v3060 = vpack.c.b16 %v2366, %v2364
    %v3061 = vpack.c.b16 %v2367, %v2365
    %v3062 = vpack.c.b16 %v2370, %v2368
    %v3063 = vpack.c.b16 %v2371, %v2369
    %v3064 = vpack.c.b16 %v2374, %v2372
    %v3065 = vpack.c.b16 %v2375, %v2373
    %v3066 = vpack.c.b16 %v2378, %v2376
    %v3067 = vpack.c.b16 %v2379, %v2377
    %v3068 = vpack.c.b16 %v2382, %v2380
    %v3069 = vpack.c.b16 %v2383, %v2381
    %v3070 = vpack.c.b16 %v2386, %v2384
    %v3071 = vpack.c.b16 %v2387, %v2385
    %v3072 = vpack.c.b16 %v2390, %v2388
    %v3073 = vpack.c.b16 %v2391, %v2389
    %v3074 = vpack.c.b16 %v2394, %v2392
    %v3075 = vpack.c.b16 %v2395, %v2393
    %v3076 = vpack.c.b16 %v2398, %v2396
    %v3077 = vpack.c.b16 %v2399, %v2397
    %v3078 = vpack.c.b16 %v2402, %v2400
    %v3079 = vpack.c.b16 %v2403, %v2401
    %v3080 = vpack.c.b16 %v2406, %v2404
    %v3081 = vpack.c.b16 %v2407, %v2405
    %v3082 = vpack.c.b16 %v2410, %v2408
    %v3083 = vpack.c.b16 %v2411, %v2409
    %v3084 = vpack.c.b16 %v2414, %v2412
    %v3085 = vpack.c.b16 %v2415, %v2413
    %v3086 = vpack.c.b16 %v2418, %v2416
    %v3087 = vpack.c.b16 %v2419, %v2417
    %v3088 = vpack.c.b16 %v2422, %v2420
    %v3089 = vpack.c.b16 %v2423, %v2421
    %v3090 = vpack.c.b16 %v2426, %v2424
    %v3091 = vpack.c.b16 %v2427, %v2425
    %v3092 = vpack.c.b16 %v2430, %v2428
    %v3093 = vpack.c.b16 %v2431, %v2429
    %v3094 = vpack.c.b16 %v2434, %v2432
    %v3095 = vpack.c.b16 %v2435, %v2433
    %v3096 = vpack.c.b16 %v2438, %v2436
    %v3097 = vpack.c.b16 %v2439, %v2437
    %v3098 = vpack.c.b16 %v2442, %v2440
    %v3099 = vpack.c.b16 %v2443, %v2441
    %v3100 = vpack.c.b16 %v2446, %v2444
    %v3101 = vpack.c.b16 %v2447, %v2445
    %v3102 = vpack.c.b16 %v2450, %v2448
    %v3103 = vpack.c.b16 %v2451, %v2449
    %v3104 = vpack.c.b16 %v2454, %v2452
    %v3105 = vpack.c.b16 %v2455, %v2453
    %v3106 = vpack.c.b16 %v2458, %v2456
    %v3107 = vpack.c.b16 %v2459, %v2457
    %v3108 = vpack.c.b16 %v2462, %v2460
    %v3109 = vpack.c.b16 %v2463, %v2461
    %v3110 = vpack.c.b16 %v2466, %v2464
    %v3111 = vpack.c.b16 %v2467, %v2465
    %v3112 = vpack.c.b16 %v2470, %v2468
    %v3113 = vpack.c.b16 %v2471, %v2469
    %v3114 = vpack.c.b16 %v2474, %v2472
    %v3115 = vpack.c.b16 %v2475, %v2473
    %v3116 = vpack.c.b16 %v2478, %v2476
    %v3117 = vpack.c.b16 %v2479, %v2477
    %v3118 = vpack.c.b16 %v2482, %v2480
    %v3119 = vpack.c.b16 %v2483, %v2481
    %v3120 = vpack.c.b16 %v2486, %v2484
    %v3121 = vpack.c.b16 %v2487, %v2485
    %v3122 = vpack.c.b16 %v2490, %v2488
    %v3123 = vpack.c.b16 %v2491, %v2489
    %v3124 = vpack.c.b16 %v2494, %v2492
    %v3125 = vpack.c.b16 %v2495, %v2493
    %v3126 = vpack.c.b16 %v2498, %v2496
    %v3127 = vpack.c.b16 %v2499, %v2497
    %v3128 = vpack.c.b16 %v2502, %v2500
    %v3129 = vpack.c.b16 %v2503, %v2501
    %v3130 = vpack.c.b16 %v2506, %v2504
    %v3131 = vpack.c.b16 %v2507, %v2505
    %v3132 = vpack.c.b16 %v2510, %v2508
    %v3133 = vpack.c.b16 %v2511, %v2509
    %v3134 = vpack.c.b16 %v2514, %v2512
    %v3135 = vpack.c.b16 %v2515, %v2513
    %v3136 = vpack.c.b16 %v2518, %v2516
    %v3137 = vpack.c.b16 %v2519, %v2517
    %v3138 = vpack.c.b16 %v2522, %v2520
    %v3139 = vpack.c.b16 %v2523, %v2521
    %v3140 = vpack.c.b16 %v2526, %v2524
    %v3141 = vpack.c.b16 %v2527, %v2525
    %v3142 = vpack.c.b16 %v2530, %v2528
    %v3143 = vpack.c.b16 %v2531, %v2529
    %v3144 = vpack.c.b16 %v2534, %v2532
    %v3145 = vpack.c.b16 %v2535, %v2533
    %v3146 = vpack.c.b16 %v2538, %v2536
    %v3147 = vpack.c.b16 %v2539, %v2537
    %v3148 = vpack.c.b16 %v2542, %v2540
    %v3149 = vpack.c.b16 %v2543, %v2541
    %v3150 = vpack.c.b16 %v2546, %v2544
    %v3151 = vpack.c.b16 %v2547, %v2545
    %v3152 = vpack.c.b16 %v2550, %v2548
    %v3153 = vpack.c.b16 %v2551, %v2549
    %v3154 = vpack.c.b16 %v2554, %v2552
    %v3155 = vpack.c.b16 %v2555, %v2553
    %v3156 = vpack.c.b16 %v2558, %v2556
    %v3157 = vpack.c.b16 %v2559, %v2557
    %v3158 = vpack.c.b16 %v2562, %v2560
    %v3159 = vpack.c.b16 %v2563, %v2561
    %v3160 = vpack.c.b16 %v2566, %v2564
    %v3161 = vpack.c.b16 %v2567, %v2565
    %v3162 = vpack.c.b16 %v2570, %v2568
    %v3163 = vpack.c.b16 %v2571, %v2569
    %v3164 = vpack.c.b16 %v2574, %v2572
    %v3165 = vpack.c.b16 %v2575, %v2573
    %v3166 = vpack.c.b16 %v2578, %v2576
    %v3167 = vpack.c.b16 %v2579, %v2577
    %v3168 = vpack.c.b16 %v2582, %v2580
    %v3169 = vpack.c.b16 %v2583, %v2581
    %v3170 = vpack.c.b16 %v2586, %v2584
    %v3171 = vpack.c.b16 %v2587, %v2585
    %v3172 = vpack.c.b16 %v2590, %v2588
    %v3173 = vpack.c.b16 %v2591, %v2589
    %v3174 = vpack.c.b16 %v2594, %v2592
    %v3175 = vpack.c.b16 %v2595, %v2593
    %v3176 = vpack.c.b16 %v2598, %v2596
    %v3177 = vpack.c.b16 %v2599, %v2597
    %v3178 = vpack.c.b16 %v2602, %v2600
    %v3179 = vpack.c.b16 %v2603, %v2601
    %3756 = vmatprep.subr.bf16.mxu0 %v2605
    %3757 = vmatpush1.bf16.msra.mxu0 %v2604
    %3758 = vmatprep.subr.bf16.mxu0 %v2607
    %3759 = vmatpush1.bf16.msra.mxu0 %v2606
    %3760 = vmatprep.subr.bf16.mxu0 %v2609
    %3761 = vmatpush1.bf16.msra.mxu0 %v2608
    %3762 = vmatprep.subr.bf16.mxu0 %v2611
    %3763 = vmatpush1.bf16.msra.mxu0 %v2610
    %3764 = vmatprep.subr.bf16.mxu0 %v2613
    %3765 = vmatpush1.bf16.msra.mxu0 %v2612
    %3766 = vmatprep.subr.bf16.mxu0 %v2615
    %3767 = vmatpush1.bf16.msra.mxu0 %v2614
    %3768 = vmatprep.subr.bf16.mxu0 %v2617
    %3769 = vmatpush1.bf16.msra.mxu0 %v2616
    %3770 = vmatprep.subr.bf16.mxu0 %v2619
    %3771 = vmatpush1.bf16.msra.mxu0 %v2618
    %3772 = vmatprep.subr.bf16.mxu0 %v2621
    %3773 = vmatpush1.bf16.msra.mxu0 %v2620
    %3774 = vmatprep.subr.bf16.mxu0 %v2623
    %3775 = vmatpush1.bf16.msra.mxu0 %v2622
    %3776 = vmatprep.subr.bf16.mxu0 %v2625
    %3777 = vmatpush1.bf16.msra.mxu0 %v2624
    %3778 = vmatprep.subr.bf16.mxu0 %v2627
    %3779 = vmatpush1.bf16.msra.mxu0 %v2626
    %3780 = vmatprep.subr.bf16.mxu0 %v2629
    %3781 = vmatpush1.bf16.msra.mxu0 %v2628
    %3782 = vmatprep.subr.bf16.mxu0 %v2631
    %3783 = vmatpush1.bf16.msra.mxu0 %v2630
    %3784 = vmatprep.subr.bf16.mxu0 %v2633
    %3785 = vmatpush1.bf16.msra.mxu0 %v2632
    %3786 = vmatprep.subr.bf16.mxu0 %v2635
    %3787 = vmatpush1.bf16.msra.mxu0 %v2634
    %3788 = vmatprep.mubr.bf16.mxu0 %v657
    %3789 = vmatmul.mubr.bf16.gmra.mrb[0].mxu0 %v643
    %v3790 = vpop.f32.mrb[0].mxu0
    %v3791 = vadd.f32 %v608, %v3790
    %v3792 = vpop.f32.mrb[0].mxu0
    %v3793 = vadd.f32 %v612, %v3792
    %v3794 = vpop.f32.mrb[0].mxu0
    %v3795 = vpop.f32.mrb[0].mxu0
    %3796 = vdwg.mxu0
    %3797 = vmatprep.subr.bf16.mxu0 %v2637
    %3798 = vmatpush1.bf16.msra.mxu0 %v2636
    %3799 = vmatprep.subr.bf16.mxu0 %v2639
    %3800 = vmatpush1.bf16.msra.mxu0 %v2638
    %3801 = vmatprep.subr.bf16.mxu0 %v2641
    %3802 = vmatpush1.bf16.msra.mxu0 %v2640
    %3803 = vmatprep.subr.bf16.mxu0 %v2643
    %3804 = vmatpush1.bf16.msra.mxu0 %v2642
    %3805 = vmatprep.subr.bf16.mxu0 %v2645
    %3806 = vmatpush1.bf16.msra.mxu0 %v2644
    %3807 = vmatprep.subr.bf16.mxu0 %v2647
    %3808 = vmatpush1.bf16.msra.mxu0 %v2646
    %3809 = vmatprep.subr.bf16.mxu0 %v2649
    %3810 = vmatpush1.bf16.msra.mxu0 %v2648
    %3811 = vmatprep.subr.bf16.mxu0 %v2651
    %3812 = vmatpush1.bf16.msra.mxu0 %v2650
    %3813 = vmatprep.subr.bf16.mxu0 %v2653
    %3814 = vmatpush1.bf16.msra.mxu0 %v2652
    %3815 = vmatprep.subr.bf16.mxu0 %v2655
    %3816 = vmatpush1.bf16.msra.mxu0 %v2654
    %3817 = vmatprep.subr.bf16.mxu0 %v2657
    %3818 = vmatpush1.bf16.msra.mxu0 %v2656
    %3819 = vmatprep.subr.bf16.mxu0 %v2659
    %3820 = vmatpush1.bf16.msra.mxu0 %v2658
    %3821 = vmatprep.subr.bf16.mxu0 %v2661
    %3822 = vmatpush1.bf16.msra.mxu0 %v2660
    %3823 = vmatprep.subr.bf16.mxu0 %v2663
    %3824 = vmatpush1.bf16.msra.mxu0 %v2662
    %3825 = vmatprep.subr.bf16.mxu0 %v2665
    %3826 = vmatpush1.bf16.msra.mxu0 %v2664
    %3827 = vmatprep.subr.bf16.mxu0 %v2667
    %3828 = vmatpush1.bf16.msra.mxu0 %v2666
    %3829 = vmatprep.mubr.bf16.mxu0 %v667
    %3830 = vmatmul.mubr.bf16.gmra.mrb[0].mxu0 %v665
    %v3831 = vpop.f32.mrb[0].mxu0
    %v3832 = vadd.f32 %v3791, %v3831
    %v3833 = vpop.f32.mrb[0].mxu0
    %v3834 = vadd.f32 %v3793, %v3833
    %v3835 = vpop.f32.mrb[0].mxu0
    %v3836 = vpop.f32.mrb[0].mxu0
    %3837 = vdwg.mxu0
    %3838 = vmatprep.subr.bf16.mxu0 %v2669
    %3839 = vmatpush1.bf16.msra.mxu0 %v2668
    %3840 = vmatprep.subr.bf16.mxu0 %v2671
    %3841 = vmatpush1.bf16.msra.mxu0 %v2670
    %3842 = vmatprep.subr.bf16.mxu0 %v2673
    %3843 = vmatpush1.bf16.msra.mxu0 %v2672
    %3844 = vmatprep.subr.bf16.mxu0 %v2675
    %3845 = vmatpush1.bf16.msra.mxu0 %v2674
    %3846 = vmatprep.subr.bf16.mxu0 %v2677
    %3847 = vmatpush1.bf16.msra.mxu0 %v2676
    %3848 = vmatprep.subr.bf16.mxu0 %v2679
    %3849 = vmatpush1.bf16.msra.mxu0 %v2678
    %3850 = vmatprep.subr.bf16.mxu0 %v2681
    %3851 = vmatpush1.bf16.msra.mxu0 %v2680
    %3852 = vmatprep.subr.bf16.mxu0 %v2683
    %3853 = vmatpush1.bf16.msra.mxu0 %v2682
    %3854 = vmatprep.subr.bf16.mxu0 %v2685
    %3855 = vmatpush1.bf16.msra.mxu0 %v2684
    %3856 = vmatprep.subr.bf16.mxu0 %v2687
    %3857 = vmatpush1.bf16.msra.mxu0 %v2686
    %3858 = vmatprep.subr.bf16.mxu0 %v2689
    %3859 = vmatpush1.bf16.msra.mxu0 %v2688
    %3860 = vmatprep.subr.bf16.mxu0 %v2691
    %3861 = vmatpush1.bf16.msra.mxu0 %v2690
    %3862 = vmatprep.subr.bf16.mxu0 %v2693
    %3863 = vmatpush1.bf16.msra.mxu0 %v2692
    %3864 = vmatprep.subr.bf16.mxu0 %v2695
    %3865 = vmatpush1.bf16.msra.mxu0 %v2694
    %3866 = vmatprep.subr.bf16.mxu0 %v2697
    %3867 = vmatpush1.bf16.msra.mxu0 %v2696
    %3868 = vmatprep.subr.bf16.mxu0 %v2699
    %3869 = vmatpush1.bf16.msra.mxu0 %v2698
    %3870 = vmatprep.mubr.bf16.mxu0 %v664
    %3871 = vmatmul.mubr.bf16.gmra.mrb[0].mxu0 %v650
    %v3872 = vpop.f32.mrb[0].mxu0
    %v3873 = vadd.f32 %v3832, %v3872
    %v3874 = vpop.f32.mrb[0].mxu0
    %v3875 = vadd.f32 %v3834, %v3874
    %v3876 = vpop.f32.mrb[0].mxu0
    %v3877 = vpop.f32.mrb[0].mxu0
    %3878 = vdwg.mxu0
    %3879 = vmatprep.subr.bf16.mxu0 %v2701
    %3880 = vmatpush1.bf16.msra.mxu0 %v2700
    %3881 = vmatprep.subr.bf16.mxu0 %v2703
    %3882 = vmatpush1.bf16.msra.mxu0 %v2702
    %3883 = vmatprep.subr.bf16.mxu0 %v2705
    %3884 = vmatpush1.bf16.msra.mxu0 %v2704
    %3885 = vmatprep.subr.bf16.mxu0 %v2707
    %3886 = vmatpush1.bf16.msra.mxu0 %v2706
    %3887 = vmatprep.subr.bf16.mxu0 %v2709
    %3888 = vmatpush1.bf16.msra.mxu0 %v2708
    %3889 = vmatprep.subr.bf16.mxu0 %v2711
    %3890 = vmatpush1.bf16.msra.mxu0 %v2710
    %3891 = vmatprep.subr.bf16.mxu0 %v2713
    %3892 = vmatpush1.bf16.msra.mxu0 %v2712
    %3893 = vmatprep.subr.bf16.mxu0 %v2715
    %3894 = vmatpush1.bf16.msra.mxu0 %v2714
    %3895 = vmatprep.subr.bf16.mxu0 %v2717
    %3896 = vmatpush1.bf16.msra.mxu0 %v2716
    %3897 = vmatprep.subr.bf16.mxu0 %v2719
    %3898 = vmatpush1.bf16.msra.mxu0 %v2718
    %3899 = vmatprep.subr.bf16.mxu0 %v2721
    %3900 = vmatpush1.bf16.msra.mxu0 %v2720
    %3901 = vmatprep.subr.bf16.mxu0 %v2723
    %3902 = vmatpush1.bf16.msra.mxu0 %v2722
    %3903 = vmatprep.subr.bf16.mxu0 %v2725
    %3904 = vmatpush1.bf16.msra.mxu0 %v2724
    %3905 = vmatprep.subr.bf16.mxu0 %v2727
    %3906 = vmatpush1.bf16.msra.mxu0 %v2726
    %3907 = vmatprep.subr.bf16.mxu0 %v2729
    %3908 = vmatpush1.bf16.msra.mxu0 %v2728
    %3909 = vmatprep.subr.bf16.mxu0 %v2731
    %3910 = vmatpush1.bf16.msra.mxu0 %v2730
    %3911 = vmatprep.mubr.bf16.mxu0 %v668
    %3912 = vmatmul.mubr.bf16.gmra.mrb[0].mxu0 %v666
    %v3913 = vpop.f32.mrb[0].mxu0
    %v3914 = vadd.f32 %v3873, %v3913
    %v3915 = vpop.f32.mrb[0].mxu0
    %v3916 = vadd.f32 %v3875, %v3915
    %v3917 = vpop.f32.mrb[0].mxu0
    %v3918 = vpop.f32.mrb[0].mxu0
    %3919 = vdwg.mxu0
    %3920 = vmatprep.subr.bf16.mxu0 %v2733
    %3921 = vmatpush1.bf16.msra.mxu0 %v2732
    %3922 = vmatprep.subr.bf16.mxu0 %v2735
    %3923 = vmatpush1.bf16.msra.mxu0 %v2734
    %3924 = vmatprep.subr.bf16.mxu0 %v2737
    %3925 = vmatpush1.bf16.msra.mxu0 %v2736
    %3926 = vmatprep.subr.bf16.mxu0 %v2739
    %3927 = vmatpush1.bf16.msra.mxu0 %v2738
    %3928 = vmatprep.subr.bf16.mxu0 %v2741
    %3929 = vmatpush1.bf16.msra.mxu0 %v2740
    %3930 = vmatprep.subr.bf16.mxu0 %v2743
    %3931 = vmatpush1.bf16.msra.mxu0 %v2742
    %3932 = vmatprep.subr.bf16.mxu0 %v2745
    %3933 = vmatpush1.bf16.msra.mxu0 %v2744
    %3934 = vmatprep.subr.bf16.mxu0 %v2747
    %3935 = vmatpush1.bf16.msra.mxu0 %v2746
    %3936 = vmatprep.subr.bf16.mxu0 %v2749
    %3937 = vmatpush1.bf16.msra.mxu0 %v2748
    %3938 = vmatprep.subr.bf16.mxu0 %v2751
    %3939 = vmatpush1.bf16.msra.mxu0 %v2750
    %3940 = vmatprep.subr.bf16.mxu0 %v2753
    %3941 = vmatpush1.bf16.msra.mxu0 %v2752
    %3942 = vmatprep.subr.bf16.mxu0 %v2755
    %3943 = vmatpush1.bf16.msra.mxu0 %v2754
    %3944 = vmatprep.subr.bf16.mxu0 %v2757
    %3945 = vmatpush1.bf16.msra.mxu0 %v2756
    %3946 = vmatprep.subr.bf16.mxu0 %v2759
    %3947 = vmatpush1.bf16.msra.mxu0 %v2758
    %3948 = vmatprep.subr.bf16.mxu0 %v2761
    %3949 = vmatpush1.bf16.msra.mxu0 %v2760
    %3950 = vmatprep.subr.bf16.mxu0 %v2763
    %3951 = vmatpush1.bf16.msra.mxu0 %v2762
    %3952 = vmatprep.mubr.bf16.mxu0 %v706
    %3953 = vmatmul.mubr.bf16.gmra.mrb[0].mxu0 %v692
    %v3954 = vpop.f32.mrb[0].mxu0
    %v3955 = vadd.f32 %v3914, %v3954
    %v3956 = vpop.f32.mrb[0].mxu0
    %v3957 = vadd.f32 %v3916, %v3956
    %v3958 = vpop.f32.mrb[0].mxu0
    %v3959 = vpop.f32.mrb[0].mxu0
    %3960 = vdwg.mxu0
    %3961 = vmatprep.subr.bf16.mxu0 %v2765
    %3962 = vmatpush1.bf16.msra.mxu0 %v2764
    %3963 = vmatprep.subr.bf16.mxu0 %v2767
    %3964 = vmatpush1.bf16.msra.mxu0 %v2766
    %3965 = vmatprep.subr.bf16.mxu0 %v2769
    %3966 = vmatpush1.bf16.msra.mxu0 %v2768
    %3967 = vmatprep.subr.bf16.mxu0 %v2771
    %3968 = vmatpush1.bf16.msra.mxu0 %v2770
    %3969 = vmatprep.subr.bf16.mxu0 %v2773
    %3970 = vmatpush1.bf16.msra.mxu0 %v2772
    %3971 = vmatprep.subr.bf16.mxu0 %v2775
    %3972 = vmatpush1.bf16.msra.mxu0 %v2774
    %3973 = vmatprep.subr.bf16.mxu0 %v2777
    %3974 = vmatpush1.bf16.msra.mxu0 %v2776
    %3975 = vmatprep.subr.bf16.mxu0 %v2779
    %3976 = vmatpush1.bf16.msra.mxu0 %v2778
    %3977 = vmatprep.subr.bf16.mxu0 %v2781
    %3978 = vmatpush1.bf16.msra.mxu0 %v2780
    %3979 = vmatprep.subr.bf16.mxu0 %v2783
    %3980 = vmatpush1.bf16.msra.mxu0 %v2782
    %3981 = vmatprep.subr.bf16.mxu0 %v2785
    %3982 = vmatpush1.bf16.msra.mxu0 %v2784
    %3983 = vmatprep.subr.bf16.mxu0 %v2787
    %3984 = vmatpush1.bf16.msra.mxu0 %v2786
    %3985 = vmatprep.subr.bf16.mxu0 %v2789
    %3986 = vmatpush1.bf16.msra.mxu0 %v2788
    %3987 = vmatprep.subr.bf16.mxu0 %v2791
    %3988 = vmatpush1.bf16.msra.mxu0 %v2790
    %3989 = vmatprep.subr.bf16.mxu0 %v2793
    %3990 = vmatpush1.bf16.msra.mxu0 %v2792
    %3991 = vmatprep.subr.bf16.mxu0 %v2795
    %3992 = vmatpush1.bf16.msra.mxu0 %v2794
    %3993 = vmatprep.mubr.bf16.mxu0 %v716
    %3994 = vmatmul.mubr.bf16.gmra.mrb[0].mxu0 %v714
    %v3995 = vpop.f32.mrb[0].mxu0
    %v3996 = vadd.f32 %v3955, %v3995
    %v3997 = vpop.f32.mrb[0].mxu0
    %v3998 = vadd.f32 %v3957, %v3997
    %v3999 = vpop.f32.mrb[0].mxu0
    %v4000 = vpop.f32.mrb[0].mxu0
    %4001 = vdwg.mxu0
    %4002 = vmatprep.subr.bf16.mxu0 %v2797
    %4003 = vmatpush1.bf16.msra.mxu0 %v2796
    %4004 = vmatprep.subr.bf16.mxu0 %v2799
    %4005 = vmatpush1.bf16.msra.mxu0 %v2798
    %4006 = vmatprep.subr.bf16.mxu0 %v2801
    %4007 = vmatpush1.bf16.msra.mxu0 %v2800
    %4008 = vmatprep.subr.bf16.mxu0 %v2803
    %4009 = vmatpush1.bf16.msra.mxu0 %v2802
    %4010 = vmatprep.subr.bf16.mxu0 %v2805
    %4011 = vmatpush1.bf16.msra.mxu0 %v2804
    %4012 = vmatprep.subr.bf16.mxu0 %v2807
    %4013 = vmatpush1.bf16.msra.mxu0 %v2806
    %4014 = vmatprep.subr.bf16.mxu0 %v2809
    %4015 = vmatpush1.bf16.msra.mxu0 %v2808
    %4016 = vmatprep.subr.bf16.mxu0 %v2811
    %4017 = vmatpush1.bf16.msra.mxu0 %v2810
    %4018 = vmatprep.subr.bf16.mxu0 %v2813
    %4019 = vmatpush1.bf16.msra.mxu0 %v2812
    %4020 = vmatprep.subr.bf16.mxu0 %v2815
    %4021 = vmatpush1.bf16.msra.mxu0 %v2814
    %4022 = vmatprep.subr.bf16.mxu0 %v2817
    %4023 = vmatpush1.bf16.msra.mxu0 %v2816
    %4024 = vmatprep.subr.bf16.mxu0 %v2819
    %4025 = vmatpush1.bf16.msra.mxu0 %v2818
    %4026 = vmatprep.subr.bf16.mxu0 %v2821
    %4027 = vmatpush1.bf16.msra.mxu0 %v2820
    %4028 = vmatprep.subr.bf16.mxu0 %v2823
    %4029 = vmatpush1.bf16.msra.mxu0 %v2822
    %4030 = vmatprep.subr.bf16.mxu0 %v2825
    %4031 = vmatpush1.bf16.msra.mxu0 %v2824
    %4032 = vmatprep.subr.bf16.mxu0 %v2827
    %4033 = vmatpush1.bf16.msra.mxu0 %v2826
    %4034 = vmatprep.mubr.bf16.mxu0 %v713
    %4035 = vmatmul.mubr.bf16.gmra.mrb[0].mxu0 %v699
    %v4036 = vpop.f32.mrb[0].mxu0
    %v4037 = vadd.f32 %v3996, %v4036
    %v4038 = vpop.f32.mrb[0].mxu0
    %v4039 = vadd.f32 %v3998, %v4038
    %v4040 = vpop.f32.mrb[0].mxu0
    %v4041 = vpop.f32.mrb[0].mxu0
    %4042 = vdwg.mxu0
    %4043 = vmatprep.subr.bf16.mxu0 %v2829
    %4044 = vmatpush1.bf16.msra.mxu0 %v2828
    %4045 = vmatprep.subr.bf16.mxu0 %v2831
    %4046 = vmatpush1.bf16.msra.mxu0 %v2830
    %4047 = vmatprep.subr.bf16.mxu0 %v2833
    %4048 = vmatpush1.bf16.msra.mxu0 %v2832
    %4049 = vmatprep.subr.bf16.mxu0 %v2835
    %4050 = vmatpush1.bf16.msra.mxu0 %v2834
    %4051 = vmatprep.subr.bf16.mxu0 %v2837
    %4052 = vmatpush1.bf16.msra.mxu0 %v2836
    %4053 = vmatprep.subr.bf16.mxu0 %v2839
    %4054 = vmatpush1.bf16.msra.mxu0 %v2838
    %4055 = vmatprep.subr.bf16.mxu0 %v2841
    %4056 = vmatpush1.bf16.msra.mxu0 %v2840
    %4057 = vmatprep.subr.bf16.mxu0 %v2843
    %4058 = vmatpush1.bf16.msra.mxu0 %v2842
    %4059 = vmatprep.subr.bf16.mxu0 %v2845
    %4060 = vmatpush1.bf16.msra.mxu0 %v2844
    %4061 = vmatprep.subr.bf16.mxu0 %v2847
    %4062 = vmatpush1.bf16.msra.mxu0 %v2846
    %4063 = vmatprep.subr.bf16.mxu0 %v2849
    %4064 = vmatpush1.bf16.msra.mxu0 %v2848
    %4065 = vmatprep.subr.bf16.mxu0 %v2851
    %4066 = vmatpush1.bf16.msra.mxu0 %v2850
    %4067 = vmatprep.subr.bf16.mxu0 %v2853
    %4068 = vmatpush1.bf16.msra.mxu0 %v2852
    %4069 = vmatprep.subr.bf16.mxu0 %v2855
    %4070 = vmatpush1.bf16.msra.mxu0 %v2854
    %4071 = vmatprep.subr.bf16.mxu0 %v2857
    %4072 = vmatpush1.bf16.msra.mxu0 %v2856
    %4073 = vmatprep.subr.bf16.mxu0 %v2859
    %4074 = vmatpush1.bf16.msra.mxu0 %v2858
    %4075 = vmatprep.mubr.bf16.mxu0 %v717
    %4076 = vmatmul.mubr.bf16.gmra.mrb[0].mxu0 %v715
    %v4077 = vpop.f32.mrb[0].mxu0
    %v4078 = vadd.f32 %v4037, %v4077
    %v4079 = vpop.f32.mrb[0].mxu0
    %v4080 = vadd.f32 %v4039, %v4079
    %v4081 = vpop.f32.mrb[0].mxu0
    %v4082 = vpop.f32.mrb[0].mxu0
    %4083 = vdwg.mxu0
    %4084 = vmatprep.subr.bf16.mxu0 %v2861
    %4085 = vmatpush1.bf16.msra.mxu0 %v2860
    %4086 = vmatprep.subr.bf16.mxu0 %v2863
    %4087 = vmatpush1.bf16.msra.mxu0 %v2862
    %4088 = vmatprep.subr.bf16.mxu0 %v2865
    %4089 = vmatpush1.bf16.msra.mxu0 %v2864
    %4090 = vmatprep.subr.bf16.mxu0 %v2867
    %4091 = vmatpush1.bf16.msra.mxu0 %v2866
    %4092 = vmatprep.subr.bf16.mxu0 %v2869
    %4093 = vmatpush1.bf16.msra.mxu0 %v2868
    %4094 = vmatprep.subr.bf16.mxu0 %v2871
    %4095 = vmatpush1.bf16.msra.mxu0 %v2870
    %4096 = vmatprep.subr.bf16.mxu0 %v2873
    %4097 = vmatpush1.bf16.msra.mxu0 %v2872
    %4098 = vmatprep.subr.bf16.mxu0 %v2875
    %4099 = vmatpush1.bf16.msra.mxu0 %v2874
    %4100 = vmatprep.subr.bf16.mxu0 %v2877
    %4101 = vmatpush1.bf16.msra.mxu0 %v2876
    %4102 = vmatprep.subr.bf16.mxu0 %v2879
    %4103 = vmatpush1.bf16.msra.mxu0 %v2878
    %4104 = vmatprep.subr.bf16.mxu0 %v2881
    %4105 = vmatpush1.bf16.msra.mxu0 %v2880
    %4106 = vmatprep.subr.bf16.mxu0 %v2883
    %4107 = vmatpush1.bf16.msra.mxu0 %v2882
    %4108 = vmatprep.subr.bf16.mxu0 %v2885
    %4109 = vmatpush1.bf16.msra.mxu0 %v2884
    %4110 = vmatprep.subr.bf16.mxu0 %v2887
    %4111 = vmatpush1.bf16.msra.mxu0 %v2886
    %4112 = vmatprep.subr.bf16.mxu0 %v2889
    %4113 = vmatpush1.bf16.msra.mxu0 %v2888
    %4114 = vmatprep.subr.bf16.mxu0 %v2891
    %4115 = vmatpush1.bf16.msra.mxu0 %v2890
    %4116 = vmatprep.mubr.bf16.mxu0 %v755
    %4117 = vmatmul.mubr.bf16.gmra.mrb[0].mxu0 %v741
    %v4118 = vpop.f32.mrb[0].mxu0
    %v4119 = vadd.f32 %v4078, %v4118
    %v4120 = vpop.f32.mrb[0].mxu0
    %v4121 = vadd.f32 %v4080, %v4120
    %v4122 = vpop.f32.mrb[0].mxu0
    %v4123 = vpop.f32.mrb[0].mxu0
    %4124 = vdwg.mxu0
    %4125 = vmatprep.subr.bf16.mxu0 %v2893
    %4126 = vmatpush1.bf16.msra.mxu0 %v2892
    %4127 = vmatprep.subr.bf16.mxu0 %v2895
    %4128 = vmatpush1.bf16.msra.mxu0 %v2894
    %4129 = vmatprep.subr.bf16.mxu0 %v2897
    %4130 = vmatpush1.bf16.msra.mxu0 %v2896
    %4131 = vmatprep.subr.bf16.mxu0 %v2899
    %4132 = vmatpush1.bf16.msra.mxu0 %v2898
    %4133 = vmatprep.subr.bf16.mxu0 %v2901
    %4134 = vmatpush1.bf16.msra.mxu0 %v2900
    %4135 = vmatprep.subr.bf16.mxu0 %v2903
    %4136 = vmatpush1.bf16.msra.mxu0 %v2902
    %4137 = vmatprep.subr.bf16.mxu0 %v2905
    %4138 = vmatpush1.bf16.msra.mxu0 %v2904
    %4139 = vmatprep.subr.bf16.mxu0 %v2907
    %4140 = vmatpush1.bf16.msra.mxu0 %v2906
    %4141 = vmatprep.subr.bf16.mxu0 %v2909
    %4142 = vmatpush1.bf16.msra.mxu0 %v2908
    %4143 = vmatprep.subr.bf16.mxu0 %v2911
    %4144 = vmatpush1.bf16.msra.mxu0 %v2910
    %4145 = vmatprep.subr.bf16.mxu0 %v2913
    %4146 = vmatpush1.bf16.msra.mxu0 %v2912
    %4147 = vmatprep.subr.bf16.mxu0 %v2915
    %4148 = vmatpush1.bf16.msra.mxu0 %v2914
    %4149 = vmatprep.subr.bf16.mxu0 %v2917
    %4150 = vmatpush1.bf16.msra.mxu0 %v2916
    %4151 = vmatprep.subr.bf16.mxu0 %v2919
    %4152 = vmatpush1.bf16.msra.mxu0 %v2918
    %4153 = vmatprep.subr.bf16.mxu0 %v2921
    %4154 = vmatpush1.bf16.msra.mxu0 %v2920
    %4155 = vmatprep.subr.bf16.mxu0 %v2923
    %4156 = vmatpush1.bf16.msra.mxu0 %v2922
    %4157 = vmatprep.mubr.bf16.mxu0 %v765
    %4158 = vmatmul.mubr.bf16.gmra.mrb[0].mxu0 %v763
    %v4159 = vpop.f32.mrb[0].mxu0
    %v4160 = vadd.f32 %v4119, %v4159
    %v4161 = vpop.f32.mrb[0].mxu0
    %v4162 = vadd.f32 %v4121, %v4161
    %v4163 = vpop.f32.mrb[0].mxu0
    %v4164 = vpop.f32.mrb[0].mxu0
    %4165 = vdwg.mxu0
    %4166 = vmatprep.subr.bf16.mxu0 %v2925
    %4167 = vmatpush1.bf16.msra.mxu0 %v2924
    %4168 = vmatprep.subr.bf16.mxu0 %v2927
    %4169 = vmatpush1.bf16.msra.mxu0 %v2926
    %4170 = vmatprep.subr.bf16.mxu0 %v2929
    %4171 = vmatpush1.bf16.msra.mxu0 %v2928
    %4172 = vmatprep.subr.bf16.mxu0 %v2931
    %4173 = vmatpush1.bf16.msra.mxu0 %v2930
    %4174 = vmatprep.subr.bf16.mxu0 %v2933
    %4175 = vmatpush1.bf16.msra.mxu0 %v2932
    %4176 = vmatprep.subr.bf16.mxu0 %v2935
    %4177 = vmatpush1.bf16.msra.mxu0 %v2934
    %4178 = vmatprep.subr.bf16.mxu0 %v2937
    %4179 = vmatpush1.bf16.msra.mxu0 %v2936
    %4180 = vmatprep.subr.bf16.mxu0 %v2939
    %4181 = vmatpush1.bf16.msra.mxu0 %v2938
    %4182 = vmatprep.subr.bf16.mxu0 %v2941
    %4183 = vmatpush1.bf16.msra.mxu0 %v2940
    %4184 = vmatprep.subr.bf16.mxu0 %v2943
    %4185 = vmatpush1.bf16.msra.mxu0 %v2942
    %4186 = vmatprep.subr.bf16.mxu0 %v2945
    %4187 = vmatpush1.bf16.msra.mxu0 %v2944
    %4188 = vmatprep.subr.bf16.mxu0 %v2947
    %4189 = vmatpush1.bf16.msra.mxu0 %v2946
    %4190 = vmatprep.subr.bf16.mxu0 %v2949
    %4191 = vmatpush1.bf16.msra.mxu0 %v2948
    %4192 = vmatprep.subr.bf16.mxu0 %v2951
    %4193 = vmatpush1.bf16.msra.mxu0 %v2950
    %4194 = vmatprep.subr.bf16.mxu0 %v2953
    %4195 = vmatpush1.bf16.msra.mxu0 %v2952
    %4196 = vmatprep.subr.bf16.mxu0 %v2955
    %4197 = vmatpush1.bf16.msra.mxu0 %v2954
    %4198 = vmatprep.mubr.bf16.mxu0 %v762
    %4199 = vmatmul.mubr.bf16.gmra.mrb[0].mxu0 %v748
    %v4200 = vpop.f32.mrb[0].mxu0
    %v4201 = vadd.f32 %v4160, %v4200
    %v4202 = vpop.f32.mrb[0].mxu0
    %v4203 = vadd.f32 %v4162, %v4202
    %v4204 = vpop.f32.mrb[0].mxu0
    %v4205 = vpop.f32.mrb[0].mxu0
    %4206 = vdwg.mxu0
    %4207 = vmatprep.subr.bf16.mxu0 %v2957
    %4208 = vmatpush1.bf16.msra.mxu0 %v2956
    %4209 = vmatprep.subr.bf16.mxu0 %v2959
    %4210 = vmatpush1.bf16.msra.mxu0 %v2958
    %4211 = vmatprep.subr.bf16.mxu0 %v2961
    %4212 = vmatpush1.bf16.msra.mxu0 %v2960
    %4213 = vmatprep.subr.bf16.mxu0 %v2963
    %4214 = vmatpush1.bf16.msra.mxu0 %v2962
    %4215 = vmatprep.subr.bf16.mxu0 %v2965
    %4216 = vmatpush1.bf16.msra.mxu0 %v2964
    %4217 = vmatprep.subr.bf16.mxu0 %v2967
    %4218 = vmatpush1.bf16.msra.mxu0 %v2966
    %4219 = vmatprep.subr.bf16.mxu0 %v2969
    %4220 = vmatpush1.bf16.msra.mxu0 %v2968
    %4221 = vmatprep.subr.bf16.mxu0 %v2971
    %4222 = vmatpush1.bf16.msra.mxu0 %v2970
    %4223 = vmatprep.subr.bf16.mxu0 %v2973
    %4224 = vmatpush1.bf16.msra.mxu0 %v2972
    %4225 = vmatprep.subr.bf16.mxu0 %v2975
    %4226 = vmatpush1.bf16.msra.mxu0 %v2974
    %4227 = vmatprep.subr.bf16.mxu0 %v2977
    %4228 = vmatpush1.bf16.msra.mxu0 %v2976
    %4229 = vmatprep.subr.bf16.mxu0 %v2979
    %4230 = vmatpush1.bf16.msra.mxu0 %v2978
    %4231 = vmatprep.subr.bf16.mxu0 %v2981
    %4232 = vmatpush1.bf16.msra.mxu0 %v2980
    %4233 = vmatprep.subr.bf16.mxu0 %v2983
    %4234 = vmatpush1.bf16.msra.mxu0 %v2982
    %4235 = vmatprep.subr.bf16.mxu0 %v2985
    %4236 = vmatpush1.bf16.msra.mxu0 %v2984
    %4237 = vmatprep.subr.bf16.mxu0 %v2987
    %4238 = vmatpush1.bf16.msra.mxu0 %v2986
    %4239 = vmatprep.mubr.bf16.mxu0 %v766
    %4240 = vmatmul.mubr.bf16.gmra.mrb[0].mxu0 %v764
    %v4241 = vpop.f32.mrb[0].mxu0
    %v4242 = vadd.f32 %v4201, %v4241
    %v4243 = vpop.f32.mrb[0].mxu0
    %v4244 = vadd.f32 %v4203, %v4243
    %v4245 = vpop.f32.mrb[0].mxu0
    %v4246 = vpop.f32.mrb[0].mxu0
    %4247 = vdwg.mxu0
    %4248 = vmatprep.subr.bf16.mxu0 %v2989
    %4249 = vmatpush1.bf16.msra.mxu0 %v2988
    %4250 = vmatprep.subr.bf16.mxu0 %v2991
    %4251 = vmatpush1.bf16.msra.mxu0 %v2990
    %4252 = vmatprep.subr.bf16.mxu0 %v2993
    %4253 = vmatpush1.bf16.msra.mxu0 %v2992
    %4254 = vmatprep.subr.bf16.mxu0 %v2995
    %4255 = vmatpush1.bf16.msra.mxu0 %v2994
    %4256 = vmatprep.subr.bf16.mxu0 %v2997
    %4257 = vmatpush1.bf16.msra.mxu0 %v2996
    %4258 = vmatprep.subr.bf16.mxu0 %v2999
    %4259 = vmatpush1.bf16.msra.mxu0 %v2998
    %4260 = vmatprep.subr.bf16.mxu0 %v3001
    %4261 = vmatpush1.bf16.msra.mxu0 %v3000
    %4262 = vmatprep.subr.bf16.mxu0 %v3003
    %4263 = vmatpush1.bf16.msra.mxu0 %v3002
    %4264 = vmatprep.subr.bf16.mxu0 %v3005
    %4265 = vmatpush1.bf16.msra.mxu0 %v3004
    %4266 = vmatprep.subr.bf16.mxu0 %v3007
    %4267 = vmatpush1.bf16.msra.mxu0 %v3006
    %4268 = vmatprep.subr.bf16.mxu0 %v3009
    %4269 = vmatpush1.bf16.msra.mxu0 %v3008
    %4270 = vmatprep.subr.bf16.mxu0 %v3011
    %4271 = vmatpush1.bf16.msra.mxu0 %v3010
    %4272 = vmatprep.subr.bf16.mxu0 %v3013
    %4273 = vmatpush1.bf16.msra.mxu0 %v3012
    %4274 = vmatprep.subr.bf16.mxu0 %v3015
    %4275 = vmatpush1.bf16.msra.mxu0 %v3014
    %4276 = vmatprep.subr.bf16.mxu0 %v3017
    %4277 = vmatpush1.bf16.msra.mxu0 %v3016
    %4278 = vmatprep.subr.bf16.mxu0 %v3019
    %4279 = vmatpush1.bf16.msra.mxu0 %v3018
    %4280 = vmatprep.mubr.bf16.mxu0 %v804
    %4281 = vmatmul.mubr.bf16.gmra.mrb[0].mxu0 %v790
    %v4282 = vpop.f32.mrb[0].mxu0
    %v4283 = vadd.f32 %v4242, %v4282
    %v4284 = vpop.f32.mrb[0].mxu0
    %v4285 = vadd.f32 %v4244, %v4284
    %v4286 = vpop.f32.mrb[0].mxu0
    %v4287 = vpop.f32.mrb[0].mxu0
    %4288 = vdwg.mxu0
    %4289 = vmatprep.subr.bf16.mxu0 %v3021
    %4290 = vmatpush1.bf16.msra.mxu0 %v3020
    %4291 = vmatprep.subr.bf16.mxu0 %v3023
    %4292 = vmatpush1.bf16.msra.mxu0 %v3022
    %4293 = vmatprep.subr.bf16.mxu0 %v3025
    %4294 = vmatpush1.bf16.msra.mxu0 %v3024
    %4295 = vmatprep.subr.bf16.mxu0 %v3027
    %4296 = vmatpush1.bf16.msra.mxu0 %v3026
    %4297 = vmatprep.subr.bf16.mxu0 %v3029
    %4298 = vmatpush1.bf16.msra.mxu0 %v3028
    %4299 = vmatprep.subr.bf16.mxu0 %v3031
    %4300 = vmatpush1.bf16.msra.mxu0 %v3030
    %4301 = vmatprep.subr.bf16.mxu0 %v3033
    %4302 = vmatpush1.bf16.msra.mxu0 %v3032
    %4303 = vmatprep.subr.bf16.mxu0 %v3035
    %4304 = vmatpush1.bf16.msra.mxu0 %v3034
    %4305 = vmatprep.subr.bf16.mxu0 %v3037
    %4306 = vmatpush1.bf16.msra.mxu0 %v3036
    %4307 = vmatprep.subr.bf16.mxu0 %v3039
    %4308 = vmatpush1.bf16.msra.mxu0 %v3038
    %4309 = vmatprep.subr.bf16.mxu0 %v3041
    %4310 = vmatpush1.bf16.msra.mxu0 %v3040
    %4311 = vmatprep.subr.bf16.mxu0 %v3043
    %4312 = vmatpush1.bf16.msra.mxu0 %v3042
    %4313 = vmatprep.subr.bf16.mxu0 %v3045
    %4314 = vmatpush1.bf16.msra.mxu0 %v3044
    %4315 = vmatprep.subr.bf16.mxu0 %v3047
    %4316 = vmatpush1.bf16.msra.mxu0 %v3046
    %4317 = vmatprep.subr.bf16.mxu0 %v3049
    %4318 = vmatpush1.bf16.msra.mxu0 %v3048
    %4319 = vmatprep.subr.bf16.mxu0 %v3051
    %4320 = vmatpush1.bf16.msra.mxu0 %v3050
    %4321 = vmatprep.mubr.bf16.mxu0 %v814
    %4322 = vmatmul.mubr.bf16.gmra.mrb[0].mxu0 %v812
    %v4323 = vpop.f32.mrb[0].mxu0
    %v4324 = vadd.f32 %v4283, %v4323
    %v4325 = vpop.f32.mrb[0].mxu0
    %v4326 = vadd.f32 %v4285, %v4325
    %v4327 = vpop.f32.mrb[0].mxu0
    %v4328 = vpop.f32.mrb[0].mxu0
    %4329 = vdwg.mxu0
    %4330 = vmatprep.subr.bf16.mxu0 %v3053
    %4331 = vmatpush1.bf16.msra.mxu0 %v3052
    %4332 = vmatprep.subr.bf16.mxu0 %v3055
    %4333 = vmatpush1.bf16.msra.mxu0 %v3054
    %4334 = vmatprep.subr.bf16.mxu0 %v3057
    %4335 = vmatpush1.bf16.msra.mxu0 %v3056
    %4336 = vmatprep.subr.bf16.mxu0 %v3059
    %4337 = vmatpush1.bf16.msra.mxu0 %v3058
    %4338 = vmatprep.subr.bf16.mxu0 %v3061
    %4339 = vmatpush1.bf16.msra.mxu0 %v3060
    %4340 = vmatprep.subr.bf16.mxu0 %v3063
    %4341 = vmatpush1.bf16.msra.mxu0 %v3062
    %4342 = vmatprep.subr.bf16.mxu0 %v3065
    %4343 = vmatpush1.bf16.msra.mxu0 %v3064
    %4344 = vmatprep.subr.bf16.mxu0 %v3067
    %4345 = vmatpush1.bf16.msra.mxu0 %v3066
    %4346 = vmatprep.subr.bf16.mxu0 %v3069
    %4347 = vmatpush1.bf16.msra.mxu0 %v3068
    %4348 = vmatprep.subr.bf16.mxu0 %v3071
    %4349 = vmatpush1.bf16.msra.mxu0 %v3070
    %4350 = vmatprep.subr.bf16.mxu0 %v3073
    %4351 = vmatpush1.bf16.msra.mxu0 %v3072
    %4352 = vmatprep.subr.bf16.mxu0 %v3075
    %4353 = vmatpush1.bf16.msra.mxu0 %v3074
    %4354 = vmatprep.subr.bf16.mxu0 %v3077
    %4355 = vmatpush1.bf16.msra.mxu0 %v3076
    %4356 = vmatprep.subr.bf16.mxu0 %v3079
    %4357 = vmatpush1.bf16.msra.mxu0 %v3078
    %4358 = vmatprep.subr.bf16.mxu0 %v3081
    %4359 = vmatpush1.bf16.msra.mxu0 %v3080
    %4360 = vmatprep.subr.bf16.mxu0 %v3083
    %4361 = vmatpush1.bf16.msra.mxu0 %v3082
    %4362 = vmatprep.mubr.bf16.mxu0 %v811
    %4363 = vmatmul.mubr.bf16.gmra.mrb[0].mxu0 %v797
    %v4364 = vpop.f32.mrb[0].mxu0
    %v4365 = vadd.f32 %v4324, %v4364
    %v4366 = vpop.f32.mrb[0].mxu0
    %v4367 = vadd.f32 %v4326, %v4366
    %v4368 = vpop.f32.mrb[0].mxu0
    %v4369 = vpop.f32.mrb[0].mxu0
    %4370 = vdwg.mxu0
    %4371 = vmatprep.subr.bf16.mxu0 %v3085
    %4372 = vmatpush1.bf16.msra.mxu0 %v3084
    %4373 = vmatprep.subr.bf16.mxu0 %v3087
    %4374 = vmatpush1.bf16.msra.mxu0 %v3086
    %4375 = vmatprep.subr.bf16.mxu0 %v3089
    %4376 = vmatpush1.bf16.msra.mxu0 %v3088
    %4377 = vmatprep.subr.bf16.mxu0 %v3091
    %4378 = vmatpush1.bf16.msra.mxu0 %v3090
    %4379 = vmatprep.subr.bf16.mxu0 %v3093
    %4380 = vmatpush1.bf16.msra.mxu0 %v3092
    %4381 = vmatprep.subr.bf16.mxu0 %v3095
    %4382 = vmatpush1.bf16.msra.mxu0 %v3094
    %4383 = vmatprep.subr.bf16.mxu0 %v3097
    %4384 = vmatpush1.bf16.msra.mxu0 %v3096
    %4385 = vmatprep.subr.bf16.mxu0 %v3099
    %4386 = vmatpush1.bf16.msra.mxu0 %v3098
    %4387 = vmatprep.subr.bf16.mxu0 %v3101
    %4388 = vmatpush1.bf16.msra.mxu0 %v3100
    %4389 = vmatprep.subr.bf16.mxu0 %v3103
    %4390 = vmatpush1.bf16.msra.mxu0 %v3102
    %4391 = vmatprep.subr.bf16.mxu0 %v3105
    %4392 = vmatpush1.bf16.msra.mxu0 %v3104
    %4393 = vmatprep.subr.bf16.mxu0 %v3107
    %4394 = vmatpush1.bf16.msra.mxu0 %v3106
    %4395 = vmatprep.subr.bf16.mxu0 %v3109
    %4396 = vmatpush1.bf16.msra.mxu0 %v3108
    %4397 = vmatprep.subr.bf16.mxu0 %v3111
    %4398 = vmatpush1.bf16.msra.mxu0 %v3110
    %4399 = vmatprep.subr.bf16.mxu0 %v3113
    %4400 = vmatpush1.bf16.msra.mxu0 %v3112
    %4401 = vmatprep.subr.bf16.mxu0 %v3115
    %4402 = vmatpush1.bf16.msra.mxu0 %v3114
    %4403 = vmatprep.mubr.bf16.mxu0 %v815
    %4404 = vmatmul.mubr.bf16.gmra.mrb[0].mxu0 %v813
    %v4405 = vpop.f32.mrb[0].mxu0
    %v4406 = vadd.f32 %v4365, %v4405
    %v4407 = vpop.f32.mrb[0].mxu0
    %v4408 = vadd.f32 %v4367, %v4407
    %v4409 = vpop.f32.mrb[0].mxu0
    %v4410 = vpop.f32.mrb[0].mxu0
    %4411 = vdwg.mxu0
    %4412 = vmatprep.subr.bf16.mxu0 %v3117
    %4413 = vmatpush1.bf16.msra.mxu0 %v3116
    %4414 = vmatprep.subr.bf16.mxu0 %v3119
    %4415 = vmatpush1.bf16.msra.mxu0 %v3118
    %4416 = vmatprep.subr.bf16.mxu0 %v3121
    %4417 = vmatpush1.bf16.msra.mxu0 %v3120
    %4418 = vmatprep.subr.bf16.mxu0 %v3123
    %4419 = vmatpush1.bf16.msra.mxu0 %v3122
    %4420 = vmatprep.subr.bf16.mxu0 %v3125
    %4421 = vmatpush1.bf16.msra.mxu0 %v3124
    %4422 = vmatprep.subr.bf16.mxu0 %v3127
    %4423 = vmatpush1.bf16.msra.mxu0 %v3126
    %4424 = vmatprep.subr.bf16.mxu0 %v3129
    %4425 = vmatpush1.bf16.msra.mxu0 %v3128
    %4426 = vmatprep.subr.bf16.mxu0 %v3131
    %4427 = vmatpush1.bf16.msra.mxu0 %v3130
    %4428 = vmatprep.subr.bf16.mxu0 %v3133
    %4429 = vmatpush1.bf16.msra.mxu0 %v3132
    %4430 = vmatprep.subr.bf16.mxu0 %v3135
    %4431 = vmatpush1.bf16.msra.mxu0 %v3134
    %4432 = vmatprep.subr.bf16.mxu0 %v3137
    %4433 = vmatpush1.bf16.msra.mxu0 %v3136
    %4434 = vmatprep.subr.bf16.mxu0 %v3139
    %4435 = vmatpush1.bf16.msra.mxu0 %v3138
    %4436 = vmatprep.subr.bf16.mxu0 %v3141
    %4437 = vmatpush1.bf16.msra.mxu0 %v3140
    %4438 = vmatprep.subr.bf16.mxu0 %v3143
    %4439 = vmatpush1.bf16.msra.mxu0 %v3142
    %4440 = vmatprep.subr.bf16.mxu0 %v3145
    %4441 = vmatpush1.bf16.msra.mxu0 %v3144
    %4442 = vmatprep.subr.bf16.mxu0 %v3147
    %4443 = vmatpush1.bf16.msra.mxu0 %v3146
    %4444 = vmatprep.mubr.bf16.mxu0 %v837
    %4445 = vmatmul.mubr.bf16.gmra.mrb[0].mxu0 %v830
    %v4446 = vpop.f32.mrb[0].mxu0
    %v4447 = vadd.f32 %v4406, %v4446
    %v4448 = vpop.f32.mrb[0].mxu0
    %v4449 = vadd.f32 %v4408, %v4448
    %v4450 = vpop.f32.mrb[0].mxu0
    %v4451 = vpop.f32.mrb[0].mxu0
    %4452 = vdwg.mxu0
    %4453 = vmatprep.subr.bf16.mxu0 %v3149
    %4454 = vmatpush1.bf16.msra.mxu0 %v3148
    %4455 = vmatprep.subr.bf16.mxu0 %v3151
    %4456 = vmatpush1.bf16.msra.mxu0 %v3150
    %4457 = vmatprep.subr.bf16.mxu0 %v3153
    %4458 = vmatpush1.bf16.msra.mxu0 %v3152
    %4459 = vmatprep.subr.bf16.mxu0 %v3155
    %4460 = vmatpush1.bf16.msra.mxu0 %v3154
    %4461 = vmatprep.subr.bf16.mxu0 %v3157
    %4462 = vmatpush1.bf16.msra.mxu0 %v3156
    %4463 = vmatprep.subr.bf16.mxu0 %v3159
    %4464 = vmatpush1.bf16.msra.mxu0 %v3158
    %4465 = vmatprep.subr.bf16.mxu0 %v3161
    %4466 = vmatpush1.bf16.msra.mxu0 %v3160
    %4467 = vmatprep.subr.bf16.mxu0 %v3163
    %4468 = vmatpush1.bf16.msra.mxu0 %v3162
    %4469 = vmatprep.subr.bf16.mxu0 %v3165
    %4470 = vmatpush1.bf16.msra.mxu0 %v3164
    %4471 = vmatprep.subr.bf16.mxu0 %v3167
    %4472 = vmatpush1.bf16.msra.mxu0 %v3166
    %4473 = vmatprep.subr.bf16.mxu0 %v3169
    %4474 = vmatpush1.bf16.msra.mxu0 %v3168
    %4475 = vmatprep.subr.bf16.mxu0 %v3171
    %4476 = vmatpush1.bf16.msra.mxu0 %v3170
    %4477 = vmatprep.subr.bf16.mxu0 %v3173
    %4478 = vmatpush1.bf16.msra.mxu0 %v3172
    %4479 = vmatprep.subr.bf16.mxu0 %v3175
    %4480 = vmatpush1.bf16.msra.mxu0 %v3174
    %4481 = vmatprep.subr.bf16.mxu0 %v3177
    %4482 = vmatpush1.bf16.msra.mxu0 %v3176
    %4483 = vmatprep.subr.bf16.mxu0 %v3179
    %4484 = vmatpush1.bf16.msra.mxu0 %v3178
    %4485 = vmatprep.mubr.bf16.mxu0 %v839
    %4486 = vmatmul.mubr.bf16.gmra.mrb[0].mxu0 %v838
    %v4487 = vpop.f32.mrb[0].mxu0
    %v4488 = vadd.f32 %v4447, %v4487
    %v4489 = vpop.f32.mrb[0].mxu0
    %v4490 = vadd.f32 %v4449, %v4489
    %v4491 = vpop.f32.mrb[0].mxu0
    %v4492 = vpop.f32.mrb[0].mxu0
    %4493 = vdwg.mxu0
    %v4494 = vmax.f32 %v4488, 0.0
    %v4495 = vmax.f32 %v4490, 0.0
    %v4496 = vpack.c.bf16 %v4494, %v4494
    %v4497 = vpack.c.bf16 %v4495, %v4495
    %v4498 = vld [vmem:[%s3] sm:$0xf]
    %v4499 = vld [vmem:[%s3 + $0x4] sm:$0xf]
    %v4500 = vld [vmem:[%s3 + $0x8] sm:$0xf]
    %v4501 = vld [vmem:[%s3 + $0xc] sm:$0xf]
    %v4502 = vld [vmem:[%s3 + $0x10] sm:$0xf]
    %v4503 = vld [vmem:[%s3 + $0x14] sm:$0xf]
    %v4504 = vld [vmem:[%s3 + $0x18] sm:$0xf]
    %v4505 = vld [vmem:[%s3 + $0x1c] sm:$0xf]
    %v4506 = vld [vmem:[%s3 + $0x20] sm:$0xf]
    %v4507 = vld [vmem:[%s3 + $0x24] sm:$0xf]
    %v4508 = vld [vmem:[%s3 + $0x28] sm:$0xf]
    %v4509 = vld [vmem:[%s3 + $0x2c] sm:$0xf]
    %v4510 = vld [vmem:[%s3 + $0x30] sm:$0xf]
    %v4511 = vld [vmem:[%s3 + $0x34] sm:$0xf]
    %v4512 = vld [vmem:[%s3 + $0x38] sm:$0xf]
    %v4513 = vld [vmem:[%s3 + $0x3c] sm:$0xf]
    %v4514 = vld [vmem:[%s3 + $0x40] sm:$0xf]
    %v4515 = vld [vmem:[%s3 + $0x44] sm:$0xf]
    %v4516 = vld [vmem:[%s3 + $0x48] sm:$0xf]
    %v4517 = vld [vmem:[%s3 + $0x4c] sm:$0xf]
    %v4518 = vld [vmem:[%s3 + $0x50] sm:$0xf]
    %v4519 = vld [vmem:[%s3 + $0x54] sm:$0xf]
    %v4520 = vld [vmem:[%s3 + $0x58] sm:$0xf]
    %v4521 = vld [vmem:[%s3 + $0x5c] sm:$0xf]
    %v4522 = vld [vmem:[%s3 + $0x60] sm:$0xf]
    %v4523 = vld [vmem:[%s4] sm:$0x1]
    %v4525 = vlaneseq
    %v4526 = vshrl.u32 %v4525, 7
    %v4527 = vsub.s32 0, %v4526
    %v4528 = vrot.slane %v4523, %v4527
    %v4555 = vunpack.c.l.b16 %v4498
    %v4556 = vunpack.c.l.b16 %v4499
    %v4557 = vunpack.c.l.b16 %v4500
    %v4558 = vunpack.c.l.b16 %v4501
    %v4559 = vunpack.c.l.b16 %v4502
    %v4560 = vunpack.c.l.b16 %v4503
    %v4561 = vunpack.c.l.b16 %v4504
    %v4562 = vunpack.c.l.b16 %v4505
    %v4563 = vunpack.c.l.b16 %v4506
    %v4564 = vunpack.c.l.b16 %v4507
    %v4565 = vunpack.c.l.b16 %v4508
    %v4566 = vunpack.c.l.b16 %v4509
    %v4567 = vunpack.c.l.b16 %v4510
    %v4568 = vunpack.c.l.b16 %v4511
    %v4569 = vunpack.c.l.b16 %v4512
    %v4570 = vunpack.c.l.b16 %v4513
    %v4571 = vunpack.c.l.b16 %v4514
    %v4572 = vunpack.c.l.b16 %v4515
    %v4573 = vunpack.c.l.b16 %v4516
    %v4574 = vunpack.c.l.b16 %v4517
    %v4575 = vunpack.c.l.b16 %v4518
    %v4576 = vunpack.c.l.b16 %v4519
    %v4577 = vunpack.c.l.b16 %v4520
    %v4578 = vunpack.c.l.b16 %v4521
    %v4579 = vunpack.c.l.b16 %v4522
    %v4580 = vpack.c.b16 %v4556, %v4555
    %v4581 = vpack.c.b16 %v4558, %v4557
    %v4582 = vpack.c.b16 %v4560, %v4559
    %v4583 = vpack.c.b16 %v4562, %v4561
    %v4584 = vpack.c.b16 %v4564, %v4563
    %v4585 = vpack.c.b16 %v4566, %v4565
    %v4586 = vpack.c.b16 %v4568, %v4567
    %v4587 = vpack.c.b16 %v4570, %v4569
    %v4588 = vpack.c.b16 %v4572, %v4571
    %v4589 = vpack.c.b16 %v4574, %v4573
    %v4590 = vpack.c.b16 %v4576, %v4575
    %v4591 = vpack.c.b16 %v4578, %v4577
    %v4592 = vpack.c.b16 %v4579, %v4579
    %vm4605 = vcmask 588800
    %v4607 = vsel %vm4605, %v4497, 0
    %vm4609 = vcmask 1043456
    %v4611 = vsel %vm4609, %v4592, 0
    %4613 = vmatprep.subr.bf16.mxu0 0
    %4614 = vmatpush1.bf16.msra.mxu0 %v4580
    %4615 = vmatprep.subr.bf16.mxu0 0
    %4616 = vmatpush1.bf16.msra.mxu0 %v4581
    %4617 = vmatprep.subr.bf16.mxu0 0
    %4618 = vmatpush1.bf16.msra.mxu0 %v4582
    %4619 = vmatprep.subr.bf16.mxu0 0
    %4620 = vmatpush1.bf16.msra.mxu0 %v4583
    %4621 = vmatprep.subr.bf16.mxu0 0
    %4622 = vmatpush1.bf16.msra.mxu0 %v4584
    %4623 = vmatprep.subr.bf16.mxu0 0
    %4624 = vmatpush1.bf16.msra.mxu0 %v4585
    %4625 = vmatprep.subr.bf16.mxu0 0
    %4626 = vmatpush1.bf16.msra.mxu0 %v4586
    %4627 = vmatprep.subr.bf16.mxu0 0
    %4628 = vmatpush1.bf16.msra.mxu0 %v4587
    %4629 = vmatprep.subr.bf16.mxu0 0
    %4630 = vmatpush1.bf16.msra.mxu0 %v4588
    %4631 = vmatprep.subr.bf16.mxu0 0
    %4632 = vmatpush1.bf16.msra.mxu0 %v4589
    %4633 = vmatprep.subr.bf16.mxu0 0
    %4634 = vmatpush1.bf16.msra.mxu0 %v4590
    %4635 = vmatprep.subr.bf16.mxu0 0
    %4636 = vmatpush1.bf16.msra.mxu0 %v4591
    %4637 = vmatprep.subr.bf16.mxu0 0
    %4638 = vmatpush1.bf16.msra.mxu0 %v4611
    %4639 = vmatprep.subr.bf16.mxu0 0
    %4640 = vmatpush1.bf16.msra.mxu0 0
    %4641 = vmatprep.subr.bf16.mxu0 0
    %4642 = vmatpush1.bf16.msra.mxu0 0
    %4643 = vmatprep.subr.bf16.mxu0 0
    %4644 = vmatpush1.bf16.msra.mxu0 0
    %4645 = vmatprep.mubr.bf16.mxu0 %v4607
    %4646 = vmatmul.mubr.bf16.gmra.mrb[0].mxu0 %v4496
    %v4647 = vpop.f32.mrb[0].mxu0
    %v4648 = vadd.f32 %v4528, %v4647
    %v4649 = vpop.f32.mrb[0].mxu0
    %v4650 = vpop.f32.mrb[0].mxu0
    %v4651 = vpop.f32.mrb[0].mxu0
    %4652 = vdwg.mxu0
    %vm4653 = vcmask 9216
    %v4654 = vsel %vm4653, %v4648, -inf
    %4655 = vmax.xlane.f32.xlu0 %v4654
    %v4656 = vpop.xlane.xlu0 %4655
    %v4657 = vsub.f32 %v4648, %v4656
    %v4658 = vmul.f32 %v4657, 1.442695
    %v4659 = vpow.pop %v4658
    %v4660 = vsel %vm4653, %v4659, 0.0
    %4661 = vadd.xlane.f32.xlu0 %v4660
    %v4662 = vpop.xlane.xlu0 %4661
    %v4663 = vlog2.pop %v4662
    %v4664 = vmul.f32 %v4663, 0.6931472
    %v4665 = vsub.f32 %v4657, %v4664
    %4666 = vst.msk [vmem:[#allocation2] sm:$0x3] %vm4653, %v4665
    // Predicated region
    $region22: #{cnn_forward.3} parent=1 // pred_check
      _
    $region23: #{cnn_forward.3} parent=1 // pred_check_branch
      %4668 = sbr.rel (0) target = $region25
    $region24: #{cnn_forward.3} parent=1 // pred_region
      %s4670 = ssub.s32 32, 32
      %4671 = vsyncadd [#allocation3], %s4670
      %s4673 = sshll.u32 [#allocation2], 4
      %s4674 = int_to_ptr.vmem [resolvable:$true] %s4673
      %4676 = dma.vmem_to_hbm [thread:$0]  %s4674, 32, %s5, [#allocation3]
    $region25: #{cnn_forward.3} parent=1 // pred_fallthru
      _
    // Predicated region
    $region26: #{cnn_forward.3} parent=1 // pred_check
      _
    $region27: #{cnn_forward.3} parent=1 // pred_check_branch
      %4678 = sbr.rel (0) target = $region29
    $region28: #{cnn_forward.3} parent=1 // pred_region
      %4679 = dma.done [#allocation3], 32
    $region29: #{cnn_forward.3} parent=1 // pred_fallthru
      _
    %4680 = vsyncpa [#allocation3], 1

</llo_original>
